<compile_context>
chip_gen: v6e
topology: v6e:2x2x1
jax: 0.10.0
libtpu: 0.0.40
codegen_flags: <defaults>
</compile_context>

<pallas_src>
import jax
import jax.numpy as jnp
from jax.experimental import pallas as pl
from jax.experimental.pallas import tpu as pltpu


# ----------------------------- fused encoder-stack kernel -----------------------------

def encoder_stack_kernel(x_ref,
                         wqkv_ref, bqkv_ref,      # (L,3,H,D,hd) bf16, (L,3,H,1,hd) f32
                         wo_ref, bo_ref,          # (L,H,hd,D)   bf16, (L,1,D)      f32
                         ln1g_ref, ln1b_ref,      # (L,1,D) f32
                         w1_ref, b1_ref,          # (L,D,F) bf16, (L,1,F) f32
                         w2_ref, b2_ref,          # (L,F,D) bf16, (L,1,D) f32
                         ln2g_ref, ln2b_ref,      # (L,1,D) f32
                         o_ref):
    """Whole TransformerEncoder forward for one (block_b, S, D) batch tile."""
    TB, S, D = x_ref.shape
    L, _, H, _, hd = wqkv_ref.shape
    M = TB * S
    scale = 1.0 / float(hd) ** 0.5
    f32, bf16 = jnp.float32, jnp.bfloat16

    def layer_norm(t, g, b):
        mu = jnp.mean(t, axis=-1, keepdims=True)
        var = jnp.mean((t - mu) ** 2, axis=-1, keepdims=True)
        return (t - mu) * jax.lax.rsqrt(var + 1e-5) * g + b

    # residual stream in f32, batch folded into the matmul M dimension
    h_res = x_ref[...].astype(f32).reshape(M, D)

    for l in range(L):                      # layers fused: no HBM round trip in between
        xb = h_res.astype(bf16)             # one bf16 copy feeds every MXU op of this layer

        # ---- multi-head self-attention ----
        # Heads are statically unrolled, but every per-head weight slab is indexed on leading
        # ref dims (free): no 32-lane lane-slicing, no concatenate, no relayout copies.
        # TODO(synk): when hd is a multiple of 128, a single fused (M,D)x(D,3D) QKV matmul with
        #             tile-aligned output slices would give better MXU column occupancy.
        attn_out = jnp.zeros((M, D), f32)
        for h in range(H):
            q = jnp.dot(xb, wqkv_ref[l, 0, h], preferred_element_type=f32) + bqkv_ref[l, 0, h]
            k = jnp.dot(xb, wqkv_ref[l, 1, h], preferred_element_type=f32) + bqkv_ref[l, 1, h]
            v = jnp.dot(xb, wqkv_ref[l, 2, h], preferred_element_type=f32) + bqkv_ref[l, 2, h]
            qb = (q * scale).astype(bf16).reshape(TB, S, hd)   # fold 1/sqrt(hd) into q
            kb = k.astype(bf16).reshape(TB, S, hd)
            vb = v.astype(bf16).reshape(TB, S, hd)

            # TODO(synk): flash-style KV tiling needed for long S; here the (S,S) logits are
            #             materialized per head (S is small in this configuration).
            logits = jnp.einsum("bqd,bkd->bqk", qb, kb, preferred_element_type=f32)
            logits = logits - jnp.max(logits, axis=-1, keepdims=True)
            p = jnp.exp(logits)
            p = p * pl.reciprocal(jnp.sum(p, axis=-1, keepdims=True), approx=True)
            ctx = jnp.einsum("bqk,bkd->bqd", p.astype(bf16), vb,
                             preferred_element_type=f32).reshape(M, hd)
            # fold this head's rows of the output projection directly into the accumulator
            attn_out = attn_out + jnp.dot(ctx.astype(bf16), wo_ref[l, h],
                                          preferred_element_type=f32)
        attn_out = attn_out + bo_ref[l]

        # ---- residual + LayerNorm 1 (f32) ----
        h1 = layer_norm(h_res + attn_out, ln1g_ref[l], ln1b_ref[l])

        # ---- feed-forward: Linear -> Dropout(p=0) -> ReLU -> Linear ----
        ff = jnp.dot(h1.astype(bf16), w1_ref[l], preferred_element_type=f32) + b1_ref[l]
        ff = jnp.maximum(ff, 0.0)
        ff = jnp.dot(ff.astype(bf16), w2_ref[l], preferred_element_type=f32) + b2_ref[l]

        # ---- residual + LayerNorm 2 (f32) ----
        h_res = layer_norm(h1 + ff, ln2g_ref[l], ln2b_ref[l])

    # D is a multiple of 128 in the example config -> lane-dense (unmasked) store
    o_ref[...] = h_res.reshape(TB, S, D).astype(o_ref.dtype)


# ----------------------------- VMEM budgeting helpers -----------------------------

def _vmem_capacity_bytes():
    try:
        return int(pltpu.get_tpu_info().vmem_capacity_bytes)
    except Exception:
        return 64 * 1024 * 1024             # conservative: v7x per-TensorCore physical VMEM


def _weight_vmem_bytes(L, D, F):
    bf16_w = 2 * L * (4 * D * D + 2 * D * F)              # wqkv + wo + w1 + w2 (bf16)
    f32_p = 4 * L * (3 * D + D + F + D + 4 * D)           # biases + LayerNorm params (f32)
    return int(bf16_w + f32_p)


def _act_vmem_bytes(block_b, S, D, F):
    M = block_b * S
    return int(4 * M * (4 * D + 2 * F)      # residual / attn / h1 f32 + bf16 copies + (M,F) FFN
               + 4 * block_b * S * S        # one head's logits (heads run sequentially)
               + 16 * block_b * S * D)      # double-buffered x / out blocks


# ----------------------------- wrapper -----------------------------

def transformer_encoder_pallas(x, sp, *, block_b=None):
    """x: (B, S, D) float32; sp: stacked parameter dict from stack_params()."""
    B, S, D = x.shape
    L, _, H, _, hd = sp["wqkv"].shape
    F = sp["w1"].shape[-1]
    assert D == H * hd

    capacity = _vmem_capacity_bytes()
    weight_bytes = _weight_vmem_bytes(L, D, F)
    act_budget = max(8 * 1024 * 1024, int(0.7 * capacity) - 2 * weight_bytes)

    if block_b is None:
        # One batch tile by default (grid=(1,)): every projection/FFN matmul sees the full
        # M = B*S rows, and single-TC v5e/v6e do not pay a serial 2-way grid split.
        # Shrink only if VMEM forces it AND each half keeps >= 256 matmul rows.
        block_b = B
        while (block_b % 2 == 0
               and _act_vmem_bytes(block_b, S, D, F) > act_budget
               and (block_b // 2) * S >= 256):
            block_b //= 2
    assert B % block_b == 0
    grid = (B // block_b,)

    bf16, f32 = jnp.bfloat16, jnp.float32

    def full_spec(shape):
        n = len(shape)
        # whole-array block, identical for every grid point (kept resident, no re-DMA)
        return pl.BlockSpec(shape, lambda b: (0,) * n)

    in_specs = [
        pl.BlockSpec((block_b, S, D), lambda b: (b, 0, 0)),            # x
        full_spec(sp["wqkv"].shape), full_spec(sp["bqkv"].shape),
        full_spec(sp["wo"].shape), full_spec(sp["bo"].shape),
        full_spec(sp["ln1g"].shape), full_spec(sp["ln1b"].shape),
        full_spec(sp["w1"].shape), full_spec(sp["b1"].shape),
        full_spec(sp["w2"].shape), full_spec(sp["b2"].shape),
        full_spec(sp["ln2g"].shape), full_spec(sp["ln2b"].shape),
    ]

    # ---- advisory cost estimate for XLA's scheduler ----
    M = B * S
    flops = L * (2 * M * D * 3 * D            # QKV projections (per-head total == fused total)
                 + 4 * B * H * S * S * hd     # QK^T + PV
                 + 2 * M * D * D              # output projection
                 + 4 * M * D * F)             # FFN
    transcendentals = L * B * H * S * S       # softmax exps
    bytes_accessed = 2 * 4 * M * D + weight_bytes
    cost = pl.CostEstimate(flops=int(flops), transcendentals=int(transcendentals),
                           bytes_accessed=int(bytes_accessed))

    vmem_need = 2 * weight_bytes + _act_vmem_bytes(block_b, S, D, F)
    vmem_limit = int(min(0.9 * capacity, max(32 * 1024 * 1024, 1.25 * vmem_need)))

    return pl.pallas_call(
        encoder_stack_kernel,
        out_shape=jax.ShapeDtypeStruct((B, S, D), x.dtype),
        grid=grid,
        in_specs=in_specs,
        out_specs=pl.BlockSpec((block_b, S, D), lambda b: (b, 0, 0)),
        compiler_params=pltpu.CompilerParams(
            dimension_semantics=("parallel",),
            vmem_limit_bytes=vmem_limit),
        cost_estimate=cost,
    )(x.astype(f32),
      sp["wqkv"].astype(bf16), sp["bqkv"].astype(f32),
      sp["wo"].astype(bf16), sp["bo"].astype(f32),
      sp["ln1g"].astype(f32), sp["ln1b"].astype(f32),
      sp["w1"].astype(bf16), sp["b1"].astype(f32),
      sp["w2"].astype(bf16), sp["b2"].astype(f32),
      sp["ln2g"].astype(f32), sp["ln2b"].astype(f32))


# ---------------- deterministic parameter construction ----------------

def init_layer_params(key, input_dim, num_heads, dim_feedforward):
    D, H, F = input_dim, num_heads, dim_feedforward
    hd = D // H
    ks = jax.random.split(key, 6)
    s = 0.05

    # qkv_proj: single Linear(D, 3D); reproduce the PyTorch reshape/chunk convention
    # qkv.reshape(B, S, H, 3*hd).chunk(3, dim=-1)  -> per-head [q | k | v] interleaving.
    wqkv = s * jax.random.normal(ks[0], (D, 3 * D), jnp.float32)
    bqkv = s * jax.random.normal(ks[1], (3 * D,), jnp.float32)
    wqkv3 = wqkv.reshape(D, H, 3 * hd)
    bqkv3 = bqkv.reshape(H, 3 * hd)
    wq = wqkv3[:, :, 0 * hd:1 * hd].reshape(D, D)
    wk = wqkv3[:, :, 1 * hd:2 * hd].reshape(D, D)
    wv = wqkv3[:, :, 2 * hd:3 * hd].reshape(D, D)
    bq = bqkv3[:, 0 * hd:1 * hd].reshape(1, D)
    bk = bqkv3[:, 1 * hd:2 * hd].reshape(1, D)
    bv = bqkv3[:, 2 * hd:3 * hd].reshape(1, D)

    wo = s * jax.random.normal(ks[2], (D, D), jnp.float32)
    bo = s * jax.random.normal(ks[3], (1, D), jnp.float32)
    w1 = s * jax.random.normal(ks[4], (D, F), jnp.float32)
    b1 = jnp.zeros((1, F), jnp.float32)
    w2 = s * jax.random.normal(ks[5], (F, D), jnp.float32)
    b2 = jnp.zeros((1, D), jnp.float32)

    return dict(
        wq=wq, bq=bq, wk=wk, bk=bk, wv=wv, bv=bv, wo=wo, bo=bo,
        ln1g=jnp.ones((1, D), jnp.float32), ln1b=jnp.zeros((1, D), jnp.float32),
        w1=w1, b1=b1, w2=w2, b2=b2,
        ln2g=jnp.ones((1, D), jnp.float32), ln2b=jnp.zeros((1, D), jnp.float32),
    )


def stack_params(layer_params, num_heads):
    """Host-side rearrangement into the kernel's stacked per-layer / per-head layout."""
    H = num_heads
    D = layer_params[0]["wq"].shape[0]
    hd = D // H

    def heads_cols(w):   # (D, D) with head-major columns -> (H, D, hd)
        return jnp.transpose(w.reshape(D, H, hd), (1, 0, 2))

    def heads_bias(b):   # (1, D) -> (H, 1, hd)
        return b.reshape(H, hd)[:, None, :]

    def one(p):
        wqkv = jnp.stack([heads_cols(p["wq"]), heads_cols(p["wk"]), heads_cols(p["wv"])])
        bqkv = jnp.stack([heads_bias(p["bq"]), heads_bias(p["bk"]), heads_bias(p["bv"])])
        return dict(wqkv=wqkv, bqkv=bqkv, wo=p["wo"].reshape(H, hd, D), bo=p["bo"],
                    ln1g=p["ln1g"], ln1b=p["ln1b"], w1=p["w1"], b1=p["b1"],
                    w2=p["w2"], b2=p["b2"], ln2g=p["ln2g"], ln2b=p["ln2b"])

    per = [one(p) for p in layer_params]
    return {k: jnp.stack([q[k] for q in per]) for k in per[0]}


# ------------- pure-JAX reference with matched bf16 rounding (silent check) -------------

def encoder_block_ref(x, p, num_heads):
    B, S, D = x.shape
    H = num_heads
    hd = D // H
    bf, f32 = jnp.bfloat16, jnp.float32
    scale = 1.0 / float(hd) ** 0.5

    def mm(a, w):
        return jnp.dot(a.astype(bf), w.astype(bf), preferred_element_type=f32)

    def ln(t, g, b):
        mu = jnp.mean(t, axis=-1, keepdims=True)
        var = jnp.mean((t - mu) ** 2, axis=-1, keepdims=True)
        return (t - mu) * jax.lax.rsqrt(var + 1e-5) * g + b

    x2 = x.reshape(B * S, D).astype(f32)
    q = mm(x2, p["wq"]) + p["bq"][0]
    k = mm(x2, p["wk"]) + p["bk"][0]
    v = mm(x2, p["wv"]) + p["bv"][0]
    qb = (q * scale).astype(bf).reshape(B, S, H, hd)
    kb = k.astype(bf).reshape(B, S, H, hd)
    vb = v.astype(bf).reshape(B, S, H, hd)

    logits = jnp.einsum("bqhd,bkhd->bhqk", qb, kb, preferred_element_type=f32)
    logits = logits - jnp.max(logits, axis=-1, keepdims=True)
    pr = jnp.exp(logits)
    pr = pr / jnp.sum(pr, axis=-1, keepdims=True)
    attn = jnp.einsum("bhqk,bkhd->bqhd", pr.astype(bf), vb,
                      preferred_element_type=f32).reshape(B * S, D)
    attn_out = mm(attn, p["wo"]) + p["bo"][0]

    h1 = ln(x2 + attn_out, p["ln1g"][0], p["ln1b"][0])
    ff = jnp.maximum(mm(h1, p["w1"]) + p["b1"][0], 0.0)
    ff = mm(ff, p["w2"]) + p["b2"][0]
    out = ln(h1 + ff, p["ln2g"][0], p["ln2b"][0])
    return out.reshape(B, S, D)


if __name__ == "__main__":
    B, S, D = 2, 8, 128          # D multiple of 128 -> lane-dense loads/stores
    num_heads = 4
    dim_feedforward = 256
    num_layers = 2

    root = jax.random.PRNGKey(0)
    kx, *layer_keys = jax.random.split(root, num_layers + 1)
    x = jax.random.normal(kx, (B, S, D), jnp.float32)
    layer_params = [init_layer_params(k, D, num_heads, dim_feedforward) for k in layer_keys]
    stacked = stack_params(layer_params, num_heads)

    out = transformer_encoder_pallas(x, stacked)
    out = jax.block_until_ready(out)

    # quiet reference check (reference applies the same bf16 matmul rounding)
    ref = x
    for p in layer_params:
        ref = encoder_block_ref(ref, p, num_heads)
    assert out.shape == (B, S, D)
    err = float(jnp.max(jnp.abs(out - ref)))
    assert err < 3e-2, err

    print("KERNEL_OK")
</pallas_src>

<mosaic_0001>
module attributes {stable_mosaic.version = 11 : i64} {
  func.func @encoder_stack_kernel(%arg0: i32, %arg1: memref<2x8x128xf32, #tpu.memory_space<vmem>>, %arg2: memref<2x3x4x128x32xbf16, #tpu.memory_space<vmem>>, %arg3: memref<2x3x4x1x32xf32, #tpu.memory_space<vmem>>, %arg4: memref<2x4x32x128xbf16, #tpu.memory_space<vmem>>, %arg5: memref<2x1x128xf32, #tpu.memory_space<vmem>>, %arg6: memref<2x1x128xf32, #tpu.memory_space<vmem>>, %arg7: memref<2x1x128xf32, #tpu.memory_space<vmem>>, %arg8: memref<2x128x256xbf16, #tpu.memory_space<vmem>>, %arg9: memref<2x1x256xf32, #tpu.memory_space<vmem>>, %arg10: memref<2x256x128xbf16, #tpu.memory_space<vmem>>, %arg11: memref<2x1x128xf32, #tpu.memory_space<vmem>>, %arg12: memref<2x1x128xf32, #tpu.memory_space<vmem>>, %arg13: memref<2x1x128xf32, #tpu.memory_space<vmem>>, %arg14: memref<2x8x128xf32, #tpu.memory_space<vmem>>) attributes {dimension_semantics = [#tpu.dimension_semantics<parallel>], iteration_bounds = array<i64: 1>, scalar_prefetch = 0 : i64, scratch_operands = 0 : i64, tpu.core_type = #tpu.core_type<tc>, window_params = [{transform_indices = @transform_0, window_bounds = array<i64: 2, 8, 128>}, {pipeline_mode = #tpu.pipeline_mode<synchronous>, transform_indices = @transform_1, window_bounds = array<i64: 2, 3, 4, 128, 32>}, {pipeline_mode = #tpu.pipeline_mode<synchronous>, transform_indices = @transform_2, window_bounds = array<i64: 2, 3, 4, 1, 32>}, {pipeline_mode = #tpu.pipeline_mode<synchronous>, transform_indices = @transform_3, window_bounds = array<i64: 2, 4, 32, 128>}, {pipeline_mode = #tpu.pipeline_mode<synchronous>, transform_indices = @transform_4, window_bounds = array<i64: 2, 1, 128>}, {pipeline_mode = #tpu.pipeline_mode<synchronous>, transform_indices = @transform_5, window_bounds = array<i64: 2, 1, 128>}, {pipeline_mode = #tpu.pipeline_mode<synchronous>, transform_indices = @transform_6, window_bounds = array<i64: 2, 1, 128>}, {pipeline_mode = #tpu.pipeline_mode<synchronous>, transform_indices = @transform_7, window_bounds = array<i64: 2, 128, 256>}, {pipeline_mode = #tpu.pipeline_mode<synchronous>, transform_indices = @transform_8, window_bounds = array<i64: 2, 1, 256>}, {pipeline_mode = #tpu.pipeline_mode<synchronous>, transform_indices = @transform_9, window_bounds = array<i64: 2, 256, 128>}, {pipeline_mode = #tpu.pipeline_mode<synchronous>, transform_indices = @transform_10, window_bounds = array<i64: 2, 1, 128>}, {pipeline_mode = #tpu.pipeline_mode<synchronous>, transform_indices = @transform_11, window_bounds = array<i64: 2, 1, 128>}, {pipeline_mode = #tpu.pipeline_mode<synchronous>, transform_indices = @transform_12, window_bounds = array<i64: 2, 1, 128>}, {transform_indices = @transform_13, window_bounds = array<i64: 2, 8, 128>}]} {
    %c0 = arith.constant 0 : index
    %c0_0 = arith.constant 0 : index
    %c0_1 = arith.constant 0 : index
    %0 = vector.load %arg1[%c0, %c0_0, %c0_1] : memref<2x8x128xf32, #tpu.memory_space<vmem>>, vector<2x8x128xf32>
    %1 = vector.shape_cast %0 : vector<2x8x128xf32> to vector<16x128xf32>
    %2 = arith.truncf %1 : vector<16x128xf32> to vector<16x128xbf16>
    %cst = arith.constant 0.000000e+00 : f32
    %3 = vector.broadcast %cst : f32 to vector<16x128xf32>
    %c0_2 = arith.constant 0 : index
    %c0_3 = arith.constant 0 : index
    %c0_4 = arith.constant 0 : index
    %c0_5 = arith.constant 0 : index
    %c0_6 = arith.constant 0 : index
    %4 = vector.load %arg2[%c0_2, %c0_3, %c0_4, %c0_5, %c0_6] : memref<2x3x4x128x32xbf16, #tpu.memory_space<vmem>>, vector<1x1x1x128x32xbf16>
    %5 = vector.shape_cast %4 : vector<1x1x1x128x32xbf16> to vector<128x32xbf16>
    %cst_7 = arith.constant dense<0.000000e+00> : vector<16x32xf32>
    %6 = tpu.matmul %2, %5, %cst_7 {dimension_numbers = #tpu.dot_dimension_numbers<[1], [0], [0], [1], [0, 0, 1, 1], [], []>} : vector<16x128xbf16>, vector<128x32xbf16>, vector<16x32xf32> -> vector<16x32xf32>
    %c0_8 = arith.constant 0 : index
    %c0_9 = arith.constant 0 : index
    %c0_10 = arith.constant 0 : index
    %c0_11 = arith.constant 0 : index
    %c0_12 = arith.constant 0 : index
    %7 = vector.load %arg3[%c0_8, %c0_9, %c0_10, %c0_11, %c0_12] : memref<2x3x4x1x32xf32, #tpu.memory_space<vmem>>, vector<1x1x1x1x32xf32>
    %8 = vector.shape_cast %7 : vector<1x1x1x1x32xf32> to vector<1x32xf32>
    %9 = vector.broadcast %8 : vector<1x32xf32> to vector<16x32xf32>
    %10 = arith.addf %6, %9 : vector<16x32xf32>
    %c0_13 = arith.constant 0 : index
    %c1 = arith.constant 1 : index
    %c0_14 = arith.constant 0 : index
    %c0_15 = arith.constant 0 : index
    %c0_16 = arith.constant 0 : index
    %11 = vector.load %arg2[%c0_13, %c1, %c0_14, %c0_15, %c0_16] : memref<2x3x4x128x32xbf16, #tpu.memory_space<vmem>>, vector<1x1x1x128x32xbf16>
    %12 = vector.shape_cast %11 : vector<1x1x1x128x32xbf16> to vector<128x32xbf16>
    %cst_17 = arith.constant dense<0.000000e+00> : vector<16x32xf32>
    %13 = tpu.matmul %2, %12, %cst_17 {dimension_numbers = #tpu.dot_dimension_numbers<[1], [0], [0], [1], [0, 0, 1, 1], [], []>} : vector<16x128xbf16>, vector<128x32xbf16>, vector<16x32xf32> -> vector<16x32xf32>
    %c0_18 = arith.constant 0 : index
    %c1_19 = arith.constant 1 : index
    %c0_20 = arith.constant 0 : index
    %c0_21 = arith.constant 0 : index
    %c0_22 = arith.constant 0 : index
    %14 = vector.load %arg3[%c0_18, %c1_19, %c0_20, %c0_21, %c0_22] : memref<2x3x4x1x32xf32, #tpu.memory_space<vmem>>, vector<1x1x1x1x32xf32>
    %15 = vector.shape_cast %14 : vector<1x1x1x1x32xf32> to vector<1x32xf32>
    %16 = vector.broadcast %15 : vector<1x32xf32> to vector<16x32xf32>
    %17 = arith.addf %13, %16 : vector<16x32xf32>
    %c0_23 = arith.constant 0 : index
    %c2 = arith.constant 2 : index
    %c0_24 = arith.constant 0 : index
    %c0_25 = arith.constant 0 : index
    %c0_26 = arith.constant 0 : index
    %18 = vector.load %arg2[%c0_23, %c2, %c0_24, %c0_25, %c0_26] : memref<2x3x4x128x32xbf16, #tpu.memory_space<vmem>>, vector<1x1x1x128x32xbf16>
    %19 = vector.shape_cast %18 : vector<1x1x1x128x32xbf16> to vector<128x32xbf16>
    %cst_27 = arith.constant dense<0.000000e+00> : vector<16x32xf32>
    %20 = tpu.matmul %2, %19, %cst_27 {dimension_numbers = #tpu.dot_dimension_numbers<[1], [0], [0], [1], [0, 0, 1, 1], [], []>} : vector<16x128xbf16>, vector<128x32xbf16>, vector<16x32xf32> -> vector<16x32xf32>
    %c0_28 = arith.constant 0 : index
    %c2_29 = arith.constant 2 : index
    %c0_30 = arith.constant 0 : index
    %c0_31 = arith.constant 0 : index
    %c0_32 = arith.constant 0 : index
    %21 = vector.load %arg3[%c0_28, %c2_29, %c0_30, %c0_31, %c0_32] : memref<2x3x4x1x32xf32, #tpu.memory_space<vmem>>, vector<1x1x1x1x32xf32>
    %22 = vector.shape_cast %21 : vector<1x1x1x1x32xf32> to vector<1x32xf32>
    %23 = vector.broadcast %22 : vector<1x32xf32> to vector<16x32xf32>
    %24 = arith.addf %20, %23 : vector<16x32xf32>
    %cst_33 = arith.constant 0.176776692 : f32
    %25 = vector.broadcast %cst_33 : f32 to vector<16x32xf32>
    %26 = arith.mulf %10, %25 : vector<16x32xf32>
    %27 = arith.truncf %26 : vector<16x32xf32> to vector<16x32xbf16>
    %28 = vector.shape_cast %27 : vector<16x32xbf16> to vector<2x8x32xbf16>
    %29 = arith.truncf %17 : vector<16x32xf32> to vector<16x32xbf16>
    %30 = vector.shape_cast %29 : vector<16x32xbf16> to vector<2x8x32xbf16>
    %31 = arith.truncf %24 : vector<16x32xf32> to vector<16x32xbf16>
    %32 = vector.shape_cast %31 : vector<16x32xbf16> to vector<2x8x32xbf16>
    "tpu.trace_start"() <{level = 10 : i32, message = "bqd,bkd->bqk"}> : () -> ()
    %cst_34 = arith.constant dense<0.000000e+00> : vector<2x8x8xf32>
    %33 = tpu.matmul %28, %30, %cst_34 {dimension_numbers = #tpu.dot_dimension_numbers<[2], [2], [1], [1], [0, 0, 0, 1, 1, 1], [0], [0]>} : vector<2x8x32xbf16>, vector<2x8x32xbf16>, vector<2x8x8xf32> -> vector<2x8x8xf32>
    "tpu.trace_stop"() : () -> ()
    %cst_35 = arith.constant dense<0xFF800000> : vector<2x8xf32>
    %34 = vector.multi_reduction <maximumf>, %33, %cst_35 [2] : vector<2x8x8xf32> to vector<2x8xf32>
    %35 = vector.shape_cast %34 : vector<2x8xf32> to vector<2x8x1xf32>
    %36 = vector.broadcast %35 : vector<2x8x1xf32> to vector<2x8x8xf32>
    %37 = arith.subf %33, %36 : vector<2x8x8xf32>
    %38 = math.exp %37 : vector<2x8x8xf32>
    %cst_36 = arith.constant dense<0.000000e+00> : vector<2x8xf32>
    %39 = vector.multi_reduction <add>, %38, %cst_36 [2] : vector<2x8x8xf32> to vector<2x8xf32>
    %40 = vector.shape_cast %39 : vector<2x8xf32> to vector<2x8x1xf32>
    %41 = tpu.reciprocal %40 {approx = true} : vector<2x8x1xf32> -> vector<2x8x1xf32>
    %42 = vector.broadcast %41 : vector<2x8x1xf32> to vector<2x8x8xf32>
    %43 = arith.mulf %38, %42 : vector<2x8x8xf32>
    %44 = arith.truncf %43 : vector<2x8x8xf32> to vector<2x8x8xbf16>
    "tpu.trace_start"() <{level = 10 : i32, message = "bqk,bkd->bqd"}> : () -> ()
    %cst_37 = arith.constant dense<0.000000e+00> : vector<2x8x32xf32>
    %45 = tpu.matmul %44, %32, %cst_37 {dimension_numbers = #tpu.dot_dimension_numbers<[2], [1], [1], [2], [0, 0, 0, 1, 1, 2], [0], [0]>} : vector<2x8x8xbf16>, vector<2x8x32xbf16>, vector<2x8x32xf32> -> vector<2x8x32xf32>
    "tpu.trace_stop"() : () -> ()
    %46 = vector.shape_cast %45 : vector<2x8x32xf32> to vector<16x32xf32>
    %47 = arith.truncf %46 : vector<16x32xf32> to vector<16x32xbf16>
    %c0_38 = arith.constant 0 : index
    %c0_39 = arith.constant 0 : index
    %c0_40 = arith.constant 0 : index
    %c0_41 = arith.constant 0 : index
    %48 = vector.load %arg4[%c0_38, %c0_39, %c0_40, %c0_41] : memref<2x4x32x128xbf16, #tpu.memory_space<vmem>>, vector<1x1x32x128xbf16>
    %49 = vector.shape_cast %48 : vector<1x1x32x128xbf16> to vector<32x128xbf16>
    %cst_42 = arith.constant dense<0.000000e+00> : vector<16x128xf32>
    %50 = tpu.matmul %47, %49, %cst_42 {dimension_numbers = #tpu.dot_dimension_numbers<[1], [0], [0], [1], [0, 0, 1, 1], [], []>} : vector<16x32xbf16>, vector<32x128xbf16>, vector<16x128xf32> -> vector<16x128xf32>
    %51 = arith.addf %3, %50 : vector<16x128xf32>
    %c0_43 = arith.constant 0 : index
    %c0_44 = arith.constant 0 : index
    %c1_45 = arith.constant 1 : index
    %c0_46 = arith.constant 0 : index
    %c0_47 = arith.constant 0 : index
    %52 = vector.load %arg2[%c0_43, %c0_44, %c1_45, %c0_46, %c0_47] : memref<2x3x4x128x32xbf16, #tpu.memory_space<vmem>>, vector<1x1x1x128x32xbf16>
    %53 = vector.shape_cast %52 : vector<1x1x1x128x32xbf16> to vector<128x32xbf16>
    %cst_48 = arith.constant dense<0.000000e+00> : vector<16x32xf32>
    %54 = tpu.matmul %2, %53, %cst_48 {dimension_numbers = #tpu.dot_dimension_numbers<[1], [0], [0], [1], [0, 0, 1, 1], [], []>} : vector<16x128xbf16>, vector<128x32xbf16>, vector<16x32xf32> -> vector<16x32xf32>
    %c0_49 = arith.constant 0 : index
    %c0_50 = arith.constant 0 : index
    %c1_51 = arith.constant 1 : index
    %c0_52 = arith.constant 0 : index
    %c0_53 = arith.constant 0 : index
    %55 = vector.load %arg3[%c0_49, %c0_50, %c1_51, %c0_52, %c0_53] : memref<2x3x4x1x32xf32, #tpu.memory_space<vmem>>, vector<1x1x1x1x32xf32>
    %56 = vector.shape_cast %55 : vector<1x1x1x1x32xf32> to vector<1x32xf32>
    %57 = vector.broadcast %56 : vector<1x32xf32> to vector<16x32xf32>
    %58 = arith.addf %54, %57 : vector<16x32xf32>
    %c0_54 = arith.constant 0 : index
    %c1_55 = arith.constant 1 : index
    %c1_56 = arith.constant 1 : index
    %c0_57 = arith.constant 0 : index
    %c0_58 = arith.constant 0 : index
    %59 = vector.load %arg2[%c0_54, %c1_55, %c1_56, %c0_57, %c0_58] : memref<2x3x4x128x32xbf16, #tpu.memory_space<vmem>>, vector<1x1x1x128x32xbf16>
    %60 = vector.shape_cast %59 : vector<1x1x1x128x32xbf16> to vector<128x32xbf16>
    %cst_59 = arith.constant dense<0.000000e+00> : vector<16x32xf32>
    %61 = tpu.matmul %2, %60, %cst_59 {dimension_numbers = #tpu.dot_dimension_numbers<[1], [0], [0], [1], [0, 0, 1, 1], [], []>} : vector<16x128xbf16>, vector<128x32xbf16>, vector<16x32xf32> -> vector<16x32xf32>
    %c0_60 = arith.constant 0 : index
    %c1_61 = arith.constant 1 : index
    %c1_62 = arith.constant 1 : index
    %c0_63 = arith.constant 0 : index
    %c0_64 = arith.constant 0 : index
    %62 = vector.load %arg3[%c0_60, %c1_61, %c1_62, %c0_63, %c0_64] : memref<2x3x4x1x32xf32, #tpu.memory_space<vmem>>, vector<1x1x1x1x32xf32>
    %63 = vector.shape_cast %62 : vector<1x1x1x1x32xf32> to vector<1x32xf32>
    %64 = vector.broadcast %63 : vector<1x32xf32> to vector<16x32xf32>
    %65 = arith.addf %61, %64 : vector<16x32xf32>
    %c0_65 = arith.constant 0 : index
    %c2_66 = arith.constant 2 : index
    %c1_67 = arith.constant 1 : index
    %c0_68 = arith.constant 0 : index
    %c0_69 = arith.constant 0 : index
    %66 = vector.load %arg2[%c0_65, %c2_66, %c1_67, %c0_68, %c0_69] : memref<2x3x4x128x32xbf16, #tpu.memory_space<vmem>>, vector<1x1x1x128x32xbf16>
    %67 = vector.shape_cast %66 : vector<1x1x1x128x32xbf16> to vector<128x32xbf16>
    %cst_70 = arith.constant dense<0.000000e+00> : vector<16x32xf32>
    %68 = tpu.matmul %2, %67, %cst_70 {dimension_numbers = #tpu.dot_dimension_numbers<[1], [0], [0], [1], [0, 0, 1, 1], [], []>} : vector<16x128xbf16>, vector<128x32xbf16>, vector<16x32xf32> -> vector<16x32xf32>
    %c0_71 = arith.constant 0 : index
    %c2_72 = arith.constant 2 : index
    %c1_73 = arith.constant 1 : index
    %c0_74 = arith.constant 0 : index
    %c0_75 = arith.constant 0 : index
    %69 = vector.load %arg3[%c0_71, %c2_72, %c1_73, %c0_74, %c0_75] : memref<2x3x4x1x32xf32, #tpu.memory_space<vmem>>, vector<1x1x1x1x32xf32>
    %70 = vector.shape_cast %69 : vector<1x1x1x1x32xf32> to vector<1x32xf32>
    %71 = vector.broadcast %70 : vector<1x32xf32> to vector<16x32xf32>
    %72 = arith.addf %68, %71 : vector<16x32xf32>
    %cst_76 = arith.constant 0.176776692 : f32
    %73 = vector.broadcast %cst_76 : f32 to vector<16x32xf32>
    %74 = arith.mulf %58, %73 : vector<16x32xf32>
    %75 = arith.truncf %74 : vector<16x32xf32> to vector<16x32xbf16>
    %76 = vector.shape_cast %75 : vector<16x32xbf16> to vector<2x8x32xbf16>
    %77 = arith.truncf %65 : vector<16x32xf32> to vector<16x32xbf16>
    %78 = vector.shape_cast %77 : vector<16x32xbf16> to vector<2x8x32xbf16>
    %79 = arith.truncf %72 : vector<16x32xf32> to vector<16x32xbf16>
    %80 = vector.shape_cast %79 : vector<16x32xbf16> to vector<2x8x32xbf16>
    "tpu.trace_start"() <{level = 10 : i32, message = "bqd,bkd->bqk"}> : () -> ()
    %cst_77 = arith.constant dense<0.000000e+00> : vector<2x8x8xf32>
    %81 = tpu.matmul %76, %78, %cst_77 {dimension_numbers = #tpu.dot_dimension_numbers<[2], [2], [1], [1], [0, 0, 0, 1, 1, 1], [0], [0]>} : vector<2x8x32xbf16>, vector<2x8x32xbf16>, vector<2x8x8xf32> -> vector<2x8x8xf32>
    "tpu.trace_stop"() : () -> ()
    %cst_78 = arith.constant dense<0xFF800000> : vector<2x8xf32>
    %82 = vector.multi_reduction <maximumf>, %81, %cst_78 [2] : vector<2x8x8xf32> to vector<2x8xf32>
    %83 = vector.shape_cast %82 : vector<2x8xf32> to vector<2x8x1xf32>
    %84 = vector.broadcast %83 : vector<2x8x1xf32> to vector<2x8x8xf32>
    %85 = arith.subf %81, %84 : vector<2x8x8xf32>
    %86 = math.exp %85 : vector<2x8x8xf32>
    %cst_79 = arith.constant dense<0.000000e+00> : vector<2x8xf32>
    %87 = vector.multi_reduction <add>, %86, %cst_79 [2] : vector<2x8x8xf32> to vector<2x8xf32>
    %88 = vector.shape_cast %87 : vector<2x8xf32> to vector<2x8x1xf32>
    %89 = tpu.reciprocal %88 {approx = true} : vector<2x8x1xf32> -> vector<2x8x1xf32>
    %90 = vector.broadcast %89 : vector<2x8x1xf32> to vector<2x8x8xf32>
    %91 = arith.mulf %86, %90 : vector<2x8x8xf32>
    %92 = arith.truncf %91 : vector<2x8x8xf32> to vector<2x8x8xbf16>
    "tpu.trace_start"() <{level = 10 : i32, message = "bqk,bkd->bqd"}> : () -> ()
    %cst_80 = arith.constant dense<0.000000e+00> : vector<2x8x32xf32>
    %93 = tpu.matmul %92, %80, %cst_80 {dimension_numbers = #tpu.dot_dimension_numbers<[2], [1], [1], [2], [0, 0, 0, 1, 1, 2], [0], [0]>} : vector<2x8x8xbf16>, vector<2x8x32xbf16>, vector<2x8x32xf32> -> vector<2x8x32xf32>
    "tpu.trace_stop"() : () -> ()
    %94 = vector.shape_cast %93 : vector<2x8x32xf32> to vector<16x32xf32>
    %95 = arith.truncf %94 : vector<16x32xf32> to vector<16x32xbf16>
    %c0_81 = arith.constant 0 : index
    %c1_82 = arith.constant 1 : index
    %c0_83 = arith.constant 0 : index
    %c0_84 = arith.constant 0 : index
    %96 = vector.load %arg4[%c0_81, %c1_82, %c0_83, %c0_84] : memref<2x4x32x128xbf16, #tpu.memory_space<vmem>>, vector<1x1x32x128xbf16>
    %97 = vector.shape_cast %96 : vector<1x1x32x128xbf16> to vector<32x128xbf16>
    %cst_85 = arith.constant dense<0.000000e+00> : vector<16x128xf32>
    %98 = tpu.matmul %95, %97, %cst_85 {dimension_numbers = #tpu.dot_dimension_numbers<[1], [0], [0], [1], [0, 0, 1, 1], [], []>} : vector<16x32xbf16>, vector<32x128xbf16>, vector<16x128xf32> -> vector<16x128xf32>
    %99 = arith.addf %51, %98 : vector<16x128xf32>
    %c0_86 = arith.constant 0 : index
    %c0_87 = arith.constant 0 : index
    %c2_88 = arith.constant 2 : index
    %c0_89 = arith.constant 0 : index
    %c0_90 = arith.constant 0 : index
    %100 = vector.load %arg2[%c0_86, %c0_87, %c2_88, %c0_89, %c0_90] : memref<2x3x4x128x32xbf16, #tpu.memory_space<vmem>>, vector<1x1x1x128x32xbf16>
    %101 = vector.shape_cast %100 : vector<1x1x1x128x32xbf16> to vector<128x32xbf16>
    %cst_91 = arith.constant dense<0.000000e+00> : vector<16x32xf32>
    %102 = tpu.matmul %2, %101, %cst_91 {dimension_numbers = #tpu.dot_dimension_numbers<[1], [0], [0], [1], [0, 0, 1, 1], [], []>} : vector<16x128xbf16>, vector<128x32xbf16>, vector<16x32xf32> -> vector<16x32xf32>
    %c0_92 = arith.constant 0 : index
    %c0_93 = arith.constant 0 : index
    %c2_94 = arith.constant 2 : index
    %c0_95 = arith.constant 0 : index
    %c0_96 = arith.constant 0 : index
    %103 = vector.load %arg3[%c0_92, %c0_93, %c2_94, %c0_95, %c0_96] : memref<2x3x4x1x32xf32, #tpu.memory_space<vmem>>, vector<1x1x1x1x32xf32>
    %104 = vector.shape_cast %103 : vector<1x1x1x1x32xf32> to vector<1x32xf32>
    %105 = vector.broadcast %104 : vector<1x32xf32> to vector<16x32xf32>
    %106 = arith.addf %102, %105 : vector<16x32xf32>
    %c0_97 = arith.constant 0 : index
    %c1_98 = arith.constant 1 : index
    %c2_99 = arith.constant 2 : index
    %c0_100 = arith.constant 0 : index
    %c0_101 = arith.constant 0 : index
    %107 = vector.load %arg2[%c0_97, %c1_98, %c2_99, %c0_100, %c0_101] : memref<2x3x4x128x32xbf16, #tpu.memory_space<vmem>>, vector<1x1x1x128x32xbf16>
    %108 = vector.shape_cast %107 : vector<1x1x1x128x32xbf16> to vector<128x32xbf16>
    %cst_102 = arith.constant dense<0.000000e+00> : vector<16x32xf32>
    %109 = tpu.matmul %2, %108, %cst_102 {dimension_numbers = #tpu.dot_dimension_numbers<[1], [0], [0], [1], [0, 0, 1, 1], [], []>} : vector<16x128xbf16>, vector<128x32xbf16>, vector<16x32xf32> -> vector<16x32xf32>
    %c0_103 = arith.constant 0 : index
    %c1_104 = arith.constant 1 : index
    %c2_105 = arith.constant 2 : index
    %c0_106 = arith.constant 0 : index
    %c0_107 = arith.constant 0 : index
    %110 = vector.load %arg3[%c0_103, %c1_104, %c2_105, %c0_106, %c0_107] : memref<2x3x4x1x32xf32, #tpu.memory_space<vmem>>, vector<1x1x1x1x32xf32>
    %111 = vector.shape_cast %110 : vector<1x1x1x1x32xf32> to vector<1x32xf32>
    %112 = vector.broadcast %111 : vector<1x32xf32> to vector<16x32xf32>
    %113 = arith.addf %109, %112 : vector<16x32xf32>
    %c0_108 = arith.constant 0 : index
    %c2_109 = arith.constant 2 : index
    %c2_110 = arith.constant 2 : index
    %c0_111 = arith.constant 0 : index
    %c0_112 = arith.constant 0 : index
    %114 = vector.load %arg2[%c0_108, %c2_109, %c2_110, %c0_111, %c0_112] : memref<2x3x4x128x32xbf16, #tpu.memory_space<vmem>>, vector<1x1x1x128x32xbf16>
    %115 = vector.shape_cast %114 : vector<1x1x1x128x32xbf16> to vector<128x32xbf16>
    %cst_113 = arith.constant dense<0.000000e+00> : vector<16x32xf32>
    %116 = tpu.matmul %2, %115, %cst_113 {dimension_numbers = #tpu.dot_dimension_numbers<[1], [0], [0], [1], [0, 0, 1, 1], [], []>} : vector<16x128xbf16>, vector<128x32xbf16>, vector<16x32xf32> -> vector<16x32xf32>
    %c0_114 = arith.constant 0 : index
    %c2_115 = arith.constant 2 : index
    %c2_116 = arith.constant 2 : index
    %c0_117 = arith.constant 0 : index
    %c0_118 = arith.constant 0 : index
    %117 = vector.load %arg3[%c0_114, %c2_115, %c2_116, %c0_117, %c0_118] : memref<2x3x4x1x32xf32, #tpu.memory_space<vmem>>, vector<1x1x1x1x32xf32>
    %118 = vector.shape_cast %117 : vector<1x1x1x1x32xf32> to vector<1x32xf32>
    %119 = vector.broadcast %118 : vector<1x32xf32> to vector<16x32xf32>
    %120 = arith.addf %116, %119 : vector<16x32xf32>
    %cst_119 = arith.constant 0.176776692 : f32
    %121 = vector.broadcast %cst_119 : f32 to vector<16x32xf32>
    %122 = arith.mulf %106, %121 : vector<16x32xf32>
    %123 = arith.truncf %122 : vector<16x32xf32> to vector<16x32xbf16>
    %124 = vector.shape_cast %123 : vector<16x32xbf16> to vector<2x8x32xbf16>
    %125 = arith.truncf %113 : vector<16x32xf32> to vector<16x32xbf16>
    %126 = vector.shape_cast %125 : vector<16x32xbf16> to vector<2x8x32xbf16>
    %127 = arith.truncf %120 : vector<16x32xf32> to vector<16x32xbf16>
    %128 = vector.shape_cast %127 : vector<16x32xbf16> to vector<2x8x32xbf16>
    "tpu.trace_start"() <{level = 10 : i32, message = "bqd,bkd->bqk"}> : () -> ()
    %cst_120 = arith.constant dense<0.000000e+00> : vector<2x8x8xf32>
    %129 = tpu.matmul %124, %126, %cst_120 {dimension_numbers = #tpu.dot_dimension_numbers<[2], [2], [1], [1], [0, 0, 0, 1, 1, 1], [0], [0]>} : vector<2x8x32xbf16>, vector<2x8x32xbf16>, vector<2x8x8xf32> -> vector<2x8x8xf32>
    "tpu.trace_stop"() : () -> ()
    %cst_121 = arith.constant dense<0xFF800000> : vector<2x8xf32>
    %130 = vector.multi_reduction <maximumf>, %129, %cst_121 [2] : vector<2x8x8xf32> to vector<2x8xf32>
    %131 = vector.shape_cast %130 : vector<2x8xf32> to vector<2x8x1xf32>
    %132 = vector.broadcast %131 : vector<2x8x1xf32> to vector<2x8x8xf32>
    %133 = arith.subf %129, %132 : vector<2x8x8xf32>
    %134 = math.exp %133 : vector<2x8x8xf32>
    %cst_122 = arith.constant dense<0.000000e+00> : vector<2x8xf32>
    %135 = vector.multi_reduction <add>, %134, %cst_122 [2] : vector<2x8x8xf32> to vector<2x8xf32>
    %136 = vector.shape_cast %135 : vector<2x8xf32> to vector<2x8x1xf32>
    %137 = tpu.reciprocal %136 {approx = true} : vector<2x8x1xf32> -> vector<2x8x1xf32>
    %138 = vector.broadcast %137 : vector<2x8x1xf32> to vector<2x8x8xf32>
    %139 = arith.mulf %134, %138 : vector<2x8x8xf32>
    %140 = arith.truncf %139 : vector<2x8x8xf32> to vector<2x8x8xbf16>
    "tpu.trace_start"() <{level = 10 : i32, message = "bqk,bkd->bqd"}> : () -> ()
    %cst_123 = arith.constant dense<0.000000e+00> : vector<2x8x32xf32>
    %141 = tpu.matmul %140, %128, %cst_123 {dimension_numbers = #tpu.dot_dimension_numbers<[2], [1], [1], [2], [0, 0, 0, 1, 1, 2], [0], [0]>} : vector<2x8x8xbf16>, vector<2x8x32xbf16>, vector<2x8x32xf32> -> vector<2x8x32xf32>
    "tpu.trace_stop"() : () -> ()
    %142 = vector.shape_cast %141 : vector<2x8x32xf32> to vector<16x32xf32>
    %143 = arith.truncf %142 : vector<16x32xf32> to vector<16x32xbf16>
    %c0_124 = arith.constant 0 : index
    %c2_125 = arith.constant 2 : index
    %c0_126 = arith.constant 0 : index
    %c0_127 = arith.constant 0 : index
    %144 = vector.load %arg4[%c0_124, %c2_125, %c0_126, %c0_127] : memref<2x4x32x128xbf16, #tpu.memory_space<vmem>>, vector<1x1x32x128xbf16>
    %145 = vector.shape_cast %144 : vector<1x1x32x128xbf16> to vector<32x128xbf16>
    %cst_128 = arith.constant dense<0.000000e+00> : vector<16x128xf32>
    %146 = tpu.matmul %143, %145, %cst_128 {dimension_numbers = #tpu.dot_dimension_numbers<[1], [0], [0], [1], [0, 0, 1, 1], [], []>} : vector<16x32xbf16>, vector<32x128xbf16>, vector<16x128xf32> -> vector<16x128xf32>
    %147 = arith.addf %99, %146 : vector<16x128xf32>
    %c0_129 = arith.constant 0 : index
    %c0_130 = arith.constant 0 : index
    %c3 = arith.constant 3 : index
    %c0_131 = arith.constant 0 : index
    %c0_132 = arith.constant 0 : index
    %148 = vector.load %arg2[%c0_129, %c0_130, %c3, %c0_131, %c0_132] : memref<2x3x4x128x32xbf16, #tpu.memory_space<vmem>>, vector<1x1x1x128x32xbf16>
    %149 = vector.shape_cast %148 : vector<1x1x1x128x32xbf16> to vector<128x32xbf16>
    %cst_133 = arith.constant dense<0.000000e+00> : vector<16x32xf32>
    %150 = tpu.matmul %2, %149, %cst_133 {dimension_numbers = #tpu.dot_dimension_numbers<[1], [0], [0], [1], [0, 0, 1, 1], [], []>} : vector<16x128xbf16>, vector<128x32xbf16>, vector<16x32xf32> -> vector<16x32xf32>
    %c0_134 = arith.constant 0 : index
    %c0_135 = arith.constant 0 : index
    %c3_136 = arith.constant 3 : index
    %c0_137 = arith.constant 0 : index
    %c0_138 = arith.constant 0 : index
    %151 = vector.load %arg3[%c0_134, %c0_135, %c3_136, %c0_137, %c0_138] : memref<2x3x4x1x32xf32, #tpu.memory_space<vmem>>, vector<1x1x1x1x32xf32>
    %152 = vector.shape_cast %151 : vector<1x1x1x1x32xf32> to vector<1x32xf32>
    %153 = vector.broadcast %152 : vector<1x32xf32> to vector<16x32xf32>
    %154 = arith.addf %150, %153 : vector<16x32xf32>
    %c0_139 = arith.constant 0 : index
    %c1_140 = arith.constant 1 : index
    %c3_141 = arith.constant 3 : index
    %c0_142 = arith.constant 0 : index
    %c0_143 = arith.constant 0 : index
    %155 = vector.load %arg2[%c0_139, %c1_140, %c3_141, %c0_142, %c0_143] : memref<2x3x4x128x32xbf16, #tpu.memory_space<vmem>>, vector<1x1x1x128x32xbf16>
    %156 = vector.shape_cast %155 : vector<1x1x1x128x32xbf16> to vector<128x32xbf16>
    %cst_144 = arith.constant dense<0.000000e+00> : vector<16x32xf32>
    %157 = tpu.matmul %2, %156, %cst_144 {dimension_numbers = #tpu.dot_dimension_numbers<[1], [0], [0], [1], [0, 0, 1, 1], [], []>} : vector<16x128xbf16>, vector<128x32xbf16>, vector<16x32xf32> -> vector<16x32xf32>
    %c0_145 = arith.constant 0 : index
    %c1_146 = arith.constant 1 : index
    %c3_147 = arith.constant 3 : index
    %c0_148 = arith.constant 0 : index
    %c0_149 = arith.constant 0 : index
    %158 = vector.load %arg3[%c0_145, %c1_146, %c3_147, %c0_148, %c0_149] : memref<2x3x4x1x32xf32, #tpu.memory_space<vmem>>, vector<1x1x1x1x32xf32>
    %159 = vector.shape_cast %158 : vector<1x1x1x1x32xf32> to vector<1x32xf32>
    %160 = vector.broadcast %159 : vector<1x32xf32> to vector<16x32xf32>
    %161 = arith.addf %157, %160 : vector<16x32xf32>
    %c0_150 = arith.constant 0 : index
    %c2_151 = arith.constant 2 : index
    %c3_152 = arith.constant 3 : index
    %c0_153 = arith.constant 0 : index
    %c0_154 = arith.constant 0 : index
    %162 = vector.load %arg2[%c0_150, %c2_151, %c3_152, %c0_153, %c0_154] : memref<2x3x4x128x32xbf16, #tpu.memory_space<vmem>>, vector<1x1x1x128x32xbf16>
    %163 = vector.shape_cast %162 : vector<1x1x1x128x32xbf16> to vector<128x32xbf16>
    %cst_155 = arith.constant dense<0.000000e+00> : vector<16x32xf32>
    %164 = tpu.matmul %2, %163, %cst_155 {dimension_numbers = #tpu.dot_dimension_numbers<[1], [0], [0], [1], [0, 0, 1, 1], [], []>} : vector<16x128xbf16>, vector<128x32xbf16>, vector<16x32xf32> -> vector<16x32xf32>
    %c0_156 = arith.constant 0 : index
    %c2_157 = arith.constant 2 : index
    %c3_158 = arith.constant 3 : index
    %c0_159 = arith.constant 0 : index
    %c0_160 = arith.constant 0 : index
    %165 = vector.load %arg3[%c0_156, %c2_157, %c3_158, %c0_159, %c0_160] : memref<2x3x4x1x32xf32, #tpu.memory_space<vmem>>, vector<1x1x1x1x32xf32>
    %166 = vector.shape_cast %165 : vector<1x1x1x1x32xf32> to vector<1x32xf32>
    %167 = vector.broadcast %166 : vector<1x32xf32> to vector<16x32xf32>
    %168 = arith.addf %164, %167 : vector<16x32xf32>
    %cst_161 = arith.constant 0.176776692 : f32
    %169 = vector.broadcast %cst_161 : f32 to vector<16x32xf32>
    %170 = arith.mulf %154, %169 : vector<16x32xf32>
    %171 = arith.truncf %170 : vector<16x32xf32> to vector<16x32xbf16>
    %172 = vector.shape_cast %171 : vector<16x32xbf16> to vector<2x8x32xbf16>
    %173 = arith.truncf %161 : vector<16x32xf32> to vector<16x32xbf16>
    %174 = vector.shape_cast %173 : vector<16x32xbf16> to vector<2x8x32xbf16>
    %175 = arith.truncf %168 : vector<16x32xf32> to vector<16x32xbf16>
    %176 = vector.shape_cast %175 : vector<16x32xbf16> to vector<2x8x32xbf16>
    "tpu.trace_start"() <{level = 10 : i32, message = "bqd,bkd->bqk"}> : () -> ()
    %cst_162 = arith.constant dense<0.000000e+00> : vector<2x8x8xf32>
    %177 = tpu.matmul %172, %174, %cst_162 {dimension_numbers = #tpu.dot_dimension_numbers<[2], [2], [1], [1], [0, 0, 0, 1, 1, 1], [0], [0]>} : vector<2x8x32xbf16>, vector<2x8x32xbf16>, vector<2x8x8xf32> -> vector<2x8x8xf32>
    "tpu.trace_stop"() : () -> ()
    %cst_163 = arith.constant dense<0xFF800000> : vector<2x8xf32>
    %178 = vector.multi_reduction <maximumf>, %177, %cst_163 [2] : vector<2x8x8xf32> to vector<2x8xf32>
    %179 = vector.shape_cast %178 : vector<2x8xf32> to vector<2x8x1xf32>
    %180 = vector.broadcast %179 : vector<2x8x1xf32> to vector<2x8x8xf32>
    %181 = arith.subf %177, %180 : vector<2x8x8xf32>
    %182 = math.exp %181 : vector<2x8x8xf32>
    %cst_164 = arith.constant dense<0.000000e+00> : vector<2x8xf32>
    %183 = vector.multi_reduction <add>, %182, %cst_164 [2] : vector<2x8x8xf32> to vector<2x8xf32>
    %184 = vector.shape_cast %183 : vector<2x8xf32> to vector<2x8x1xf32>
    %185 = tpu.reciprocal %184 {approx = true} : vector<2x8x1xf32> -> vector<2x8x1xf32>
    %186 = vector.broadcast %185 : vector<2x8x1xf32> to vector<2x8x8xf32>
    %187 = arith.mulf %182, %186 : vector<2x8x8xf32>
    %188 = arith.truncf %187 : vector<2x8x8xf32> to vector<2x8x8xbf16>
    "tpu.trace_start"() <{level = 10 : i32, message = "bqk,bkd->bqd"}> : () -> ()
    %cst_165 = arith.constant dense<0.000000e+00> : vector<2x8x32xf32>
    %189 = tpu.matmul %188, %176, %cst_165 {dimension_numbers = #tpu.dot_dimension_numbers<[2], [1], [1], [2], [0, 0, 0, 1, 1, 2], [0], [0]>} : vector<2x8x8xbf16>, vector<2x8x32xbf16>, vector<2x8x32xf32> -> vector<2x8x32xf32>
    "tpu.trace_stop"() : () -> ()
    %190 = vector.shape_cast %189 : vector<2x8x32xf32> to vector<16x32xf32>
    %191 = arith.truncf %190 : vector<16x32xf32> to vector<16x32xbf16>
    %c0_166 = arith.constant 0 : index
    %c3_167 = arith.constant 3 : index
    %c0_168 = arith.constant 0 : index
    %c0_169 = arith.constant 0 : index
    %192 = vector.load %arg4[%c0_166, %c3_167, %c0_168, %c0_169] : memref<2x4x32x128xbf16, #tpu.memory_space<vmem>>, vector<1x1x32x128xbf16>
    %193 = vector.shape_cast %192 : vector<1x1x32x128xbf16> to vector<32x128xbf16>
    %cst_170 = arith.constant dense<0.000000e+00> : vector<16x128xf32>
    %194 = tpu.matmul %191, %193, %cst_170 {dimension_numbers = #tpu.dot_dimension_numbers<[1], [0], [0], [1], [0, 0, 1, 1], [], []>} : vector<16x32xbf16>, vector<32x128xbf16>, vector<16x128xf32> -> vector<16x128xf32>
    %195 = arith.addf %147, %194 : vector<16x128xf32>
    %c0_171 = arith.constant 0 : index
    %c0_172 = arith.constant 0 : index
    %c0_173 = arith.constant 0 : index
    %196 = vector.load %arg5[%c0_171, %c0_172, %c0_173] : memref<2x1x128xf32, #tpu.memory_space<vmem>>, vector<1x1x128xf32>
    %197 = vector.shape_cast %196 : vector<1x1x128xf32> to vector<1x128xf32>
    %198 = vector.broadcast %197 : vector<1x128xf32> to vector<16x128xf32>
    %199 = arith.addf %195, %198 : vector<16x128xf32>
    %200 = arith.addf %1, %199 : vector<16x128xf32>
    %c0_174 = arith.constant 0 : index
    %c0_175 = arith.constant 0 : index
    %c0_176 = arith.constant 0 : index
    %201 = vector.load %arg6[%c0_174, %c0_175, %c0_176] : memref<2x1x128xf32, #tpu.memory_space<vmem>>, vector<1x1x128xf32>
    %202 = vector.shape_cast %201 : vector<1x1x128xf32> to vector<1x128xf32>
    %c0_177 = arith.constant 0 : index
    %c0_178 = arith.constant 0 : index
    %c0_179 = arith.constant 0 : index
    %203 = vector.load %arg7[%c0_177, %c0_178, %c0_179] : memref<2x1x128xf32, #tpu.memory_space<vmem>>, vector<1x1x128xf32>
    %204 = vector.shape_cast %203 : vector<1x1x128xf32> to vector<1x128xf32>
    %cst_180 = arith.constant dense<0.000000e+00> : vector<16xf32>
    %205 = vector.multi_reduction <add>, %200, %cst_180 [1] : vector<16x128xf32> to vector<16xf32>
    %206 = vector.shape_cast %205 : vector<16xf32> to vector<16x1xf32>
    %cst_181 = arith.constant 1.280000e+02 : f32
    %207 = vector.broadcast %cst_181 : f32 to vector<16x1xf32>
    %208 = arith.divf %206, %207 : vector<16x1xf32>
    %209 = vector.broadcast %208 : vector<16x1xf32> to vector<16x128xf32>
    %210 = arith.subf %200, %209 : vector<16x128xf32>
    %211 = arith.mulf %210, %210 : vector<16x128xf32>
    %cst_182 = arith.constant dense<0.000000e+00> : vector<16xf32>
    %212 = vector.multi_reduction <add>, %211, %cst_182 [1] : vector<16x128xf32> to vector<16xf32>
    %213 = vector.shape_cast %212 : vector<16xf32> to vector<16x1xf32>
    %cst_183 = arith.constant 1.280000e+02 : f32
    %214 = vector.broadcast %cst_183 : f32 to vector<16x1xf32>
    %215 = arith.divf %213, %214 : vector<16x1xf32>
    %216 = vector.broadcast %208 : vector<16x1xf32> to vector<16x128xf32>
    %217 = arith.subf %200, %216 : vector<16x128xf32>
    %cst_184 = arith.constant 9.99999974E-6 : f32
    %218 = vector.broadcast %cst_184 : f32 to vector<16x1xf32>
    %219 = arith.addf %215, %218 : vector<16x1xf32>
    %220 = math.rsqrt %219 : vector<16x1xf32>
    %221 = vector.broadcast %220 : vector<16x1xf32> to vector<16x128xf32>
    %222 = arith.mulf %217, %221 : vector<16x128xf32>
    %223 = vector.broadcast %202 : vector<1x128xf32> to vector<16x128xf32>
    %224 = arith.mulf %222, %223 : vector<16x128xf32>
    %225 = vector.broadcast %204 : vector<1x128xf32> to vector<16x128xf32>
    %226 = arith.addf %224, %225 : vector<16x128xf32>
    %227 = arith.truncf %226 : vector<16x128xf32> to vector<16x128xbf16>
    %c0_185 = arith.constant 0 : index
    %c0_186 = arith.constant 0 : index
    %c0_187 = arith.constant 0 : index
    %228 = vector.load %arg8[%c0_185, %c0_186, %c0_187] : memref<2x128x256xbf16, #tpu.memory_space<vmem>>, vector<1x128x256xbf16>
    %229 = vector.shape_cast %228 : vector<1x128x256xbf16> to vector<128x256xbf16>
    %cst_188 = arith.constant dense<0.000000e+00> : vector<16x256xf32>
    %230 = tpu.matmul %227, %229, %cst_188 {dimension_numbers = #tpu.dot_dimension_numbers<[1], [0], [0], [1], [0, 0, 1, 1], [], []>} : vector<16x128xbf16>, vector<128x256xbf16>, vector<16x256xf32> -> vector<16x256xf32>
    %c0_189 = arith.constant 0 : index
    %c0_190 = arith.constant 0 : index
    %c0_191 = arith.constant 0 : index
    %231 = vector.load %arg9[%c0_189, %c0_190, %c0_191] : memref<2x1x256xf32, #tpu.memory_space<vmem>>, vector<1x1x256xf32>
    %232 = vector.shape_cast %231 : vector<1x1x256xf32> to vector<1x256xf32>
    %233 = vector.broadcast %232 : vector<1x256xf32> to vector<16x256xf32>
    %234 = arith.addf %230, %233 : vector<16x256xf32>
    %cst_192 = arith.constant 0.000000e+00 : f32
    %235 = vector.broadcast %cst_192 : f32 to vector<16x256xf32>
    %236 = arith.maximumf %234, %235 : vector<16x256xf32>
    %237 = arith.truncf %236 : vector<16x256xf32> to vector<16x256xbf16>
    %c0_193 = arith.constant 0 : index
    %c0_194 = arith.constant 0 : index
    %c0_195 = arith.constant 0 : index
    %238 = vector.load %arg10[%c0_193, %c0_194, %c0_195] : memref<2x256x128xbf16, #tpu.memory_space<vmem>>, vector<1x256x128xbf16>
    %239 = vector.shape_cast %238 : vector<1x256x128xbf16> to vector<256x128xbf16>
    %cst_196 = arith.constant dense<0.000000e+00> : vector<16x128xf32>
    %240 = tpu.matmul %237, %239, %cst_196 {dimension_numbers = #tpu.dot_dimension_numbers<[1], [0], [0], [1], [0, 0, 1, 1], [], []>} : vector<16x256xbf16>, vector<256x128xbf16>, vector<16x128xf32> -> vector<16x128xf32>
    %c0_197 = arith.constant 0 : index
    %c0_198 = arith.constant 0 : index
    %c0_199 = arith.constant 0 : index
    %241 = vector.load %arg11[%c0_197, %c0_198, %c0_199] : memref<2x1x128xf32, #tpu.memory_space<vmem>>, vector<1x1x128xf32>
    %242 = vector.shape_cast %241 : vector<1x1x128xf32> to vector<1x128xf32>
    %243 = vector.broadcast %242 : vector<1x128xf32> to vector<16x128xf32>
    %244 = arith.addf %240, %243 : vector<16x128xf32>
    %245 = arith.addf %226, %244 : vector<16x128xf32>
    %c0_200 = arith.constant 0 : index
    %c0_201 = arith.constant 0 : index
    %c0_202 = arith.constant 0 : index
    %246 = vector.load %arg12[%c0_200, %c0_201, %c0_202] : memref<2x1x128xf32, #tpu.memory_space<vmem>>, vector<1x1x128xf32>
    %247 = vector.shape_cast %246 : vector<1x1x128xf32> to vector<1x128xf32>
    %c0_203 = arith.constant 0 : index
    %c0_204 = arith.constant 0 : index
    %c0_205 = arith.constant 0 : index
    %248 = vector.load %arg13[%c0_203, %c0_204, %c0_205] : memref<2x1x128xf32, #tpu.memory_space<vmem>>, vector<1x1x128xf32>
    %249 = vector.shape_cast %248 : vector<1x1x128xf32> to vector<1x128xf32>
    %cst_206 = arith.constant dense<0.000000e+00> : vector<16xf32>
    %250 = vector.multi_reduction <add>, %245, %cst_206 [1] : vector<16x128xf32> to vector<16xf32>
    %251 = vector.shape_cast %250 : vector<16xf32> to vector<16x1xf32>
    %cst_207 = arith.constant 1.280000e+02 : f32
    %252 = vector.broadcast %cst_207 : f32 to vector<16x1xf32>
    %253 = arith.divf %251, %252 : vector<16x1xf32>
    %254 = vector.broadcast %253 : vector<16x1xf32> to vector<16x128xf32>
    %255 = arith.subf %245, %254 : vector<16x128xf32>
    %256 = arith.mulf %255, %255 : vector<16x128xf32>
    %cst_208 = arith.constant dense<0.000000e+00> : vector<16xf32>
    %257 = vector.multi_reduction <add>, %256, %cst_208 [1] : vector<16x128xf32> to vector<16xf32>
    %258 = vector.shape_cast %257 : vector<16xf32> to vector<16x1xf32>
    %cst_209 = arith.constant 1.280000e+02 : f32
    %259 = vector.broadcast %cst_209 : f32 to vector<16x1xf32>
    %260 = arith.divf %258, %259 : vector<16x1xf32>
    %261 = vector.broadcast %253 : vector<16x1xf32> to vector<16x128xf32>
    %262 = arith.subf %245, %261 : vector<16x128xf32>
    %cst_210 = arith.constant 9.99999974E-6 : f32
    %263 = vector.broadcast %cst_210 : f32 to vector<16x1xf32>
    %264 = arith.addf %260, %263 : vector<16x1xf32>
    %265 = math.rsqrt %264 : vector<16x1xf32>
    %266 = vector.broadcast %265 : vector<16x1xf32> to vector<16x128xf32>
    %267 = arith.mulf %262, %266 : vector<16x128xf32>
    %268 = vector.broadcast %247 : vector<1x128xf32> to vector<16x128xf32>
    %269 = arith.mulf %267, %268 : vector<16x128xf32>
    %270 = vector.broadcast %249 : vector<1x128xf32> to vector<16x128xf32>
    %271 = arith.addf %269, %270 : vector<16x128xf32>
    %272 = arith.truncf %271 : vector<16x128xf32> to vector<16x128xbf16>
    %cst_211 = arith.constant 0.000000e+00 : f32
    %273 = vector.broadcast %cst_211 : f32 to vector<16x128xf32>
    %c1_212 = arith.constant 1 : index
    %c0_213 = arith.constant 0 : index
    %c0_214 = arith.constant 0 : index
    %c0_215 = arith.constant 0 : index
    %c0_216 = arith.constant 0 : index
    %274 = vector.load %arg2[%c1_212, %c0_213, %c0_214, %c0_215, %c0_216] : memref<2x3x4x128x32xbf16, #tpu.memory_space<vmem>>, vector<1x1x1x128x32xbf16>
    %275 = vector.shape_cast %274 : vector<1x1x1x128x32xbf16> to vector<128x32xbf16>
    %cst_217 = arith.constant dense<0.000000e+00> : vector<16x32xf32>
    %276 = tpu.matmul %272, %275, %cst_217 {dimension_numbers = #tpu.dot_dimension_numbers<[1], [0], [0], [1], [0, 0, 1, 1], [], []>} : vector<16x128xbf16>, vector<128x32xbf16>, vector<16x32xf32> -> vector<16x32xf32>
    %c1_218 = arith.constant 1 : index
    %c0_219 = arith.constant 0 : index
    %c0_220 = arith.constant 0 : index
    %c0_221 = arith.constant 0 : index
    %c0_222 = arith.constant 0 : index
    %277 = vector.load %arg3[%c1_218, %c0_219, %c0_220, %c0_221, %c0_222] : memref<2x3x4x1x32xf32, #tpu.memory_space<vmem>>, vector<1x1x1x1x32xf32>
    %278 = vector.shape_cast %277 : vector<1x1x1x1x32xf32> to vector<1x32xf32>
    %279 = vector.broadcast %278 : vector<1x32xf32> to vector<16x32xf32>
    %280 = arith.addf %276, %279 : vector<16x32xf32>
    %c1_223 = arith.constant 1 : index
    %c1_224 = arith.constant 1 : index
    %c0_225 = arith.constant 0 : index
    %c0_226 = arith.constant 0 : index
    %c0_227 = arith.constant 0 : index
    %281 = vector.load %arg2[%c1_223, %c1_224, %c0_225, %c0_226, %c0_227] : memref<2x3x4x128x32xbf16, #tpu.memory_space<vmem>>, vector<1x1x1x128x32xbf16>
    %282 = vector.shape_cast %281 : vector<1x1x1x128x32xbf16> to vector<128x32xbf16>
    %cst_228 = arith.constant dense<0.000000e+00> : vector<16x32xf32>
    %283 = tpu.matmul %272, %282, %cst_228 {dimension_numbers = #tpu.dot_dimension_numbers<[1], [0], [0], [1], [0, 0, 1, 1], [], []>} : vector<16x128xbf16>, vector<128x32xbf16>, vector<16x32xf32> -> vector<16x32xf32>
    %c1_229 = arith.constant 1 : index
    %c1_230 = arith.constant 1 : index
    %c0_231 = arith.constant 0 : index
    %c0_232 = arith.constant 0 : index
    %c0_233 = arith.constant 0 : index
    %284 = vector.load %arg3[%c1_229, %c1_230, %c0_231, %c0_232, %c0_233] : memref<2x3x4x1x32xf32, #tpu.memory_space<vmem>>, vector<1x1x1x1x32xf32>
    %285 = vector.shape_cast %284 : vector<1x1x1x1x32xf32> to vector<1x32xf32>
    %286 = vector.broadcast %285 : vector<1x32xf32> to vector<16x32xf32>
    %287 = arith.addf %283, %286 : vector<16x32xf32>
    %c1_234 = arith.constant 1 : index
    %c2_235 = arith.constant 2 : index
    %c0_236 = arith.constant 0 : index
    %c0_237 = arith.constant 0 : index
    %c0_238 = arith.constant 0 : index
    %288 = vector.load %arg2[%c1_234, %c2_235, %c0_236, %c0_237, %c0_238] : memref<2x3x4x128x32xbf16, #tpu.memory_space<vmem>>, vector<1x1x1x128x32xbf16>
    %289 = vector.shape_cast %288 : vector<1x1x1x128x32xbf16> to vector<128x32xbf16>
    %cst_239 = arith.constant dense<0.000000e+00> : vector<16x32xf32>
    %290 = tpu.matmul %272, %289, %cst_239 {dimension_numbers = #tpu.dot_dimension_numbers<[1], [0], [0], [1], [0, 0, 1, 1], [], []>} : vector<16x128xbf16>, vector<128x32xbf16>, vector<16x32xf32> -> vector<16x32xf32>
    %c1_240 = arith.constant 1 : index
    %c2_241 = arith.constant 2 : index
    %c0_242 = arith.constant 0 : index
    %c0_243 = arith.constant 0 : index
    %c0_244 = arith.constant 0 : index
    %291 = vector.load %arg3[%c1_240, %c2_241, %c0_242, %c0_243, %c0_244] : memref<2x3x4x1x32xf32, #tpu.memory_space<vmem>>, vector<1x1x1x1x32xf32>
    %292 = vector.shape_cast %291 : vector<1x1x1x1x32xf32> to vector<1x32xf32>
    %293 = vector.broadcast %292 : vector<1x32xf32> to vector<16x32xf32>
    %294 = arith.addf %290, %293 : vector<16x32xf32>
    %cst_245 = arith.constant 0.176776692 : f32
    %295 = vector.broadcast %cst_245 : f32 to vector<16x32xf32>
    %296 = arith.mulf %280, %295 : vector<16x32xf32>
    %297 = arith.truncf %296 : vector<16x32xf32> to vector<16x32xbf16>
    %298 = vector.shape_cast %297 : vector<16x32xbf16> to vector<2x8x32xbf16>
    %299 = arith.truncf %287 : vector<16x32xf32> to vector<16x32xbf16>
    %300 = vector.shape_cast %299 : vector<16x32xbf16> to vector<2x8x32xbf16>
    %301 = arith.truncf %294 : vector<16x32xf32> to vector<16x32xbf16>
    %302 = vector.shape_cast %301 : vector<16x32xbf16> to vector<2x8x32xbf16>
    "tpu.trace_start"() <{level = 10 : i32, message = "bqd,bkd->bqk"}> : () -> ()
    %cst_246 = arith.constant dense<0.000000e+00> : vector<2x8x8xf32>
    %303 = tpu.matmul %298, %300, %cst_246 {dimension_numbers = #tpu.dot_dimension_numbers<[2], [2], [1], [1], [0, 0, 0, 1, 1, 1], [0], [0]>} : vector<2x8x32xbf16>, vector<2x8x32xbf16>, vector<2x8x8xf32> -> vector<2x8x8xf32>
    "tpu.trace_stop"() : () -> ()
    %cst_247 = arith.constant dense<0xFF800000> : vector<2x8xf32>
    %304 = vector.multi_reduction <maximumf>, %303, %cst_247 [2] : vector<2x8x8xf32> to vector<2x8xf32>
    %305 = vector.shape_cast %304 : vector<2x8xf32> to vector<2x8x1xf32>
    %306 = vector.broadcast %305 : vector<2x8x1xf32> to vector<2x8x8xf32>
    %307 = arith.subf %303, %306 : vector<2x8x8xf32>
    %308 = math.exp %307 : vector<2x8x8xf32>
    %cst_248 = arith.constant dense<0.000000e+00> : vector<2x8xf32>
    %309 = vector.multi_reduction <add>, %308, %cst_248 [2] : vector<2x8x8xf32> to vector<2x8xf32>
    %310 = vector.shape_cast %309 : vector<2x8xf32> to vector<2x8x1xf32>
    %311 = tpu.reciprocal %310 {approx = true} : vector<2x8x1xf32> -> vector<2x8x1xf32>
    %312 = vector.broadcast %311 : vector<2x8x1xf32> to vector<2x8x8xf32>
    %313 = arith.mulf %308, %312 : vector<2x8x8xf32>
    %314 = arith.truncf %313 : vector<2x8x8xf32> to vector<2x8x8xbf16>
    "tpu.trace_start"() <{level = 10 : i32, message = "bqk,bkd->bqd"}> : () -> ()
    %cst_249 = arith.constant dense<0.000000e+00> : vector<2x8x32xf32>
    %315 = tpu.matmul %314, %302, %cst_249 {dimension_numbers = #tpu.dot_dimension_numbers<[2], [1], [1], [2], [0, 0, 0, 1, 1, 2], [0], [0]>} : vector<2x8x8xbf16>, vector<2x8x32xbf16>, vector<2x8x32xf32> -> vector<2x8x32xf32>
    "tpu.trace_stop"() : () -> ()
    %316 = vector.shape_cast %315 : vector<2x8x32xf32> to vector<16x32xf32>
    %317 = arith.truncf %316 : vector<16x32xf32> to vector<16x32xbf16>
    %c1_250 = arith.constant 1 : index
    %c0_251 = arith.constant 0 : index
    %c0_252 = arith.constant 0 : index
    %c0_253 = arith.constant 0 : index
    %318 = vector.load %arg4[%c1_250, %c0_251, %c0_252, %c0_253] : memref<2x4x32x128xbf16, #tpu.memory_space<vmem>>, vector<1x1x32x128xbf16>
    %319 = vector.shape_cast %318 : vector<1x1x32x128xbf16> to vector<32x128xbf16>
    %cst_254 = arith.constant dense<0.000000e+00> : vector<16x128xf32>
    %320 = tpu.matmul %317, %319, %cst_254 {dimension_numbers = #tpu.dot_dimension_numbers<[1], [0], [0], [1], [0, 0, 1, 1], [], []>} : vector<16x32xbf16>, vector<32x128xbf16>, vector<16x128xf32> -> vector<16x128xf32>
    %321 = arith.addf %273, %320 : vector<16x128xf32>
    %c1_255 = arith.constant 1 : index
    %c0_256 = arith.constant 0 : index
    %c1_257 = arith.constant 1 : index
    %c0_258 = arith.constant 0 : index
    %c0_259 = arith.constant 0 : index
    %322 = vector.load %arg2[%c1_255, %c0_256, %c1_257, %c0_258, %c0_259] : memref<2x3x4x128x32xbf16, #tpu.memory_space<vmem>>, vector<1x1x1x128x32xbf16>
    %323 = vector.shape_cast %322 : vector<1x1x1x128x32xbf16> to vector<128x32xbf16>
    %cst_260 = arith.constant dense<0.000000e+00> : vector<16x32xf32>
    %324 = tpu.matmul %272, %323, %cst_260 {dimension_numbers = #tpu.dot_dimension_numbers<[1], [0], [0], [1], [0, 0, 1, 1], [], []>} : vector<16x128xbf16>, vector<128x32xbf16>, vector<16x32xf32> -> vector<16x32xf32>
    %c1_261 = arith.constant 1 : index
    %c0_262 = arith.constant 0 : index
    %c1_263 = arith.constant 1 : index
    %c0_264 = arith.constant 0 : index
    %c0_265 = arith.constant 0 : index
    %325 = vector.load %arg3[%c1_261, %c0_262, %c1_263, %c0_264, %c0_265] : memref<2x3x4x1x32xf32, #tpu.memory_space<vmem>>, vector<1x1x1x1x32xf32>
    %326 = vector.shape_cast %325 : vector<1x1x1x1x32xf32> to vector<1x32xf32>
    %327 = vector.broadcast %326 : vector<1x32xf32> to vector<16x32xf32>
    %328 = arith.addf %324, %327 : vector<16x32xf32>
    %c1_266 = arith.constant 1 : index
    %c1_267 = arith.constant 1 : index
    %c1_268 = arith.constant 1 : index
    %c0_269 = arith.constant 0 : index
    %c0_270 = arith.constant 0 : index
    %329 = vector.load %arg2[%c1_266, %c1_267, %c1_268, %c0_269, %c0_270] : memref<2x3x4x128x32xbf16, #tpu.memory_space<vmem>>, vector<1x1x1x128x32xbf16>
    %330 = vector.shape_cast %329 : vector<1x1x1x128x32xbf16> to vector<128x32xbf16>
    %cst_271 = arith.constant dense<0.000000e+00> : vector<16x32xf32>
    %331 = tpu.matmul %272, %330, %cst_271 {dimension_numbers = #tpu.dot_dimension_numbers<[1], [0], [0], [1], [0, 0, 1, 1], [], []>} : vector<16x128xbf16>, vector<128x32xbf16>, vector<16x32xf32> -> vector<16x32xf32>
    %c1_272 = arith.constant 1 : index
    %c1_273 = arith.constant 1 : index
    %c1_274 = arith.constant 1 : index
    %c0_275 = arith.constant 0 : index
    %c0_276 = arith.constant 0 : index
    %332 = vector.load %arg3[%c1_272, %c1_273, %c1_274, %c0_275, %c0_276] : memref<2x3x4x1x32xf32, #tpu.memory_space<vmem>>, vector<1x1x1x1x32xf32>
    %333 = vector.shape_cast %332 : vector<1x1x1x1x32xf32> to vector<1x32xf32>
    %334 = vector.broadcast %333 : vector<1x32xf32> to vector<16x32xf32>
    %335 = arith.addf %331, %334 : vector<16x32xf32>
    %c1_277 = arith.constant 1 : index
    %c2_278 = arith.constant 2 : index
    %c1_279 = arith.constant 1 : index
    %c0_280 = arith.constant 0 : index
    %c0_281 = arith.constant 0 : index
    %336 = vector.load %arg2[%c1_277, %c2_278, %c1_279, %c0_280, %c0_281] : memref<2x3x4x128x32xbf16, #tpu.memory_space<vmem>>, vector<1x1x1x128x32xbf16>
    %337 = vector.shape_cast %336 : vector<1x1x1x128x32xbf16> to vector<128x32xbf16>
    %cst_282 = arith.constant dense<0.000000e+00> : vector<16x32xf32>
    %338 = tpu.matmul %272, %337, %cst_282 {dimension_numbers = #tpu.dot_dimension_numbers<[1], [0], [0], [1], [0, 0, 1, 1], [], []>} : vector<16x128xbf16>, vector<128x32xbf16>, vector<16x32xf32> -> vector<16x32xf32>
    %c1_283 = arith.constant 1 : index
    %c2_284 = arith.constant 2 : index
    %c1_285 = arith.constant 1 : index
    %c0_286 = arith.constant 0 : index
    %c0_287 = arith.constant 0 : index
    %339 = vector.load %arg3[%c1_283, %c2_284, %c1_285, %c0_286, %c0_287] : memref<2x3x4x1x32xf32, #tpu.memory_space<vmem>>, vector<1x1x1x1x32xf32>
    %340 = vector.shape_cast %339 : vector<1x1x1x1x32xf32> to vector<1x32xf32>
    %341 = vector.broadcast %340 : vector<1x32xf32> to vector<16x32xf32>
    %342 = arith.addf %338, %341 : vector<16x32xf32>
    %cst_288 = arith.constant 0.176776692 : f32
    %343 = vector.broadcast %cst_288 : f32 to vector<16x32xf32>
    %344 = arith.mulf %328, %343 : vector<16x32xf32>
    %345 = arith.truncf %344 : vector<16x32xf32> to vector<16x32xbf16>
    %346 = vector.shape_cast %345 : vector<16x32xbf16> to vector<2x8x32xbf16>
    %347 = arith.truncf %335 : vector<16x32xf32> to vector<16x32xbf16>
    %348 = vector.shape_cast %347 : vector<16x32xbf16> to vector<2x8x32xbf16>
    %349 = arith.truncf %342 : vector<16x32xf32> to vector<16x32xbf16>
    %350 = vector.shape_cast %349 : vector<16x32xbf16> to vector<2x8x32xbf16>
    "tpu.trace_start"() <{level = 10 : i32, message = "bqd,bkd->bqk"}> : () -> ()
    %cst_289 = arith.constant dense<0.000000e+00> : vector<2x8x8xf32>
    %351 = tpu.matmul %346, %348, %cst_289 {dimension_numbers = #tpu.dot_dimension_numbers<[2], [2], [1], [1], [0, 0, 0, 1, 1, 1], [0], [0]>} : vector<2x8x32xbf16>, vector<2x8x32xbf16>, vector<2x8x8xf32> -> vector<2x8x8xf32>
    "tpu.trace_stop"() : () -> ()
    %cst_290 = arith.constant dense<0xFF800000> : vector<2x8xf32>
    %352 = vector.multi_reduction <maximumf>, %351, %cst_290 [2] : vector<2x8x8xf32> to vector<2x8xf32>
    %353 = vector.shape_cast %352 : vector<2x8xf32> to vector<2x8x1xf32>
    %354 = vector.broadcast %353 : vector<2x8x1xf32> to vector<2x8x8xf32>
    %355 = arith.subf %351, %354 : vector<2x8x8xf32>
    %356 = math.exp %355 : vector<2x8x8xf32>
    %cst_291 = arith.constant dense<0.000000e+00> : vector<2x8xf32>
    %357 = vector.multi_reduction <add>, %356, %cst_291 [2] : vector<2x8x8xf32> to vector<2x8xf32>
    %358 = vector.shape_cast %357 : vector<2x8xf32> to vector<2x8x1xf32>
    %359 = tpu.reciprocal %358 {approx = true} : vector<2x8x1xf32> -> vector<2x8x1xf32>
    %360 = vector.broadcast %359 : vector<2x8x1xf32> to vector<2x8x8xf32>
    %361 = arith.mulf %356, %360 : vector<2x8x8xf32>
    %362 = arith.truncf %361 : vector<2x8x8xf32> to vector<2x8x8xbf16>
    "tpu.trace_start"() <{level = 10 : i32, message = "bqk,bkd->bqd"}> : () -> ()
    %cst_292 = arith.constant dense<0.000000e+00> : vector<2x8x32xf32>
    %363 = tpu.matmul %362, %350, %cst_292 {dimension_numbers = #tpu.dot_dimension_numbers<[2], [1], [1], [2], [0, 0, 0, 1, 1, 2], [0], [0]>} : vector<2x8x8xbf16>, vector<2x8x32xbf16>, vector<2x8x32xf32> -> vector<2x8x32xf32>
    "tpu.trace_stop"() : () -> ()
    %364 = vector.shape_cast %363 : vector<2x8x32xf32> to vector<16x32xf32>
    %365 = arith.truncf %364 : vector<16x32xf32> to vector<16x32xbf16>
    %c1_293 = arith.constant 1 : index
    %c1_294 = arith.constant 1 : index
    %c0_295 = arith.constant 0 : index
    %c0_296 = arith.constant 0 : index
    %366 = vector.load %arg4[%c1_293, %c1_294, %c0_295, %c0_296] : memref<2x4x32x128xbf16, #tpu.memory_space<vmem>>, vector<1x1x32x128xbf16>
    %367 = vector.shape_cast %366 : vector<1x1x32x128xbf16> to vector<32x128xbf16>
    %cst_297 = arith.constant dense<0.000000e+00> : vector<16x128xf32>
    %368 = tpu.matmul %365, %367, %cst_297 {dimension_numbers = #tpu.dot_dimension_numbers<[1], [0], [0], [1], [0, 0, 1, 1], [], []>} : vector<16x32xbf16>, vector<32x128xbf16>, vector<16x128xf32> -> vector<16x128xf32>
    %369 = arith.addf %321, %368 : vector<16x128xf32>
    %c1_298 = arith.constant 1 : index
    %c0_299 = arith.constant 0 : index
    %c2_300 = arith.constant 2 : index
    %c0_301 = arith.constant 0 : index
    %c0_302 = arith.constant 0 : index
    %370 = vector.load %arg2[%c1_298, %c0_299, %c2_300, %c0_301, %c0_302] : memref<2x3x4x128x32xbf16, #tpu.memory_space<vmem>>, vector<1x1x1x128x32xbf16>
    %371 = vector.shape_cast %370 : vector<1x1x1x128x32xbf16> to vector<128x32xbf16>
    %cst_303 = arith.constant dense<0.000000e+00> : vector<16x32xf32>
    %372 = tpu.matmul %272, %371, %cst_303 {dimension_numbers = #tpu.dot_dimension_numbers<[1], [0], [0], [1], [0, 0, 1, 1], [], []>} : vector<16x128xbf16>, vector<128x32xbf16>, vector<16x32xf32> -> vector<16x32xf32>
    %c1_304 = arith.constant 1 : index
    %c0_305 = arith.constant 0 : index
    %c2_306 = arith.constant 2 : index
    %c0_307 = arith.constant 0 : index
    %c0_308 = arith.constant 0 : index
    %373 = vector.load %arg3[%c1_304, %c0_305, %c2_306, %c0_307, %c0_308] : memref<2x3x4x1x32xf32, #tpu.memory_space<vmem>>, vector<1x1x1x1x32xf32>
    %374 = vector.shape_cast %373 : vector<1x1x1x1x32xf32> to vector<1x32xf32>
    %375 = vector.broadcast %374 : vector<1x32xf32> to vector<16x32xf32>
    %376 = arith.addf %372, %375 : vector<16x32xf32>
    %c1_309 = arith.constant 1 : index
    %c1_310 = arith.constant 1 : index
    %c2_311 = arith.constant 2 : index
    %c0_312 = arith.constant 0 : index
    %c0_313 = arith.constant 0 : index
    %377 = vector.load %arg2[%c1_309, %c1_310, %c2_311, %c0_312, %c0_313] : memref<2x3x4x128x32xbf16, #tpu.memory_space<vmem>>, vector<1x1x1x128x32xbf16>
    %378 = vector.shape_cast %377 : vector<1x1x1x128x32xbf16> to vector<128x32xbf16>
    %cst_314 = arith.constant dense<0.000000e+00> : vector<16x32xf32>
    %379 = tpu.matmul %272, %378, %cst_314 {dimension_numbers = #tpu.dot_dimension_numbers<[1], [0], [0], [1], [0, 0, 1, 1], [], []>} : vector<16x128xbf16>, vector<128x32xbf16>, vector<16x32xf32> -> vector<16x32xf32>
    %c1_315 = arith.constant 1 : index
    %c1_316 = arith.constant 1 : index
    %c2_317 = arith.constant 2 : index
    %c0_318 = arith.constant 0 : index
    %c0_319 = arith.constant 0 : index
    %380 = vector.load %arg3[%c1_315, %c1_316, %c2_317, %c0_318, %c0_319] : memref<2x3x4x1x32xf32, #tpu.memory_space<vmem>>, vector<1x1x1x1x32xf32>
    %381 = vector.shape_cast %380 : vector<1x1x1x1x32xf32> to vector<1x32xf32>
    %382 = vector.broadcast %381 : vector<1x32xf32> to vector<16x32xf32>
    %383 = arith.addf %379, %382 : vector<16x32xf32>
    %c1_320 = arith.constant 1 : index
    %c2_321 = arith.constant 2 : index
    %c2_322 = arith.constant 2 : index
    %c0_323 = arith.constant 0 : index
    %c0_324 = arith.constant 0 : index
    %384 = vector.load %arg2[%c1_320, %c2_321, %c2_322, %c0_323, %c0_324] : memref<2x3x4x128x32xbf16, #tpu.memory_space<vmem>>, vector<1x1x1x128x32xbf16>
    %385 = vector.shape_cast %384 : vector<1x1x1x128x32xbf16> to vector<128x32xbf16>
    %cst_325 = arith.constant dense<0.000000e+00> : vector<16x32xf32>
    %386 = tpu.matmul %272, %385, %cst_325 {dimension_numbers = #tpu.dot_dimension_numbers<[1], [0], [0], [1], [0, 0, 1, 1], [], []>} : vector<16x128xbf16>, vector<128x32xbf16>, vector<16x32xf32> -> vector<16x32xf32>
    %c1_326 = arith.constant 1 : index
    %c2_327 = arith.constant 2 : index
    %c2_328 = arith.constant 2 : index
    %c0_329 = arith.constant 0 : index
    %c0_330 = arith.constant 0 : index
    %387 = vector.load %arg3[%c1_326, %c2_327, %c2_328, %c0_329, %c0_330] : memref<2x3x4x1x32xf32, #tpu.memory_space<vmem>>, vector<1x1x1x1x32xf32>
    %388 = vector.shape_cast %387 : vector<1x1x1x1x32xf32> to vector<1x32xf32>
    %389 = vector.broadcast %388 : vector<1x32xf32> to vector<16x32xf32>
    %390 = arith.addf %386, %389 : vector<16x32xf32>
    %cst_331 = arith.constant 0.176776692 : f32
    %391 = vector.broadcast %cst_331 : f32 to vector<16x32xf32>
    %392 = arith.mulf %376, %391 : vector<16x32xf32>
    %393 = arith.truncf %392 : vector<16x32xf32> to vector<16x32xbf16>
    %394 = vector.shape_cast %393 : vector<16x32xbf16> to vector<2x8x32xbf16>
    %395 = arith.truncf %383 : vector<16x32xf32> to vector<16x32xbf16>
    %396 = vector.shape_cast %395 : vector<16x32xbf16> to vector<2x8x32xbf16>
    %397 = arith.truncf %390 : vector<16x32xf32> to vector<16x32xbf16>
    %398 = vector.shape_cast %397 : vector<16x32xbf16> to vector<2x8x32xbf16>
    "tpu.trace_start"() <{level = 10 : i32, message = "bqd,bkd->bqk"}> : () -> ()
    %cst_332 = arith.constant dense<0.000000e+00> : vector<2x8x8xf32>
    %399 = tpu.matmul %394, %396, %cst_332 {dimension_numbers = #tpu.dot_dimension_numbers<[2], [2], [1], [1], [0, 0, 0, 1, 1, 1], [0], [0]>} : vector<2x8x32xbf16>, vector<2x8x32xbf16>, vector<2x8x8xf32> -> vector<2x8x8xf32>
    "tpu.trace_stop"() : () -> ()
    %cst_333 = arith.constant dense<0xFF800000> : vector<2x8xf32>
    %400 = vector.multi_reduction <maximumf>, %399, %cst_333 [2] : vector<2x8x8xf32> to vector<2x8xf32>
    %401 = vector.shape_cast %400 : vector<2x8xf32> to vector<2x8x1xf32>
    %402 = vector.broadcast %401 : vector<2x8x1xf32> to vector<2x8x8xf32>
    %403 = arith.subf %399, %402 : vector<2x8x8xf32>
    %404 = math.exp %403 : vector<2x8x8xf32>
    %cst_334 = arith.constant dense<0.000000e+00> : vector<2x8xf32>
    %405 = vector.multi_reduction <add>, %404, %cst_334 [2] : vector<2x8x8xf32> to vector<2x8xf32>
    %406 = vector.shape_cast %405 : vector<2x8xf32> to vector<2x8x1xf32>
    %407 = tpu.reciprocal %406 {approx = true} : vector<2x8x1xf32> -> vector<2x8x1xf32>
    %408 = vector.broadcast %407 : vector<2x8x1xf32> to vector<2x8x8xf32>
    %409 = arith.mulf %404, %408 : vector<2x8x8xf32>
    %410 = arith.truncf %409 : vector<2x8x8xf32> to vector<2x8x8xbf16>
    "tpu.trace_start"() <{level = 10 : i32, message = "bqk,bkd->bqd"}> : () -> ()
    %cst_335 = arith.constant dense<0.000000e+00> : vector<2x8x32xf32>
    %411 = tpu.matmul %410, %398, %cst_335 {dimension_numbers = #tpu.dot_dimension_numbers<[2], [1], [1], [2], [0, 0, 0, 1, 1, 2], [0], [0]>} : vector<2x8x8xbf16>, vector<2x8x32xbf16>, vector<2x8x32xf32> -> vector<2x8x32xf32>
    "tpu.trace_stop"() : () -> ()
    %412 = vector.shape_cast %411 : vector<2x8x32xf32> to vector<16x32xf32>
    %413 = arith.truncf %412 : vector<16x32xf32> to vector<16x32xbf16>
    %c1_336 = arith.constant 1 : index
    %c2_337 = arith.constant 2 : index
    %c0_338 = arith.constant 0 : index
    %c0_339 = arith.constant 0 : index
    %414 = vector.load %arg4[%c1_336, %c2_337, %c0_338, %c0_339] : memref<2x4x32x128xbf16, #tpu.memory_space<vmem>>, vector<1x1x32x128xbf16>
    %415 = vector.shape_cast %414 : vector<1x1x32x128xbf16> to vector<32x128xbf16>
    %cst_340 = arith.constant dense<0.000000e+00> : vector<16x128xf32>
    %416 = tpu.matmul %413, %415, %cst_340 {dimension_numbers = #tpu.dot_dimension_numbers<[1], [0], [0], [1], [0, 0, 1, 1], [], []>} : vector<16x32xbf16>, vector<32x128xbf16>, vector<16x128xf32> -> vector<16x128xf32>
    %417 = arith.addf %369, %416 : vector<16x128xf32>
    %c1_341 = arith.constant 1 : index
    %c0_342 = arith.constant 0 : index
    %c3_343 = arith.constant 3 : index
    %c0_344 = arith.constant 0 : index
    %c0_345 = arith.constant 0 : index
    %418 = vector.load %arg2[%c1_341, %c0_342, %c3_343, %c0_344, %c0_345] : memref<2x3x4x128x32xbf16, #tpu.memory_space<vmem>>, vector<1x1x1x128x32xbf16>
    %419 = vector.shape_cast %418 : vector<1x1x1x128x32xbf16> to vector<128x32xbf16>
    %cst_346 = arith.constant dense<0.000000e+00> : vector<16x32xf32>
    %420 = tpu.matmul %272, %419, %cst_346 {dimension_numbers = #tpu.dot_dimension_numbers<[1], [0], [0], [1], [0, 0, 1, 1], [], []>} : vector<16x128xbf16>, vector<128x32xbf16>, vector<16x32xf32> -> vector<16x32xf32>
    %c1_347 = arith.constant 1 : index
    %c0_348 = arith.constant 0 : index
    %c3_349 = arith.constant 3 : index
    %c0_350 = arith.constant 0 : index
    %c0_351 = arith.constant 0 : index
    %421 = vector.load %arg3[%c1_347, %c0_348, %c3_349, %c0_350, %c0_351] : memref<2x3x4x1x32xf32, #tpu.memory_space<vmem>>, vector<1x1x1x1x32xf32>
    %422 = vector.shape_cast %421 : vector<1x1x1x1x32xf32> to vector<1x32xf32>
    %423 = vector.broadcast %422 : vector<1x32xf32> to vector<16x32xf32>
    %424 = arith.addf %420, %423 : vector<16x32xf32>
    %c1_352 = arith.constant 1 : index
    %c1_353 = arith.constant 1 : index
    %c3_354 = arith.constant 3 : index
    %c0_355 = arith.constant 0 : index
    %c0_356 = arith.constant 0 : index
    %425 = vector.load %arg2[%c1_352, %c1_353, %c3_354, %c0_355, %c0_356] : memref<2x3x4x128x32xbf16, #tpu.memory_space<vmem>>, vector<1x1x1x128x32xbf16>
    %426 = vector.shape_cast %425 : vector<1x1x1x128x32xbf16> to vector<128x32xbf16>
    %cst_357 = arith.constant dense<0.000000e+00> : vector<16x32xf32>
    %427 = tpu.matmul %272, %426, %cst_357 {dimension_numbers = #tpu.dot_dimension_numbers<[1], [0], [0], [1], [0, 0, 1, 1], [], []>} : vector<16x128xbf16>, vector<128x32xbf16>, vector<16x32xf32> -> vector<16x32xf32>
    %c1_358 = arith.constant 1 : index
    %c1_359 = arith.constant 1 : index
    %c3_360 = arith.constant 3 : index
    %c0_361 = arith.constant 0 : index
    %c0_362 = arith.constant 0 : index
    %428 = vector.load %arg3[%c1_358, %c1_359, %c3_360, %c0_361, %c0_362] : memref<2x3x4x1x32xf32, #tpu.memory_space<vmem>>, vector<1x1x1x1x32xf32>
    %429 = vector.shape_cast %428 : vector<1x1x1x1x32xf32> to vector<1x32xf32>
    %430 = vector.broadcast %429 : vector<1x32xf32> to vector<16x32xf32>
    %431 = arith.addf %427, %430 : vector<16x32xf32>
    %c1_363 = arith.constant 1 : index
    %c2_364 = arith.constant 2 : index
    %c3_365 = arith.constant 3 : index
    %c0_366 = arith.constant 0 : index
    %c0_367 = arith.constant 0 : index
    %432 = vector.load %arg2[%c1_363, %c2_364, %c3_365, %c0_366, %c0_367] : memref<2x3x4x128x32xbf16, #tpu.memory_space<vmem>>, vector<1x1x1x128x32xbf16>
    %433 = vector.shape_cast %432 : vector<1x1x1x128x32xbf16> to vector<128x32xbf16>
    %cst_368 = arith.constant dense<0.000000e+00> : vector<16x32xf32>
    %434 = tpu.matmul %272, %433, %cst_368 {dimension_numbers = #tpu.dot_dimension_numbers<[1], [0], [0], [1], [0, 0, 1, 1], [], []>} : vector<16x128xbf16>, vector<128x32xbf16>, vector<16x32xf32> -> vector<16x32xf32>
    %c1_369 = arith.constant 1 : index
    %c2_370 = arith.constant 2 : index
    %c3_371 = arith.constant 3 : index
    %c0_372 = arith.constant 0 : index
    %c0_373 = arith.constant 0 : index
    %435 = vector.load %arg3[%c1_369, %c2_370, %c3_371, %c0_372, %c0_373] : memref<2x3x4x1x32xf32, #tpu.memory_space<vmem>>, vector<1x1x1x1x32xf32>
    %436 = vector.shape_cast %435 : vector<1x1x1x1x32xf32> to vector<1x32xf32>
    %437 = vector.broadcast %436 : vector<1x32xf32> to vector<16x32xf32>
    %438 = arith.addf %434, %437 : vector<16x32xf32>
    %cst_374 = arith.constant 0.176776692 : f32
    %439 = vector.broadcast %cst_374 : f32 to vector<16x32xf32>
    %440 = arith.mulf %424, %439 : vector<16x32xf32>
    %441 = arith.truncf %440 : vector<16x32xf32> to vector<16x32xbf16>
    %442 = vector.shape_cast %441 : vector<16x32xbf16> to vector<2x8x32xbf16>
    %443 = arith.truncf %431 : vector<16x32xf32> to vector<16x32xbf16>
    %444 = vector.shape_cast %443 : vector<16x32xbf16> to vector<2x8x32xbf16>
    %445 = arith.truncf %438 : vector<16x32xf32> to vector<16x32xbf16>
    %446 = vector.shape_cast %445 : vector<16x32xbf16> to vector<2x8x32xbf16>
    "tpu.trace_start"() <{level = 10 : i32, message = "bqd,bkd->bqk"}> : () -> ()
    %cst_375 = arith.constant dense<0.000000e+00> : vector<2x8x8xf32>
    %447 = tpu.matmul %442, %444, %cst_375 {dimension_numbers = #tpu.dot_dimension_numbers<[2], [2], [1], [1], [0, 0, 0, 1, 1, 1], [0], [0]>} : vector<2x8x32xbf16>, vector<2x8x32xbf16>, vector<2x8x8xf32> -> vector<2x8x8xf32>
    "tpu.trace_stop"() : () -> ()
    %cst_376 = arith.constant dense<0xFF800000> : vector<2x8xf32>
    %448 = vector.multi_reduction <maximumf>, %447, %cst_376 [2] : vector<2x8x8xf32> to vector<2x8xf32>
    %449 = vector.shape_cast %448 : vector<2x8xf32> to vector<2x8x1xf32>
    %450 = vector.broadcast %449 : vector<2x8x1xf32> to vector<2x8x8xf32>
    %451 = arith.subf %447, %450 : vector<2x8x8xf32>
    %452 = math.exp %451 : vector<2x8x8xf32>
    %cst_377 = arith.constant dense<0.000000e+00> : vector<2x8xf32>
    %453 = vector.multi_reduction <add>, %452, %cst_377 [2] : vector<2x8x8xf32> to vector<2x8xf32>
    %454 = vector.shape_cast %453 : vector<2x8xf32> to vector<2x8x1xf32>
    %455 = tpu.reciprocal %454 {approx = true} : vector<2x8x1xf32> -> vector<2x8x1xf32>
    %456 = vector.broadcast %455 : vector<2x8x1xf32> to vector<2x8x8xf32>
    %457 = arith.mulf %452, %456 : vector<2x8x8xf32>
    %458 = arith.truncf %457 : vector<2x8x8xf32> to vector<2x8x8xbf16>
    "tpu.trace_start"() <{level = 10 : i32, message = "bqk,bkd->bqd"}> : () -> ()
    %cst_378 = arith.constant dense<0.000000e+00> : vector<2x8x32xf32>
    %459 = tpu.matmul %458, %446, %cst_378 {dimension_numbers = #tpu.dot_dimension_numbers<[2], [1], [1], [2], [0, 0, 0, 1, 1, 2], [0], [0]>} : vector<2x8x8xbf16>, vector<2x8x32xbf16>, vector<2x8x32xf32> -> vector<2x8x32xf32>
    "tpu.trace_stop"() : () -> ()
    %460 = vector.shape_cast %459 : vector<2x8x32xf32> to vector<16x32xf32>
    %461 = arith.truncf %460 : vector<16x32xf32> to vector<16x32xbf16>
    %c1_379 = arith.constant 1 : index
    %c3_380 = arith.constant 3 : index
    %c0_381 = arith.constant 0 : index
    %c0_382 = arith.constant 0 : index
    %462 = vector.load %arg4[%c1_379, %c3_380, %c0_381, %c0_382] : memref<2x4x32x128xbf16, #tpu.memory_space<vmem>>, vector<1x1x32x128xbf16>
    %463 = vector.shape_cast %462 : vector<1x1x32x128xbf16> to vector<32x128xbf16>
    %cst_383 = arith.constant dense<0.000000e+00> : vector<16x128xf32>
    %464 = tpu.matmul %461, %463, %cst_383 {dimension_numbers = #tpu.dot_dimension_numbers<[1], [0], [0], [1], [0, 0, 1, 1], [], []>} : vector<16x32xbf16>, vector<32x128xbf16>, vector<16x128xf32> -> vector<16x128xf32>
    %465 = arith.addf %417, %464 : vector<16x128xf32>
    %c1_384 = arith.constant 1 : index
    %c0_385 = arith.constant 0 : index
    %c0_386 = arith.constant 0 : index
    %466 = vector.load %arg5[%c1_384, %c0_385, %c0_386] : memref<2x1x128xf32, #tpu.memory_space<vmem>>, vector<1x1x128xf32>
    %467 = vector.shape_cast %466 : vector<1x1x128xf32> to vector<1x128xf32>
    %468 = vector.broadcast %467 : vector<1x128xf32> to vector<16x128xf32>
    %469 = arith.addf %465, %468 : vector<16x128xf32>
    %470 = arith.addf %271, %469 : vector<16x128xf32>
    %c1_387 = arith.constant 1 : index
    %c0_388 = arith.constant 0 : index
    %c0_389 = arith.constant 0 : index
    %471 = vector.load %arg6[%c1_387, %c0_388, %c0_389] : memref<2x1x128xf32, #tpu.memory_space<vmem>>, vector<1x1x128xf32>
    %472 = vector.shape_cast %471 : vector<1x1x128xf32> to vector<1x128xf32>
    %c1_390 = arith.constant 1 : index
    %c0_391 = arith.constant 0 : index
    %c0_392 = arith.constant 0 : index
    %473 = vector.load %arg7[%c1_390, %c0_391, %c0_392] : memref<2x1x128xf32, #tpu.memory_space<vmem>>, vector<1x1x128xf32>
    %474 = vector.shape_cast %473 : vector<1x1x128xf32> to vector<1x128xf32>
    %cst_393 = arith.constant dense<0.000000e+00> : vector<16xf32>
    %475 = vector.multi_reduction <add>, %470, %cst_393 [1] : vector<16x128xf32> to vector<16xf32>
    %476 = vector.shape_cast %475 : vector<16xf32> to vector<16x1xf32>
    %cst_394 = arith.constant 1.280000e+02 : f32
    %477 = vector.broadcast %cst_394 : f32 to vector<16x1xf32>
    %478 = arith.divf %476, %477 : vector<16x1xf32>
    %479 = vector.broadcast %478 : vector<16x1xf32> to vector<16x128xf32>
    %480 = arith.subf %470, %479 : vector<16x128xf32>
    %481 = arith.mulf %480, %480 : vector<16x128xf32>
    %cst_395 = arith.constant dense<0.000000e+00> : vector<16xf32>
    %482 = vector.multi_reduction <add>, %481, %cst_395 [1] : vector<16x128xf32> to vector<16xf32>
    %483 = vector.shape_cast %482 : vector<16xf32> to vector<16x1xf32>
    %cst_396 = arith.constant 1.280000e+02 : f32
    %484 = vector.broadcast %cst_396 : f32 to vector<16x1xf32>
    %485 = arith.divf %483, %484 : vector<16x1xf32>
    %486 = vector.broadcast %478 : vector<16x1xf32> to vector<16x128xf32>
    %487 = arith.subf %470, %486 : vector<16x128xf32>
    %cst_397 = arith.constant 9.99999974E-6 : f32
    %488 = vector.broadcast %cst_397 : f32 to vector<16x1xf32>
    %489 = arith.addf %485, %488 : vector<16x1xf32>
    %490 = math.rsqrt %489 : vector<16x1xf32>
    %491 = vector.broadcast %490 : vector<16x1xf32> to vector<16x128xf32>
    %492 = arith.mulf %487, %491 : vector<16x128xf32>
    %493 = vector.broadcast %472 : vector<1x128xf32> to vector<16x128xf32>
    %494 = arith.mulf %492, %493 : vector<16x128xf32>
    %495 = vector.broadcast %474 : vector<1x128xf32> to vector<16x128xf32>
    %496 = arith.addf %494, %495 : vector<16x128xf32>
    %497 = arith.truncf %496 : vector<16x128xf32> to vector<16x128xbf16>
    %c1_398 = arith.constant 1 : index
    %c0_399 = arith.constant 0 : index
    %c0_400 = arith.constant 0 : index
    %498 = vector.load %arg8[%c1_398, %c0_399, %c0_400] : memref<2x128x256xbf16, #tpu.memory_space<vmem>>, vector<1x128x256xbf16>
    %499 = vector.shape_cast %498 : vector<1x128x256xbf16> to vector<128x256xbf16>
    %cst_401 = arith.constant dense<0.000000e+00> : vector<16x256xf32>
    %500 = tpu.matmul %497, %499, %cst_401 {dimension_numbers = #tpu.dot_dimension_numbers<[1], [0], [0], [1], [0, 0, 1, 1], [], []>} : vector<16x128xbf16>, vector<128x256xbf16>, vector<16x256xf32> -> vector<16x256xf32>
    %c1_402 = arith.constant 1 : index
    %c0_403 = arith.constant 0 : index
    %c0_404 = arith.constant 0 : index
    %501 = vector.load %arg9[%c1_402, %c0_403, %c0_404] : memref<2x1x256xf32, #tpu.memory_space<vmem>>, vector<1x1x256xf32>
    %502 = vector.shape_cast %501 : vector<1x1x256xf32> to vector<1x256xf32>
    %503 = vector.broadcast %502 : vector<1x256xf32> to vector<16x256xf32>
    %504 = arith.addf %500, %503 : vector<16x256xf32>
    %cst_405 = arith.constant 0.000000e+00 : f32
    %505 = vector.broadcast %cst_405 : f32 to vector<16x256xf32>
    %506 = arith.maximumf %504, %505 : vector<16x256xf32>
    %507 = arith.truncf %506 : vector<16x256xf32> to vector<16x256xbf16>
    %c1_406 = arith.constant 1 : index
    %c0_407 = arith.constant 0 : index
    %c0_408 = arith.constant 0 : index
    %508 = vector.load %arg10[%c1_406, %c0_407, %c0_408] : memref<2x256x128xbf16, #tpu.memory_space<vmem>>, vector<1x256x128xbf16>
    %509 = vector.shape_cast %508 : vector<1x256x128xbf16> to vector<256x128xbf16>
    %cst_409 = arith.constant dense<0.000000e+00> : vector<16x128xf32>
    %510 = tpu.matmul %507, %509, %cst_409 {dimension_numbers = #tpu.dot_dimension_numbers<[1], [0], [0], [1], [0, 0, 1, 1], [], []>} : vector<16x256xbf16>, vector<256x128xbf16>, vector<16x128xf32> -> vector<16x128xf32>
    %c1_410 = arith.constant 1 : index
    %c0_411 = arith.constant 0 : index
    %c0_412 = arith.constant 0 : index
    %511 = vector.load %arg11[%c1_410, %c0_411, %c0_412] : memref<2x1x128xf32, #tpu.memory_space<vmem>>, vector<1x1x128xf32>
    %512 = vector.shape_cast %511 : vector<1x1x128xf32> to vector<1x128xf32>
    %513 = vector.broadcast %512 : vector<1x128xf32> to vector<16x128xf32>
    %514 = arith.addf %510, %513 : vector<16x128xf32>
    %515 = arith.addf %496, %514 : vector<16x128xf32>
    %c1_413 = arith.constant 1 : index
    %c0_414 = arith.constant 0 : index
    %c0_415 = arith.constant 0 : index
    %516 = vector.load %arg12[%c1_413, %c0_414, %c0_415] : memref<2x1x128xf32, #tpu.memory_space<vmem>>, vector<1x1x128xf32>
    %517 = vector.shape_cast %516 : vector<1x1x128xf32> to vector<1x128xf32>
    %c1_416 = arith.constant 1 : index
    %c0_417 = arith.constant 0 : index
    %c0_418 = arith.constant 0 : index
    %518 = vector.load %arg13[%c1_416, %c0_417, %c0_418] : memref<2x1x128xf32, #tpu.memory_space<vmem>>, vector<1x1x128xf32>
    %519 = vector.shape_cast %518 : vector<1x1x128xf32> to vector<1x128xf32>
    %cst_419 = arith.constant dense<0.000000e+00> : vector<16xf32>
    %520 = vector.multi_reduction <add>, %515, %cst_419 [1] : vector<16x128xf32> to vector<16xf32>
    %521 = vector.shape_cast %520 : vector<16xf32> to vector<16x1xf32>
    %cst_420 = arith.constant 1.280000e+02 : f32
    %522 = vector.broadcast %cst_420 : f32 to vector<16x1xf32>
    %523 = arith.divf %521, %522 : vector<16x1xf32>
    %524 = vector.broadcast %523 : vector<16x1xf32> to vector<16x128xf32>
    %525 = arith.subf %515, %524 : vector<16x128xf32>
    %526 = arith.mulf %525, %525 : vector<16x128xf32>
    %cst_421 = arith.constant dense<0.000000e+00> : vector<16xf32>
    %527 = vector.multi_reduction <add>, %526, %cst_421 [1] : vector<16x128xf32> to vector<16xf32>
    %528 = vector.shape_cast %527 : vector<16xf32> to vector<16x1xf32>
    %cst_422 = arith.constant 1.280000e+02 : f32
    %529 = vector.broadcast %cst_422 : f32 to vector<16x1xf32>
    %530 = arith.divf %528, %529 : vector<16x1xf32>
    %531 = vector.broadcast %523 : vector<16x1xf32> to vector<16x128xf32>
    %532 = arith.subf %515, %531 : vector<16x128xf32>
    %cst_423 = arith.constant 9.99999974E-6 : f32
    %533 = vector.broadcast %cst_423 : f32 to vector<16x1xf32>
    %534 = arith.addf %530, %533 : vector<16x1xf32>
    %535 = math.rsqrt %534 : vector<16x1xf32>
    %536 = vector.broadcast %535 : vector<16x1xf32> to vector<16x128xf32>
    %537 = arith.mulf %532, %536 : vector<16x128xf32>
    %538 = vector.broadcast %517 : vector<1x128xf32> to vector<16x128xf32>
    %539 = arith.mulf %537, %538 : vector<16x128xf32>
    %540 = vector.broadcast %519 : vector<1x128xf32> to vector<16x128xf32>
    %541 = arith.addf %539, %540 : vector<16x128xf32>
    %542 = vector.shape_cast %541 : vector<16x128xf32> to vector<2x8x128xf32>
    %c0_424 = arith.constant 0 : index
    %c0_425 = arith.constant 0 : index
    %c0_426 = arith.constant 0 : index
    %543 = vector.load %arg14[%c0_424, %c0_425, %c0_426] : memref<2x8x128xf32, #tpu.memory_space<vmem>>, vector<2x8x128xf32>
    tpu.vector_store %arg14[%c0_424, %c0_425, %c0_426], %542 {strides = array<i32>} : memref<2x8x128xf32, #tpu.memory_space<vmem>>, vector<2x8x128xf32>,
    return
  }
  func.func @transform_0(%arg0: i32) -> (i32, i32, i32) {
    %c0_i32 = arith.constant 0 : i32
    %c0_i32_0 = arith.constant 0 : i32
    %c0_i32_1 = arith.constant 0 : i32
    return %arg0, %c0_i32, %c0_i32_0 : i32, i32, i32
  }
  func.func @transform_1(%arg0: i32) -> (i32, i32, i32, i32, i32) {
    %c0_i32 = arith.constant 0 : i32
    %c0_i32_0 = arith.constant 0 : i32
    %c0_i32_1 = arith.constant 0 : i32
    %c0_i32_2 = arith.constant 0 : i32
    %c0_i32_3 = arith.constant 0 : i32
    %c0_i32_4 = arith.constant 0 : i32
    return %c0_i32, %c0_i32_0, %c0_i32_1, %c0_i32_2, %c0_i32_3 : i32, i32, i32, i32, i32
  }
  func.func @transform_2(%arg0: i32) -> (i32, i32, i32, i32, i32) {
    %c0_i32 = arith.constant 0 : i32
    %c0_i32_0 = arith.constant 0 : i32
    %c0_i32_1 = arith.constant 0 : i32
    %c0_i32_2 = arith.constant 0 : i32
    %c0_i32_3 = arith.constant 0 : i32
    %c0_i32_4 = arith.constant 0 : i32
    return %c0_i32, %c0_i32_0, %c0_i32_1, %c0_i32_2, %c0_i32_3 : i32, i32, i32, i32, i32
  }
  func.func @transform_3(%arg0: i32) -> (i32, i32, i32, i32) {
    %c0_i32 = arith.constant 0 : i32
    %c0_i32_0 = arith.constant 0 : i32
    %c0_i32_1 = arith.constant 0 : i32
    %c0_i32_2 = arith.constant 0 : i32
    %c0_i32_3 = arith.constant 0 : i32
    return %c0_i32, %c0_i32_0, %c0_i32_1, %c0_i32_2 : i32, i32, i32, i32
  }
  func.func @transform_4(%arg0: i32) -> (i32, i32, i32) {
    %c0_i32 = arith.constant 0 : i32
    %c0_i32_0 = arith.constant 0 : i32
    %c0_i32_1 = arith.constant 0 : i32
    %c0_i32_2 = arith.constant 0 : i32
    return %c0_i32, %c0_i32_0, %c0_i32_1 : i32, i32, i32
  }
  func.func @transform_5(%arg0: i32) -> (i32, i32, i32) {
    %c0_i32 = arith.constant 0 : i32
    %c0_i32_0 = arith.constant 0 : i32
    %c0_i32_1 = arith.constant 0 : i32
    %c0_i32_2 = arith.constant 0 : i32
    return %c0_i32, %c0_i32_0, %c0_i32_1 : i32, i32, i32
  }
  func.func @transform_6(%arg0: i32) -> (i32, i32, i32) {
    %c0_i32 = arith.constant 0 : i32
    %c0_i32_0 = arith.constant 0 : i32
    %c0_i32_1 = arith.constant 0 : i32
    %c0_i32_2 = arith.constant 0 : i32
    return %c0_i32, %c0_i32_0, %c0_i32_1 : i32, i32, i32
  }
  func.func @transform_7(%arg0: i32) -> (i32, i32, i32) {
    %c0_i32 = arith.constant 0 : i32
    %c0_i32_0 = arith.constant 0 : i32
    %c0_i32_1 = arith.constant 0 : i32
    %c0_i32_2 = arith.constant 0 : i32
    return %c0_i32, %c0_i32_0, %c0_i32_1 : i32, i32, i32
  }
  func.func @transform_8(%arg0: i32) -> (i32, i32, i32) {
    %c0_i32 = arith.constant 0 : i32
    %c0_i32_0 = arith.constant 0 : i32
    %c0_i32_1 = arith.constant 0 : i32
    %c0_i32_2 = arith.constant 0 : i32
    return %c0_i32, %c0_i32_0, %c0_i32_1 : i32, i32, i32
  }
  func.func @transform_9(%arg0: i32) -> (i32, i32, i32) {
    %c0_i32 = arith.constant 0 : i32
    %c0_i32_0 = arith.constant 0 : i32
    %c0_i32_1 = arith.constant 0 : i32
    %c0_i32_2 = arith.constant 0 : i32
    return %c0_i32, %c0_i32_0, %c0_i32_1 : i32, i32, i32
  }
  func.func @transform_10(%arg0: i32) -> (i32, i32, i32) {
    %c0_i32 = arith.constant 0 : i32
    %c0_i32_0 = arith.constant 0 : i32
    %c0_i32_1 = arith.constant 0 : i32
    %c0_i32_2 = arith.constant 0 : i32
    return %c0_i32, %c0_i32_0, %c0_i32_1 : i32, i32, i32
  }
  func.func @transform_11(%arg0: i32) -> (i32, i32, i32) {
    %c0_i32 = arith.constant 0 : i32
    %c0_i32_0 = arith.constant 0 : i32
    %c0_i32_1 = arith.constant 0 : i32
    %c0_i32_2 = arith.constant 0 : i32
    return %c0_i32, %c0_i32_0, %c0_i32_1 : i32, i32, i32
  }
  func.func @transform_12(%arg0: i32) -> (i32, i32, i32) {
    %c0_i32 = arith.constant 0 : i32
    %c0_i32_0 = arith.constant 0 : i32
    %c0_i32_1 = arith.constant 0 : i32
    %c0_i32_2 = arith.constant 0 : i32
    return %c0_i32, %c0_i32_0, %c0_i32_1 : i32, i32, i32
  }
  func.func @transform_13(%arg0: i32) -> (i32, i32, i32) {
    %c0_i32 = arith.constant 0 : i32
    %c0_i32_0 = arith.constant 0 : i32
    %c0_i32_1 = arith.constant 0 : i32
    return %arg0, %c0_i32, %c0_i32_0 : i32, i32, i32
  }
}

</mosaic_0001>

<llo_original>
// kernel: tpu_custom_call.1
$region0: #{tpu_custom_call.1}
  #allocation0 [shape = 'u32[]', space=smem, size = 0x4, offset = 0x4, fixed_abs, tag = 'smem constant byte address 0x4 - core index']
  #allocation1 [shape = 'u32[144,128]{1,0:T(1,128)}', space=vmem, size = 0x12000, scoped, tag = 'internal scratch']
  %s0 = inlined_call_operand.vmem [shape: f32[2,8,128], index: 0, kind: input, shape index: {}]
  %s1 = inlined_call_operand.vmem [shape: bf16[2,3,4,128,32], index: 1, kind: input, shape index: {}]
  %s2 = inlined_call_operand.vmem [shape: f32[2,3,4,1,32], index: 2, kind: input, shape index: {}]
  %s3 = inlined_call_operand.vmem [shape: bf16[2,4,32,128], index: 3, kind: input, shape index: {}]
  %s4 = inlined_call_operand.vmem [shape: f32[2,1,128], index: 4, kind: input, shape index: {}]
  %s5 = inlined_call_operand.vmem [shape: f32[2,1,128], index: 5, kind: input, shape index: {}]
  %s6 = inlined_call_operand.vmem [shape: f32[2,1,128], index: 6, kind: input, shape index: {}]
  %s7 = inlined_call_operand.vmem [shape: bf16[2,128,256], index: 7, kind: input, shape index: {}]
  %s8 = inlined_call_operand.vmem [shape: f32[2,1,256], index: 8, kind: input, shape index: {}]
  %s9 = inlined_call_operand.vmem [shape: bf16[2,256,128], index: 9, kind: input, shape index: {}]
  %s10 = inlined_call_operand.vmem [shape: f32[2,1,128], index: 10, kind: input, shape index: {}]
  %s11 = inlined_call_operand.vmem [shape: f32[2,1,128], index: 11, kind: input, shape index: {}]
  %s12 = inlined_call_operand.vmem [shape: f32[2,1,128], index: 12, kind: input, shape index: {}]
  %s13 = inlined_call_operand.hbm [shape: f32[2,8,128], index: 13, kind: output, shape index: {}]
  %s14 = sld [smem:[#allocation0]]
  $region62: #{tpu_custom_call.1} parent=0
    _
  %s16 = ssub.s32 1, %s14
  %s17 = scalar_select 0, %s16, %s14
  $region1: #{tpu_custom_call.1} parent=0
    #allocation2 [shape = 'u8[8192]{0}', space=vmem, size = 0x2000, scoped, tag = 'output window, operand 0, single buffered']
    #allocation3 [shape = 's32[1]{0}', space=sflag, size = 0x4, scoped, tag = 'scoped memory for tpu_custom_call.1']
    %18 = vsyncpa [#allocation3], 0
    // Predicated region
    $region2: #{tpu_custom_call.1} parent=1 // pred_check
      _
    $region3: #{tpu_custom_call.1} parent=1 // pred_check_branch
      %20 = sbr.rel (0) target = $region5
    $region4: #{tpu_custom_call.1} parent=1 // pred_region
      _
    $region5: #{tpu_custom_call.1} parent=1 // pred_fallthru
      _
    // Predicated region
    $region6: #{tpu_custom_call.1} parent=1 // pred_check
      _
    $region7: #{tpu_custom_call.1} parent=1 // pred_check_branch
      %22 = sbr.rel (0) target = $region9
    $region8: #{tpu_custom_call.1} parent=1 // pred_region
      _
    $region9: #{tpu_custom_call.1} parent=1 // pred_fallthru
      _
    // Predicated region
    $region10: #{tpu_custom_call.1} parent=1 // pred_check
      _
    $region11: #{tpu_custom_call.1} parent=1 // pred_check_branch
      %24 = sbr.rel (0) target = $region13
    $region12: #{tpu_custom_call.1} parent=1 // pred_region
      _
    $region13: #{tpu_custom_call.1} parent=1 // pred_fallthru
      _
    // Predicated region
    $region14: #{tpu_custom_call.1} parent=1 // pred_check
      _
    $region15: #{tpu_custom_call.1} parent=1 // pred_check_branch
      %26 = sbr.rel (0) target = $region17
    $region16: #{tpu_custom_call.1} parent=1 // pred_region
      _
    $region17: #{tpu_custom_call.1} parent=1 // pred_fallthru
      _
    // Predicated region
    $region18: #{tpu_custom_call.1} parent=1 // pred_check
      _
    $region19: #{tpu_custom_call.1} parent=1 // pred_check_branch
      %28 = sbr.rel (0) target = $region21
    $region20: #{tpu_custom_call.1} parent=1 // pred_region
      _
    $region21: #{tpu_custom_call.1} parent=1 // pred_fallthru
      _
    // Predicated region
    $region22: #{tpu_custom_call.1} parent=1 // pred_check
      _
    $region23: #{tpu_custom_call.1} parent=1 // pred_check_branch
      %30 = sbr.rel (0) target = $region25
    $region24: #{tpu_custom_call.1} parent=1 // pred_region
      _
    $region25: #{tpu_custom_call.1} parent=1 // pred_fallthru
      _
    // Predicated region
    $region26: #{tpu_custom_call.1} parent=1 // pred_check
      _
    $region27: #{tpu_custom_call.1} parent=1 // pred_check_branch
      %32 = sbr.rel (0) target = $region29
    $region28: #{tpu_custom_call.1} parent=1 // pred_region
      _
    $region29: #{tpu_custom_call.1} parent=1 // pred_fallthru
      _
    // Predicated region
    $region30: #{tpu_custom_call.1} parent=1 // pred_check
      _
    $region31: #{tpu_custom_call.1} parent=1 // pred_check_branch
      %34 = sbr.rel (0) target = $region33
    $region32: #{tpu_custom_call.1} parent=1 // pred_region
      _
    $region33: #{tpu_custom_call.1} parent=1 // pred_fallthru
      _
    // Predicated region
    $region34: #{tpu_custom_call.1} parent=1 // pred_check
      _
    $region35: #{tpu_custom_call.1} parent=1 // pred_check_branch
      %36 = sbr.rel (0) target = $region37
    $region36: #{tpu_custom_call.1} parent=1 // pred_region
      _
    $region37: #{tpu_custom_call.1} parent=1 // pred_fallthru
      _
    // Predicated region
    $region38: #{tpu_custom_call.1} parent=1 // pred_check
      _
    $region39: #{tpu_custom_call.1} parent=1 // pred_check_branch
      %38 = sbr.rel (0) target = $region41
    $region40: #{tpu_custom_call.1} parent=1 // pred_region
      _
    $region41: #{tpu_custom_call.1} parent=1 // pred_fallthru
      _
    // Predicated region
    $region42: #{tpu_custom_call.1} parent=1 // pred_check
      _
    $region43: #{tpu_custom_call.1} parent=1 // pred_check_branch
      %40 = sbr.rel (0) target = $region45
    $region44: #{tpu_custom_call.1} parent=1 // pred_region
      _
    $region45: #{tpu_custom_call.1} parent=1 // pred_fallthru
      _
    // Predicated region
    $region46: #{tpu_custom_call.1} parent=1 // pred_check
      _
    $region47: #{tpu_custom_call.1} parent=1 // pred_check_branch
      %42 = sbr.rel (0) target = $region49
    $region48: #{tpu_custom_call.1} parent=1 // pred_region
      _
    $region49: #{tpu_custom_call.1} parent=1 // pred_fallthru
      _
    // Predicated region
    $region50: #{tpu_custom_call.1} parent=1 // pred_check
      _
    $region51: #{tpu_custom_call.1} parent=1 // pred_check_branch
      %44 = sbr.rel (0) target = $region53
    $region52: #{tpu_custom_call.1} parent=1 // pred_region
      _
    $region53: #{tpu_custom_call.1} parent=1 // pred_fallthru
      _
    %v46 = vld [vmem:[%s0] sm:$0xff]
    %v47 = vld [vmem:[%s0 + $0x8] sm:$0xff]
    %v48 = vpack.c.bf16 %v47, %v46
    %v49 = vld [vmem:[%s1] sm:$0xf]
    %v50 = vld [vmem:[%s1 + $0x4] sm:$0xf]
    %v51 = vld [vmem:[%s1 + $0x8] sm:$0xf]
    %v52 = vld [vmem:[%s1 + $0xc] sm:$0xf]
    %v53 = vld [vmem:[%s1 + $0x10] sm:$0xf]
    %v54 = vld [vmem:[%s1 + $0x14] sm:$0xf]
    %v55 = vld [vmem:[%s1 + $0x18] sm:$0xf]
    %v56 = vld [vmem:[%s1 + $0x1c] sm:$0xf]
    %v57 = vld [vmem:[%s1 + $0x20] sm:$0xf]
    %v58 = vld [vmem:[%s1 + $0x24] sm:$0xf]
    %v59 = vld [vmem:[%s1 + $0x28] sm:$0xf]
    %v60 = vld [vmem:[%s1 + $0x2c] sm:$0xf]
    %v61 = vld [vmem:[%s1 + $0x30] sm:$0xf]
    %v62 = vld [vmem:[%s1 + $0x34] sm:$0xf]
    %v63 = vld [vmem:[%s1 + $0x38] sm:$0xf]
    %v64 = vld [vmem:[%s1 + $0x3c] sm:$0xf]
    %v65 = vld [vmem:[%s2] sm:$0x1]
    %v67 = vlaneseq
    %v68 = vshrl.u32 %v67, 7
    %v69 = vsub.s32 0, %v68
    %v70 = vrot.slane %v65, %v69
    %v88 = vunpack.c.l.b16 %v49
    %v89 = vunpack.c.l.b16 %v50
    %v90 = vunpack.c.l.b16 %v51
    %v91 = vunpack.c.l.b16 %v52
    %v92 = vunpack.c.l.b16 %v53
    %v93 = vunpack.c.l.b16 %v54
    %v94 = vunpack.c.l.b16 %v55
    %v95 = vunpack.c.l.b16 %v56
    %v96 = vunpack.c.l.b16 %v57
    %v97 = vunpack.c.l.b16 %v58
    %v98 = vunpack.c.l.b16 %v59
    %v99 = vunpack.c.l.b16 %v60
    %v100 = vunpack.c.l.b16 %v61
    %v101 = vunpack.c.l.b16 %v62
    %v102 = vunpack.c.l.b16 %v63
    %v103 = vunpack.c.l.b16 %v64
    %v104 = vpack.c.b16 %v89, %v88
    %v105 = vpack.c.b16 %v91, %v90
    %v106 = vpack.c.b16 %v93, %v92
    %v107 = vpack.c.b16 %v95, %v94
    %v108 = vpack.c.b16 %v97, %v96
    %v109 = vpack.c.b16 %v99, %v98
    %v110 = vpack.c.b16 %v101, %v100
    %v111 = vpack.c.b16 %v103, %v102
    %120 = vmatprep.subr.bf16.mxu0 0
    %121 = vmatpush1.bf16.msra.mxu0 %v111
    %122 = vmatprep.subr.bf16.mxu0 0
    %123 = vmatpush1.bf16.msra.mxu0 %v110
    %124 = vmatprep.subr.bf16.mxu0 0
    %125 = vmatpush1.bf16.msra.mxu0 %v109
    %126 = vmatprep.subr.bf16.mxu0 0
    %127 = vmatpush1.bf16.msra.mxu0 %v108
    %128 = vmatprep.subr.bf16.mxu0 0
    %129 = vmatpush1.bf16.msra.mxu0 %v107
    %130 = vmatprep.subr.bf16.mxu0 0
    %131 = vmatpush1.bf16.msra.mxu0 %v106
    %132 = vmatprep.subr.bf16.mxu0 0
    %133 = vmatpush1.bf16.msra.mxu0 %v105
    %134 = vmatprep.subr.bf16.mxu0 0
    %135 = vmatpush1.bf16.msra.mxu0 %v104
    %136 = vmatprep.subr.bf16.mxu0 0
    %137 = vmatpush2.bf16.msra.mxu0 0
    %138 = vmatprep.subr.bf16.mxu0 0
    %139 = vmatpush2.bf16.msra.mxu0 0
    %140 = vmatprep.subr.bf16.mxu0 0
    %141 = vmatpush2.bf16.msra.mxu0 0
    %142 = vmatprep.subr.bf16.mxu0 0
    %143 = vmatpush2.bf16.msra.mxu0 0
    %144 = vmatprep.subr.bf16.mxu0 0
    %145 = vmatpush2.bf16.msra.mxu0 0
    %146 = vmatprep.subr.bf16.mxu0 0
    %147 = vmatpush2.bf16.msra.mxu0 0
    %148 = vmatprep.subr.bf16.mxu0 0
    %149 = vmatpush2.bf16.msra.mxu0 0
    %150 = vmatprep.subr.bf16.mxu0 0
    %151 = vmatpush2.bf16.msra.mxu0 0
    %152 = vmatprep.mubr.bf16.mxu0 0
    %153 = vmatmul.mubr.bf16.gmra.mxu0 %v48
    %v154 = vpop.f32.mrf.mxu0
    %v155 = vadd.f32 %v70, %v154
    %v156 = vpop.f32.mrf.mxu0
    %v157 = vpop.f32.mrf.mxu0
    %v158 = vadd.f32 %v70, %v157
    %v159 = vpop.f32.mrf.mxu0
    %160 = vdwg.mxu0
    %s161 = scalar_lea.vmem %s1, 256
    %v162 = vld [vmem:[%s161] sm:$0xf]
    %v163 = vld [vmem:[%s161 + $0x4] sm:$0xf]
    %v164 = vld [vmem:[%s161 + $0x8] sm:$0xf]
    %v165 = vld [vmem:[%s161 + $0xc] sm:$0xf]
    %v166 = vld [vmem:[%s161 + $0x10] sm:$0xf]
    %v167 = vld [vmem:[%s161 + $0x14] sm:$0xf]
    %v168 = vld [vmem:[%s161 + $0x18] sm:$0xf]
    %v169 = vld [vmem:[%s161 + $0x1c] sm:$0xf]
    %v170 = vld [vmem:[%s161 + $0x20] sm:$0xf]
    %v171 = vld [vmem:[%s161 + $0x24] sm:$0xf]
    %v172 = vld [vmem:[%s161 + $0x28] sm:$0xf]
    %v173 = vld [vmem:[%s161 + $0x2c] sm:$0xf]
    %v174 = vld [vmem:[%s161 + $0x30] sm:$0xf]
    %v175 = vld [vmem:[%s161 + $0x34] sm:$0xf]
    %v176 = vld [vmem:[%s161 + $0x38] sm:$0xf]
    %v177 = vld [vmem:[%s161 + $0x3c] sm:$0xf]
    %s178 = scalar_lea.vmem %s2, 4
    %v179 = vld [vmem:[%s178] sm:$0x1]
    %v181 = vlaneseq
    %v182 = vshrl.u32 %v181, 7
    %v183 = vsub.s32 0, %v182
    %v184 = vrot.slane %v179, %v183
    %v202 = vunpack.c.l.b16 %v162
    %v203 = vunpack.c.l.b16 %v163
    %v204 = vunpack.c.l.b16 %v164
    %v205 = vunpack.c.l.b16 %v165
    %v206 = vunpack.c.l.b16 %v166
    %v207 = vunpack.c.l.b16 %v167
    %v208 = vunpack.c.l.b16 %v168
    %v209 = vunpack.c.l.b16 %v169
    %v210 = vunpack.c.l.b16 %v170
    %v211 = vunpack.c.l.b16 %v171
    %v212 = vunpack.c.l.b16 %v172
    %v213 = vunpack.c.l.b16 %v173
    %v214 = vunpack.c.l.b16 %v174
    %v215 = vunpack.c.l.b16 %v175
    %v216 = vunpack.c.l.b16 %v176
    %v217 = vunpack.c.l.b16 %v177
    %v218 = vpack.c.b16 %v203, %v202
    %v219 = vpack.c.b16 %v205, %v204
    %v220 = vpack.c.b16 %v207, %v206
    %v221 = vpack.c.b16 %v209, %v208
    %v222 = vpack.c.b16 %v211, %v210
    %v223 = vpack.c.b16 %v213, %v212
    %v224 = vpack.c.b16 %v215, %v214
    %v225 = vpack.c.b16 %v217, %v216
    %234 = vmatprep.subr.bf16.mxu0 0
    %235 = vmatpush1.bf16.msra.mxu0 %v225
    %236 = vmatprep.subr.bf16.mxu0 0
    %237 = vmatpush1.bf16.msra.mxu0 %v224
    %238 = vmatprep.subr.bf16.mxu0 0
    %239 = vmatpush1.bf16.msra.mxu0 %v223
    %240 = vmatprep.subr.bf16.mxu0 0
    %241 = vmatpush1.bf16.msra.mxu0 %v222
    %242 = vmatprep.subr.bf16.mxu0 0
    %243 = vmatpush1.bf16.msra.mxu0 %v221
    %244 = vmatprep.subr.bf16.mxu0 0
    %245 = vmatpush1.bf16.msra.mxu0 %v220
    %246 = vmatprep.subr.bf16.mxu0 0
    %247 = vmatpush1.bf16.msra.mxu0 %v219
    %248 = vmatprep.subr.bf16.mxu0 0
    %249 = vmatpush1.bf16.msra.mxu0 %v218
    %250 = vmatprep.subr.bf16.mxu0 0
    %251 = vmatpush2.bf16.msra.mxu0 0
    %252 = vmatprep.subr.bf16.mxu0 0
    %253 = vmatpush2.bf16.msra.mxu0 0
    %254 = vmatprep.subr.bf16.mxu0 0
    %255 = vmatpush2.bf16.msra.mxu0 0
    %256 = vmatprep.subr.bf16.mxu0 0
    %257 = vmatpush2.bf16.msra.mxu0 0
    %258 = vmatprep.subr.bf16.mxu0 0
    %259 = vmatpush2.bf16.msra.mxu0 0
    %260 = vmatprep.subr.bf16.mxu0 0
    %261 = vmatpush2.bf16.msra.mxu0 0
    %262 = vmatprep.subr.bf16.mxu0 0
    %263 = vmatpush2.bf16.msra.mxu0 0
    %264 = vmatprep.subr.bf16.mxu0 0
    %265 = vmatpush2.bf16.msra.mxu0 0
    %266 = vmatprep.mubr.bf16.mxu0 0
    %267 = vmatmul.mubr.bf16.gmra.mxu0 %v48
    %v268 = vpop.f32.mrf.mxu0
    %v269 = vadd.f32 %v184, %v268
    %v270 = vpop.f32.mrf.mxu0
    %v271 = vpop.f32.mrf.mxu0
    %v272 = vadd.f32 %v184, %v271
    %v273 = vpop.f32.mrf.mxu0
    %274 = vdwg.mxu0
    %s275 = scalar_lea.vmem %s1, 512
    %v276 = vld [vmem:[%s275] sm:$0xf]
    %v277 = vld [vmem:[%s275 + $0x4] sm:$0xf]
    %v278 = vld [vmem:[%s275 + $0x8] sm:$0xf]
    %v279 = vld [vmem:[%s275 + $0xc] sm:$0xf]
    %v280 = vld [vmem:[%s275 + $0x10] sm:$0xf]
    %v281 = vld [vmem:[%s275 + $0x14] sm:$0xf]
    %v282 = vld [vmem:[%s275 + $0x18] sm:$0xf]
    %v283 = vld [vmem:[%s275 + $0x1c] sm:$0xf]
    %v284 = vld [vmem:[%s275 + $0x20] sm:$0xf]
    %v285 = vld [vmem:[%s275 + $0x24] sm:$0xf]
    %v286 = vld [vmem:[%s275 + $0x28] sm:$0xf]
    %v287 = vld [vmem:[%s275 + $0x2c] sm:$0xf]
    %v288 = vld [vmem:[%s275 + $0x30] sm:$0xf]
    %v289 = vld [vmem:[%s275 + $0x34] sm:$0xf]
    %v290 = vld [vmem:[%s275 + $0x38] sm:$0xf]
    %v291 = vld [vmem:[%s275 + $0x3c] sm:$0xf]
    %s292 = scalar_lea.vmem %s2, 8
    %v293 = vld [vmem:[%s292] sm:$0x1]
    %v295 = vlaneseq
    %v296 = vshrl.u32 %v295, 7
    %v297 = vsub.s32 0, %v296
    %v298 = vrot.slane %v293, %v297
    %v316 = vunpack.c.l.b16 %v276
    %v317 = vunpack.c.l.b16 %v277
    %v318 = vunpack.c.l.b16 %v278
    %v319 = vunpack.c.l.b16 %v279
    %v320 = vunpack.c.l.b16 %v280
    %v321 = vunpack.c.l.b16 %v281
    %v322 = vunpack.c.l.b16 %v282
    %v323 = vunpack.c.l.b16 %v283
    %v324 = vunpack.c.l.b16 %v284
    %v325 = vunpack.c.l.b16 %v285
    %v326 = vunpack.c.l.b16 %v286
    %v327 = vunpack.c.l.b16 %v287
    %v328 = vunpack.c.l.b16 %v288
    %v329 = vunpack.c.l.b16 %v289
    %v330 = vunpack.c.l.b16 %v290
    %v331 = vunpack.c.l.b16 %v291
    %v332 = vpack.c.b16 %v317, %v316
    %v333 = vpack.c.b16 %v319, %v318
    %v334 = vpack.c.b16 %v321, %v320
    %v335 = vpack.c.b16 %v323, %v322
    %v336 = vpack.c.b16 %v325, %v324
    %v337 = vpack.c.b16 %v327, %v326
    %v338 = vpack.c.b16 %v329, %v328
    %v339 = vpack.c.b16 %v331, %v330
    %348 = vmatprep.subr.bf16.mxu0 0
    %349 = vmatpush1.bf16.msra.mxu0 %v339
    %350 = vmatprep.subr.bf16.mxu0 0
    %351 = vmatpush1.bf16.msra.mxu0 %v338
    %352 = vmatprep.subr.bf16.mxu0 0
    %353 = vmatpush1.bf16.msra.mxu0 %v337
    %354 = vmatprep.subr.bf16.mxu0 0
    %355 = vmatpush1.bf16.msra.mxu0 %v336
    %356 = vmatprep.subr.bf16.mxu0 0
    %357 = vmatpush1.bf16.msra.mxu0 %v335
    %358 = vmatprep.subr.bf16.mxu0 0
    %359 = vmatpush1.bf16.msra.mxu0 %v334
    %360 = vmatprep.subr.bf16.mxu0 0
    %361 = vmatpush1.bf16.msra.mxu0 %v333
    %362 = vmatprep.subr.bf16.mxu0 0
    %363 = vmatpush1.bf16.msra.mxu0 %v332
    %364 = vmatprep.subr.bf16.mxu0 0
    %365 = vmatpush2.bf16.msra.mxu0 0
    %366 = vmatprep.subr.bf16.mxu0 0
    %367 = vmatpush2.bf16.msra.mxu0 0
    %368 = vmatprep.subr.bf16.mxu0 0
    %369 = vmatpush2.bf16.msra.mxu0 0
    %370 = vmatprep.subr.bf16.mxu0 0
    %371 = vmatpush2.bf16.msra.mxu0 0
    %372 = vmatprep.subr.bf16.mxu0 0
    %373 = vmatpush2.bf16.msra.mxu0 0
    %374 = vmatprep.subr.bf16.mxu0 0
    %375 = vmatpush2.bf16.msra.mxu0 0
    %376 = vmatprep.subr.bf16.mxu0 0
    %377 = vmatpush2.bf16.msra.mxu0 0
    %378 = vmatprep.subr.bf16.mxu0 0
    %379 = vmatpush2.bf16.msra.mxu0 0
    %380 = vmatprep.mubr.bf16.mxu0 0
    %381 = vmatmul.mubr.bf16.gmra.mxu0 %v48
    %v382 = vpop.f32.mrf.mxu0
    %v383 = vadd.f32 %v298, %v382
    %v384 = vpop.f32.mrf.mxu0
    %v385 = vpop.f32.mrf.mxu0
    %v386 = vadd.f32 %v298, %v385
    %v387 = vpop.f32.mrf.mxu0
    %388 = vdwg.mxu0
    %v389 = vmul.f32 %v155, 0.17677669
    %v390 = vmul.f32 %v158, 0.17677669
    %v391 = vpack.c.bf16 %v390, %v389
    %v393 = vunpack.c.l.b16 %v391
    %v394 = vunpack.c.h.b16 %v391
    %v395 = vpack.c.b16 %v393, %v393
    %v396 = vpack.c.b16 %v394, %v394
    %v397 = vpack.c.bf16 %v272, %v269
    %v399 = vunpack.c.l.b16 %v397
    %v400 = vunpack.c.h.b16 %v397
    %v401 = vpack.c.b16 %v399, %v399
    %v402 = vpack.c.b16 %v400, %v400
    %v403 = vpack.c.bf16 %v386, %v383
    %v405 = vunpack.c.l.b16 %v403
    %v406 = vunpack.c.h.b16 %v403
    %v407 = vpack.c.b16 %v405, %v405
    %v408 = vpack.c.b16 %v406, %v406
    %vm409 = vcmask 261120
    %v411 = vsel %vm409, %v395, 0
    %v414 = vsel %vm409, %v401, 0
    %416 = vmatprep.subr.bf16.mxu0 0
    %417 = vmatpush1.bf16.xpose.msra.mxu0 0
    %418 = vmatprep.subr.bf16.mxu0 0
    %419 = vmatpush1.bf16.xpose.msra.mxu0 0
    %420 = vmatprep.subr.bf16.mxu0 0
    %421 = vmatpush1.bf16.xpose.msra.mxu0 0
    %422 = vmatprep.subr.bf16.mxu0 0
    %423 = vmatpush1.bf16.xpose.msra.mxu0 0
    %424 = vmatprep.subr.bf16.mxu0 0
    %425 = vmatpush1.bf16.xpose.msra.mxu0 0
    %426 = vmatprep.subr.bf16.mxu0 0
    %427 = vmatpush1.bf16.xpose.msra.mxu0 0
    %428 = vmatprep.subr.bf16.mxu0 0
    %429 = vmatpush1.bf16.xpose.msra.mxu0 0
    %430 = vmatprep.subr.bf16.mxu0 0
    %431 = vmatpush1.bf16.xpose.msra.mxu0 %v414
    %432 = vmatprep.subr.bf16.mxu0 0
    %433 = vmatpush2.bf16.xpose.msra.mxu0 0
    %434 = vmatprep.subr.bf16.mxu0 0
    %435 = vmatpush2.bf16.xpose.msra.mxu0 0
    %436 = vmatprep.subr.bf16.mxu0 0
    %437 = vmatpush2.bf16.xpose.msra.mxu0 0
    %438 = vmatprep.subr.bf16.mxu0 0
    %439 = vmatpush2.bf16.xpose.msra.mxu0 0
    %440 = vmatprep.subr.bf16.mxu0 0
    %441 = vmatpush2.bf16.xpose.msra.mxu0 0
    %442 = vmatprep.subr.bf16.mxu0 0
    %443 = vmatpush2.bf16.xpose.msra.mxu0 0
    %444 = vmatprep.subr.bf16.mxu0 0
    %445 = vmatpush2.bf16.xpose.msra.mxu0 0
    %446 = vmatprep.subr.bf16.mxu0 0
    %447 = vmatpush2.bf16.xpose.msra.mxu0 0
    %448 = vmatprep.mubr.bf16.mxu0 0
    %449 = vmatmul.mubr.bf16.gmra.mxu0 %v411
    %v450 = vpop.f32.mrf.mxu0
    %v451 = vadd.f32 0.0, %v450
    %v452 = vpop.f32.mrf.mxu0
    %v453 = vpop.f32.mrf.mxu0
    %v454 = vpop.f32.mrf.mxu0
    %455 = vdwg.mxu0
    %v457 = vsel %vm409, %v396, 0
    %v460 = vsel %vm409, %v402, 0
    %462 = vmatprep.subr.bf16.mxu0 0
    %463 = vmatpush1.bf16.xpose.msra.mxu0 0
    %464 = vmatprep.subr.bf16.mxu0 0
    %465 = vmatpush1.bf16.xpose.msra.mxu0 0
    %466 = vmatprep.subr.bf16.mxu0 0
    %467 = vmatpush1.bf16.xpose.msra.mxu0 0
    %468 = vmatprep.subr.bf16.mxu0 0
    %469 = vmatpush1.bf16.xpose.msra.mxu0 0
    %470 = vmatprep.subr.bf16.mxu0 0
    %471 = vmatpush1.bf16.xpose.msra.mxu0 0
    %472 = vmatprep.subr.bf16.mxu0 0
    %473 = vmatpush1.bf16.xpose.msra.mxu0 0
    %474 = vmatprep.subr.bf16.mxu0 0
    %475 = vmatpush1.bf16.xpose.msra.mxu0 0
    %476 = vmatprep.subr.bf16.mxu0 0
    %477 = vmatpush1.bf16.xpose.msra.mxu0 %v460
    %478 = vmatprep.subr.bf16.mxu0 0
    %479 = vmatpush2.bf16.xpose.msra.mxu0 0
    %480 = vmatprep.subr.bf16.mxu0 0
    %481 = vmatpush2.bf16.xpose.msra.mxu0 0
    %482 = vmatprep.subr.bf16.mxu0 0
    %483 = vmatpush2.bf16.xpose.msra.mxu0 0
    %484 = vmatprep.subr.bf16.mxu0 0
    %485 = vmatpush2.bf16.xpose.msra.mxu0 0
    %486 = vmatprep.subr.bf16.mxu0 0
    %487 = vmatpush2.bf16.xpose.msra.mxu0 0
    %488 = vmatprep.subr.bf16.mxu0 0
    %489 = vmatpush2.bf16.xpose.msra.mxu0 0
    %490 = vmatprep.subr.bf16.mxu0 0
    %491 = vmatpush2.bf16.xpose.msra.mxu0 0
    %492 = vmatprep.subr.bf16.mxu0 0
    %493 = vmatpush2.bf16.xpose.msra.mxu0 0
    %494 = vmatprep.mubr.bf16.mxu0 0
    %495 = vmatmul.mubr.bf16.gmra.mxu0 %v457
    %v496 = vpop.f32.mrf.mxu0
    %v497 = vadd.f32 0.0, %v496
    %v498 = vpop.f32.mrf.mxu0
    %v499 = vpop.f32.mrf.mxu0
    %v500 = vpop.f32.mrf.mxu0
    %501 = vdwg.mxu0
    %vm502 = vcmask 64512
    %v503 = vsel %vm502, %v451, -inf
    %504 = vmax.xlane.f32.xlu0 %v503
    %v505 = vpop.xlane.xlu0 %504
    %v506 = vsel %vm502, %v497, -inf
    %507 = vmax.xlane.f32.xlu0 %v506
    %v508 = vpop.xlane.xlu0 %507
    %v509 = vsub.f32 %v451, %v505
    %v510 = vsub.f32 %v497, %v508
    %v511 = vmul.f32 %v509, 1.442695
    %v512 = vpow.pop %v511
    %v513 = vmul.f32 %v510, 1.442695
    %v514 = vpow.pop %v513
    %v515 = vsel %vm502, %v512, 0.0
    %516 = vadd.xlane.f32.xlu0 %v515
    %v517 = vpop.xlane.xlu0 %516
    %v518 = vsel %vm502, %v514, 0.0
    %519 = vadd.xlane.f32.xlu0 %v518
    %v520 = vpop.xlane.xlu0 %519
    %v521 = vrcp.pop %v517
    %v522 = vrcp.pop %v520
    %v523 = vmul.f32 %v512, %v521
    %v524 = vmul.f32 %v514, %v522
    %v525 = vpack.c.bf16 %v523, %v523
    %v526 = vpack.c.bf16 %v524, %v524
    %v528 = vsel %vm502, %v525, 0
    %vm530 = vcmask 1043456
    %v532 = vsel %vm530, %v407, 0
    %534 = vmatprep.subr.bf16.mxu0 0
    %535 = vmatpush1.bf16.msra.mxu0 0
    %536 = vmatprep.subr.bf16.mxu0 0
    %537 = vmatpush1.bf16.msra.mxu0 0
    %538 = vmatprep.subr.bf16.mxu0 0
    %539 = vmatpush1.bf16.msra.mxu0 0
    %540 = vmatprep.subr.bf16.mxu0 0
    %541 = vmatpush1.bf16.msra.mxu0 0
    %542 = vmatprep.subr.bf16.mxu0 0
    %543 = vmatpush1.bf16.msra.mxu0 0
    %544 = vmatprep.subr.bf16.mxu0 0
    %545 = vmatpush1.bf16.msra.mxu0 0
    %546 = vmatprep.subr.bf16.mxu0 0
    %547 = vmatpush1.bf16.msra.mxu0 0
    %548 = vmatprep.subr.bf16.mxu0 0
    %549 = vmatpush1.bf16.msra.mxu0 %v532
    %550 = vmatprep.subr.bf16.mxu0 0
    %551 = vmatpush2.bf16.msra.mxu0 0
    %552 = vmatprep.subr.bf16.mxu0 0
    %553 = vmatpush2.bf16.msra.mxu0 0
    %554 = vmatprep.subr.bf16.mxu0 0
    %555 = vmatpush2.bf16.msra.mxu0 0
    %556 = vmatprep.subr.bf16.mxu0 0
    %557 = vmatpush2.bf16.msra.mxu0 0
    %558 = vmatprep.subr.bf16.mxu0 0
    %559 = vmatpush2.bf16.msra.mxu0 0
    %560 = vmatprep.subr.bf16.mxu0 0
    %561 = vmatpush2.bf16.msra.mxu0 0
    %562 = vmatprep.subr.bf16.mxu0 0
    %563 = vmatpush2.bf16.msra.mxu0 0
    %564 = vmatprep.subr.bf16.mxu0 0
    %565 = vmatpush2.bf16.msra.mxu0 0
    %566 = vmatprep.mubr.bf16.mxu0 0
    %567 = vmatmul.mubr.bf16.gmra.mxu0 %v528
    %v568 = vpop.f32.mrf.mxu0
    %v569 = vadd.f32 0.0, %v568
    %v570 = vpop.f32.mrf.mxu0
    %v571 = vpop.f32.mrf.mxu0
    %v572 = vpop.f32.mrf.mxu0
    %573 = vdwg.mxu0
    %v575 = vsel %vm502, %v526, 0
    %v578 = vsel %vm530, %v408, 0
    %580 = vmatprep.subr.bf16.mxu0 0
    %581 = vmatpush1.bf16.msra.mxu0 0
    %582 = vmatprep.subr.bf16.mxu0 0
    %583 = vmatpush1.bf16.msra.mxu0 0
    %584 = vmatprep.subr.bf16.mxu0 0
    %585 = vmatpush1.bf16.msra.mxu0 0
    %586 = vmatprep.subr.bf16.mxu0 0
    %587 = vmatpush1.bf16.msra.mxu0 0
    %588 = vmatprep.subr.bf16.mxu0 0
    %589 = vmatpush1.bf16.msra.mxu0 0
    %590 = vmatprep.subr.bf16.mxu0 0
    %591 = vmatpush1.bf16.msra.mxu0 0
    %592 = vmatprep.subr.bf16.mxu0 0
    %593 = vmatpush1.bf16.msra.mxu0 0
    %594 = vmatprep.subr.bf16.mxu0 0
    %595 = vmatpush1.bf16.msra.mxu0 %v578
    %596 = vmatprep.subr.bf16.mxu0 0
    %597 = vmatpush2.bf16.msra.mxu0 0
    %598 = vmatprep.subr.bf16.mxu0 0
    %599 = vmatpush2.bf16.msra.mxu0 0
    %600 = vmatprep.subr.bf16.mxu0 0
    %601 = vmatpush2.bf16.msra.mxu0 0
    %602 = vmatprep.subr.bf16.mxu0 0
    %603 = vmatpush2.bf16.msra.mxu0 0
    %604 = vmatprep.subr.bf16.mxu0 0
    %605 = vmatpush2.bf16.msra.mxu0 0
    %606 = vmatprep.subr.bf16.mxu0 0
    %607 = vmatpush2.bf16.msra.mxu0 0
    %608 = vmatprep.subr.bf16.mxu0 0
    %609 = vmatpush2.bf16.msra.mxu0 0
    %610 = vmatprep.subr.bf16.mxu0 0
    %611 = vmatpush2.bf16.msra.mxu0 0
    %612 = vmatprep.mubr.bf16.mxu0 0
    %613 = vmatmul.mubr.bf16.gmra.mxu0 %v575
    %v614 = vpop.f32.mrf.mxu0
    %v615 = vadd.f32 0.0, %v614
    %v616 = vpop.f32.mrf.mxu0
    %v617 = vpop.f32.mrf.mxu0
    %v618 = vpop.f32.mrf.mxu0
    %619 = vdwg.mxu0
    %v620 = vpack.c.bf16 %v615, %v569
    %v621 = vld [vmem:[%s3] sm:$0xf]
    %v622 = vld [vmem:[%s3 + $0x4] sm:$0xf]
    %v623 = vld [vmem:[%s3 + $0x8] sm:$0xf]
    %v624 = vld [vmem:[%s3 + $0xc] sm:$0xf]
    %s625 = scalar_lea.vmem %s1, 64
    %v626 = vld [vmem:[%s625] sm:$0xf]
    %v627 = vld [vmem:[%s625 + $0x4] sm:$0xf]
    %v628 = vld [vmem:[%s625 + $0x8] sm:$0xf]
    %v629 = vld [vmem:[%s625 + $0xc] sm:$0xf]
    %v630 = vld [vmem:[%s625 + $0x10] sm:$0xf]
    %v631 = vld [vmem:[%s625 + $0x14] sm:$0xf]
    %v632 = vld [vmem:[%s625 + $0x18] sm:$0xf]
    %v633 = vld [vmem:[%s625 + $0x1c] sm:$0xf]
    %v634 = vld [vmem:[%s625 + $0x20] sm:$0xf]
    %v635 = vld [vmem:[%s625 + $0x24] sm:$0xf]
    %v636 = vld [vmem:[%s625 + $0x28] sm:$0xf]
    %v637 = vld [vmem:[%s625 + $0x2c] sm:$0xf]
    %v638 = vld [vmem:[%s625 + $0x30] sm:$0xf]
    %v639 = vld [vmem:[%s625 + $0x34] sm:$0xf]
    %v640 = vld [vmem:[%s625 + $0x38] sm:$0xf]
    %v641 = vld [vmem:[%s625 + $0x3c] sm:$0xf]
    %s642 = scalar_lea.vmem %s2, 1
    %v643 = vld [vmem:[%s642] sm:$0x1]
    %v645 = vlaneseq
    %v646 = vshrl.u32 %v645, 7
    %v647 = vsub.s32 0, %v646
    %v648 = vrot.slane %v643, %v647
    %v666 = vunpack.c.l.b16 %v626
    %v667 = vunpack.c.l.b16 %v627
    %v668 = vunpack.c.l.b16 %v628
    %v669 = vunpack.c.l.b16 %v629
    %v670 = vunpack.c.l.b16 %v630
    %v671 = vunpack.c.l.b16 %v631
    %v672 = vunpack.c.l.b16 %v632
    %v673 = vunpack.c.l.b16 %v633
    %v674 = vunpack.c.l.b16 %v634
    %v675 = vunpack.c.l.b16 %v635
    %v676 = vunpack.c.l.b16 %v636
    %v677 = vunpack.c.l.b16 %v637
    %v678 = vunpack.c.l.b16 %v638
    %v679 = vunpack.c.l.b16 %v639
    %v680 = vunpack.c.l.b16 %v640
    %v681 = vunpack.c.l.b16 %v641
    %v682 = vpack.c.b16 %v667, %v666
    %v683 = vpack.c.b16 %v669, %v668
    %v684 = vpack.c.b16 %v671, %v670
    %v685 = vpack.c.b16 %v673, %v672
    %v686 = vpack.c.b16 %v675, %v674
    %v687 = vpack.c.b16 %v677, %v676
    %v688 = vpack.c.b16 %v679, %v678
    %v689 = vpack.c.b16 %v681, %v680
    %698 = vmatprep.subr.bf16.mxu0 0
    %699 = vmatpush1.bf16.msra.mxu0 %v689
    %700 = vmatprep.subr.bf16.mxu0 0
    %701 = vmatpush1.bf16.msra.mxu0 %v688
    %702 = vmatprep.subr.bf16.mxu0 0
    %703 = vmatpush1.bf16.msra.mxu0 %v687
    %704 = vmatprep.subr.bf16.mxu0 0
    %705 = vmatpush1.bf16.msra.mxu0 %v686
    %706 = vmatprep.subr.bf16.mxu0 0
    %707 = vmatpush1.bf16.msra.mxu0 %v685
    %708 = vmatprep.subr.bf16.mxu0 0
    %709 = vmatpush1.bf16.msra.mxu0 %v684
    %710 = vmatprep.subr.bf16.mxu0 0
    %711 = vmatpush1.bf16.msra.mxu0 %v683
    %712 = vmatprep.subr.bf16.mxu0 0
    %713 = vmatpush1.bf16.msra.mxu0 %v682
    %714 = vmatprep.subr.bf16.mxu0 0
    %715 = vmatpush2.bf16.msra.mxu0 0
    %716 = vmatprep.subr.bf16.mxu0 0
    %717 = vmatpush2.bf16.msra.mxu0 0
    %718 = vmatprep.subr.bf16.mxu0 0
    %719 = vmatpush2.bf16.msra.mxu0 0
    %720 = vmatprep.subr.bf16.mxu0 0
    %721 = vmatpush2.bf16.msra.mxu0 0
    %722 = vmatprep.subr.bf16.mxu0 0
    %723 = vmatpush2.bf16.msra.mxu0 0
    %724 = vmatprep.subr.bf16.mxu0 0
    %725 = vmatpush2.bf16.msra.mxu0 0
    %726 = vmatprep.subr.bf16.mxu0 0
    %727 = vmatpush2.bf16.msra.mxu0 0
    %728 = vmatprep.subr.bf16.mxu0 0
    %729 = vmatpush2.bf16.msra.mxu0 0
    %730 = vmatprep.mubr.bf16.mxu0 0
    %731 = vmatmul.mubr.bf16.gmra.mxu0 %v48
    %v732 = vpop.f32.mrf.mxu0
    %v733 = vadd.f32 %v648, %v732
    %v734 = vpop.f32.mrf.mxu0
    %v735 = vpop.f32.mrf.mxu0
    %v736 = vadd.f32 %v648, %v735
    %v737 = vpop.f32.mrf.mxu0
    %738 = vdwg.mxu0
    %s739 = scalar_lea.vmem %s1, 320
    %v740 = vld [vmem:[%s739] sm:$0xf]
    %v741 = vld [vmem:[%s739 + $0x4] sm:$0xf]
    %v742 = vld [vmem:[%s739 + $0x8] sm:$0xf]
    %v743 = vld [vmem:[%s739 + $0xc] sm:$0xf]
    %v744 = vld [vmem:[%s739 + $0x10] sm:$0xf]
    %v745 = vld [vmem:[%s739 + $0x14] sm:$0xf]
    %v746 = vld [vmem:[%s739 + $0x18] sm:$0xf]
    %v747 = vld [vmem:[%s739 + $0x1c] sm:$0xf]
    %v748 = vld [vmem:[%s739 + $0x20] sm:$0xf]
    %v749 = vld [vmem:[%s739 + $0x24] sm:$0xf]
    %v750 = vld [vmem:[%s739 + $0x28] sm:$0xf]
    %v751 = vld [vmem:[%s739 + $0x2c] sm:$0xf]
    %v752 = vld [vmem:[%s739 + $0x30] sm:$0xf]
    %v753 = vld [vmem:[%s739 + $0x34] sm:$0xf]
    %v754 = vld [vmem:[%s739 + $0x38] sm:$0xf]
    %v755 = vld [vmem:[%s739 + $0x3c] sm:$0xf]
    %s756 = scalar_lea.vmem %s2, 5
    %v757 = vld [vmem:[%s756] sm:$0x1]
    %v759 = vlaneseq
    %v760 = vshrl.u32 %v759, 7
    %v761 = vsub.s32 0, %v760
    %v762 = vrot.slane %v757, %v761
    %v780 = vunpack.c.l.b16 %v740
    %v781 = vunpack.c.l.b16 %v741
    %v782 = vunpack.c.l.b16 %v742
    %v783 = vunpack.c.l.b16 %v743
    %v784 = vunpack.c.l.b16 %v744
    %v785 = vunpack.c.l.b16 %v745
    %v786 = vunpack.c.l.b16 %v746
    %v787 = vunpack.c.l.b16 %v747
    %v788 = vunpack.c.l.b16 %v748
    %v789 = vunpack.c.l.b16 %v749
    %v790 = vunpack.c.l.b16 %v750
    %v791 = vunpack.c.l.b16 %v751
    %v792 = vunpack.c.l.b16 %v752
    %v793 = vunpack.c.l.b16 %v753
    %v794 = vunpack.c.l.b16 %v754
    %v795 = vunpack.c.l.b16 %v755
    %v796 = vpack.c.b16 %v781, %v780
    %v797 = vpack.c.b16 %v783, %v782
    %v798 = vpack.c.b16 %v785, %v784
    %v799 = vpack.c.b16 %v787, %v786
    %v800 = vpack.c.b16 %v789, %v788
    %v801 = vpack.c.b16 %v791, %v790
    %v802 = vpack.c.b16 %v793, %v792
    %v803 = vpack.c.b16 %v795, %v794
    %812 = vmatprep.subr.bf16.mxu0 0
    %813 = vmatpush1.bf16.msra.mxu0 %v803
    %814 = vmatprep.subr.bf16.mxu0 0
    %815 = vmatpush1.bf16.msra.mxu0 %v802
    %816 = vmatprep.subr.bf16.mxu0 0
    %817 = vmatpush1.bf16.msra.mxu0 %v801
    %818 = vmatprep.subr.bf16.mxu0 0
    %819 = vmatpush1.bf16.msra.mxu0 %v800
    %820 = vmatprep.subr.bf16.mxu0 0
    %821 = vmatpush1.bf16.msra.mxu0 %v799
    %822 = vmatprep.subr.bf16.mxu0 0
    %823 = vmatpush1.bf16.msra.mxu0 %v798
    %824 = vmatprep.subr.bf16.mxu0 0
    %825 = vmatpush1.bf16.msra.mxu0 %v797
    %826 = vmatprep.subr.bf16.mxu0 0
    %827 = vmatpush1.bf16.msra.mxu0 %v796
    %828 = vmatprep.subr.bf16.mxu0 0
    %829 = vmatpush2.bf16.msra.mxu0 0
    %830 = vmatprep.subr.bf16.mxu0 0
    %831 = vmatpush2.bf16.msra.mxu0 0
    %832 = vmatprep.subr.bf16.mxu0 0
    %833 = vmatpush2.bf16.msra.mxu0 0
    %834 = vmatprep.subr.bf16.mxu0 0
    %835 = vmatpush2.bf16.msra.mxu0 0
    %836 = vmatprep.subr.bf16.mxu0 0
    %837 = vmatpush2.bf16.msra.mxu0 0
    %838 = vmatprep.subr.bf16.mxu0 0
    %839 = vmatpush2.bf16.msra.mxu0 0
    %840 = vmatprep.subr.bf16.mxu0 0
    %841 = vmatpush2.bf16.msra.mxu0 0
    %842 = vmatprep.subr.bf16.mxu0 0
    %843 = vmatpush2.bf16.msra.mxu0 0
    %844 = vmatprep.mubr.bf16.mxu0 0
    %845 = vmatmul.mubr.bf16.gmra.mxu0 %v48
    %v846 = vpop.f32.mrf.mxu0
    %v847 = vadd.f32 %v762, %v846
    %v848 = vpop.f32.mrf.mxu0
    %v849 = vpop.f32.mrf.mxu0
    %v850 = vadd.f32 %v762, %v849
    %v851 = vpop.f32.mrf.mxu0
    %852 = vdwg.mxu0
    %s853 = scalar_lea.vmem %s1, 576
    %v854 = vld [vmem:[%s853] sm:$0xf]
    %v855 = vld [vmem:[%s853 + $0x4] sm:$0xf]
    %v856 = vld [vmem:[%s853 + $0x8] sm:$0xf]
    %v857 = vld [vmem:[%s853 + $0xc] sm:$0xf]
    %v858 = vld [vmem:[%s853 + $0x10] sm:$0xf]
    %v859 = vld [vmem:[%s853 + $0x14] sm:$0xf]
    %v860 = vld [vmem:[%s853 + $0x18] sm:$0xf]
    %v861 = vld [vmem:[%s853 + $0x1c] sm:$0xf]
    %v862 = vld [vmem:[%s853 + $0x20] sm:$0xf]
    %v863 = vld [vmem:[%s853 + $0x24] sm:$0xf]
    %v864 = vld [vmem:[%s853 + $0x28] sm:$0xf]
    %v865 = vld [vmem:[%s853 + $0x2c] sm:$0xf]
    %v866 = vld [vmem:[%s853 + $0x30] sm:$0xf]
    %v867 = vld [vmem:[%s853 + $0x34] sm:$0xf]
    %v868 = vld [vmem:[%s853 + $0x38] sm:$0xf]
    %v869 = vld [vmem:[%s853 + $0x3c] sm:$0xf]
    %s870 = scalar_lea.vmem %s2, 9
    %v871 = vld [vmem:[%s870] sm:$0x1]
    %v873 = vlaneseq
    %v874 = vshrl.u32 %v873, 7
    %v875 = vsub.s32 0, %v874
    %v876 = vrot.slane %v871, %v875
    %v894 = vunpack.c.l.b16 %v854
    %v895 = vunpack.c.l.b16 %v855
    %v896 = vunpack.c.l.b16 %v856
    %v897 = vunpack.c.l.b16 %v857
    %v898 = vunpack.c.l.b16 %v858
    %v899 = vunpack.c.l.b16 %v859
    %v900 = vunpack.c.l.b16 %v860
    %v901 = vunpack.c.l.b16 %v861
    %v902 = vunpack.c.l.b16 %v862
    %v903 = vunpack.c.l.b16 %v863
    %v904 = vunpack.c.l.b16 %v864
    %v905 = vunpack.c.l.b16 %v865
    %v906 = vunpack.c.l.b16 %v866
    %v907 = vunpack.c.l.b16 %v867
    %v908 = vunpack.c.l.b16 %v868
    %v909 = vunpack.c.l.b16 %v869
    %v910 = vpack.c.b16 %v895, %v894
    %v911 = vpack.c.b16 %v897, %v896
    %v912 = vpack.c.b16 %v899, %v898
    %v913 = vpack.c.b16 %v901, %v900
    %v914 = vpack.c.b16 %v903, %v902
    %v915 = vpack.c.b16 %v905, %v904
    %v916 = vpack.c.b16 %v907, %v906
    %v917 = vpack.c.b16 %v909, %v908
    %926 = vmatprep.subr.bf16.mxu0 0
    %927 = vmatpush1.bf16.msra.mxu0 %v917
    %928 = vmatprep.subr.bf16.mxu0 0
    %929 = vmatpush1.bf16.msra.mxu0 %v916
    %930 = vmatprep.subr.bf16.mxu0 0
    %931 = vmatpush1.bf16.msra.mxu0 %v915
    %932 = vmatprep.subr.bf16.mxu0 0
    %933 = vmatpush1.bf16.msra.mxu0 %v914
    %934 = vmatprep.subr.bf16.mxu0 0
    %935 = vmatpush1.bf16.msra.mxu0 %v913
    %936 = vmatprep.subr.bf16.mxu0 0
    %937 = vmatpush1.bf16.msra.mxu0 %v912
    %938 = vmatprep.subr.bf16.mxu0 0
    %939 = vmatpush1.bf16.msra.mxu0 %v911
    %940 = vmatprep.subr.bf16.mxu0 0
    %941 = vmatpush1.bf16.msra.mxu0 %v910
    %942 = vmatprep.subr.bf16.mxu0 0
    %943 = vmatpush2.bf16.msra.mxu0 0
    %944 = vmatprep.subr.bf16.mxu0 0
    %945 = vmatpush2.bf16.msra.mxu0 0
    %946 = vmatprep.subr.bf16.mxu0 0
    %947 = vmatpush2.bf16.msra.mxu0 0
    %948 = vmatprep.subr.bf16.mxu0 0
    %949 = vmatpush2.bf16.msra.mxu0 0
    %950 = vmatprep.subr.bf16.mxu0 0
    %951 = vmatpush2.bf16.msra.mxu0 0
    %952 = vmatprep.subr.bf16.mxu0 0
    %953 = vmatpush2.bf16.msra.mxu0 0
    %954 = vmatprep.subr.bf16.mxu0 0
    %955 = vmatpush2.bf16.msra.mxu0 0
    %956 = vmatprep.subr.bf16.mxu0 0
    %957 = vmatpush2.bf16.msra.mxu0 0
    %958 = vmatprep.mubr.bf16.mxu0 0
    %959 = vmatmul.mubr.bf16.gmra.mxu0 %v48
    %v960 = vpop.f32.mrf.mxu0
    %v961 = vadd.f32 %v876, %v960
    %v962 = vpop.f32.mrf.mxu0
    %v963 = vpop.f32.mrf.mxu0
    %v964 = vadd.f32 %v876, %v963
    %v965 = vpop.f32.mrf.mxu0
    %966 = vdwg.mxu0
    %v967 = vmul.f32 %v733, 0.17677669
    %v968 = vmul.f32 %v736, 0.17677669
    %v969 = vpack.c.bf16 %v968, %v967
    %v971 = vunpack.c.l.b16 %v969
    %v972 = vunpack.c.h.b16 %v969
    %v973 = vpack.c.b16 %v971, %v971
    %v974 = vpack.c.b16 %v972, %v972
    %v975 = vpack.c.bf16 %v850, %v847
    %v977 = vunpack.c.l.b16 %v975
    %v978 = vunpack.c.h.b16 %v975
    %v979 = vpack.c.b16 %v977, %v977
    %v980 = vpack.c.b16 %v978, %v978
    %v981 = vpack.c.bf16 %v964, %v961
    %v983 = vunpack.c.l.b16 %v981
    %v984 = vunpack.c.h.b16 %v981
    %v985 = vpack.c.b16 %v983, %v983
    %v986 = vpack.c.b16 %v984, %v984
    %v988 = vsel %vm409, %v973, 0
    %v991 = vsel %vm409, %v979, 0
    %993 = vmatprep.subr.bf16.mxu0 0
    %994 = vmatpush1.bf16.xpose.msra.mxu0 0
    %995 = vmatprep.subr.bf16.mxu0 0
    %996 = vmatpush1.bf16.xpose.msra.mxu0 0
    %997 = vmatprep.subr.bf16.mxu0 0
    %998 = vmatpush1.bf16.xpose.msra.mxu0 0
    %999 = vmatprep.subr.bf16.mxu0 0
    %1000 = vmatpush1.bf16.xpose.msra.mxu0 0
    %1001 = vmatprep.subr.bf16.mxu0 0
    %1002 = vmatpush1.bf16.xpose.msra.mxu0 0
    %1003 = vmatprep.subr.bf16.mxu0 0
    %1004 = vmatpush1.bf16.xpose.msra.mxu0 0
    %1005 = vmatprep.subr.bf16.mxu0 0
    %1006 = vmatpush1.bf16.xpose.msra.mxu0 0
    %1007 = vmatprep.subr.bf16.mxu0 0
    %1008 = vmatpush1.bf16.xpose.msra.mxu0 %v991
    %1009 = vmatprep.subr.bf16.mxu0 0
    %1010 = vmatpush2.bf16.xpose.msra.mxu0 0
    %1011 = vmatprep.subr.bf16.mxu0 0
    %1012 = vmatpush2.bf16.xpose.msra.mxu0 0
    %1013 = vmatprep.subr.bf16.mxu0 0
    %1014 = vmatpush2.bf16.xpose.msra.mxu0 0
    %1015 = vmatprep.subr.bf16.mxu0 0
    %1016 = vmatpush2.bf16.xpose.msra.mxu0 0
    %1017 = vmatprep.subr.bf16.mxu0 0
    %1018 = vmatpush2.bf16.xpose.msra.mxu0 0
    %1019 = vmatprep.subr.bf16.mxu0 0
    %1020 = vmatpush2.bf16.xpose.msra.mxu0 0
    %1021 = vmatprep.subr.bf16.mxu0 0
    %1022 = vmatpush2.bf16.xpose.msra.mxu0 0
    %1023 = vmatprep.subr.bf16.mxu0 0
    %1024 = vmatpush2.bf16.xpose.msra.mxu0 0
    %1025 = vmatprep.mubr.bf16.mxu0 0
    %1026 = vmatmul.mubr.bf16.gmra.mxu0 %v988
    %v1027 = vpop.f32.mrf.mxu0
    %v1028 = vadd.f32 0.0, %v1027
    %v1029 = vpop.f32.mrf.mxu0
    %v1030 = vpop.f32.mrf.mxu0
    %v1031 = vpop.f32.mrf.mxu0
    %1032 = vdwg.mxu0
    %v1034 = vsel %vm409, %v974, 0
    %v1037 = vsel %vm409, %v980, 0
    %1039 = vmatprep.subr.bf16.mxu0 0
    %1040 = vmatpush1.bf16.xpose.msra.mxu0 0
    %1041 = vmatprep.subr.bf16.mxu0 0
    %1042 = vmatpush1.bf16.xpose.msra.mxu0 0
    %1043 = vmatprep.subr.bf16.mxu0 0
    %1044 = vmatpush1.bf16.xpose.msra.mxu0 0
    %1045 = vmatprep.subr.bf16.mxu0 0
    %1046 = vmatpush1.bf16.xpose.msra.mxu0 0
    %1047 = vmatprep.subr.bf16.mxu0 0
    %1048 = vmatpush1.bf16.xpose.msra.mxu0 0
    %1049 = vmatprep.subr.bf16.mxu0 0
    %1050 = vmatpush1.bf16.xpose.msra.mxu0 0
    %1051 = vmatprep.subr.bf16.mxu0 0
    %1052 = vmatpush1.bf16.xpose.msra.mxu0 0
    %1053 = vmatprep.subr.bf16.mxu0 0
    %1054 = vmatpush1.bf16.xpose.msra.mxu0 %v1037
    %1055 = vmatprep.subr.bf16.mxu0 0
    %1056 = vmatpush2.bf16.xpose.msra.mxu0 0
    %1057 = vmatprep.subr.bf16.mxu0 0
    %1058 = vmatpush2.bf16.xpose.msra.mxu0 0
    %1059 = vmatprep.subr.bf16.mxu0 0
    %1060 = vmatpush2.bf16.xpose.msra.mxu0 0
    %1061 = vmatprep.subr.bf16.mxu0 0
    %1062 = vmatpush2.bf16.xpose.msra.mxu0 0
    %1063 = vmatprep.subr.bf16.mxu0 0
    %1064 = vmatpush2.bf16.xpose.msra.mxu0 0
    %1065 = vmatprep.subr.bf16.mxu0 0
    %1066 = vmatpush2.bf16.xpose.msra.mxu0 0
    %1067 = vmatprep.subr.bf16.mxu0 0
    %1068 = vmatpush2.bf16.xpose.msra.mxu0 0
    %1069 = vmatprep.subr.bf16.mxu0 0
    %1070 = vmatpush2.bf16.xpose.msra.mxu0 0
    %1071 = vmatprep.mubr.bf16.mxu0 0
    %1072 = vmatmul.mubr.bf16.gmra.mxu0 %v1034
    %v1073 = vpop.f32.mrf.mxu0
    %v1074 = vadd.f32 0.0, %v1073
    %v1075 = vpop.f32.mrf.mxu0
    %v1076 = vpop.f32.mrf.mxu0
    %v1077 = vpop.f32.mrf.mxu0
    %1078 = vdwg.mxu0
    %v1079 = vsel %vm502, %v1028, -inf
    %1080 = vmax.xlane.f32.xlu0 %v1079
    %v1081 = vpop.xlane.xlu0 %1080
    %v1082 = vsel %vm502, %v1074, -inf
    %1083 = vmax.xlane.f32.xlu0 %v1082
    %v1084 = vpop.xlane.xlu0 %1083
    %v1085 = vsub.f32 %v1028, %v1081
    %v1086 = vsub.f32 %v1074, %v1084
    %v1087 = vmul.f32 %v1085, 1.442695
    %v1088 = vpow.pop %v1087
    %v1089 = vmul.f32 %v1086, 1.442695
    %v1090 = vpow.pop %v1089
    %v1091 = vsel %vm502, %v1088, 0.0
    %1092 = vadd.xlane.f32.xlu0 %v1091
    %v1093 = vpop.xlane.xlu0 %1092
    %v1094 = vsel %vm502, %v1090, 0.0
    %1095 = vadd.xlane.f32.xlu0 %v1094
    %v1096 = vpop.xlane.xlu0 %1095
    %v1097 = vrcp.pop %v1093
    %v1098 = vrcp.pop %v1096
    %v1099 = vmul.f32 %v1088, %v1097
    %v1100 = vmul.f32 %v1090, %v1098
    %v1101 = vpack.c.bf16 %v1099, %v1099
    %v1102 = vpack.c.bf16 %v1100, %v1100
    %v1104 = vsel %vm502, %v1101, 0
    %v1107 = vsel %vm530, %v985, 0
    %1109 = vmatprep.subr.bf16.mxu0 0
    %1110 = vmatpush1.bf16.msra.mxu0 0
    %1111 = vmatprep.subr.bf16.mxu0 0
    %1112 = vmatpush1.bf16.msra.mxu0 0
    %1113 = vmatprep.subr.bf16.mxu0 0
    %1114 = vmatpush1.bf16.msra.mxu0 0
    %1115 = vmatprep.subr.bf16.mxu0 0
    %1116 = vmatpush1.bf16.msra.mxu0 0
    %1117 = vmatprep.subr.bf16.mxu0 0
    %1118 = vmatpush1.bf16.msra.mxu0 0
    %1119 = vmatprep.subr.bf16.mxu0 0
    %1120 = vmatpush1.bf16.msra.mxu0 0
    %1121 = vmatprep.subr.bf16.mxu0 0
    %1122 = vmatpush1.bf16.msra.mxu0 0
    %1123 = vmatprep.subr.bf16.mxu0 0
    %1124 = vmatpush1.bf16.msra.mxu0 %v1107
    %1125 = vmatprep.subr.bf16.mxu0 0
    %1126 = vmatpush2.bf16.msra.mxu0 0
    %1127 = vmatprep.subr.bf16.mxu0 0
    %1128 = vmatpush2.bf16.msra.mxu0 0
    %1129 = vmatprep.subr.bf16.mxu0 0
    %1130 = vmatpush2.bf16.msra.mxu0 0
    %1131 = vmatprep.subr.bf16.mxu0 0
    %1132 = vmatpush2.bf16.msra.mxu0 0
    %1133 = vmatprep.subr.bf16.mxu0 0
    %1134 = vmatpush2.bf16.msra.mxu0 0
    %1135 = vmatprep.subr.bf16.mxu0 0
    %1136 = vmatpush2.bf16.msra.mxu0 0
    %1137 = vmatprep.subr.bf16.mxu0 0
    %1138 = vmatpush2.bf16.msra.mxu0 0
    %1139 = vmatprep.subr.bf16.mxu0 0
    %1140 = vmatpush2.bf16.msra.mxu0 0
    %1141 = vmatprep.mubr.bf16.mxu0 0
    %1142 = vmatmul.mubr.bf16.gmra.mxu0 %v1104
    %v1143 = vpop.f32.mrf.mxu0
    %v1144 = vadd.f32 0.0, %v1143
    %v1145 = vpop.f32.mrf.mxu0
    %v1146 = vpop.f32.mrf.mxu0
    %v1147 = vpop.f32.mrf.mxu0
    %1148 = vdwg.mxu0
    %v1150 = vsel %vm502, %v1102, 0
    %v1153 = vsel %vm530, %v986, 0
    %1155 = vmatprep.subr.bf16.mxu0 0
    %1156 = vmatpush1.bf16.msra.mxu0 0
    %1157 = vmatprep.subr.bf16.mxu0 0
    %1158 = vmatpush1.bf16.msra.mxu0 0
    %1159 = vmatprep.subr.bf16.mxu0 0
    %1160 = vmatpush1.bf16.msra.mxu0 0
    %1161 = vmatprep.subr.bf16.mxu0 0
    %1162 = vmatpush1.bf16.msra.mxu0 0
    %1163 = vmatprep.subr.bf16.mxu0 0
    %1164 = vmatpush1.bf16.msra.mxu0 0
    %1165 = vmatprep.subr.bf16.mxu0 0
    %1166 = vmatpush1.bf16.msra.mxu0 0
    %1167 = vmatprep.subr.bf16.mxu0 0
    %1168 = vmatpush1.bf16.msra.mxu0 0
    %1169 = vmatprep.subr.bf16.mxu0 0
    %1170 = vmatpush1.bf16.msra.mxu0 %v1153
    %1171 = vmatprep.subr.bf16.mxu0 0
    %1172 = vmatpush2.bf16.msra.mxu0 0
    %1173 = vmatprep.subr.bf16.mxu0 0
    %1174 = vmatpush2.bf16.msra.mxu0 0
    %1175 = vmatprep.subr.bf16.mxu0 0
    %1176 = vmatpush2.bf16.msra.mxu0 0
    %1177 = vmatprep.subr.bf16.mxu0 0
    %1178 = vmatpush2.bf16.msra.mxu0 0
    %1179 = vmatprep.subr.bf16.mxu0 0
    %1180 = vmatpush2.bf16.msra.mxu0 0
    %1181 = vmatprep.subr.bf16.mxu0 0
    %1182 = vmatpush2.bf16.msra.mxu0 0
    %1183 = vmatprep.subr.bf16.mxu0 0
    %1184 = vmatpush2.bf16.msra.mxu0 0
    %1185 = vmatprep.subr.bf16.mxu0 0
    %1186 = vmatpush2.bf16.msra.mxu0 0
    %1187 = vmatprep.mubr.bf16.mxu0 0
    %1188 = vmatmul.mubr.bf16.gmra.mxu0 %v1150
    %v1189 = vpop.f32.mrf.mxu0
    %v1190 = vadd.f32 0.0, %v1189
    %v1191 = vpop.f32.mrf.mxu0
    %v1192 = vpop.f32.mrf.mxu0
    %v1193 = vpop.f32.mrf.mxu0
    %1194 = vdwg.mxu0
    %v1195 = vpack.c.bf16 %v1190, %v1144
    %s1196 = scalar_lea.vmem %s3, 16
    %v1197 = vld [vmem:[%s1196] sm:$0xf]
    %v1198 = vld [vmem:[%s1196 + $0x4] sm:$0xf]
    %v1199 = vld [vmem:[%s1196 + $0x8] sm:$0xf]
    %v1200 = vld [vmem:[%s1196 + $0xc] sm:$0xf]
    %v1205 = vunpack.c.l.b16 %v1197
    %v1206 = vunpack.c.l.b16 %v1198
    %v1207 = vunpack.c.l.b16 %v1199
    %v1208 = vunpack.c.l.b16 %v1200
    %v1209 = vpack.c.b16 %v1206, %v1205
    %v1210 = vpack.c.b16 %v1208, %v1207
    %v1214 = vsel %vm409, %v1195, 0
    %1216 = vmatprep.subr.bf16.mxu0 0
    %1217 = vmatpush1.bf16.msra.mxu0 0
    %1218 = vmatprep.subr.bf16.mxu0 0
    %1219 = vmatpush1.bf16.msra.mxu0 0
    %1220 = vmatprep.subr.bf16.mxu0 0
    %1221 = vmatpush1.bf16.msra.mxu0 0
    %1222 = vmatprep.subr.bf16.mxu0 0
    %1223 = vmatpush1.bf16.msra.mxu0 0
    %1224 = vmatprep.subr.bf16.mxu0 0
    %1225 = vmatpush1.bf16.msra.mxu0 0
    %1226 = vmatprep.subr.bf16.mxu0 0
    %1227 = vmatpush1.bf16.msra.mxu0 0
    %1228 = vmatprep.subr.bf16.mxu0 0
    %1229 = vmatpush1.bf16.msra.mxu0 %v1210
    %1230 = vmatprep.subr.bf16.mxu0 0
    %1231 = vmatpush1.bf16.msra.mxu0 %v1209
    %1232 = vmatprep.subr.bf16.mxu0 0
    %1233 = vmatpush2.bf16.msra.mxu0 0
    %1234 = vmatprep.subr.bf16.mxu0 0
    %1235 = vmatpush2.bf16.msra.mxu0 0
    %1236 = vmatprep.subr.bf16.mxu0 0
    %1237 = vmatpush2.bf16.msra.mxu0 0
    %1238 = vmatprep.subr.bf16.mxu0 0
    %1239 = vmatpush2.bf16.msra.mxu0 0
    %1240 = vmatprep.subr.bf16.mxu0 0
    %1241 = vmatpush2.bf16.msra.mxu0 0
    %1242 = vmatprep.subr.bf16.mxu0 0
    %1243 = vmatpush2.bf16.msra.mxu0 0
    %1244 = vmatprep.subr.bf16.mxu0 0
    %1245 = vmatpush2.bf16.msra.mxu0 0
    %1246 = vmatprep.subr.bf16.mxu0 0
    %1247 = vmatpush2.bf16.msra.mxu0 0
    %1248 = vmatprep.mubr.bf16.mxu0 0
    %1249 = vmatmul.mubr.bf16.gmra.mxu0 %v1214
    %v1250 = vpop.f32.mrf.mxu0
    %v1251 = vadd.f32 0.0, %v1250
    %v1252 = vpop.f32.mrf.mxu0
    %v1253 = vpop.f32.mrf.mxu0
    %v1254 = vadd.f32 0.0, %v1253
    %v1255 = vpop.f32.mrf.mxu0
    %1256 = vdwg.mxu0
    %v1261 = vunpack.c.l.b16 %v621
    %v1262 = vunpack.c.l.b16 %v622
    %v1263 = vunpack.c.l.b16 %v623
    %v1264 = vunpack.c.l.b16 %v624
    %v1265 = vpack.c.b16 %v1262, %v1261
    %v1266 = vpack.c.b16 %v1264, %v1263
    %v1270 = vsel %vm409, %v620, 0
    %1272 = vmatprep.subr.bf16.mxu0 0
    %1273 = vmatpush1.bf16.msra.mxu0 0
    %1274 = vmatprep.subr.bf16.mxu0 0
    %1275 = vmatpush1.bf16.msra.mxu0 0
    %1276 = vmatprep.subr.bf16.mxu0 0
    %1277 = vmatpush1.bf16.msra.mxu0 0
    %1278 = vmatprep.subr.bf16.mxu0 0
    %1279 = vmatpush1.bf16.msra.mxu0 0
    %1280 = vmatprep.subr.bf16.mxu0 0
    %1281 = vmatpush1.bf16.msra.mxu0 0
    %1282 = vmatprep.subr.bf16.mxu0 0
    %1283 = vmatpush1.bf16.msra.mxu0 0
    %1284 = vmatprep.subr.bf16.mxu0 0
    %1285 = vmatpush1.bf16.msra.mxu0 %v1266
    %1286 = vmatprep.subr.bf16.mxu0 0
    %1287 = vmatpush1.bf16.msra.mxu0 %v1265
    %1288 = vmatprep.subr.bf16.mxu0 0
    %1289 = vmatpush2.bf16.msra.mxu0 0
    %1290 = vmatprep.subr.bf16.mxu0 0
    %1291 = vmatpush2.bf16.msra.mxu0 0
    %1292 = vmatprep.subr.bf16.mxu0 0
    %1293 = vmatpush2.bf16.msra.mxu0 0
    %1294 = vmatprep.subr.bf16.mxu0 0
    %1295 = vmatpush2.bf16.msra.mxu0 0
    %1296 = vmatprep.subr.bf16.mxu0 0
    %1297 = vmatpush2.bf16.msra.mxu0 0
    %1298 = vmatprep.subr.bf16.mxu0 0
    %1299 = vmatpush2.bf16.msra.mxu0 0
    %1300 = vmatprep.subr.bf16.mxu0 0
    %1301 = vmatpush2.bf16.msra.mxu0 0
    %1302 = vmatprep.subr.bf16.mxu0 0
    %1303 = vmatpush2.bf16.msra.mxu0 0
    %1304 = vmatprep.mubr.bf16.mxu0 0
    %1305 = vmatmul.mubr.bf16.gmra.mxu0 %v1270
    %v1306 = vpop.f32.mrf.mxu0
    %v1307 = vadd.f32 %v1251, %v1306
    %v1308 = vpop.f32.mrf.mxu0
    %v1309 = vpop.f32.mrf.mxu0
    %v1310 = vadd.f32 %v1254, %v1309
    %v1311 = vpop.f32.mrf.mxu0
    %1312 = vdwg.mxu0
    %s1313 = scalar_lea.vmem %s1, 128
    %v1314 = vld [vmem:[%s1313] sm:$0xf]
    %v1315 = vld [vmem:[%s1313 + $0x4] sm:$0xf]
    %v1316 = vld [vmem:[%s1313 + $0x8] sm:$0xf]
    %v1317 = vld [vmem:[%s1313 + $0xc] sm:$0xf]
    %v1318 = vld [vmem:[%s1313 + $0x10] sm:$0xf]
    %v1319 = vld [vmem:[%s1313 + $0x14] sm:$0xf]
    %v1320 = vld [vmem:[%s1313 + $0x18] sm:$0xf]
    %v1321 = vld [vmem:[%s1313 + $0x1c] sm:$0xf]
    %v1322 = vld [vmem:[%s1313 + $0x20] sm:$0xf]
    %v1323 = vld [vmem:[%s1313 + $0x24] sm:$0xf]
    %v1324 = vld [vmem:[%s1313 + $0x28] sm:$0xf]
    %v1325 = vld [vmem:[%s1313 + $0x2c] sm:$0xf]
    %v1326 = vld [vmem:[%s1313 + $0x30] sm:$0xf]
    %v1327 = vld [vmem:[%s1313 + $0x34] sm:$0xf]
    %v1328 = vld [vmem:[%s1313 + $0x38] sm:$0xf]
    %v1329 = vld [vmem:[%s1313 + $0x3c] sm:$0xf]
    %s1330 = scalar_lea.vmem %s2, 2
    %v1331 = vld [vmem:[%s1330] sm:$0x1]
    %v1333 = vlaneseq
    %v1334 = vshrl.u32 %v1333, 7
    %v1335 = vsub.s32 0, %v1334
    %v1336 = vrot.slane %v1331, %v1335
    %v1354 = vunpack.c.l.b16 %v1314
    %v1355 = vunpack.c.l.b16 %v1315
    %v1356 = vunpack.c.l.b16 %v1316
    %v1357 = vunpack.c.l.b16 %v1317
    %v1358 = vunpack.c.l.b16 %v1318
    %v1359 = vunpack.c.l.b16 %v1319
    %v1360 = vunpack.c.l.b16 %v1320
    %v1361 = vunpack.c.l.b16 %v1321
    %v1362 = vunpack.c.l.b16 %v1322
    %v1363 = vunpack.c.l.b16 %v1323
    %v1364 = vunpack.c.l.b16 %v1324
    %v1365 = vunpack.c.l.b16 %v1325
    %v1366 = vunpack.c.l.b16 %v1326
    %v1367 = vunpack.c.l.b16 %v1327
    %v1368 = vunpack.c.l.b16 %v1328
    %v1369 = vunpack.c.l.b16 %v1329
    %v1370 = vpack.c.b16 %v1355, %v1354
    %v1371 = vpack.c.b16 %v1357, %v1356
    %v1372 = vpack.c.b16 %v1359, %v1358
    %v1373 = vpack.c.b16 %v1361, %v1360
    %v1374 = vpack.c.b16 %v1363, %v1362
    %v1375 = vpack.c.b16 %v1365, %v1364
    %v1376 = vpack.c.b16 %v1367, %v1366
    %v1377 = vpack.c.b16 %v1369, %v1368
    %1386 = vmatprep.subr.bf16.mxu0 0
    %1387 = vmatpush1.bf16.msra.mxu0 %v1377
    %1388 = vmatprep.subr.bf16.mxu0 0
    %1389 = vmatpush1.bf16.msra.mxu0 %v1376
    %1390 = vmatprep.subr.bf16.mxu0 0
    %1391 = vmatpush1.bf16.msra.mxu0 %v1375
    %1392 = vmatprep.subr.bf16.mxu0 0
    %1393 = vmatpush1.bf16.msra.mxu0 %v1374
    %1394 = vmatprep.subr.bf16.mxu0 0
    %1395 = vmatpush1.bf16.msra.mxu0 %v1373
    %1396 = vmatprep.subr.bf16.mxu0 0
    %1397 = vmatpush1.bf16.msra.mxu0 %v1372
    %1398 = vmatprep.subr.bf16.mxu0 0
    %1399 = vmatpush1.bf16.msra.mxu0 %v1371
    %1400 = vmatprep.subr.bf16.mxu0 0
    %1401 = vmatpush1.bf16.msra.mxu0 %v1370
    %1402 = vmatprep.subr.bf16.mxu0 0
    %1403 = vmatpush2.bf16.msra.mxu0 0
    %1404 = vmatprep.subr.bf16.mxu0 0
    %1405 = vmatpush2.bf16.msra.mxu0 0
    %1406 = vmatprep.subr.bf16.mxu0 0
    %1407 = vmatpush2.bf16.msra.mxu0 0
    %1408 = vmatprep.subr.bf16.mxu0 0
    %1409 = vmatpush2.bf16.msra.mxu0 0
    %1410 = vmatprep.subr.bf16.mxu0 0
    %1411 = vmatpush2.bf16.msra.mxu0 0
    %1412 = vmatprep.subr.bf16.mxu0 0
    %1413 = vmatpush2.bf16.msra.mxu0 0
    %1414 = vmatprep.subr.bf16.mxu0 0
    %1415 = vmatpush2.bf16.msra.mxu0 0
    %1416 = vmatprep.subr.bf16.mxu0 0
    %1417 = vmatpush2.bf16.msra.mxu0 0
    %1418 = vmatprep.mubr.bf16.mxu0 0
    %1419 = vmatmul.mubr.bf16.gmra.mxu0 %v48
    %v1420 = vpop.f32.mrf.mxu0
    %v1421 = vadd.f32 %v1336, %v1420
    %v1422 = vpop.f32.mrf.mxu0
    %v1423 = vpop.f32.mrf.mxu0
    %v1424 = vadd.f32 %v1336, %v1423
    %v1425 = vpop.f32.mrf.mxu0
    %1426 = vdwg.mxu0
    %s1427 = scalar_lea.vmem %s1, 384
    %v1428 = vld [vmem:[%s1427] sm:$0xf]
    %v1429 = vld [vmem:[%s1427 + $0x4] sm:$0xf]
    %v1430 = vld [vmem:[%s1427 + $0x8] sm:$0xf]
    %v1431 = vld [vmem:[%s1427 + $0xc] sm:$0xf]
    %v1432 = vld [vmem:[%s1427 + $0x10] sm:$0xf]
    %v1433 = vld [vmem:[%s1427 + $0x14] sm:$0xf]
    %v1434 = vld [vmem:[%s1427 + $0x18] sm:$0xf]
    %v1435 = vld [vmem:[%s1427 + $0x1c] sm:$0xf]
    %v1436 = vld [vmem:[%s1427 + $0x20] sm:$0xf]
    %v1437 = vld [vmem:[%s1427 + $0x24] sm:$0xf]
    %v1438 = vld [vmem:[%s1427 + $0x28] sm:$0xf]
    %v1439 = vld [vmem:[%s1427 + $0x2c] sm:$0xf]
    %v1440 = vld [vmem:[%s1427 + $0x30] sm:$0xf]
    %v1441 = vld [vmem:[%s1427 + $0x34] sm:$0xf]
    %v1442 = vld [vmem:[%s1427 + $0x38] sm:$0xf]
    %v1443 = vld [vmem:[%s1427 + $0x3c] sm:$0xf]
    %s1444 = scalar_lea.vmem %s2, 6
    %v1445 = vld [vmem:[%s1444] sm:$0x1]
    %v1447 = vlaneseq
    %v1448 = vshrl.u32 %v1447, 7
    %v1449 = vsub.s32 0, %v1448
    %v1450 = vrot.slane %v1445, %v1449
    %v1468 = vunpack.c.l.b16 %v1428
    %v1469 = vunpack.c.l.b16 %v1429
    %v1470 = vunpack.c.l.b16 %v1430
    %v1471 = vunpack.c.l.b16 %v1431
    %v1472 = vunpack.c.l.b16 %v1432
    %v1473 = vunpack.c.l.b16 %v1433
    %v1474 = vunpack.c.l.b16 %v1434
    %v1475 = vunpack.c.l.b16 %v1435
    %v1476 = vunpack.c.l.b16 %v1436
    %v1477 = vunpack.c.l.b16 %v1437
    %v1478 = vunpack.c.l.b16 %v1438
    %v1479 = vunpack.c.l.b16 %v1439
    %v1480 = vunpack.c.l.b16 %v1440
    %v1481 = vunpack.c.l.b16 %v1441
    %v1482 = vunpack.c.l.b16 %v1442
    %v1483 = vunpack.c.l.b16 %v1443
    %v1484 = vpack.c.b16 %v1469, %v1468
    %v1485 = vpack.c.b16 %v1471, %v1470
    %v1486 = vpack.c.b16 %v1473, %v1472
    %v1487 = vpack.c.b16 %v1475, %v1474
    %v1488 = vpack.c.b16 %v1477, %v1476
    %v1489 = vpack.c.b16 %v1479, %v1478
    %v1490 = vpack.c.b16 %v1481, %v1480
    %v1491 = vpack.c.b16 %v1483, %v1482
    %1500 = vmatprep.subr.bf16.mxu0 0
    %1501 = vmatpush1.bf16.msra.mxu0 %v1491
    %1502 = vmatprep.subr.bf16.mxu0 0
    %1503 = vmatpush1.bf16.msra.mxu0 %v1490
    %1504 = vmatprep.subr.bf16.mxu0 0
    %1505 = vmatpush1.bf16.msra.mxu0 %v1489
    %1506 = vmatprep.subr.bf16.mxu0 0
    %1507 = vmatpush1.bf16.msra.mxu0 %v1488
    %1508 = vmatprep.subr.bf16.mxu0 0
    %1509 = vmatpush1.bf16.msra.mxu0 %v1487
    %1510 = vmatprep.subr.bf16.mxu0 0
    %1511 = vmatpush1.bf16.msra.mxu0 %v1486
    %1512 = vmatprep.subr.bf16.mxu0 0
    %1513 = vmatpush1.bf16.msra.mxu0 %v1485
    %1514 = vmatprep.subr.bf16.mxu0 0
    %1515 = vmatpush1.bf16.msra.mxu0 %v1484
    %1516 = vmatprep.subr.bf16.mxu0 0
    %1517 = vmatpush2.bf16.msra.mxu0 0
    %1518 = vmatprep.subr.bf16.mxu0 0
    %1519 = vmatpush2.bf16.msra.mxu0 0
    %1520 = vmatprep.subr.bf16.mxu0 0
    %1521 = vmatpush2.bf16.msra.mxu0 0
    %1522 = vmatprep.subr.bf16.mxu0 0
    %1523 = vmatpush2.bf16.msra.mxu0 0
    %1524 = vmatprep.subr.bf16.mxu0 0
    %1525 = vmatpush2.bf16.msra.mxu0 0
    %1526 = vmatprep.subr.bf16.mxu0 0
    %1527 = vmatpush2.bf16.msra.mxu0 0
    %1528 = vmatprep.subr.bf16.mxu0 0
    %1529 = vmatpush2.bf16.msra.mxu0 0
    %1530 = vmatprep.subr.bf16.mxu0 0
    %1531 = vmatpush2.bf16.msra.mxu0 0
    %1532 = vmatprep.mubr.bf16.mxu0 0
    %1533 = vmatmul.mubr.bf16.gmra.mxu0 %v48
    %v1534 = vpop.f32.mrf.mxu0
    %v1535 = vadd.f32 %v1450, %v1534
    %v1536 = vpop.f32.mrf.mxu0
    %v1537 = vpop.f32.mrf.mxu0
    %v1538 = vadd.f32 %v1450, %v1537
    %v1539 = vpop.f32.mrf.mxu0
    %1540 = vdwg.mxu0
    %s1541 = scalar_lea.vmem %s1, 640
    %v1542 = vld [vmem:[%s1541] sm:$0xf]
    %v1543 = vld [vmem:[%s1541 + $0x4] sm:$0xf]
    %v1544 = vld [vmem:[%s1541 + $0x8] sm:$0xf]
    %v1545 = vld [vmem:[%s1541 + $0xc] sm:$0xf]
    %v1546 = vld [vmem:[%s1541 + $0x10] sm:$0xf]
    %v1547 = vld [vmem:[%s1541 + $0x14] sm:$0xf]
    %v1548 = vld [vmem:[%s1541 + $0x18] sm:$0xf]
    %v1549 = vld [vmem:[%s1541 + $0x1c] sm:$0xf]
    %v1550 = vld [vmem:[%s1541 + $0x20] sm:$0xf]
    %v1551 = vld [vmem:[%s1541 + $0x24] sm:$0xf]
    %v1552 = vld [vmem:[%s1541 + $0x28] sm:$0xf]
    %v1553 = vld [vmem:[%s1541 + $0x2c] sm:$0xf]
    %v1554 = vld [vmem:[%s1541 + $0x30] sm:$0xf]
    %v1555 = vld [vmem:[%s1541 + $0x34] sm:$0xf]
    %v1556 = vld [vmem:[%s1541 + $0x38] sm:$0xf]
    %v1557 = vld [vmem:[%s1541 + $0x3c] sm:$0xf]
    %s1558 = scalar_lea.vmem %s2, 10
    %v1559 = vld [vmem:[%s1558] sm:$0x1]
    %v1561 = vlaneseq
    %v1562 = vshrl.u32 %v1561, 7
    %v1563 = vsub.s32 0, %v1562
    %v1564 = vrot.slane %v1559, %v1563
    %v1582 = vunpack.c.l.b16 %v1542
    %v1583 = vunpack.c.l.b16 %v1543
    %v1584 = vunpack.c.l.b16 %v1544
    %v1585 = vunpack.c.l.b16 %v1545
    %v1586 = vunpack.c.l.b16 %v1546
    %v1587 = vunpack.c.l.b16 %v1547
    %v1588 = vunpack.c.l.b16 %v1548
    %v1589 = vunpack.c.l.b16 %v1549
    %v1590 = vunpack.c.l.b16 %v1550
    %v1591 = vunpack.c.l.b16 %v1551
    %v1592 = vunpack.c.l.b16 %v1552
    %v1593 = vunpack.c.l.b16 %v1553
    %v1594 = vunpack.c.l.b16 %v1554
    %v1595 = vunpack.c.l.b16 %v1555
    %v1596 = vunpack.c.l.b16 %v1556
    %v1597 = vunpack.c.l.b16 %v1557
    %v1598 = vpack.c.b16 %v1583, %v1582
    %v1599 = vpack.c.b16 %v1585, %v1584
    %v1600 = vpack.c.b16 %v1587, %v1586
    %v1601 = vpack.c.b16 %v1589, %v1588
    %v1602 = vpack.c.b16 %v1591, %v1590
    %v1603 = vpack.c.b16 %v1593, %v1592
    %v1604 = vpack.c.b16 %v1595, %v1594
    %v1605 = vpack.c.b16 %v1597, %v1596
    %1614 = vmatprep.subr.bf16.mxu0 0
    %1615 = vmatpush1.bf16.msra.mxu0 %v1605
    %1616 = vmatprep.subr.bf16.mxu0 0
    %1617 = vmatpush1.bf16.msra.mxu0 %v1604
    %1618 = vmatprep.subr.bf16.mxu0 0
    %1619 = vmatpush1.bf16.msra.mxu0 %v1603
    %1620 = vmatprep.subr.bf16.mxu0 0
    %1621 = vmatpush1.bf16.msra.mxu0 %v1602
    %1622 = vmatprep.subr.bf16.mxu0 0
    %1623 = vmatpush1.bf16.msra.mxu0 %v1601
    %1624 = vmatprep.subr.bf16.mxu0 0
    %1625 = vmatpush1.bf16.msra.mxu0 %v1600
    %1626 = vmatprep.subr.bf16.mxu0 0
    %1627 = vmatpush1.bf16.msra.mxu0 %v1599
    %1628 = vmatprep.subr.bf16.mxu0 0
    %1629 = vmatpush1.bf16.msra.mxu0 %v1598
    %1630 = vmatprep.subr.bf16.mxu0 0
    %1631 = vmatpush2.bf16.msra.mxu0 0
    %1632 = vmatprep.subr.bf16.mxu0 0
    %1633 = vmatpush2.bf16.msra.mxu0 0
    %1634 = vmatprep.subr.bf16.mxu0 0
    %1635 = vmatpush2.bf16.msra.mxu0 0
    %1636 = vmatprep.subr.bf16.mxu0 0
    %1637 = vmatpush2.bf16.msra.mxu0 0
    %1638 = vmatprep.subr.bf16.mxu0 0
    %1639 = vmatpush2.bf16.msra.mxu0 0
    %1640 = vmatprep.subr.bf16.mxu0 0
    %1641 = vmatpush2.bf16.msra.mxu0 0
    %1642 = vmatprep.subr.bf16.mxu0 0
    %1643 = vmatpush2.bf16.msra.mxu0 0
    %1644 = vmatprep.subr.bf16.mxu0 0
    %1645 = vmatpush2.bf16.msra.mxu0 0
    %1646 = vmatprep.mubr.bf16.mxu0 0
    %1647 = vmatmul.mubr.bf16.gmra.mxu0 %v48
    %v1648 = vpop.f32.mrf.mxu0
    %v1649 = vadd.f32 %v1564, %v1648
    %v1650 = vpop.f32.mrf.mxu0
    %v1651 = vpop.f32.mrf.mxu0
    %v1652 = vadd.f32 %v1564, %v1651
    %v1653 = vpop.f32.mrf.mxu0
    %1654 = vdwg.mxu0
    %v1655 = vmul.f32 %v1421, 0.17677669
    %v1656 = vmul.f32 %v1424, 0.17677669
    %v1657 = vpack.c.bf16 %v1656, %v1655
    %v1659 = vunpack.c.l.b16 %v1657
    %v1660 = vunpack.c.h.b16 %v1657
    %v1661 = vpack.c.b16 %v1659, %v1659
    %v1662 = vpack.c.b16 %v1660, %v1660
    %v1663 = vpack.c.bf16 %v1538, %v1535
    %v1665 = vunpack.c.l.b16 %v1663
    %v1666 = vunpack.c.h.b16 %v1663
    %v1667 = vpack.c.b16 %v1665, %v1665
    %v1668 = vpack.c.b16 %v1666, %v1666
    %v1669 = vpack.c.bf16 %v1652, %v1649
    %v1671 = vunpack.c.l.b16 %v1669
    %v1672 = vunpack.c.h.b16 %v1669
    %v1673 = vpack.c.b16 %v1671, %v1671
    %v1674 = vpack.c.b16 %v1672, %v1672
    %v1676 = vsel %vm409, %v1661, 0
    %v1679 = vsel %vm409, %v1667, 0
    %1681 = vmatprep.subr.bf16.mxu0 0
    %1682 = vmatpush1.bf16.xpose.msra.mxu0 0
    %1683 = vmatprep.subr.bf16.mxu0 0
    %1684 = vmatpush1.bf16.xpose.msra.mxu0 0
    %1685 = vmatprep.subr.bf16.mxu0 0
    %1686 = vmatpush1.bf16.xpose.msra.mxu0 0
    %1687 = vmatprep.subr.bf16.mxu0 0
    %1688 = vmatpush1.bf16.xpose.msra.mxu0 0
    %1689 = vmatprep.subr.bf16.mxu0 0
    %1690 = vmatpush1.bf16.xpose.msra.mxu0 0
    %1691 = vmatprep.subr.bf16.mxu0 0
    %1692 = vmatpush1.bf16.xpose.msra.mxu0 0
    %1693 = vmatprep.subr.bf16.mxu0 0
    %1694 = vmatpush1.bf16.xpose.msra.mxu0 0
    %1695 = vmatprep.subr.bf16.mxu0 0
    %1696 = vmatpush1.bf16.xpose.msra.mxu0 %v1679
    %1697 = vmatprep.subr.bf16.mxu0 0
    %1698 = vmatpush2.bf16.xpose.msra.mxu0 0
    %1699 = vmatprep.subr.bf16.mxu0 0
    %1700 = vmatpush2.bf16.xpose.msra.mxu0 0
    %1701 = vmatprep.subr.bf16.mxu0 0
    %1702 = vmatpush2.bf16.xpose.msra.mxu0 0
    %1703 = vmatprep.subr.bf16.mxu0 0
    %1704 = vmatpush2.bf16.xpose.msra.mxu0 0
    %1705 = vmatprep.subr.bf16.mxu0 0
    %1706 = vmatpush2.bf16.xpose.msra.mxu0 0
    %1707 = vmatprep.subr.bf16.mxu0 0
    %1708 = vmatpush2.bf16.xpose.msra.mxu0 0
    %1709 = vmatprep.subr.bf16.mxu0 0
    %1710 = vmatpush2.bf16.xpose.msra.mxu0 0
    %1711 = vmatprep.subr.bf16.mxu0 0
    %1712 = vmatpush2.bf16.xpose.msra.mxu0 0
    %1713 = vmatprep.mubr.bf16.mxu0 0
    %1714 = vmatmul.mubr.bf16.gmra.mxu0 %v1676
    %v1715 = vpop.f32.mrf.mxu0
    %v1716 = vadd.f32 0.0, %v1715
    %v1717 = vpop.f32.mrf.mxu0
    %v1718 = vpop.f32.mrf.mxu0
    %v1719 = vpop.f32.mrf.mxu0
    %1720 = vdwg.mxu0
    %v1722 = vsel %vm409, %v1662, 0
    %v1725 = vsel %vm409, %v1668, 0
    %1727 = vmatprep.subr.bf16.mxu0 0
    %1728 = vmatpush1.bf16.xpose.msra.mxu0 0
    %1729 = vmatprep.subr.bf16.mxu0 0
    %1730 = vmatpush1.bf16.xpose.msra.mxu0 0
    %1731 = vmatprep.subr.bf16.mxu0 0
    %1732 = vmatpush1.bf16.xpose.msra.mxu0 0
    %1733 = vmatprep.subr.bf16.mxu0 0
    %1734 = vmatpush1.bf16.xpose.msra.mxu0 0
    %1735 = vmatprep.subr.bf16.mxu0 0
    %1736 = vmatpush1.bf16.xpose.msra.mxu0 0
    %1737 = vmatprep.subr.bf16.mxu0 0
    %1738 = vmatpush1.bf16.xpose.msra.mxu0 0
    %1739 = vmatprep.subr.bf16.mxu0 0
    %1740 = vmatpush1.bf16.xpose.msra.mxu0 0
    %1741 = vmatprep.subr.bf16.mxu0 0
    %1742 = vmatpush1.bf16.xpose.msra.mxu0 %v1725
    %1743 = vmatprep.subr.bf16.mxu0 0
    %1744 = vmatpush2.bf16.xpose.msra.mxu0 0
    %1745 = vmatprep.subr.bf16.mxu0 0
    %1746 = vmatpush2.bf16.xpose.msra.mxu0 0
    %1747 = vmatprep.subr.bf16.mxu0 0
    %1748 = vmatpush2.bf16.xpose.msra.mxu0 0
    %1749 = vmatprep.subr.bf16.mxu0 0
    %1750 = vmatpush2.bf16.xpose.msra.mxu0 0
    %1751 = vmatprep.subr.bf16.mxu0 0
    %1752 = vmatpush2.bf16.xpose.msra.mxu0 0
    %1753 = vmatprep.subr.bf16.mxu0 0
    %1754 = vmatpush2.bf16.xpose.msra.mxu0 0
    %1755 = vmatprep.subr.bf16.mxu0 0
    %1756 = vmatpush2.bf16.xpose.msra.mxu0 0
    %1757 = vmatprep.subr.bf16.mxu0 0
    %1758 = vmatpush2.bf16.xpose.msra.mxu0 0
    %1759 = vmatprep.mubr.bf16.mxu0 0
    %1760 = vmatmul.mubr.bf16.gmra.mxu0 %v1722
    %v1761 = vpop.f32.mrf.mxu0
    %v1762 = vadd.f32 0.0, %v1761
    %v1763 = vpop.f32.mrf.mxu0
    %v1764 = vpop.f32.mrf.mxu0
    %v1765 = vpop.f32.mrf.mxu0
    %1766 = vdwg.mxu0
    %v1767 = vsel %vm502, %v1716, -inf
    %1768 = vmax.xlane.f32.xlu0 %v1767
    %v1769 = vpop.xlane.xlu0 %1768
    %v1770 = vsel %vm502, %v1762, -inf
    %1771 = vmax.xlane.f32.xlu0 %v1770
    %v1772 = vpop.xlane.xlu0 %1771
    %v1773 = vsub.f32 %v1716, %v1769
    %v1774 = vsub.f32 %v1762, %v1772
    %v1775 = vmul.f32 %v1773, 1.442695
    %v1776 = vpow.pop %v1775
    %v1777 = vmul.f32 %v1774, 1.442695
    %v1778 = vpow.pop %v1777
    %v1779 = vsel %vm502, %v1776, 0.0
    %1780 = vadd.xlane.f32.xlu0 %v1779
    %v1781 = vpop.xlane.xlu0 %1780
    %v1782 = vsel %vm502, %v1778, 0.0
    %1783 = vadd.xlane.f32.xlu0 %v1782
    %v1784 = vpop.xlane.xlu0 %1783
    %v1785 = vrcp.pop %v1781
    %v1786 = vrcp.pop %v1784
    %v1787 = vmul.f32 %v1776, %v1785
    %v1788 = vmul.f32 %v1778, %v1786
    %v1789 = vpack.c.bf16 %v1787, %v1787
    %v1790 = vpack.c.bf16 %v1788, %v1788
    %v1792 = vsel %vm502, %v1789, 0
    %v1795 = vsel %vm530, %v1673, 0
    %1797 = vmatprep.subr.bf16.mxu0 0
    %1798 = vmatpush1.bf16.msra.mxu0 0
    %1799 = vmatprep.subr.bf16.mxu0 0
    %1800 = vmatpush1.bf16.msra.mxu0 0
    %1801 = vmatprep.subr.bf16.mxu0 0
    %1802 = vmatpush1.bf16.msra.mxu0 0
    %1803 = vmatprep.subr.bf16.mxu0 0
    %1804 = vmatpush1.bf16.msra.mxu0 0
    %1805 = vmatprep.subr.bf16.mxu0 0
    %1806 = vmatpush1.bf16.msra.mxu0 0
    %1807 = vmatprep.subr.bf16.mxu0 0
    %1808 = vmatpush1.bf16.msra.mxu0 0
    %1809 = vmatprep.subr.bf16.mxu0 0
    %1810 = vmatpush1.bf16.msra.mxu0 0
    %1811 = vmatprep.subr.bf16.mxu0 0
    %1812 = vmatpush1.bf16.msra.mxu0 %v1795
    %1813 = vmatprep.subr.bf16.mxu0 0
    %1814 = vmatpush2.bf16.msra.mxu0 0
    %1815 = vmatprep.subr.bf16.mxu0 0
    %1816 = vmatpush2.bf16.msra.mxu0 0
    %1817 = vmatprep.subr.bf16.mxu0 0
    %1818 = vmatpush2.bf16.msra.mxu0 0
    %1819 = vmatprep.subr.bf16.mxu0 0
    %1820 = vmatpush2.bf16.msra.mxu0 0
    %1821 = vmatprep.subr.bf16.mxu0 0
    %1822 = vmatpush2.bf16.msra.mxu0 0
    %1823 = vmatprep.subr.bf16.mxu0 0
    %1824 = vmatpush2.bf16.msra.mxu0 0
    %1825 = vmatprep.subr.bf16.mxu0 0
    %1826 = vmatpush2.bf16.msra.mxu0 0
    %1827 = vmatprep.subr.bf16.mxu0 0
    %1828 = vmatpush2.bf16.msra.mxu0 0
    %1829 = vmatprep.mubr.bf16.mxu0 0
    %1830 = vmatmul.mubr.bf16.gmra.mxu0 %v1792
    %v1831 = vpop.f32.mrf.mxu0
    %v1832 = vadd.f32 0.0, %v1831
    %v1833 = vpop.f32.mrf.mxu0
    %v1834 = vpop.f32.mrf.mxu0
    %v1835 = vpop.f32.mrf.mxu0
    %1836 = vdwg.mxu0
    %v1838 = vsel %vm502, %v1790, 0
    %v1841 = vsel %vm530, %v1674, 0
    %1843 = vmatprep.subr.bf16.mxu0 0
    %1844 = vmatpush1.bf16.msra.mxu0 0
    %1845 = vmatprep.subr.bf16.mxu0 0
    %1846 = vmatpush1.bf16.msra.mxu0 0
    %1847 = vmatprep.subr.bf16.mxu0 0
    %1848 = vmatpush1.bf16.msra.mxu0 0
    %1849 = vmatprep.subr.bf16.mxu0 0
    %1850 = vmatpush1.bf16.msra.mxu0 0
    %1851 = vmatprep.subr.bf16.mxu0 0
    %1852 = vmatpush1.bf16.msra.mxu0 0
    %1853 = vmatprep.subr.bf16.mxu0 0
    %1854 = vmatpush1.bf16.msra.mxu0 0
    %1855 = vmatprep.subr.bf16.mxu0 0
    %1856 = vmatpush1.bf16.msra.mxu0 0
    %1857 = vmatprep.subr.bf16.mxu0 0
    %1858 = vmatpush1.bf16.msra.mxu0 %v1841
    %1859 = vmatprep.subr.bf16.mxu0 0
    %1860 = vmatpush2.bf16.msra.mxu0 0
    %1861 = vmatprep.subr.bf16.mxu0 0
    %1862 = vmatpush2.bf16.msra.mxu0 0
    %1863 = vmatprep.subr.bf16.mxu0 0
    %1864 = vmatpush2.bf16.msra.mxu0 0
    %1865 = vmatprep.subr.bf16.mxu0 0
    %1866 = vmatpush2.bf16.msra.mxu0 0
    %1867 = vmatprep.subr.bf16.mxu0 0
    %1868 = vmatpush2.bf16.msra.mxu0 0
    %1869 = vmatprep.subr.bf16.mxu0 0
    %1870 = vmatpush2.bf16.msra.mxu0 0
    %1871 = vmatprep.subr.bf16.mxu0 0
    %1872 = vmatpush2.bf16.msra.mxu0 0
    %1873 = vmatprep.subr.bf16.mxu0 0
    %1874 = vmatpush2.bf16.msra.mxu0 0
    %1875 = vmatprep.mubr.bf16.mxu0 0
    %1876 = vmatmul.mubr.bf16.gmra.mxu0 %v1838
    %v1877 = vpop.f32.mrf.mxu0
    %v1878 = vadd.f32 0.0, %v1877
    %v1879 = vpop.f32.mrf.mxu0
    %v1880 = vpop.f32.mrf.mxu0
    %v1881 = vpop.f32.mrf.mxu0
    %1882 = vdwg.mxu0
    %v1883 = vpack.c.bf16 %v1878, %v1832
    %s1884 = scalar_lea.vmem %s3, 32
    %v1885 = vld [vmem:[%s1884] sm:$0xf]
    %v1886 = vld [vmem:[%s1884 + $0x4] sm:$0xf]
    %v1887 = vld [vmem:[%s1884 + $0x8] sm:$0xf]
    %v1888 = vld [vmem:[%s1884 + $0xc] sm:$0xf]
    %v1893 = vunpack.c.l.b16 %v1885
    %v1894 = vunpack.c.l.b16 %v1886
    %v1895 = vunpack.c.l.b16 %v1887
    %v1896 = vunpack.c.l.b16 %v1888
    %v1897 = vpack.c.b16 %v1894, %v1893
    %v1898 = vpack.c.b16 %v1896, %v1895
    %v1902 = vsel %vm409, %v1883, 0
    %1904 = vmatprep.subr.bf16.mxu0 0
    %1905 = vmatpush1.bf16.msra.mxu0 0
    %1906 = vmatprep.subr.bf16.mxu0 0
    %1907 = vmatpush1.bf16.msra.mxu0 0
    %1908 = vmatprep.subr.bf16.mxu0 0
    %1909 = vmatpush1.bf16.msra.mxu0 0
    %1910 = vmatprep.subr.bf16.mxu0 0
    %1911 = vmatpush1.bf16.msra.mxu0 0
    %1912 = vmatprep.subr.bf16.mxu0 0
    %1913 = vmatpush1.bf16.msra.mxu0 0
    %1914 = vmatprep.subr.bf16.mxu0 0
    %1915 = vmatpush1.bf16.msra.mxu0 0
    %1916 = vmatprep.subr.bf16.mxu0 0
    %1917 = vmatpush1.bf16.msra.mxu0 %v1898
    %1918 = vmatprep.subr.bf16.mxu0 0
    %1919 = vmatpush1.bf16.msra.mxu0 %v1897
    %1920 = vmatprep.subr.bf16.mxu0 0
    %1921 = vmatpush2.bf16.msra.mxu0 0
    %1922 = vmatprep.subr.bf16.mxu0 0
    %1923 = vmatpush2.bf16.msra.mxu0 0
    %1924 = vmatprep.subr.bf16.mxu0 0
    %1925 = vmatpush2.bf16.msra.mxu0 0
    %1926 = vmatprep.subr.bf16.mxu0 0
    %1927 = vmatpush2.bf16.msra.mxu0 0
    %1928 = vmatprep.subr.bf16.mxu0 0
    %1929 = vmatpush2.bf16.msra.mxu0 0
    %1930 = vmatprep.subr.bf16.mxu0 0
    %1931 = vmatpush2.bf16.msra.mxu0 0
    %1932 = vmatprep.subr.bf16.mxu0 0
    %1933 = vmatpush2.bf16.msra.mxu0 0
    %1934 = vmatprep.subr.bf16.mxu0 0
    %1935 = vmatpush2.bf16.msra.mxu0 0
    %1936 = vmatprep.mubr.bf16.mxu0 0
    %1937 = vmatmul.mubr.bf16.gmra.mxu0 %v1902
    %v1938 = vpop.f32.mrf.mxu0
    %v1939 = vadd.f32 0.0, %v1938
    %v1940 = vpop.f32.mrf.mxu0
    %v1941 = vpop.f32.mrf.mxu0
    %v1942 = vadd.f32 0.0, %v1941
    %v1943 = vpop.f32.mrf.mxu0
    %1944 = vdwg.mxu0
    %v1945 = vadd.f32 %v1307, %v1939
    %v1946 = vadd.f32 %v1310, %v1942
    %s1947 = scalar_lea.vmem %s1, 192
    %v1948 = vld [vmem:[%s1947] sm:$0xf]
    %v1949 = vld [vmem:[%s1947 + $0x4] sm:$0xf]
    %v1950 = vld [vmem:[%s1947 + $0x8] sm:$0xf]
    %v1951 = vld [vmem:[%s1947 + $0xc] sm:$0xf]
    %v1952 = vld [vmem:[%s1947 + $0x10] sm:$0xf]
    %v1953 = vld [vmem:[%s1947 + $0x14] sm:$0xf]
    %v1954 = vld [vmem:[%s1947 + $0x18] sm:$0xf]
    %v1955 = vld [vmem:[%s1947 + $0x1c] sm:$0xf]
    %v1956 = vld [vmem:[%s1947 + $0x20] sm:$0xf]
    %v1957 = vld [vmem:[%s1947 + $0x24] sm:$0xf]
    %v1958 = vld [vmem:[%s1947 + $0x28] sm:$0xf]
    %v1959 = vld [vmem:[%s1947 + $0x2c] sm:$0xf]
    %v1960 = vld [vmem:[%s1947 + $0x30] sm:$0xf]
    %v1961 = vld [vmem:[%s1947 + $0x34] sm:$0xf]
    %v1962 = vld [vmem:[%s1947 + $0x38] sm:$0xf]
    %v1963 = vld [vmem:[%s1947 + $0x3c] sm:$0xf]
    %s1964 = scalar_lea.vmem %s2, 3
    %v1965 = vld [vmem:[%s1964] sm:$0x1]
    %v1967 = vlaneseq
    %v1968 = vshrl.u32 %v1967, 7
    %v1969 = vsub.s32 0, %v1968
    %v1970 = vrot.slane %v1965, %v1969
    %v1988 = vunpack.c.l.b16 %v1948
    %v1989 = vunpack.c.l.b16 %v1949
    %v1990 = vunpack.c.l.b16 %v1950
    %v1991 = vunpack.c.l.b16 %v1951
    %v1992 = vunpack.c.l.b16 %v1952
    %v1993 = vunpack.c.l.b16 %v1953
    %v1994 = vunpack.c.l.b16 %v1954
    %v1995 = vunpack.c.l.b16 %v1955
    %v1996 = vunpack.c.l.b16 %v1956
    %v1997 = vunpack.c.l.b16 %v1957
    %v1998 = vunpack.c.l.b16 %v1958
    %v1999 = vunpack.c.l.b16 %v1959
    %v2000 = vunpack.c.l.b16 %v1960
    %v2001 = vunpack.c.l.b16 %v1961
    %v2002 = vunpack.c.l.b16 %v1962
    %v2003 = vunpack.c.l.b16 %v1963
    %v2004 = vpack.c.b16 %v1989, %v1988
    %v2005 = vpack.c.b16 %v1991, %v1990
    %v2006 = vpack.c.b16 %v1993, %v1992
    %v2007 = vpack.c.b16 %v1995, %v1994
    %v2008 = vpack.c.b16 %v1997, %v1996
    %v2009 = vpack.c.b16 %v1999, %v1998
    %v2010 = vpack.c.b16 %v2001, %v2000
    %v2011 = vpack.c.b16 %v2003, %v2002
    %2020 = vmatprep.subr.bf16.mxu0 0
    %2021 = vmatpush1.bf16.msra.mxu0 %v2011
    %2022 = vmatprep.subr.bf16.mxu0 0
    %2023 = vmatpush1.bf16.msra.mxu0 %v2010
    %2024 = vmatprep.subr.bf16.mxu0 0
    %2025 = vmatpush1.bf16.msra.mxu0 %v2009
    %2026 = vmatprep.subr.bf16.mxu0 0
    %2027 = vmatpush1.bf16.msra.mxu0 %v2008
    %2028 = vmatprep.subr.bf16.mxu0 0
    %2029 = vmatpush1.bf16.msra.mxu0 %v2007
    %2030 = vmatprep.subr.bf16.mxu0 0
    %2031 = vmatpush1.bf16.msra.mxu0 %v2006
    %2032 = vmatprep.subr.bf16.mxu0 0
    %2033 = vmatpush1.bf16.msra.mxu0 %v2005
    %2034 = vmatprep.subr.bf16.mxu0 0
    %2035 = vmatpush1.bf16.msra.mxu0 %v2004
    %2036 = vmatprep.subr.bf16.mxu0 0
    %2037 = vmatpush2.bf16.msra.mxu0 0
    %2038 = vmatprep.subr.bf16.mxu0 0
    %2039 = vmatpush2.bf16.msra.mxu0 0
    %2040 = vmatprep.subr.bf16.mxu0 0
    %2041 = vmatpush2.bf16.msra.mxu0 0
    %2042 = vmatprep.subr.bf16.mxu0 0
    %2043 = vmatpush2.bf16.msra.mxu0 0
    %2044 = vmatprep.subr.bf16.mxu0 0
    %2045 = vmatpush2.bf16.msra.mxu0 0
    %2046 = vmatprep.subr.bf16.mxu0 0
    %2047 = vmatpush2.bf16.msra.mxu0 0
    %2048 = vmatprep.subr.bf16.mxu0 0
    %2049 = vmatpush2.bf16.msra.mxu0 0
    %2050 = vmatprep.subr.bf16.mxu0 0
    %2051 = vmatpush2.bf16.msra.mxu0 0
    %2052 = vmatprep.mubr.bf16.mxu0 0
    %2053 = vmatmul.mubr.bf16.gmra.mxu0 %v48
    %v2054 = vpop.f32.mrf.mxu0
    %v2055 = vadd.f32 %v1970, %v2054
    %v2056 = vpop.f32.mrf.mxu0
    %v2057 = vpop.f32.mrf.mxu0
    %v2058 = vadd.f32 %v1970, %v2057
    %v2059 = vpop.f32.mrf.mxu0
    %2060 = vdwg.mxu0
    %s2061 = scalar_lea.vmem %s1, 448
    %v2062 = vld [vmem:[%s2061] sm:$0xf]
    %v2063 = vld [vmem:[%s2061 + $0x4] sm:$0xf]
    %v2064 = vld [vmem:[%s2061 + $0x8] sm:$0xf]
    %v2065 = vld [vmem:[%s2061 + $0xc] sm:$0xf]
    %v2066 = vld [vmem:[%s2061 + $0x10] sm:$0xf]
    %v2067 = vld [vmem:[%s2061 + $0x14] sm:$0xf]
    %v2068 = vld [vmem:[%s2061 + $0x18] sm:$0xf]
    %v2069 = vld [vmem:[%s2061 + $0x1c] sm:$0xf]
    %v2070 = vld [vmem:[%s2061 + $0x20] sm:$0xf]
    %v2071 = vld [vmem:[%s2061 + $0x24] sm:$0xf]
    %v2072 = vld [vmem:[%s2061 + $0x28] sm:$0xf]
    %v2073 = vld [vmem:[%s2061 + $0x2c] sm:$0xf]
    %v2074 = vld [vmem:[%s2061 + $0x30] sm:$0xf]
    %v2075 = vld [vmem:[%s2061 + $0x34] sm:$0xf]
    %v2076 = vld [vmem:[%s2061 + $0x38] sm:$0xf]
    %v2077 = vld [vmem:[%s2061 + $0x3c] sm:$0xf]
    %s2078 = scalar_lea.vmem %s2, 7
    %v2079 = vld [vmem:[%s2078] sm:$0x1]
    %v2081 = vlaneseq
    %v2082 = vshrl.u32 %v2081, 7
    %v2083 = vsub.s32 0, %v2082
    %v2084 = vrot.slane %v2079, %v2083
    %v2102 = vunpack.c.l.b16 %v2062
    %v2103 = vunpack.c.l.b16 %v2063
    %v2104 = vunpack.c.l.b16 %v2064
    %v2105 = vunpack.c.l.b16 %v2065
    %v2106 = vunpack.c.l.b16 %v2066
    %v2107 = vunpack.c.l.b16 %v2067
    %v2108 = vunpack.c.l.b16 %v2068
    %v2109 = vunpack.c.l.b16 %v2069
    %v2110 = vunpack.c.l.b16 %v2070
    %v2111 = vunpack.c.l.b16 %v2071
    %v2112 = vunpack.c.l.b16 %v2072
    %v2113 = vunpack.c.l.b16 %v2073
    %v2114 = vunpack.c.l.b16 %v2074
    %v2115 = vunpack.c.l.b16 %v2075
    %v2116 = vunpack.c.l.b16 %v2076
    %v2117 = vunpack.c.l.b16 %v2077
    %v2118 = vpack.c.b16 %v2103, %v2102
    %v2119 = vpack.c.b16 %v2105, %v2104
    %v2120 = vpack.c.b16 %v2107, %v2106
    %v2121 = vpack.c.b16 %v2109, %v2108
    %v2122 = vpack.c.b16 %v2111, %v2110
    %v2123 = vpack.c.b16 %v2113, %v2112
    %v2124 = vpack.c.b16 %v2115, %v2114
    %v2125 = vpack.c.b16 %v2117, %v2116
    %2134 = vmatprep.subr.bf16.mxu0 0
    %2135 = vmatpush1.bf16.msra.mxu0 %v2125
    %2136 = vmatprep.subr.bf16.mxu0 0
    %2137 = vmatpush1.bf16.msra.mxu0 %v2124
    %2138 = vmatprep.subr.bf16.mxu0 0
    %2139 = vmatpush1.bf16.msra.mxu0 %v2123
    %2140 = vmatprep.subr.bf16.mxu0 0
    %2141 = vmatpush1.bf16.msra.mxu0 %v2122
    %2142 = vmatprep.subr.bf16.mxu0 0
    %2143 = vmatpush1.bf16.msra.mxu0 %v2121
    %2144 = vmatprep.subr.bf16.mxu0 0
    %2145 = vmatpush1.bf16.msra.mxu0 %v2120
    %2146 = vmatprep.subr.bf16.mxu0 0
    %2147 = vmatpush1.bf16.msra.mxu0 %v2119
    %2148 = vmatprep.subr.bf16.mxu0 0
    %2149 = vmatpush1.bf16.msra.mxu0 %v2118
    %2150 = vmatprep.subr.bf16.mxu0 0
    %2151 = vmatpush2.bf16.msra.mxu0 0
    %2152 = vmatprep.subr.bf16.mxu0 0
    %2153 = vmatpush2.bf16.msra.mxu0 0
    %2154 = vmatprep.subr.bf16.mxu0 0
    %2155 = vmatpush2.bf16.msra.mxu0 0
    %2156 = vmatprep.subr.bf16.mxu0 0
    %2157 = vmatpush2.bf16.msra.mxu0 0
    %2158 = vmatprep.subr.bf16.mxu0 0
    %2159 = vmatpush2.bf16.msra.mxu0 0
    %2160 = vmatprep.subr.bf16.mxu0 0
    %2161 = vmatpush2.bf16.msra.mxu0 0
    %2162 = vmatprep.subr.bf16.mxu0 0
    %2163 = vmatpush2.bf16.msra.mxu0 0
    %2164 = vmatprep.subr.bf16.mxu0 0
    %2165 = vmatpush2.bf16.msra.mxu0 0
    %2166 = vmatprep.mubr.bf16.mxu0 0
    %2167 = vmatmul.mubr.bf16.gmra.mxu0 %v48
    %v2168 = vpop.f32.mrf.mxu0
    %v2169 = vadd.f32 %v2084, %v2168
    %v2170 = vpop.f32.mrf.mxu0
    %v2171 = vpop.f32.mrf.mxu0
    %v2172 = vadd.f32 %v2084, %v2171
    %v2173 = vpop.f32.mrf.mxu0
    %2174 = vdwg.mxu0
    %s2175 = scalar_lea.vmem %s1, 704
    %v2176 = vld [vmem:[%s2175] sm:$0xf]
    %v2177 = vld [vmem:[%s2175 + $0x4] sm:$0xf]
    %v2178 = vld [vmem:[%s2175 + $0x8] sm:$0xf]
    %v2179 = vld [vmem:[%s2175 + $0xc] sm:$0xf]
    %v2180 = vld [vmem:[%s2175 + $0x10] sm:$0xf]
    %v2181 = vld [vmem:[%s2175 + $0x14] sm:$0xf]
    %v2182 = vld [vmem:[%s2175 + $0x18] sm:$0xf]
    %v2183 = vld [vmem:[%s2175 + $0x1c] sm:$0xf]
    %v2184 = vld [vmem:[%s2175 + $0x20] sm:$0xf]
    %v2185 = vld [vmem:[%s2175 + $0x24] sm:$0xf]
    %v2186 = vld [vmem:[%s2175 + $0x28] sm:$0xf]
    %v2187 = vld [vmem:[%s2175 + $0x2c] sm:$0xf]
    %v2188 = vld [vmem:[%s2175 + $0x30] sm:$0xf]
    %v2189 = vld [vmem:[%s2175 + $0x34] sm:$0xf]
    %v2190 = vld [vmem:[%s2175 + $0x38] sm:$0xf]
    %v2191 = vld [vmem:[%s2175 + $0x3c] sm:$0xf]
    %s2192 = scalar_lea.vmem %s2, 11
    %v2193 = vld [vmem:[%s2192] sm:$0x1]
    %v2195 = vlaneseq
    %v2196 = vshrl.u32 %v2195, 7
    %v2197 = vsub.s32 0, %v2196
    %v2198 = vrot.slane %v2193, %v2197
    %v2216 = vunpack.c.l.b16 %v2176
    %v2217 = vunpack.c.l.b16 %v2177
    %v2218 = vunpack.c.l.b16 %v2178
    %v2219 = vunpack.c.l.b16 %v2179
    %v2220 = vunpack.c.l.b16 %v2180
    %v2221 = vunpack.c.l.b16 %v2181
    %v2222 = vunpack.c.l.b16 %v2182
    %v2223 = vunpack.c.l.b16 %v2183
    %v2224 = vunpack.c.l.b16 %v2184
    %v2225 = vunpack.c.l.b16 %v2185
    %v2226 = vunpack.c.l.b16 %v2186
    %v2227 = vunpack.c.l.b16 %v2187
    %v2228 = vunpack.c.l.b16 %v2188
    %v2229 = vunpack.c.l.b16 %v2189
    %v2230 = vunpack.c.l.b16 %v2190
    %v2231 = vunpack.c.l.b16 %v2191
    %v2232 = vpack.c.b16 %v2217, %v2216
    %v2233 = vpack.c.b16 %v2219, %v2218
    %v2234 = vpack.c.b16 %v2221, %v2220
    %v2235 = vpack.c.b16 %v2223, %v2222
    %v2236 = vpack.c.b16 %v2225, %v2224
    %v2237 = vpack.c.b16 %v2227, %v2226
    %v2238 = vpack.c.b16 %v2229, %v2228
    %v2239 = vpack.c.b16 %v2231, %v2230
    %2248 = vmatprep.subr.bf16.mxu0 0
    %2249 = vmatpush1.bf16.msra.mxu0 %v2239
    %2250 = vmatprep.subr.bf16.mxu0 0
    %2251 = vmatpush1.bf16.msra.mxu0 %v2238
    %2252 = vmatprep.subr.bf16.mxu0 0
    %2253 = vmatpush1.bf16.msra.mxu0 %v2237
    %2254 = vmatprep.subr.bf16.mxu0 0
    %2255 = vmatpush1.bf16.msra.mxu0 %v2236
    %2256 = vmatprep.subr.bf16.mxu0 0
    %2257 = vmatpush1.bf16.msra.mxu0 %v2235
    %2258 = vmatprep.subr.bf16.mxu0 0
    %2259 = vmatpush1.bf16.msra.mxu0 %v2234
    %2260 = vmatprep.subr.bf16.mxu0 0
    %2261 = vmatpush1.bf16.msra.mxu0 %v2233
    %2262 = vmatprep.subr.bf16.mxu0 0
    %2263 = vmatpush1.bf16.msra.mxu0 %v2232
    %2264 = vmatprep.subr.bf16.mxu0 0
    %2265 = vmatpush2.bf16.msra.mxu0 0
    %2266 = vmatprep.subr.bf16.mxu0 0
    %2267 = vmatpush2.bf16.msra.mxu0 0
    %2268 = vmatprep.subr.bf16.mxu0 0
    %2269 = vmatpush2.bf16.msra.mxu0 0
    %2270 = vmatprep.subr.bf16.mxu0 0
    %2271 = vmatpush2.bf16.msra.mxu0 0
    %2272 = vmatprep.subr.bf16.mxu0 0
    %2273 = vmatpush2.bf16.msra.mxu0 0
    %2274 = vmatprep.subr.bf16.mxu0 0
    %2275 = vmatpush2.bf16.msra.mxu0 0
    %2276 = vmatprep.subr.bf16.mxu0 0
    %2277 = vmatpush2.bf16.msra.mxu0 0
    %2278 = vmatprep.subr.bf16.mxu0 0
    %2279 = vmatpush2.bf16.msra.mxu0 0
    %2280 = vmatprep.mubr.bf16.mxu0 0
    %2281 = vmatmul.mubr.bf16.gmra.mxu0 %v48
    %v2282 = vpop.f32.mrf.mxu0
    %v2283 = vadd.f32 %v2198, %v2282
    %v2284 = vpop.f32.mrf.mxu0
    %v2285 = vpop.f32.mrf.mxu0
    %v2286 = vadd.f32 %v2198, %v2285
    %v2287 = vpop.f32.mrf.mxu0
    %2288 = vdwg.mxu0
    %v2289 = vmul.f32 %v2055, 0.17677669
    %v2290 = vmul.f32 %v2058, 0.17677669
    %v2291 = vpack.c.bf16 %v2290, %v2289
    %v2293 = vunpack.c.l.b16 %v2291
    %v2294 = vunpack.c.h.b16 %v2291
    %v2295 = vpack.c.b16 %v2293, %v2293
    %v2296 = vpack.c.b16 %v2294, %v2294
    %v2297 = vpack.c.bf16 %v2172, %v2169
    %v2299 = vunpack.c.l.b16 %v2297
    %v2300 = vunpack.c.h.b16 %v2297
    %v2301 = vpack.c.b16 %v2299, %v2299
    %v2302 = vpack.c.b16 %v2300, %v2300
    %v2303 = vpack.c.bf16 %v2286, %v2283
    %v2305 = vunpack.c.l.b16 %v2303
    %v2306 = vunpack.c.h.b16 %v2303
    %v2307 = vpack.c.b16 %v2305, %v2305
    %v2308 = vpack.c.b16 %v2306, %v2306
    %v2310 = vsel %vm409, %v2295, 0
    %v2313 = vsel %vm409, %v2301, 0
    %2315 = vmatprep.subr.bf16.mxu0 0
    %2316 = vmatpush1.bf16.xpose.msra.mxu0 0
    %2317 = vmatprep.subr.bf16.mxu0 0
    %2318 = vmatpush1.bf16.xpose.msra.mxu0 0
    %2319 = vmatprep.subr.bf16.mxu0 0
    %2320 = vmatpush1.bf16.xpose.msra.mxu0 0
    %2321 = vmatprep.subr.bf16.mxu0 0
    %2322 = vmatpush1.bf16.xpose.msra.mxu0 0
    %2323 = vmatprep.subr.bf16.mxu0 0
    %2324 = vmatpush1.bf16.xpose.msra.mxu0 0
    %2325 = vmatprep.subr.bf16.mxu0 0
    %2326 = vmatpush1.bf16.xpose.msra.mxu0 0
    %2327 = vmatprep.subr.bf16.mxu0 0
    %2328 = vmatpush1.bf16.xpose.msra.mxu0 0
    %2329 = vmatprep.subr.bf16.mxu0 0
    %2330 = vmatpush1.bf16.xpose.msra.mxu0 %v2313
    %2331 = vmatprep.subr.bf16.mxu0 0
    %2332 = vmatpush2.bf16.xpose.msra.mxu0 0
    %2333 = vmatprep.subr.bf16.mxu0 0
    %2334 = vmatpush2.bf16.xpose.msra.mxu0 0
    %2335 = vmatprep.subr.bf16.mxu0 0
    %2336 = vmatpush2.bf16.xpose.msra.mxu0 0
    %2337 = vmatprep.subr.bf16.mxu0 0
    %2338 = vmatpush2.bf16.xpose.msra.mxu0 0
    %2339 = vmatprep.subr.bf16.mxu0 0
    %2340 = vmatpush2.bf16.xpose.msra.mxu0 0
    %2341 = vmatprep.subr.bf16.mxu0 0
    %2342 = vmatpush2.bf16.xpose.msra.mxu0 0
    %2343 = vmatprep.subr.bf16.mxu0 0
    %2344 = vmatpush2.bf16.xpose.msra.mxu0 0
    %2345 = vmatprep.subr.bf16.mxu0 0
    %2346 = vmatpush2.bf16.xpose.msra.mxu0 0
    %2347 = vmatprep.mubr.bf16.mxu0 0
    %2348 = vmatmul.mubr.bf16.gmra.mxu0 %v2310
    %v2349 = vpop.f32.mrf.mxu0
    %v2350 = vadd.f32 0.0, %v2349
    %v2351 = vpop.f32.mrf.mxu0
    %v2352 = vpop.f32.mrf.mxu0
    %v2353 = vpop.f32.mrf.mxu0
    %2354 = vdwg.mxu0
    %v2356 = vsel %vm409, %v2296, 0
    %v2359 = vsel %vm409, %v2302, 0
    %2361 = vmatprep.subr.bf16.mxu0 0
    %2362 = vmatpush1.bf16.xpose.msra.mxu0 0
    %2363 = vmatprep.subr.bf16.mxu0 0
    %2364 = vmatpush1.bf16.xpose.msra.mxu0 0
    %2365 = vmatprep.subr.bf16.mxu0 0
    %2366 = vmatpush1.bf16.xpose.msra.mxu0 0
    %2367 = vmatprep.subr.bf16.mxu0 0
    %2368 = vmatpush1.bf16.xpose.msra.mxu0 0
    %2369 = vmatprep.subr.bf16.mxu0 0
    %2370 = vmatpush1.bf16.xpose.msra.mxu0 0
    %2371 = vmatprep.subr.bf16.mxu0 0
    %2372 = vmatpush1.bf16.xpose.msra.mxu0 0
    %2373 = vmatprep.subr.bf16.mxu0 0
    %2374 = vmatpush1.bf16.xpose.msra.mxu0 0
    %2375 = vmatprep.subr.bf16.mxu0 0
    %2376 = vmatpush1.bf16.xpose.msra.mxu0 %v2359
    %2377 = vmatprep.subr.bf16.mxu0 0
    %2378 = vmatpush2.bf16.xpose.msra.mxu0 0
    %2379 = vmatprep.subr.bf16.mxu0 0
    %2380 = vmatpush2.bf16.xpose.msra.mxu0 0
    %2381 = vmatprep.subr.bf16.mxu0 0
    %2382 = vmatpush2.bf16.xpose.msra.mxu0 0
    %2383 = vmatprep.subr.bf16.mxu0 0
    %2384 = vmatpush2.bf16.xpose.msra.mxu0 0
    %2385 = vmatprep.subr.bf16.mxu0 0
    %2386 = vmatpush2.bf16.xpose.msra.mxu0 0
    %2387 = vmatprep.subr.bf16.mxu0 0
    %2388 = vmatpush2.bf16.xpose.msra.mxu0 0
    %2389 = vmatprep.subr.bf16.mxu0 0
    %2390 = vmatpush2.bf16.xpose.msra.mxu0 0
    %2391 = vmatprep.subr.bf16.mxu0 0
    %2392 = vmatpush2.bf16.xpose.msra.mxu0 0
    %2393 = vmatprep.mubr.bf16.mxu0 0
    %2394 = vmatmul.mubr.bf16.gmra.mxu0 %v2356
    %v2395 = vpop.f32.mrf.mxu0
    %v2396 = vadd.f32 0.0, %v2395
    %v2397 = vpop.f32.mrf.mxu0
    %v2398 = vpop.f32.mrf.mxu0
    %v2399 = vpop.f32.mrf.mxu0
    %2400 = vdwg.mxu0
    %v2401 = vsel %vm502, %v2350, -inf
    %2402 = vmax.xlane.f32.xlu0 %v2401
    %v2403 = vpop.xlane.xlu0 %2402
    %v2404 = vsel %vm502, %v2396, -inf
    %2405 = vmax.xlane.f32.xlu0 %v2404
    %v2406 = vpop.xlane.xlu0 %2405
    %v2407 = vsub.f32 %v2350, %v2403
    %v2408 = vsub.f32 %v2396, %v2406
    %v2409 = vmul.f32 %v2407, 1.442695
    %v2410 = vpow.pop %v2409
    %v2411 = vmul.f32 %v2408, 1.442695
    %v2412 = vpow.pop %v2411
    %v2413 = vsel %vm502, %v2410, 0.0
    %2414 = vadd.xlane.f32.xlu0 %v2413
    %v2415 = vpop.xlane.xlu0 %2414
    %v2416 = vsel %vm502, %v2412, 0.0
    %2417 = vadd.xlane.f32.xlu0 %v2416
    %v2418 = vpop.xlane.xlu0 %2417
    %v2419 = vrcp.pop %v2415
    %v2420 = vrcp.pop %v2418
    %v2421 = vmul.f32 %v2410, %v2419
    %v2422 = vmul.f32 %v2412, %v2420
    %v2423 = vpack.c.bf16 %v2421, %v2421
    %v2424 = vpack.c.bf16 %v2422, %v2422
    %v2426 = vsel %vm502, %v2423, 0
    %v2429 = vsel %vm530, %v2307, 0
    %2431 = vmatprep.subr.bf16.mxu0 0
    %2432 = vmatpush1.bf16.msra.mxu0 0
    %2433 = vmatprep.subr.bf16.mxu0 0
    %2434 = vmatpush1.bf16.msra.mxu0 0
    %2435 = vmatprep.subr.bf16.mxu0 0
    %2436 = vmatpush1.bf16.msra.mxu0 0
    %2437 = vmatprep.subr.bf16.mxu0 0
    %2438 = vmatpush1.bf16.msra.mxu0 0
    %2439 = vmatprep.subr.bf16.mxu0 0
    %2440 = vmatpush1.bf16.msra.mxu0 0
    %2441 = vmatprep.subr.bf16.mxu0 0
    %2442 = vmatpush1.bf16.msra.mxu0 0
    %2443 = vmatprep.subr.bf16.mxu0 0
    %2444 = vmatpush1.bf16.msra.mxu0 0
    %2445 = vmatprep.subr.bf16.mxu0 0
    %2446 = vmatpush1.bf16.msra.mxu0 %v2429
    %2447 = vmatprep.subr.bf16.mxu0 0
    %2448 = vmatpush2.bf16.msra.mxu0 0
    %2449 = vmatprep.subr.bf16.mxu0 0
    %2450 = vmatpush2.bf16.msra.mxu0 0
    %2451 = vmatprep.subr.bf16.mxu0 0
    %2452 = vmatpush2.bf16.msra.mxu0 0
    %2453 = vmatprep.subr.bf16.mxu0 0
    %2454 = vmatpush2.bf16.msra.mxu0 0
    %2455 = vmatprep.subr.bf16.mxu0 0
    %2456 = vmatpush2.bf16.msra.mxu0 0
    %2457 = vmatprep.subr.bf16.mxu0 0
    %2458 = vmatpush2.bf16.msra.mxu0 0
    %2459 = vmatprep.subr.bf16.mxu0 0
    %2460 = vmatpush2.bf16.msra.mxu0 0
    %2461 = vmatprep.subr.bf16.mxu0 0
    %2462 = vmatpush2.bf16.msra.mxu0 0
    %2463 = vmatprep.mubr.bf16.mxu0 0
    %2464 = vmatmul.mubr.bf16.gmra.mxu0 %v2426
    %v2465 = vpop.f32.mrf.mxu0
    %v2466 = vadd.f32 0.0, %v2465
    %v2467 = vpop.f32.mrf.mxu0
    %v2468 = vpop.f32.mrf.mxu0
    %v2469 = vpop.f32.mrf.mxu0
    %2470 = vdwg.mxu0
    %v2472 = vsel %vm502, %v2424, 0
    %v2475 = vsel %vm530, %v2308, 0
    %2477 = vmatprep.subr.bf16.mxu0 0
    %2478 = vmatpush1.bf16.msra.mxu0 0
    %2479 = vmatprep.subr.bf16.mxu0 0
    %2480 = vmatpush1.bf16.msra.mxu0 0
    %2481 = vmatprep.subr.bf16.mxu0 0
    %2482 = vmatpush1.bf16.msra.mxu0 0
    %2483 = vmatprep.subr.bf16.mxu0 0
    %2484 = vmatpush1.bf16.msra.mxu0 0
    %2485 = vmatprep.subr.bf16.mxu0 0
    %2486 = vmatpush1.bf16.msra.mxu0 0
    %2487 = vmatprep.subr.bf16.mxu0 0
    %2488 = vmatpush1.bf16.msra.mxu0 0
    %2489 = vmatprep.subr.bf16.mxu0 0
    %2490 = vmatpush1.bf16.msra.mxu0 0
    %2491 = vmatprep.subr.bf16.mxu0 0
    %2492 = vmatpush1.bf16.msra.mxu0 %v2475
    %2493 = vmatprep.subr.bf16.mxu0 0
    %2494 = vmatpush2.bf16.msra.mxu0 0
    %2495 = vmatprep.subr.bf16.mxu0 0
    %2496 = vmatpush2.bf16.msra.mxu0 0
    %2497 = vmatprep.subr.bf16.mxu0 0
    %2498 = vmatpush2.bf16.msra.mxu0 0
    %2499 = vmatprep.subr.bf16.mxu0 0
    %2500 = vmatpush2.bf16.msra.mxu0 0
    %2501 = vmatprep.subr.bf16.mxu0 0
    %2502 = vmatpush2.bf16.msra.mxu0 0
    %2503 = vmatprep.subr.bf16.mxu0 0
    %2504 = vmatpush2.bf16.msra.mxu0 0
    %2505 = vmatprep.subr.bf16.mxu0 0
    %2506 = vmatpush2.bf16.msra.mxu0 0
    %2507 = vmatprep.subr.bf16.mxu0 0
    %2508 = vmatpush2.bf16.msra.mxu0 0
    %2509 = vmatprep.mubr.bf16.mxu0 0
    %2510 = vmatmul.mubr.bf16.gmra.mxu0 %v2472
    %v2511 = vpop.f32.mrf.mxu0
    %v2512 = vadd.f32 0.0, %v2511
    %v2513 = vpop.f32.mrf.mxu0
    %v2514 = vpop.f32.mrf.mxu0
    %v2515 = vpop.f32.mrf.mxu0
    %2516 = vdwg.mxu0
    %v2517 = vpack.c.bf16 %v2512, %v2466
    %s2518 = scalar_lea.vmem %s3, 48
    %v2519 = vld [vmem:[%s2518] sm:$0xf]
    %v2520 = vld [vmem:[%s2518 + $0x4] sm:$0xf]
    %v2521 = vld [vmem:[%s2518 + $0x8] sm:$0xf]
    %v2522 = vld [vmem:[%s2518 + $0xc] sm:$0xf]
    %v2527 = vunpack.c.l.b16 %v2519
    %v2528 = vunpack.c.l.b16 %v2520
    %v2529 = vunpack.c.l.b16 %v2521
    %v2530 = vunpack.c.l.b16 %v2522
    %v2531 = vpack.c.b16 %v2528, %v2527
    %v2532 = vpack.c.b16 %v2530, %v2529
    %v2536 = vsel %vm409, %v2517, 0
    %2538 = vmatprep.subr.bf16.mxu0 0
    %2539 = vmatpush1.bf16.msra.mxu0 0
    %2540 = vmatprep.subr.bf16.mxu0 0
    %2541 = vmatpush1.bf16.msra.mxu0 0
    %2542 = vmatprep.subr.bf16.mxu0 0
    %2543 = vmatpush1.bf16.msra.mxu0 0
    %2544 = vmatprep.subr.bf16.mxu0 0
    %2545 = vmatpush1.bf16.msra.mxu0 0
    %2546 = vmatprep.subr.bf16.mxu0 0
    %2547 = vmatpush1.bf16.msra.mxu0 0
    %2548 = vmatprep.subr.bf16.mxu0 0
    %2549 = vmatpush1.bf16.msra.mxu0 0
    %2550 = vmatprep.subr.bf16.mxu0 0
    %2551 = vmatpush1.bf16.msra.mxu0 %v2532
    %2552 = vmatprep.subr.bf16.mxu0 0
    %2553 = vmatpush1.bf16.msra.mxu0 %v2531
    %2554 = vmatprep.subr.bf16.mxu0 0
    %2555 = vmatpush2.bf16.msra.mxu0 0
    %2556 = vmatprep.subr.bf16.mxu0 0
    %2557 = vmatpush2.bf16.msra.mxu0 0
    %2558 = vmatprep.subr.bf16.mxu0 0
    %2559 = vmatpush2.bf16.msra.mxu0 0
    %2560 = vmatprep.subr.bf16.mxu0 0
    %2561 = vmatpush2.bf16.msra.mxu0 0
    %2562 = vmatprep.subr.bf16.mxu0 0
    %2563 = vmatpush2.bf16.msra.mxu0 0
    %2564 = vmatprep.subr.bf16.mxu0 0
    %2565 = vmatpush2.bf16.msra.mxu0 0
    %2566 = vmatprep.subr.bf16.mxu0 0
    %2567 = vmatpush2.bf16.msra.mxu0 0
    %2568 = vmatprep.subr.bf16.mxu0 0
    %2569 = vmatpush2.bf16.msra.mxu0 0
    %2570 = vmatprep.mubr.bf16.mxu0 0
    %2571 = vmatmul.mubr.bf16.gmra.mxu0 %v2536
    %v2572 = vpop.f32.mrf.mxu0
    %v2573 = vadd.f32 0.0, %v2572
    %v2574 = vpop.f32.mrf.mxu0
    %v2575 = vpop.f32.mrf.mxu0
    %v2576 = vadd.f32 0.0, %v2575
    %v2577 = vpop.f32.mrf.mxu0
    %2578 = vdwg.mxu0
    %v2579 = vadd.f32 %v1945, %v2573
    %v2580 = vadd.f32 %v1946, %v2576
    %v2581 = vld [vmem:[%s4] sm:$0x1]
    %v2583 = vlaneseq
    %v2584 = vshrl.u32 %v2583, 7
    %v2585 = vsub.s32 0, %v2584
    %v2586 = vrot.slane %v2581, %v2585
    %v2588 = vadd.f32 %v2579, %v2586
    %v2589 = vadd.f32 %v2580, %v2586
    %v2590 = vadd.f32 %v46, %v2588
    %v2591 = vadd.f32 %v47, %v2589
    %v2592 = vld [vmem:[%s5] sm:$0x1]
    %v2593 = vld [vmem:[%s6] sm:$0x1]
    %2594 = vadd.xlane.f32.xlu0 %v2590
    %v2595 = vpop.xlane.xlu0 %2594
    %2596 = vadd.xlane.f32.xlu0 %v2591
    %v2597 = vpop.xlane.xlu0 %2596
    %v2598 = vrcp.pop 128.0
    %v2599 = vmul.f32 %v2595, %v2598
    %v2600 = vmul.f32 %v2597, %v2598
    %v2601 = vsub.f32 %v2590, %v2599
    %v2602 = vsub.f32 %v2591, %v2600
    %v2603 = vmul.f32 %v2601, %v2601
    %v2604 = vmul.f32 %v2602, %v2602
    %2605 = vadd.xlane.f32.xlu0 %v2603
    %v2606 = vpop.xlane.xlu0 %2605
    %2607 = vadd.xlane.f32.xlu0 %v2604
    %v2608 = vpop.xlane.xlu0 %2607
    %v2609 = vmul.f32 %v2606, %v2598
    %v2610 = vmul.f32 %v2608, %v2598
    %v2611 = vadd.f32 %v2609, 1e-05
    %v2612 = vadd.f32 %v2610, 1e-05
    %v2613 = vrsqrt.pop %v2611
    %v2614 = vrsqrt.pop %v2612
    %v2615 = vmul.f32 %v2601, %v2613
    %v2616 = vmul.f32 %v2602, %v2614
    %v2618 = vlaneseq
    %v2619 = vshrl.u32 %v2618, 7
    %v2620 = vsub.s32 0, %v2619
    %v2621 = vrot.slane %v2592, %v2620
    %v2623 = vmul.f32 %v2615, %v2621
    %v2624 = vmul.f32 %v2616, %v2621
    %v2626 = vlaneseq
    %v2627 = vshrl.u32 %v2626, 7
    %v2628 = vsub.s32 0, %v2627
    %v2629 = vrot.slane %v2593, %v2628
    %v2631 = vadd.f32 %v2623, %v2629
    %v2632 = vadd.f32 %v2624, %v2629
    %v2633 = vpack.c.bf16 %v2632, %v2631
    %v2634 = vld [vmem:[%s7] sm:$0xff]
    %v2635 = vld [vmem:[%s7 + $0x8] sm:$0xff]
    %v2636 = vld [vmem:[%s7 + $0x10] sm:$0xff]
    %v2637 = vld [vmem:[%s7 + $0x18] sm:$0xff]
    %v2638 = vld [vmem:[%s7 + $0x20] sm:$0xff]
    %v2639 = vld [vmem:[%s7 + $0x28] sm:$0xff]
    %v2640 = vld [vmem:[%s7 + $0x30] sm:$0xff]
    %v2641 = vld [vmem:[%s7 + $0x38] sm:$0xff]
    %v2642 = vld [vmem:[%s7 + $0x40] sm:$0xff]
    %v2643 = vld [vmem:[%s7 + $0x48] sm:$0xff]
    %v2644 = vld [vmem:[%s7 + $0x50] sm:$0xff]
    %v2645 = vld [vmem:[%s7 + $0x58] sm:$0xff]
    %v2646 = vld [vmem:[%s7 + $0x60] sm:$0xff]
    %v2647 = vld [vmem:[%s7 + $0x68] sm:$0xff]
    %v2648 = vld [vmem:[%s7 + $0x70] sm:$0xff]
    %v2649 = vld [vmem:[%s7 + $0x78] sm:$0xff]
    %v2650 = vld [vmem:[%s8] sm:$0x3]
    %v2652 = vlaneseq
    %v2653 = vshrl.u32 %v2652, 7
    %v2654 = vsub.s32 0, %v2653
    %v2655 = vrot.slane %v2650, %v2654
    %v2656 = vlaneseq
    %v2657 = vshrl.u32 %v2656, 7
    %v2658 = vsub.s32 1, %v2657
    %v2659 = vrot.slane %v2650, %v2658
    %v2678 = vunpack.c.l.b16 %v2634
    %v2679 = vunpack.c.h.b16 %v2634
    %v2680 = vunpack.c.l.b16 %v2635
    %v2681 = vunpack.c.h.b16 %v2635
    %v2682 = vunpack.c.l.b16 %v2636
    %v2683 = vunpack.c.h.b16 %v2636
    %v2684 = vunpack.c.l.b16 %v2637
    %v2685 = vunpack.c.h.b16 %v2637
    %v2686 = vunpack.c.l.b16 %v2638
    %v2687 = vunpack.c.h.b16 %v2638
    %v2688 = vunpack.c.l.b16 %v2639
    %v2689 = vunpack.c.h.b16 %v2639
    %v2690 = vunpack.c.l.b16 %v2640
    %v2691 = vunpack.c.h.b16 %v2640
    %v2692 = vunpack.c.l.b16 %v2641
    %v2693 = vunpack.c.h.b16 %v2641
    %v2694 = vunpack.c.l.b16 %v2642
    %v2695 = vunpack.c.h.b16 %v2642
    %v2696 = vunpack.c.l.b16 %v2643
    %v2697 = vunpack.c.h.b16 %v2643
    %v2698 = vunpack.c.l.b16 %v2644
    %v2699 = vunpack.c.h.b16 %v2644
    %v2700 = vunpack.c.l.b16 %v2645
    %v2701 = vunpack.c.h.b16 %v2645
    %v2702 = vunpack.c.l.b16 %v2646
    %v2703 = vunpack.c.h.b16 %v2646
    %v2704 = vunpack.c.l.b16 %v2647
    %v2705 = vunpack.c.h.b16 %v2647
    %v2706 = vunpack.c.l.b16 %v2648
    %v2707 = vunpack.c.h.b16 %v2648
    %v2708 = vunpack.c.l.b16 %v2649
    %v2709 = vunpack.c.h.b16 %v2649
    %v2710 = vpack.c.b16 %v2680, %v2678
    %v2711 = vpack.c.b16 %v2681, %v2679
    %v2712 = vpack.c.b16 %v2684, %v2682
    %v2713 = vpack.c.b16 %v2685, %v2683
    %v2714 = vpack.c.b16 %v2688, %v2686
    %v2715 = vpack.c.b16 %v2689, %v2687
    %v2716 = vpack.c.b16 %v2692, %v2690
    %v2717 = vpack.c.b16 %v2693, %v2691
    %v2718 = vpack.c.b16 %v2696, %v2694
    %v2719 = vpack.c.b16 %v2697, %v2695
    %v2720 = vpack.c.b16 %v2700, %v2698
    %v2721 = vpack.c.b16 %v2701, %v2699
    %v2722 = vpack.c.b16 %v2704, %v2702
    %v2723 = vpack.c.b16 %v2705, %v2703
    %v2724 = vpack.c.b16 %v2708, %v2706
    %v2725 = vpack.c.b16 %v2709, %v2707
    %2742 = vmatprep.subr.bf16.mxu0 %v2725
    %2743 = vmatpush1.bf16.msra.mxu0 %v2724
    %2744 = vmatprep.subr.bf16.mxu0 %v2723
    %2745 = vmatpush1.bf16.msra.mxu0 %v2722
    %2746 = vmatprep.subr.bf16.mxu0 %v2721
    %2747 = vmatpush1.bf16.msra.mxu0 %v2720
    %2748 = vmatprep.subr.bf16.mxu0 %v2719
    %2749 = vmatpush1.bf16.msra.mxu0 %v2718
    %2750 = vmatprep.subr.bf16.mxu0 %v2717
    %2751 = vmatpush1.bf16.msra.mxu0 %v2716
    %2752 = vmatprep.subr.bf16.mxu0 %v2715
    %2753 = vmatpush1.bf16.msra.mxu0 %v2714
    %2754 = vmatprep.subr.bf16.mxu0 %v2713
    %2755 = vmatpush1.bf16.msra.mxu0 %v2712
    %2756 = vmatprep.subr.bf16.mxu0 %v2711
    %2757 = vmatpush1.bf16.msra.mxu0 %v2710
    %2758 = vmatprep.subr.bf16.mxu0 0
    %2759 = vmatpush2.bf16.msra.mxu0 0
    %2760 = vmatprep.subr.bf16.mxu0 0
    %2761 = vmatpush2.bf16.msra.mxu0 0
    %2762 = vmatprep.subr.bf16.mxu0 0
    %2763 = vmatpush2.bf16.msra.mxu0 0
    %2764 = vmatprep.subr.bf16.mxu0 0
    %2765 = vmatpush2.bf16.msra.mxu0 0
    %2766 = vmatprep.subr.bf16.mxu0 0
    %2767 = vmatpush2.bf16.msra.mxu0 0
    %2768 = vmatprep.subr.bf16.mxu0 0
    %2769 = vmatpush2.bf16.msra.mxu0 0
    %2770 = vmatprep.subr.bf16.mxu0 0
    %2771 = vmatpush2.bf16.msra.mxu0 0
    %2772 = vmatprep.subr.bf16.mxu0 0
    %2773 = vmatpush2.bf16.msra.mxu0 0
    %2774 = vmatprep.mubr.bf16.mxu0 0
    %2775 = vmatmul.mubr.bf16.gmra.mxu0 %v2633
    %v2776 = vpop.f32.mrf.mxu0
    %v2777 = vadd.f32 %v2655, %v2776
    %v2778 = vpop.f32.mrf.mxu0
    %v2779 = vadd.f32 %v2659, %v2778
    %v2780 = vpop.f32.mrf.mxu0
    %v2781 = vadd.f32 %v2655, %v2780
    %v2782 = vpop.f32.mrf.mxu0
    %v2783 = vadd.f32 %v2659, %v2782
    %2784 = vdwg.mxu0
    %v2785 = vmax.f32 %v2777, 0.0
    %v2786 = vmax.f32 %v2779, 0.0
    %v2787 = vmax.f32 %v2781, 0.0
    %v2788 = vmax.f32 %v2783, 0.0
    %v2789 = vpack.c.bf16 %v2787, %v2785
    %v2790 = vpack.c.bf16 %v2788, %v2786
    %v2791 = vld [vmem:[%s9] sm:$0xf]
    %v2792 = vld [vmem:[%s9 + $0x4] sm:$0xf]
    %v2793 = vld [vmem:[%s9 + $0x8] sm:$0xf]
    %v2794 = vld [vmem:[%s9 + $0xc] sm:$0xf]
    %v2795 = vld [vmem:[%s9 + $0x10] sm:$0xf]
    %v2796 = vld [vmem:[%s9 + $0x14] sm:$0xf]
    %v2797 = vld [vmem:[%s9 + $0x18] sm:$0xf]
    %v2798 = vld [vmem:[%s9 + $0x1c] sm:$0xf]
    %v2799 = vld [vmem:[%s9 + $0x20] sm:$0xf]
    %v2800 = vld [vmem:[%s9 + $0x24] sm:$0xf]
    %v2801 = vld [vmem:[%s9 + $0x28] sm:$0xf]
    %v2802 = vld [vmem:[%s9 + $0x2c] sm:$0xf]
    %v2803 = vld [vmem:[%s9 + $0x30] sm:$0xf]
    %v2804 = vld [vmem:[%s9 + $0x34] sm:$0xf]
    %v2805 = vld [vmem:[%s9 + $0x38] sm:$0xf]
    %v2806 = vld [vmem:[%s9 + $0x3c] sm:$0xf]
    %v2807 = vld [vmem:[%s9 + $0x40] sm:$0xf]
    %v2808 = vld [vmem:[%s9 + $0x44] sm:$0xf]
    %v2809 = vld [vmem:[%s9 + $0x48] sm:$0xf]
    %v2810 = vld [vmem:[%s9 + $0x4c] sm:$0xf]
    %v2811 = vld [vmem:[%s9 + $0x50] sm:$0xf]
    %v2812 = vld [vmem:[%s9 + $0x54] sm:$0xf]
    %v2813 = vld [vmem:[%s9 + $0x58] sm:$0xf]
    %v2814 = vld [vmem:[%s9 + $0x5c] sm:$0xf]
    %v2815 = vld [vmem:[%s9 + $0x60] sm:$0xf]
    %v2816 = vld [vmem:[%s9 + $0x64] sm:$0xf]
    %v2817 = vld [vmem:[%s9 + $0x68] sm:$0xf]
    %v2818 = vld [vmem:[%s9 + $0x6c] sm:$0xf]
    %v2819 = vld [vmem:[%s9 + $0x70] sm:$0xf]
    %v2820 = vld [vmem:[%s9 + $0x74] sm:$0xf]
    %v2821 = vld [vmem:[%s9 + $0x78] sm:$0xf]
    %v2822 = vld [vmem:[%s9 + $0x7c] sm:$0xf]
    %v2823 = vld [vmem:[%s10] sm:$0x1]
    %v2825 = vlaneseq
    %v2826 = vshrl.u32 %v2825, 7
    %v2827 = vsub.s32 0, %v2826
    %v2828 = vrot.slane %v2823, %v2827
    %v2862 = vunpack.c.l.b16 %v2791
    %v2863 = vunpack.c.l.b16 %v2792
    %v2864 = vunpack.c.l.b16 %v2793
    %v2865 = vunpack.c.l.b16 %v2794
    %v2866 = vunpack.c.l.b16 %v2795
    %v2867 = vunpack.c.l.b16 %v2796
    %v2868 = vunpack.c.l.b16 %v2797
    %v2869 = vunpack.c.l.b16 %v2798
    %v2870 = vunpack.c.l.b16 %v2799
    %v2871 = vunpack.c.l.b16 %v2800
    %v2872 = vunpack.c.l.b16 %v2801
    %v2873 = vunpack.c.l.b16 %v2802
    %v2874 = vunpack.c.l.b16 %v2803
    %v2875 = vunpack.c.l.b16 %v2804
    %v2876 = vunpack.c.l.b16 %v2805
    %v2877 = vunpack.c.l.b16 %v2806
    %v2878 = vunpack.c.l.b16 %v2807
    %v2879 = vunpack.c.l.b16 %v2808
    %v2880 = vunpack.c.l.b16 %v2809
    %v2881 = vunpack.c.l.b16 %v2810
    %v2882 = vunpack.c.l.b16 %v2811
    %v2883 = vunpack.c.l.b16 %v2812
    %v2884 = vunpack.c.l.b16 %v2813
    %v2885 = vunpack.c.l.b16 %v2814
    %v2886 = vunpack.c.l.b16 %v2815
    %v2887 = vunpack.c.l.b16 %v2816
    %v2888 = vunpack.c.l.b16 %v2817
    %v2889 = vunpack.c.l.b16 %v2818
    %v2890 = vunpack.c.l.b16 %v2819
    %v2891 = vunpack.c.l.b16 %v2820
    %v2892 = vunpack.c.l.b16 %v2821
    %v2893 = vunpack.c.l.b16 %v2822
    %v2894 = vpack.c.b16 %v2863, %v2862
    %v2895 = vpack.c.b16 %v2865, %v2864
    %v2896 = vpack.c.b16 %v2867, %v2866
    %v2897 = vpack.c.b16 %v2869, %v2868
    %v2898 = vpack.c.b16 %v2871, %v2870
    %v2899 = vpack.c.b16 %v2873, %v2872
    %v2900 = vpack.c.b16 %v2875, %v2874
    %v2901 = vpack.c.b16 %v2877, %v2876
    %v2902 = vpack.c.b16 %v2879, %v2878
    %v2903 = vpack.c.b16 %v2881, %v2880
    %v2904 = vpack.c.b16 %v2883, %v2882
    %v2905 = vpack.c.b16 %v2885, %v2884
    %v2906 = vpack.c.b16 %v2887, %v2886
    %v2907 = vpack.c.b16 %v2889, %v2888
    %v2908 = vpack.c.b16 %v2891, %v2890
    %v2909 = vpack.c.b16 %v2893, %v2892
    %2926 = vmatprep.subr.bf16.mxu0 0
    %2927 = vmatpush1.bf16.msra.mxu0 %v2901
    %2928 = vmatprep.subr.bf16.mxu0 0
    %2929 = vmatpush1.bf16.msra.mxu0 %v2900
    %2930 = vmatprep.subr.bf16.mxu0 0
    %2931 = vmatpush1.bf16.msra.mxu0 %v2899
    %2932 = vmatprep.subr.bf16.mxu0 0
    %2933 = vmatpush1.bf16.msra.mxu0 %v2898
    %2934 = vmatprep.subr.bf16.mxu0 0
    %2935 = vmatpush1.bf16.msra.mxu0 %v2897
    %2936 = vmatprep.subr.bf16.mxu0 0
    %2937 = vmatpush1.bf16.msra.mxu0 %v2896
    %2938 = vmatprep.subr.bf16.mxu0 0
    %2939 = vmatpush1.bf16.msra.mxu0 %v2895
    %2940 = vmatprep.subr.bf16.mxu0 0
    %2941 = vmatpush1.bf16.msra.mxu0 %v2894
    %2942 = vmatprep.subr.bf16.mxu0 0
    %2943 = vmatpush2.bf16.msra.mxu0 %v2909
    %2944 = vmatprep.subr.bf16.mxu0 0
    %2945 = vmatpush2.bf16.msra.mxu0 %v2908
    %2946 = vmatprep.subr.bf16.mxu0 0
    %2947 = vmatpush2.bf16.msra.mxu0 %v2907
    %2948 = vmatprep.subr.bf16.mxu0 0
    %2949 = vmatpush2.bf16.msra.mxu0 %v2906
    %2950 = vmatprep.subr.bf16.mxu0 0
    %2951 = vmatpush2.bf16.msra.mxu0 %v2905
    %2952 = vmatprep.subr.bf16.mxu0 0
    %2953 = vmatpush2.bf16.msra.mxu0 %v2904
    %2954 = vmatprep.subr.bf16.mxu0 0
    %2955 = vmatpush2.bf16.msra.mxu0 %v2903
    %2956 = vmatprep.subr.bf16.mxu0 0
    %2957 = vmatpush2.bf16.msra.mxu0 %v2902
    %2958 = vmatprep.mubr.bf16.mxu0 %v2790
    %2959 = vmatmul.mubr.bf16.gmra.mxu0 %v2789
    %v2960 = vpop.f32.mrf.mxu0
    %v2961 = vadd.f32 %v2828, %v2960
    %v2962 = vpop.f32.mrf.mxu0
    %v2963 = vpop.f32.mrf.mxu0
    %v2964 = vadd.f32 %v2828, %v2963
    %v2965 = vpop.f32.mrf.mxu0
    %2966 = vdwg.mxu0
    %v2967 = vadd.f32 %v2631, %v2961
    %v2968 = vadd.f32 %v2632, %v2964
    %v2969 = vld [vmem:[%s11] sm:$0x1]
    %v2970 = vld [vmem:[%s12] sm:$0x1]
    %2971 = vadd.xlane.f32.xlu0 %v2967
    %v2972 = vpop.xlane.xlu0 %2971
    %2973 = vadd.xlane.f32.xlu0 %v2968
    %v2974 = vpop.xlane.xlu0 %2973
    %v2975 = vmul.f32 %v2972, %v2598
    %v2976 = vmul.f32 %v2974, %v2598
    %v2977 = vsub.f32 %v2967, %v2975
    %v2978 = vsub.f32 %v2968, %v2976
    %v2979 = vmul.f32 %v2977, %v2977
    %v2980 = vmul.f32 %v2978, %v2978
    %2981 = vadd.xlane.f32.xlu0 %v2979
    %v2982 = vpop.xlane.xlu0 %2981
    %2983 = vadd.xlane.f32.xlu0 %v2980
    %v2984 = vpop.xlane.xlu0 %2983
    %v2985 = vmul.f32 %v2982, %v2598
    %v2986 = vmul.f32 %v2984, %v2598
    %v2987 = vadd.f32 %v2985, 1e-05
    %v2988 = vadd.f32 %v2986, 1e-05
    %v2989 = vrsqrt.pop %v2987
    %v2990 = vrsqrt.pop %v2988
    %v2991 = vmul.f32 %v2977, %v2989
    %v2992 = vmul.f32 %v2978, %v2990
    %v2994 = vlaneseq
    %v2995 = vshrl.u32 %v2994, 7
    %v2996 = vsub.s32 0, %v2995
    %v2997 = vrot.slane %v2969, %v2996
    %v2999 = vmul.f32 %v2991, %v2997
    %v3000 = vmul.f32 %v2992, %v2997
    %v3002 = vlaneseq
    %v3003 = vshrl.u32 %v3002, 7
    %v3004 = vsub.s32 0, %v3003
    %v3005 = vrot.slane %v2970, %v3004
    %v3007 = vadd.f32 %v2999, %v3005
    %v3008 = vadd.f32 %v3000, %v3005
    %v3009 = vpack.c.bf16 %v3008, %v3007
    %s3010 = scalar_lea.vmem %s1, 768
    %v3011 = vld [vmem:[%s3010] sm:$0xf]
    %v3012 = vld [vmem:[%s3010 + $0x4] sm:$0xf]
    %v3013 = vld [vmem:[%s3010 + $0x8] sm:$0xf]
    %v3014 = vld [vmem:[%s3010 + $0xc] sm:$0xf]
    %v3015 = vld [vmem:[%s3010 + $0x10] sm:$0xf]
    %v3016 = vld [vmem:[%s3010 + $0x14] sm:$0xf]
    %v3017 = vld [vmem:[%s3010 + $0x18] sm:$0xf]
    %v3018 = vld [vmem:[%s3010 + $0x1c] sm:$0xf]
    %v3019 = vld [vmem:[%s3010 + $0x20] sm:$0xf]
    %v3020 = vld [vmem:[%s3010 + $0x24] sm:$0xf]
    %v3021 = vld [vmem:[%s3010 + $0x28] sm:$0xf]
    %v3022 = vld [vmem:[%s3010 + $0x2c] sm:$0xf]
    %v3023 = vld [vmem:[%s3010 + $0x30] sm:$0xf]
    %v3024 = vld [vmem:[%s3010 + $0x34] sm:$0xf]
    %v3025 = vld [vmem:[%s3010 + $0x38] sm:$0xf]
    %v3026 = vld [vmem:[%s3010 + $0x3c] sm:$0xf]
    %s3027 = scalar_lea.vmem %s2, 12
    %v3028 = vld [vmem:[%s3027] sm:$0x1]
    %v3030 = vlaneseq
    %v3031 = vshrl.u32 %v3030, 7
    %v3032 = vsub.s32 0, %v3031
    %v3033 = vrot.slane %v3028, %v3032
    %v3051 = vunpack.c.l.b16 %v3011
    %v3052 = vunpack.c.l.b16 %v3012
    %v3053 = vunpack.c.l.b16 %v3013
    %v3054 = vunpack.c.l.b16 %v3014
    %v3055 = vunpack.c.l.b16 %v3015
    %v3056 = vunpack.c.l.b16 %v3016
    %v3057 = vunpack.c.l.b16 %v3017
    %v3058 = vunpack.c.l.b16 %v3018
    %v3059 = vunpack.c.l.b16 %v3019
    %v3060 = vunpack.c.l.b16 %v3020
    %v3061 = vunpack.c.l.b16 %v3021
    %v3062 = vunpack.c.l.b16 %v3022
    %v3063 = vunpack.c.l.b16 %v3023
    %v3064 = vunpack.c.l.b16 %v3024
    %v3065 = vunpack.c.l.b16 %v3025
    %v3066 = vunpack.c.l.b16 %v3026
    %v3067 = vpack.c.b16 %v3052, %v3051
    %v3068 = vpack.c.b16 %v3054, %v3053
    %v3069 = vpack.c.b16 %v3056, %v3055
    %v3070 = vpack.c.b16 %v3058, %v3057
    %v3071 = vpack.c.b16 %v3060, %v3059
    %v3072 = vpack.c.b16 %v3062, %v3061
    %v3073 = vpack.c.b16 %v3064, %v3063
    %v3074 = vpack.c.b16 %v3066, %v3065
    %3083 = vmatprep.subr.bf16.mxu0 0
    %3084 = vmatpush1.bf16.msra.mxu0 %v3074
    %3085 = vmatprep.subr.bf16.mxu0 0
    %3086 = vmatpush1.bf16.msra.mxu0 %v3073
    %3087 = vmatprep.subr.bf16.mxu0 0
    %3088 = vmatpush1.bf16.msra.mxu0 %v3072
    %3089 = vmatprep.subr.bf16.mxu0 0
    %3090 = vmatpush1.bf16.msra.mxu0 %v3071
    %3091 = vmatprep.subr.bf16.mxu0 0
    %3092 = vmatpush1.bf16.msra.mxu0 %v3070
    %3093 = vmatprep.subr.bf16.mxu0 0
    %3094 = vmatpush1.bf16.msra.mxu0 %v3069
    %3095 = vmatprep.subr.bf16.mxu0 0
    %3096 = vmatpush1.bf16.msra.mxu0 %v3068
    %3097 = vmatprep.subr.bf16.mxu0 0
    %3098 = vmatpush1.bf16.msra.mxu0 %v3067
    %3099 = vmatprep.subr.bf16.mxu0 0
    %3100 = vmatpush2.bf16.msra.mxu0 0
    %3101 = vmatprep.subr.bf16.mxu0 0
    %3102 = vmatpush2.bf16.msra.mxu0 0
    %3103 = vmatprep.subr.bf16.mxu0 0
    %3104 = vmatpush2.bf16.msra.mxu0 0
    %3105 = vmatprep.subr.bf16.mxu0 0
    %3106 = vmatpush2.bf16.msra.mxu0 0
    %3107 = vmatprep.subr.bf16.mxu0 0
    %3108 = vmatpush2.bf16.msra.mxu0 0
    %3109 = vmatprep.subr.bf16.mxu0 0
    %3110 = vmatpush2.bf16.msra.mxu0 0
    %3111 = vmatprep.subr.bf16.mxu0 0
    %3112 = vmatpush2.bf16.msra.mxu0 0
    %3113 = vmatprep.subr.bf16.mxu0 0
    %3114 = vmatpush2.bf16.msra.mxu0 0
    %3115 = vmatprep.mubr.bf16.mxu0 0
    %3116 = vmatmul.mubr.bf16.gmra.mxu0 %v3009
    %v3117 = vpop.f32.mrf.mxu0
    %v3118 = vadd.f32 %v3033, %v3117
    %v3119 = vpop.f32.mrf.mxu0
    %v3120 = vpop.f32.mrf.mxu0
    %v3121 = vadd.f32 %v3033, %v3120
    %v3122 = vpop.f32.mrf.mxu0
    %3123 = vdwg.mxu0
    %s3124 = scalar_lea.vmem %s1, 1024
    %v3125 = vld [vmem:[%s3124] sm:$0xf]
    %v3126 = vld [vmem:[%s3124 + $0x4] sm:$0xf]
    %v3127 = vld [vmem:[%s3124 + $0x8] sm:$0xf]
    %v3128 = vld [vmem:[%s3124 + $0xc] sm:$0xf]
    %v3129 = vld [vmem:[%s3124 + $0x10] sm:$0xf]
    %v3130 = vld [vmem:[%s3124 + $0x14] sm:$0xf]
    %v3131 = vld [vmem:[%s3124 + $0x18] sm:$0xf]
    %v3132 = vld [vmem:[%s3124 + $0x1c] sm:$0xf]
    %v3133 = vld [vmem:[%s3124 + $0x20] sm:$0xf]
    %v3134 = vld [vmem:[%s3124 + $0x24] sm:$0xf]
    %v3135 = vld [vmem:[%s3124 + $0x28] sm:$0xf]
    %v3136 = vld [vmem:[%s3124 + $0x2c] sm:$0xf]
    %v3137 = vld [vmem:[%s3124 + $0x30] sm:$0xf]
    %v3138 = vld [vmem:[%s3124 + $0x34] sm:$0xf]
    %v3139 = vld [vmem:[%s3124 + $0x38] sm:$0xf]
    %v3140 = vld [vmem:[%s3124 + $0x3c] sm:$0xf]
    %s3141 = scalar_lea.vmem %s2, 16
    %v3142 = vld [vmem:[%s3141] sm:$0x1]
    %v3144 = vlaneseq
    %v3145 = vshrl.u32 %v3144, 7
    %v3146 = vsub.s32 0, %v3145
    %v3147 = vrot.slane %v3142, %v3146
    %v3165 = vunpack.c.l.b16 %v3125
    %v3166 = vunpack.c.l.b16 %v3126
    %v3167 = vunpack.c.l.b16 %v3127
    %v3168 = vunpack.c.l.b16 %v3128
    %v3169 = vunpack.c.l.b16 %v3129
    %v3170 = vunpack.c.l.b16 %v3130
    %v3171 = vunpack.c.l.b16 %v3131
    %v3172 = vunpack.c.l.b16 %v3132
    %v3173 = vunpack.c.l.b16 %v3133
    %v3174 = vunpack.c.l.b16 %v3134
    %v3175 = vunpack.c.l.b16 %v3135
    %v3176 = vunpack.c.l.b16 %v3136
    %v3177 = vunpack.c.l.b16 %v3137
    %v3178 = vunpack.c.l.b16 %v3138
    %v3179 = vunpack.c.l.b16 %v3139
    %v3180 = vunpack.c.l.b16 %v3140
    %v3181 = vpack.c.b16 %v3166, %v3165
    %v3182 = vpack.c.b16 %v3168, %v3167
    %v3183 = vpack.c.b16 %v3170, %v3169
    %v3184 = vpack.c.b16 %v3172, %v3171
    %v3185 = vpack.c.b16 %v3174, %v3173
    %v3186 = vpack.c.b16 %v3176, %v3175
    %v3187 = vpack.c.b16 %v3178, %v3177
    %v3188 = vpack.c.b16 %v3180, %v3179
    %3197 = vmatprep.subr.bf16.mxu0 0
    %3198 = vmatpush1.bf16.msra.mxu0 %v3188
    %3199 = vmatprep.subr.bf16.mxu0 0
    %3200 = vmatpush1.bf16.msra.mxu0 %v3187
    %3201 = vmatprep.subr.bf16.mxu0 0
    %3202 = vmatpush1.bf16.msra.mxu0 %v3186
    %3203 = vmatprep.subr.bf16.mxu0 0
    %3204 = vmatpush1.bf16.msra.mxu0 %v3185
    %3205 = vmatprep.subr.bf16.mxu0 0
    %3206 = vmatpush1.bf16.msra.mxu0 %v3184
    %3207 = vmatprep.subr.bf16.mxu0 0
    %3208 = vmatpush1.bf16.msra.mxu0 %v3183
    %3209 = vmatprep.subr.bf16.mxu0 0
    %3210 = vmatpush1.bf16.msra.mxu0 %v3182
    %3211 = vmatprep.subr.bf16.mxu0 0
    %3212 = vmatpush1.bf16.msra.mxu0 %v3181
    %3213 = vmatprep.subr.bf16.mxu0 0
    %3214 = vmatpush2.bf16.msra.mxu0 0
    %3215 = vmatprep.subr.bf16.mxu0 0
    %3216 = vmatpush2.bf16.msra.mxu0 0
    %3217 = vmatprep.subr.bf16.mxu0 0
    %3218 = vmatpush2.bf16.msra.mxu0 0
    %3219 = vmatprep.subr.bf16.mxu0 0
    %3220 = vmatpush2.bf16.msra.mxu0 0
    %3221 = vmatprep.subr.bf16.mxu0 0
    %3222 = vmatpush2.bf16.msra.mxu0 0
    %3223 = vmatprep.subr.bf16.mxu0 0
    %3224 = vmatpush2.bf16.msra.mxu0 0
    %3225 = vmatprep.subr.bf16.mxu0 0
    %3226 = vmatpush2.bf16.msra.mxu0 0
    %3227 = vmatprep.subr.bf16.mxu0 0
    %3228 = vmatpush2.bf16.msra.mxu0 0
    %3229 = vmatprep.mubr.bf16.mxu0 0
    %3230 = vmatmul.mubr.bf16.gmra.mxu0 %v3009
    %v3231 = vpop.f32.mrf.mxu0
    %v3232 = vadd.f32 %v3147, %v3231
    %v3233 = vpop.f32.mrf.mxu0
    %v3234 = vpop.f32.mrf.mxu0
    %v3235 = vadd.f32 %v3147, %v3234
    %v3236 = vpop.f32.mrf.mxu0
    %3237 = vdwg.mxu0
    %s3238 = scalar_lea.vmem %s1, 1280
    %v3239 = vld [vmem:[%s3238] sm:$0xf]
    %v3240 = vld [vmem:[%s3238 + $0x4] sm:$0xf]
    %v3241 = vld [vmem:[%s3238 + $0x8] sm:$0xf]
    %v3242 = vld [vmem:[%s3238 + $0xc] sm:$0xf]
    %v3243 = vld [vmem:[%s3238 + $0x10] sm:$0xf]
    %v3244 = vld [vmem:[%s3238 + $0x14] sm:$0xf]
    %v3245 = vld [vmem:[%s3238 + $0x18] sm:$0xf]
    %v3246 = vld [vmem:[%s3238 + $0x1c] sm:$0xf]
    %v3247 = vld [vmem:[%s3238 + $0x20] sm:$0xf]
    %v3248 = vld [vmem:[%s3238 + $0x24] sm:$0xf]
    %v3249 = vld [vmem:[%s3238 + $0x28] sm:$0xf]
    %v3250 = vld [vmem:[%s3238 + $0x2c] sm:$0xf]
    %v3251 = vld [vmem:[%s3238 + $0x30] sm:$0xf]
    %v3252 = vld [vmem:[%s3238 + $0x34] sm:$0xf]
    %v3253 = vld [vmem:[%s3238 + $0x38] sm:$0xf]
    %v3254 = vld [vmem:[%s3238 + $0x3c] sm:$0xf]
    %s3255 = scalar_lea.vmem %s2, 20
    %v3256 = vld [vmem:[%s3255] sm:$0x1]
    %v3258 = vlaneseq
    %v3259 = vshrl.u32 %v3258, 7
    %v3260 = vsub.s32 0, %v3259
    %v3261 = vrot.slane %v3256, %v3260
    %v3279 = vunpack.c.l.b16 %v3239
    %v3280 = vunpack.c.l.b16 %v3240
    %v3281 = vunpack.c.l.b16 %v3241
    %v3282 = vunpack.c.l.b16 %v3242
    %v3283 = vunpack.c.l.b16 %v3243
    %v3284 = vunpack.c.l.b16 %v3244
    %v3285 = vunpack.c.l.b16 %v3245
    %v3286 = vunpack.c.l.b16 %v3246
    %v3287 = vunpack.c.l.b16 %v3247
    %v3288 = vunpack.c.l.b16 %v3248
    %v3289 = vunpack.c.l.b16 %v3249
    %v3290 = vunpack.c.l.b16 %v3250
    %v3291 = vunpack.c.l.b16 %v3251
    %v3292 = vunpack.c.l.b16 %v3252
    %v3293 = vunpack.c.l.b16 %v3253
    %v3294 = vunpack.c.l.b16 %v3254
    %v3295 = vpack.c.b16 %v3280, %v3279
    %v3296 = vpack.c.b16 %v3282, %v3281
    %v3297 = vpack.c.b16 %v3284, %v3283
    %v3298 = vpack.c.b16 %v3286, %v3285
    %v3299 = vpack.c.b16 %v3288, %v3287
    %v3300 = vpack.c.b16 %v3290, %v3289
    %v3301 = vpack.c.b16 %v3292, %v3291
    %v3302 = vpack.c.b16 %v3294, %v3293
    %3311 = vmatprep.subr.bf16.mxu0 0
    %3312 = vmatpush1.bf16.msra.mxu0 %v3302
    %3313 = vmatprep.subr.bf16.mxu0 0
    %3314 = vmatpush1.bf16.msra.mxu0 %v3301
    %3315 = vmatprep.subr.bf16.mxu0 0
    %3316 = vmatpush1.bf16.msra.mxu0 %v3300
    %3317 = vmatprep.subr.bf16.mxu0 0
    %3318 = vmatpush1.bf16.msra.mxu0 %v3299
    %3319 = vmatprep.subr.bf16.mxu0 0
    %3320 = vmatpush1.bf16.msra.mxu0 %v3298
    %3321 = vmatprep.subr.bf16.mxu0 0
    %3322 = vmatpush1.bf16.msra.mxu0 %v3297
    %3323 = vmatprep.subr.bf16.mxu0 0
    %3324 = vmatpush1.bf16.msra.mxu0 %v3296
    %3325 = vmatprep.subr.bf16.mxu0 0
    %3326 = vmatpush1.bf16.msra.mxu0 %v3295
    %3327 = vmatprep.subr.bf16.mxu0 0
    %3328 = vmatpush2.bf16.msra.mxu0 0
    %3329 = vmatprep.subr.bf16.mxu0 0
    %3330 = vmatpush2.bf16.msra.mxu0 0
    %3331 = vmatprep.subr.bf16.mxu0 0
    %3332 = vmatpush2.bf16.msra.mxu0 0
    %3333 = vmatprep.subr.bf16.mxu0 0
    %3334 = vmatpush2.bf16.msra.mxu0 0
    %3335 = vmatprep.subr.bf16.mxu0 0
    %3336 = vmatpush2.bf16.msra.mxu0 0
    %3337 = vmatprep.subr.bf16.mxu0 0
    %3338 = vmatpush2.bf16.msra.mxu0 0
    %3339 = vmatprep.subr.bf16.mxu0 0
    %3340 = vmatpush2.bf16.msra.mxu0 0
    %3341 = vmatprep.subr.bf16.mxu0 0
    %3342 = vmatpush2.bf16.msra.mxu0 0
    %3343 = vmatprep.mubr.bf16.mxu0 0
    %3344 = vmatmul.mubr.bf16.gmra.mxu0 %v3009
    %v3345 = vpop.f32.mrf.mxu0
    %v3346 = vadd.f32 %v3261, %v3345
    %v3347 = vpop.f32.mrf.mxu0
    %v3348 = vpop.f32.mrf.mxu0
    %v3349 = vadd.f32 %v3261, %v3348
    %v3350 = vpop.f32.mrf.mxu0
    %3351 = vdwg.mxu0
    %v3352 = vmul.f32 %v3118, 0.17677669
    %v3353 = vmul.f32 %v3121, 0.17677669
    %v3354 = vpack.c.bf16 %v3353, %v3352
    %v3356 = vunpack.c.l.b16 %v3354
    %v3357 = vunpack.c.h.b16 %v3354
    %v3358 = vpack.c.b16 %v3356, %v3356
    %v3359 = vpack.c.b16 %v3357, %v3357
    %v3360 = vpack.c.bf16 %v3235, %v3232
    %v3362 = vunpack.c.l.b16 %v3360
    %v3363 = vunpack.c.h.b16 %v3360
    %v3364 = vpack.c.b16 %v3362, %v3362
    %v3365 = vpack.c.b16 %v3363, %v3363
    %v3366 = vpack.c.bf16 %v3349, %v3346
    %v3368 = vunpack.c.l.b16 %v3366
    %v3369 = vunpack.c.h.b16 %v3366
    %v3370 = vpack.c.b16 %v3368, %v3368
    %v3371 = vpack.c.b16 %v3369, %v3369
    %v3373 = vsel %vm409, %v3358, 0
    %v3376 = vsel %vm409, %v3364, 0
    %3378 = vmatprep.subr.bf16.mxu0 0
    %3379 = vmatpush1.bf16.xpose.msra.mxu0 0
    %3380 = vmatprep.subr.bf16.mxu0 0
    %3381 = vmatpush1.bf16.xpose.msra.mxu0 0
    %3382 = vmatprep.subr.bf16.mxu0 0
    %3383 = vmatpush1.bf16.xpose.msra.mxu0 0
    %3384 = vmatprep.subr.bf16.mxu0 0
    %3385 = vmatpush1.bf16.xpose.msra.mxu0 0
    %3386 = vmatprep.subr.bf16.mxu0 0
    %3387 = vmatpush1.bf16.xpose.msra.mxu0 0
    %3388 = vmatprep.subr.bf16.mxu0 0
    %3389 = vmatpush1.bf16.xpose.msra.mxu0 0
    %3390 = vmatprep.subr.bf16.mxu0 0
    %3391 = vmatpush1.bf16.xpose.msra.mxu0 0
    %3392 = vmatprep.subr.bf16.mxu0 0
    %3393 = vmatpush1.bf16.xpose.msra.mxu0 %v3376
    %3394 = vmatprep.subr.bf16.mxu0 0
    %3395 = vmatpush2.bf16.xpose.msra.mxu0 0
    %3396 = vmatprep.subr.bf16.mxu0 0
    %3397 = vmatpush2.bf16.xpose.msra.mxu0 0
    %3398 = vmatprep.subr.bf16.mxu0 0
    %3399 = vmatpush2.bf16.xpose.msra.mxu0 0
    %3400 = vmatprep.subr.bf16.mxu0 0
    %3401 = vmatpush2.bf16.xpose.msra.mxu0 0
    %3402 = vmatprep.subr.bf16.mxu0 0
    %3403 = vmatpush2.bf16.xpose.msra.mxu0 0
    %3404 = vmatprep.subr.bf16.mxu0 0
    %3405 = vmatpush2.bf16.xpose.msra.mxu0 0
    %3406 = vmatprep.subr.bf16.mxu0 0
    %3407 = vmatpush2.bf16.xpose.msra.mxu0 0
    %3408 = vmatprep.subr.bf16.mxu0 0
    %3409 = vmatpush2.bf16.xpose.msra.mxu0 0
    %3410 = vmatprep.mubr.bf16.mxu0 0
    %3411 = vmatmul.mubr.bf16.gmra.mxu0 %v3373
    %v3412 = vpop.f32.mrf.mxu0
    %v3413 = vadd.f32 0.0, %v3412
    %v3414 = vpop.f32.mrf.mxu0
    %v3415 = vpop.f32.mrf.mxu0
    %v3416 = vpop.f32.mrf.mxu0
    %3417 = vdwg.mxu0
    %v3419 = vsel %vm409, %v3359, 0
    %v3422 = vsel %vm409, %v3365, 0
    %3424 = vmatprep.subr.bf16.mxu0 0
    %3425 = vmatpush1.bf16.xpose.msra.mxu0 0
    %3426 = vmatprep.subr.bf16.mxu0 0
    %3427 = vmatpush1.bf16.xpose.msra.mxu0 0
    %3428 = vmatprep.subr.bf16.mxu0 0
    %3429 = vmatpush1.bf16.xpose.msra.mxu0 0
    %3430 = vmatprep.subr.bf16.mxu0 0
    %3431 = vmatpush1.bf16.xpose.msra.mxu0 0
    %3432 = vmatprep.subr.bf16.mxu0 0
    %3433 = vmatpush1.bf16.xpose.msra.mxu0 0
    %3434 = vmatprep.subr.bf16.mxu0 0
    %3435 = vmatpush1.bf16.xpose.msra.mxu0 0
    %3436 = vmatprep.subr.bf16.mxu0 0
    %3437 = vmatpush1.bf16.xpose.msra.mxu0 0
    %3438 = vmatprep.subr.bf16.mxu0 0
    %3439 = vmatpush1.bf16.xpose.msra.mxu0 %v3422
    %3440 = vmatprep.subr.bf16.mxu0 0
    %3441 = vmatpush2.bf16.xpose.msra.mxu0 0
    %3442 = vmatprep.subr.bf16.mxu0 0
    %3443 = vmatpush2.bf16.xpose.msra.mxu0 0
    %3444 = vmatprep.subr.bf16.mxu0 0
    %3445 = vmatpush2.bf16.xpose.msra.mxu0 0
    %3446 = vmatprep.subr.bf16.mxu0 0
    %3447 = vmatpush2.bf16.xpose.msra.mxu0 0
    %3448 = vmatprep.subr.bf16.mxu0 0
    %3449 = vmatpush2.bf16.xpose.msra.mxu0 0
    %3450 = vmatprep.subr.bf16.mxu0 0
    %3451 = vmatpush2.bf16.xpose.msra.mxu0 0
    %3452 = vmatprep.subr.bf16.mxu0 0
    %3453 = vmatpush2.bf16.xpose.msra.mxu0 0
    %3454 = vmatprep.subr.bf16.mxu0 0
    %3455 = vmatpush2.bf16.xpose.msra.mxu0 0
    %3456 = vmatprep.mubr.bf16.mxu0 0
    %3457 = vmatmul.mubr.bf16.gmra.mxu0 %v3419
    %v3458 = vpop.f32.mrf.mxu0
    %v3459 = vadd.f32 0.0, %v3458
    %v3460 = vpop.f32.mrf.mxu0
    %v3461 = vpop.f32.mrf.mxu0
    %v3462 = vpop.f32.mrf.mxu0
    %3463 = vdwg.mxu0
    %v3464 = vsel %vm502, %v3413, -inf
    %3465 = vmax.xlane.f32.xlu0 %v3464
    %v3466 = vpop.xlane.xlu0 %3465
    %v3467 = vsel %vm502, %v3459, -inf
    %3468 = vmax.xlane.f32.xlu0 %v3467
    %v3469 = vpop.xlane.xlu0 %3468
    %v3470 = vsub.f32 %v3413, %v3466
    %v3471 = vsub.f32 %v3459, %v3469
    %v3472 = vmul.f32 %v3470, 1.442695
    %v3473 = vpow.pop %v3472
    %v3474 = vmul.f32 %v3471, 1.442695
    %v3475 = vpow.pop %v3474
    %v3476 = vsel %vm502, %v3473, 0.0
    %3477 = vadd.xlane.f32.xlu0 %v3476
    %v3478 = vpop.xlane.xlu0 %3477
    %v3479 = vsel %vm502, %v3475, 0.0
    %3480 = vadd.xlane.f32.xlu0 %v3479
    %v3481 = vpop.xlane.xlu0 %3480
    %v3482 = vrcp.pop %v3478
    %v3483 = vrcp.pop %v3481
    %v3484 = vmul.f32 %v3473, %v3482
    %v3485 = vmul.f32 %v3475, %v3483
    %v3486 = vpack.c.bf16 %v3484, %v3484
    %v3487 = vpack.c.bf16 %v3485, %v3485
    %v3489 = vsel %vm502, %v3486, 0
    %v3492 = vsel %vm530, %v3370, 0
    %3494 = vmatprep.subr.bf16.mxu0 0
    %3495 = vmatpush1.bf16.msra.mxu0 0
    %3496 = vmatprep.subr.bf16.mxu0 0
    %3497 = vmatpush1.bf16.msra.mxu0 0
    %3498 = vmatprep.subr.bf16.mxu0 0
    %3499 = vmatpush1.bf16.msra.mxu0 0
    %3500 = vmatprep.subr.bf16.mxu0 0
    %3501 = vmatpush1.bf16.msra.mxu0 0
    %3502 = vmatprep.subr.bf16.mxu0 0
    %3503 = vmatpush1.bf16.msra.mxu0 0
    %3504 = vmatprep.subr.bf16.mxu0 0
    %3505 = vmatpush1.bf16.msra.mxu0 0
    %3506 = vmatprep.subr.bf16.mxu0 0
    %3507 = vmatpush1.bf16.msra.mxu0 0
    %3508 = vmatprep.subr.bf16.mxu0 0
    %3509 = vmatpush1.bf16.msra.mxu0 %v3492
    %3510 = vmatprep.subr.bf16.mxu0 0
    %3511 = vmatpush2.bf16.msra.mxu0 0
    %3512 = vmatprep.subr.bf16.mxu0 0
    %3513 = vmatpush2.bf16.msra.mxu0 0
    %3514 = vmatprep.subr.bf16.mxu0 0
    %3515 = vmatpush2.bf16.msra.mxu0 0
    %3516 = vmatprep.subr.bf16.mxu0 0
    %3517 = vmatpush2.bf16.msra.mxu0 0
    %3518 = vmatprep.subr.bf16.mxu0 0
    %3519 = vmatpush2.bf16.msra.mxu0 0
    %3520 = vmatprep.subr.bf16.mxu0 0
    %3521 = vmatpush2.bf16.msra.mxu0 0
    %3522 = vmatprep.subr.bf16.mxu0 0
    %3523 = vmatpush2.bf16.msra.mxu0 0
    %3524 = vmatprep.subr.bf16.mxu0 0
    %3525 = vmatpush2.bf16.msra.mxu0 0
    %3526 = vmatprep.mubr.bf16.mxu0 0
    %3527 = vmatmul.mubr.bf16.gmra.mxu0 %v3489
    %v3528 = vpop.f32.mrf.mxu0
    %v3529 = vadd.f32 0.0, %v3528
    %v3530 = vpop.f32.mrf.mxu0
    %v3531 = vpop.f32.mrf.mxu0
    %v3532 = vpop.f32.mrf.mxu0
    %3533 = vdwg.mxu0
    %v3535 = vsel %vm502, %v3487, 0
    %v3538 = vsel %vm530, %v3371, 0
    %3540 = vmatprep.subr.bf16.mxu0 0
    %3541 = vmatpush1.bf16.msra.mxu0 0
    %3542 = vmatprep.subr.bf16.mxu0 0
    %3543 = vmatpush1.bf16.msra.mxu0 0
    %3544 = vmatprep.subr.bf16.mxu0 0
    %3545 = vmatpush1.bf16.msra.mxu0 0
    %3546 = vmatprep.subr.bf16.mxu0 0
    %3547 = vmatpush1.bf16.msra.mxu0 0
    %3548 = vmatprep.subr.bf16.mxu0 0
    %3549 = vmatpush1.bf16.msra.mxu0 0
    %3550 = vmatprep.subr.bf16.mxu0 0
    %3551 = vmatpush1.bf16.msra.mxu0 0
    %3552 = vmatprep.subr.bf16.mxu0 0
    %3553 = vmatpush1.bf16.msra.mxu0 0
    %3554 = vmatprep.subr.bf16.mxu0 0
    %3555 = vmatpush1.bf16.msra.mxu0 %v3538
    %3556 = vmatprep.subr.bf16.mxu0 0
    %3557 = vmatpush2.bf16.msra.mxu0 0
    %3558 = vmatprep.subr.bf16.mxu0 0
    %3559 = vmatpush2.bf16.msra.mxu0 0
    %3560 = vmatprep.subr.bf16.mxu0 0
    %3561 = vmatpush2.bf16.msra.mxu0 0
    %3562 = vmatprep.subr.bf16.mxu0 0
    %3563 = vmatpush2.bf16.msra.mxu0 0
    %3564 = vmatprep.subr.bf16.mxu0 0
    %3565 = vmatpush2.bf16.msra.mxu0 0
    %3566 = vmatprep.subr.bf16.mxu0 0
    %3567 = vmatpush2.bf16.msra.mxu0 0
    %3568 = vmatprep.subr.bf16.mxu0 0
    %3569 = vmatpush2.bf16.msra.mxu0 0
    %3570 = vmatprep.subr.bf16.mxu0 0
    %3571 = vmatpush2.bf16.msra.mxu0 0
    %3572 = vmatprep.mubr.bf16.mxu0 0
    %3573 = vmatmul.mubr.bf16.gmra.mxu0 %v3535
    %v3574 = vpop.f32.mrf.mxu0
    %v3575 = vadd.f32 0.0, %v3574
    %v3576 = vpop.f32.mrf.mxu0
    %v3577 = vpop.f32.mrf.mxu0
    %v3578 = vpop.f32.mrf.mxu0
    %3579 = vdwg.mxu0
    %v3580 = vpack.c.bf16 %v3575, %v3529
    %s3581 = scalar_lea.vmem %s3, 64
    %v3582 = vld [vmem:[%s3581] sm:$0xf]
    %v3583 = vld [vmem:[%s3581 + $0x4] sm:$0xf]
    %v3584 = vld [vmem:[%s3581 + $0x8] sm:$0xf]
    %v3585 = vld [vmem:[%s3581 + $0xc] sm:$0xf]
    %s3586 = scalar_lea.vmem %s1, 832
    %v3587 = vld [vmem:[%s3586] sm:$0xf]
    %v3588 = vld [vmem:[%s3586 + $0x4] sm:$0xf]
    %v3589 = vld [vmem:[%s3586 + $0x8] sm:$0xf]
    %v3590 = vld [vmem:[%s3586 + $0xc] sm:$0xf]
    %v3591 = vld [vmem:[%s3586 + $0x10] sm:$0xf]
    %v3592 = vld [vmem:[%s3586 + $0x14] sm:$0xf]
    %v3593 = vld [vmem:[%s3586 + $0x18] sm:$0xf]
    %v3594 = vld [vmem:[%s3586 + $0x1c] sm:$0xf]
    %v3595 = vld [vmem:[%s3586 + $0x20] sm:$0xf]
    %v3596 = vld [vmem:[%s3586 + $0x24] sm:$0xf]
    %v3597 = vld [vmem:[%s3586 + $0x28] sm:$0xf]
    %v3598 = vld [vmem:[%s3586 + $0x2c] sm:$0xf]
    %v3599 = vld [vmem:[%s3586 + $0x30] sm:$0xf]
    %v3600 = vld [vmem:[%s3586 + $0x34] sm:$0xf]
    %v3601 = vld [vmem:[%s3586 + $0x38] sm:$0xf]
    %v3602 = vld [vmem:[%s3586 + $0x3c] sm:$0xf]
    %s3603 = scalar_lea.vmem %s2, 13
    %v3604 = vld [vmem:[%s3603] sm:$0x1]
    %v3606 = vlaneseq
    %v3607 = vshrl.u32 %v3606, 7
    %v3608 = vsub.s32 0, %v3607
    %v3609 = vrot.slane %v3604, %v3608
    %v3627 = vunpack.c.l.b16 %v3587
    %v3628 = vunpack.c.l.b16 %v3588
    %v3629 = vunpack.c.l.b16 %v3589
    %v3630 = vunpack.c.l.b16 %v3590
    %v3631 = vunpack.c.l.b16 %v3591
    %v3632 = vunpack.c.l.b16 %v3592
    %v3633 = vunpack.c.l.b16 %v3593
    %v3634 = vunpack.c.l.b16 %v3594
    %v3635 = vunpack.c.l.b16 %v3595
    %v3636 = vunpack.c.l.b16 %v3596
    %v3637 = vunpack.c.l.b16 %v3597
    %v3638 = vunpack.c.l.b16 %v3598
    %v3639 = vunpack.c.l.b16 %v3599
    %v3640 = vunpack.c.l.b16 %v3600
    %v3641 = vunpack.c.l.b16 %v3601
    %v3642 = vunpack.c.l.b16 %v3602
    %v3643 = vpack.c.b16 %v3628, %v3627
    %v3644 = vpack.c.b16 %v3630, %v3629
    %v3645 = vpack.c.b16 %v3632, %v3631
    %v3646 = vpack.c.b16 %v3634, %v3633
    %v3647 = vpack.c.b16 %v3636, %v3635
    %v3648 = vpack.c.b16 %v3638, %v3637
    %v3649 = vpack.c.b16 %v3640, %v3639
    %v3650 = vpack.c.b16 %v3642, %v3641
    %3659 = vmatprep.subr.bf16.mxu0 0
    %3660 = vmatpush1.bf16.msra.mxu0 %v3650
    %3661 = vmatprep.subr.bf16.mxu0 0
    %3662 = vmatpush1.bf16.msra.mxu0 %v3649
    %3663 = vmatprep.subr.bf16.mxu0 0
    %3664 = vmatpush1.bf16.msra.mxu0 %v3648
    %3665 = vmatprep.subr.bf16.mxu0 0
    %3666 = vmatpush1.bf16.msra.mxu0 %v3647
    %3667 = vmatprep.subr.bf16.mxu0 0
    %3668 = vmatpush1.bf16.msra.mxu0 %v3646
    %3669 = vmatprep.subr.bf16.mxu0 0
    %3670 = vmatpush1.bf16.msra.mxu0 %v3645
    %3671 = vmatprep.subr.bf16.mxu0 0
    %3672 = vmatpush1.bf16.msra.mxu0 %v3644
    %3673 = vmatprep.subr.bf16.mxu0 0
    %3674 = vmatpush1.bf16.msra.mxu0 %v3643
    %3675 = vmatprep.subr.bf16.mxu0 0
    %3676 = vmatpush2.bf16.msra.mxu0 0
    %3677 = vmatprep.subr.bf16.mxu0 0
    %3678 = vmatpush2.bf16.msra.mxu0 0
    %3679 = vmatprep.subr.bf16.mxu0 0
    %3680 = vmatpush2.bf16.msra.mxu0 0
    %3681 = vmatprep.subr.bf16.mxu0 0
    %3682 = vmatpush2.bf16.msra.mxu0 0
    %3683 = vmatprep.subr.bf16.mxu0 0
    %3684 = vmatpush2.bf16.msra.mxu0 0
    %3685 = vmatprep.subr.bf16.mxu0 0
    %3686 = vmatpush2.bf16.msra.mxu0 0
    %3687 = vmatprep.subr.bf16.mxu0 0
    %3688 = vmatpush2.bf16.msra.mxu0 0
    %3689 = vmatprep.subr.bf16.mxu0 0
    %3690 = vmatpush2.bf16.msra.mxu0 0
    %3691 = vmatprep.mubr.bf16.mxu0 0
    %3692 = vmatmul.mubr.bf16.gmra.mxu0 %v3009
    %v3693 = vpop.f32.mrf.mxu0
    %v3694 = vadd.f32 %v3609, %v3693
    %v3695 = vpop.f32.mrf.mxu0
    %v3696 = vpop.f32.mrf.mxu0
    %v3697 = vadd.f32 %v3609, %v3696
    %v3698 = vpop.f32.mrf.mxu0
    %3699 = vdwg.mxu0
    %s3700 = scalar_lea.vmem %s1, 1088
    %v3701 = vld [vmem:[%s3700] sm:$0xf]
    %v3702 = vld [vmem:[%s3700 + $0x4] sm:$0xf]
    %v3703 = vld [vmem:[%s3700 + $0x8] sm:$0xf]
    %v3704 = vld [vmem:[%s3700 + $0xc] sm:$0xf]
    %v3705 = vld [vmem:[%s3700 + $0x10] sm:$0xf]
    %v3706 = vld [vmem:[%s3700 + $0x14] sm:$0xf]
    %v3707 = vld [vmem:[%s3700 + $0x18] sm:$0xf]
    %v3708 = vld [vmem:[%s3700 + $0x1c] sm:$0xf]
    %v3709 = vld [vmem:[%s3700 + $0x20] sm:$0xf]
    %v3710 = vld [vmem:[%s3700 + $0x24] sm:$0xf]
    %v3711 = vld [vmem:[%s3700 + $0x28] sm:$0xf]
    %v3712 = vld [vmem:[%s3700 + $0x2c] sm:$0xf]
    %v3713 = vld [vmem:[%s3700 + $0x30] sm:$0xf]
    %v3714 = vld [vmem:[%s3700 + $0x34] sm:$0xf]
    %v3715 = vld [vmem:[%s3700 + $0x38] sm:$0xf]
    %v3716 = vld [vmem:[%s3700 + $0x3c] sm:$0xf]
    %s3717 = scalar_lea.vmem %s2, 17
    %v3718 = vld [vmem:[%s3717] sm:$0x1]
    %v3720 = vlaneseq
    %v3721 = vshrl.u32 %v3720, 7
    %v3722 = vsub.s32 0, %v3721
    %v3723 = vrot.slane %v3718, %v3722
    %v3741 = vunpack.c.l.b16 %v3701
    %v3742 = vunpack.c.l.b16 %v3702
    %v3743 = vunpack.c.l.b16 %v3703
    %v3744 = vunpack.c.l.b16 %v3704
    %v3745 = vunpack.c.l.b16 %v3705
    %v3746 = vunpack.c.l.b16 %v3706
    %v3747 = vunpack.c.l.b16 %v3707
    %v3748 = vunpack.c.l.b16 %v3708
    %v3749 = vunpack.c.l.b16 %v3709
    %v3750 = vunpack.c.l.b16 %v3710
    %v3751 = vunpack.c.l.b16 %v3711
    %v3752 = vunpack.c.l.b16 %v3712
    %v3753 = vunpack.c.l.b16 %v3713
    %v3754 = vunpack.c.l.b16 %v3714
    %v3755 = vunpack.c.l.b16 %v3715
    %v3756 = vunpack.c.l.b16 %v3716
    %v3757 = vpack.c.b16 %v3742, %v3741
    %v3758 = vpack.c.b16 %v3744, %v3743
    %v3759 = vpack.c.b16 %v3746, %v3745
    %v3760 = vpack.c.b16 %v3748, %v3747
    %v3761 = vpack.c.b16 %v3750, %v3749
    %v3762 = vpack.c.b16 %v3752, %v3751
    %v3763 = vpack.c.b16 %v3754, %v3753
    %v3764 = vpack.c.b16 %v3756, %v3755
    %3773 = vmatprep.subr.bf16.mxu0 0
    %3774 = vmatpush1.bf16.msra.mxu0 %v3764
    %3775 = vmatprep.subr.bf16.mxu0 0
    %3776 = vmatpush1.bf16.msra.mxu0 %v3763
    %3777 = vmatprep.subr.bf16.mxu0 0
    %3778 = vmatpush1.bf16.msra.mxu0 %v3762
    %3779 = vmatprep.subr.bf16.mxu0 0
    %3780 = vmatpush1.bf16.msra.mxu0 %v3761
    %3781 = vmatprep.subr.bf16.mxu0 0
    %3782 = vmatpush1.bf16.msra.mxu0 %v3760
    %3783 = vmatprep.subr.bf16.mxu0 0
    %3784 = vmatpush1.bf16.msra.mxu0 %v3759
    %3785 = vmatprep.subr.bf16.mxu0 0
    %3786 = vmatpush1.bf16.msra.mxu0 %v3758
    %3787 = vmatprep.subr.bf16.mxu0 0
    %3788 = vmatpush1.bf16.msra.mxu0 %v3757
    %3789 = vmatprep.subr.bf16.mxu0 0
    %3790 = vmatpush2.bf16.msra.mxu0 0
    %3791 = vmatprep.subr.bf16.mxu0 0
    %3792 = vmatpush2.bf16.msra.mxu0 0
    %3793 = vmatprep.subr.bf16.mxu0 0
    %3794 = vmatpush2.bf16.msra.mxu0 0
    %3795 = vmatprep.subr.bf16.mxu0 0
    %3796 = vmatpush2.bf16.msra.mxu0 0
    %3797 = vmatprep.subr.bf16.mxu0 0
    %3798 = vmatpush2.bf16.msra.mxu0 0
    %3799 = vmatprep.subr.bf16.mxu0 0
    %3800 = vmatpush2.bf16.msra.mxu0 0
    %3801 = vmatprep.subr.bf16.mxu0 0
    %3802 = vmatpush2.bf16.msra.mxu0 0
    %3803 = vmatprep.subr.bf16.mxu0 0
    %3804 = vmatpush2.bf16.msra.mxu0 0
    %3805 = vmatprep.mubr.bf16.mxu0 0
    %3806 = vmatmul.mubr.bf16.gmra.mxu0 %v3009
    %v3807 = vpop.f32.mrf.mxu0
    %v3808 = vadd.f32 %v3723, %v3807
    %v3809 = vpop.f32.mrf.mxu0
    %v3810 = vpop.f32.mrf.mxu0
    %v3811 = vadd.f32 %v3723, %v3810
    %v3812 = vpop.f32.mrf.mxu0
    %3813 = vdwg.mxu0
    %s3814 = scalar_lea.vmem %s1, 1344
    %v3815 = vld [vmem:[%s3814] sm:$0xf]
    %v3816 = vld [vmem:[%s3814 + $0x4] sm:$0xf]
    %v3817 = vld [vmem:[%s3814 + $0x8] sm:$0xf]
    %v3818 = vld [vmem:[%s3814 + $0xc] sm:$0xf]
    %v3819 = vld [vmem:[%s3814 + $0x10] sm:$0xf]
    %v3820 = vld [vmem:[%s3814 + $0x14] sm:$0xf]
    %v3821 = vld [vmem:[%s3814 + $0x18] sm:$0xf]
    %v3822 = vld [vmem:[%s3814 + $0x1c] sm:$0xf]
    %v3823 = vld [vmem:[%s3814 + $0x20] sm:$0xf]
    %v3824 = vld [vmem:[%s3814 + $0x24] sm:$0xf]
    %v3825 = vld [vmem:[%s3814 + $0x28] sm:$0xf]
    %v3826 = vld [vmem:[%s3814 + $0x2c] sm:$0xf]
    %v3827 = vld [vmem:[%s3814 + $0x30] sm:$0xf]
    %v3828 = vld [vmem:[%s3814 + $0x34] sm:$0xf]
    %v3829 = vld [vmem:[%s3814 + $0x38] sm:$0xf]
    %v3830 = vld [vmem:[%s3814 + $0x3c] sm:$0xf]
    %s3831 = scalar_lea.vmem %s2, 21
    %v3832 = vld [vmem:[%s3831] sm:$0x1]
    %v3834 = vlaneseq
    %v3835 = vshrl.u32 %v3834, 7
    %v3836 = vsub.s32 0, %v3835
    %v3837 = vrot.slane %v3832, %v3836
    %v3855 = vunpack.c.l.b16 %v3815
    %v3856 = vunpack.c.l.b16 %v3816
    %v3857 = vunpack.c.l.b16 %v3817
    %v3858 = vunpack.c.l.b16 %v3818
    %v3859 = vunpack.c.l.b16 %v3819
    %v3860 = vunpack.c.l.b16 %v3820
    %v3861 = vunpack.c.l.b16 %v3821
    %v3862 = vunpack.c.l.b16 %v3822
    %v3863 = vunpack.c.l.b16 %v3823
    %v3864 = vunpack.c.l.b16 %v3824
    %v3865 = vunpack.c.l.b16 %v3825
    %v3866 = vunpack.c.l.b16 %v3826
    %v3867 = vunpack.c.l.b16 %v3827
    %v3868 = vunpack.c.l.b16 %v3828
    %v3869 = vunpack.c.l.b16 %v3829
    %v3870 = vunpack.c.l.b16 %v3830
    %v3871 = vpack.c.b16 %v3856, %v3855
    %v3872 = vpack.c.b16 %v3858, %v3857
    %v3873 = vpack.c.b16 %v3860, %v3859
    %v3874 = vpack.c.b16 %v3862, %v3861
    %v3875 = vpack.c.b16 %v3864, %v3863
    %v3876 = vpack.c.b16 %v3866, %v3865
    %v3877 = vpack.c.b16 %v3868, %v3867
    %v3878 = vpack.c.b16 %v3870, %v3869
    %3887 = vmatprep.subr.bf16.mxu0 0
    %3888 = vmatpush1.bf16.msra.mxu0 %v3878
    %3889 = vmatprep.subr.bf16.mxu0 0
    %3890 = vmatpush1.bf16.msra.mxu0 %v3877
    %3891 = vmatprep.subr.bf16.mxu0 0
    %3892 = vmatpush1.bf16.msra.mxu0 %v3876
    %3893 = vmatprep.subr.bf16.mxu0 0
    %3894 = vmatpush1.bf16.msra.mxu0 %v3875
    %3895 = vmatprep.subr.bf16.mxu0 0
    %3896 = vmatpush1.bf16.msra.mxu0 %v3874
    %3897 = vmatprep.subr.bf16.mxu0 0
    %3898 = vmatpush1.bf16.msra.mxu0 %v3873
    %3899 = vmatprep.subr.bf16.mxu0 0
    %3900 = vmatpush1.bf16.msra.mxu0 %v3872
    %3901 = vmatprep.subr.bf16.mxu0 0
    %3902 = vmatpush1.bf16.msra.mxu0 %v3871
    %3903 = vmatprep.subr.bf16.mxu0 0
    %3904 = vmatpush2.bf16.msra.mxu0 0
    %3905 = vmatprep.subr.bf16.mxu0 0
    %3906 = vmatpush2.bf16.msra.mxu0 0
    %3907 = vmatprep.subr.bf16.mxu0 0
    %3908 = vmatpush2.bf16.msra.mxu0 0
    %3909 = vmatprep.subr.bf16.mxu0 0
    %3910 = vmatpush2.bf16.msra.mxu0 0
    %3911 = vmatprep.subr.bf16.mxu0 0
    %3912 = vmatpush2.bf16.msra.mxu0 0
    %3913 = vmatprep.subr.bf16.mxu0 0
    %3914 = vmatpush2.bf16.msra.mxu0 0
    %3915 = vmatprep.subr.bf16.mxu0 0
    %3916 = vmatpush2.bf16.msra.mxu0 0
    %3917 = vmatprep.subr.bf16.mxu0 0
    %3918 = vmatpush2.bf16.msra.mxu0 0
    %3919 = vmatprep.mubr.bf16.mxu0 0
    %3920 = vmatmul.mubr.bf16.gmra.mxu0 %v3009
    %v3921 = vpop.f32.mrf.mxu0
    %v3922 = vadd.f32 %v3837, %v3921
    %v3923 = vpop.f32.mrf.mxu0
    %v3924 = vpop.f32.mrf.mxu0
    %v3925 = vadd.f32 %v3837, %v3924
    %v3926 = vpop.f32.mrf.mxu0
    %3927 = vdwg.mxu0
    %v3928 = vmul.f32 %v3694, 0.17677669
    %v3929 = vmul.f32 %v3697, 0.17677669
    %v3930 = vpack.c.bf16 %v3929, %v3928
    %v3932 = vunpack.c.l.b16 %v3930
    %v3933 = vunpack.c.h.b16 %v3930
    %v3934 = vpack.c.b16 %v3932, %v3932
    %v3935 = vpack.c.b16 %v3933, %v3933
    %v3936 = vpack.c.bf16 %v3811, %v3808
    %v3938 = vunpack.c.l.b16 %v3936
    %v3939 = vunpack.c.h.b16 %v3936
    %v3940 = vpack.c.b16 %v3938, %v3938
    %v3941 = vpack.c.b16 %v3939, %v3939
    %v3942 = vpack.c.bf16 %v3925, %v3922
    %v3944 = vunpack.c.l.b16 %v3942
    %v3945 = vunpack.c.h.b16 %v3942
    %v3946 = vpack.c.b16 %v3944, %v3944
    %v3947 = vpack.c.b16 %v3945, %v3945
    %v3949 = vsel %vm409, %v3934, 0
    %v3952 = vsel %vm409, %v3940, 0
    %3954 = vmatprep.subr.bf16.mxu0 0
    %3955 = vmatpush1.bf16.xpose.msra.mxu0 0
    %3956 = vmatprep.subr.bf16.mxu0 0
    %3957 = vmatpush1.bf16.xpose.msra.mxu0 0
    %3958 = vmatprep.subr.bf16.mxu0 0
    %3959 = vmatpush1.bf16.xpose.msra.mxu0 0
    %3960 = vmatprep.subr.bf16.mxu0 0
    %3961 = vmatpush1.bf16.xpose.msra.mxu0 0
    %3962 = vmatprep.subr.bf16.mxu0 0
    %3963 = vmatpush1.bf16.xpose.msra.mxu0 0
    %3964 = vmatprep.subr.bf16.mxu0 0
    %3965 = vmatpush1.bf16.xpose.msra.mxu0 0
    %3966 = vmatprep.subr.bf16.mxu0 0
    %3967 = vmatpush1.bf16.xpose.msra.mxu0 0
    %3968 = vmatprep.subr.bf16.mxu0 0
    %3969 = vmatpush1.bf16.xpose.msra.mxu0 %v3952
    %3970 = vmatprep.subr.bf16.mxu0 0
    %3971 = vmatpush2.bf16.xpose.msra.mxu0 0
    %3972 = vmatprep.subr.bf16.mxu0 0
    %3973 = vmatpush2.bf16.xpose.msra.mxu0 0
    %3974 = vmatprep.subr.bf16.mxu0 0
    %3975 = vmatpush2.bf16.xpose.msra.mxu0 0
    %3976 = vmatprep.subr.bf16.mxu0 0
    %3977 = vmatpush2.bf16.xpose.msra.mxu0 0
    %3978 = vmatprep.subr.bf16.mxu0 0
    %3979 = vmatpush2.bf16.xpose.msra.mxu0 0
    %3980 = vmatprep.subr.bf16.mxu0 0
    %3981 = vmatpush2.bf16.xpose.msra.mxu0 0
    %3982 = vmatprep.subr.bf16.mxu0 0
    %3983 = vmatpush2.bf16.xpose.msra.mxu0 0
    %3984 = vmatprep.subr.bf16.mxu0 0
    %3985 = vmatpush2.bf16.xpose.msra.mxu0 0
    %3986 = vmatprep.mubr.bf16.mxu0 0
    %3987 = vmatmul.mubr.bf16.gmra.mxu0 %v3949
    %v3988 = vpop.f32.mrf.mxu0
    %v3989 = vadd.f32 0.0, %v3988
    %v3990 = vpop.f32.mrf.mxu0
    %v3991 = vpop.f32.mrf.mxu0
    %v3992 = vpop.f32.mrf.mxu0
    %3993 = vdwg.mxu0
    %v3995 = vsel %vm409, %v3935, 0
    %v3998 = vsel %vm409, %v3941, 0
    %4000 = vmatprep.subr.bf16.mxu0 0
    %4001 = vmatpush1.bf16.xpose.msra.mxu0 0
    %4002 = vmatprep.subr.bf16.mxu0 0
    %4003 = vmatpush1.bf16.xpose.msra.mxu0 0
    %4004 = vmatprep.subr.bf16.mxu0 0
    %4005 = vmatpush1.bf16.xpose.msra.mxu0 0
    %4006 = vmatprep.subr.bf16.mxu0 0
    %4007 = vmatpush1.bf16.xpose.msra.mxu0 0
    %4008 = vmatprep.subr.bf16.mxu0 0
    %4009 = vmatpush1.bf16.xpose.msra.mxu0 0
    %4010 = vmatprep.subr.bf16.mxu0 0
    %4011 = vmatpush1.bf16.xpose.msra.mxu0 0
    %4012 = vmatprep.subr.bf16.mxu0 0
    %4013 = vmatpush1.bf16.xpose.msra.mxu0 0
    %4014 = vmatprep.subr.bf16.mxu0 0
    %4015 = vmatpush1.bf16.xpose.msra.mxu0 %v3998
    %4016 = vmatprep.subr.bf16.mxu0 0
    %4017 = vmatpush2.bf16.xpose.msra.mxu0 0
    %4018 = vmatprep.subr.bf16.mxu0 0
    %4019 = vmatpush2.bf16.xpose.msra.mxu0 0
    %4020 = vmatprep.subr.bf16.mxu0 0
    %4021 = vmatpush2.bf16.xpose.msra.mxu0 0
    %4022 = vmatprep.subr.bf16.mxu0 0
    %4023 = vmatpush2.bf16.xpose.msra.mxu0 0
    %4024 = vmatprep.subr.bf16.mxu0 0
    %4025 = vmatpush2.bf16.xpose.msra.mxu0 0
    %4026 = vmatprep.subr.bf16.mxu0 0
    %4027 = vmatpush2.bf16.xpose.msra.mxu0 0
    %4028 = vmatprep.subr.bf16.mxu0 0
    %4029 = vmatpush2.bf16.xpose.msra.mxu0 0
    %4030 = vmatprep.subr.bf16.mxu0 0
    %4031 = vmatpush2.bf16.xpose.msra.mxu0 0
    %4032 = vmatprep.mubr.bf16.mxu0 0
    %4033 = vmatmul.mubr.bf16.gmra.mxu0 %v3995
    %v4034 = vpop.f32.mrf.mxu0
    %v4035 = vadd.f32 0.0, %v4034
    %v4036 = vpop.f32.mrf.mxu0
    %v4037 = vpop.f32.mrf.mxu0
    %v4038 = vpop.f32.mrf.mxu0
    %4039 = vdwg.mxu0
    %v4040 = vsel %vm502, %v3989, -inf
    %4041 = vmax.xlane.f32.xlu0 %v4040
    %v4042 = vpop.xlane.xlu0 %4041
    %v4043 = vsel %vm502, %v4035, -inf
    %4044 = vmax.xlane.f32.xlu0 %v4043
    %v4045 = vpop.xlane.xlu0 %4044
    %v4046 = vsub.f32 %v3989, %v4042
    %v4047 = vsub.f32 %v4035, %v4045
    %v4048 = vmul.f32 %v4046, 1.442695
    %v4049 = vpow.pop %v4048
    %v4050 = vmul.f32 %v4047, 1.442695
    %v4051 = vpow.pop %v4050
    %v4052 = vsel %vm502, %v4049, 0.0
    %4053 = vadd.xlane.f32.xlu0 %v4052
    %v4054 = vpop.xlane.xlu0 %4053
    %v4055 = vsel %vm502, %v4051, 0.0
    %4056 = vadd.xlane.f32.xlu0 %v4055
    %v4057 = vpop.xlane.xlu0 %4056
    %v4058 = vrcp.pop %v4054
    %v4059 = vrcp.pop %v4057
    %v4060 = vmul.f32 %v4049, %v4058
    %v4061 = vmul.f32 %v4051, %v4059
    %v4062 = vpack.c.bf16 %v4060, %v4060
    %v4063 = vpack.c.bf16 %v4061, %v4061
    %v4065 = vsel %vm502, %v4062, 0
    %v4068 = vsel %vm530, %v3946, 0
    %4070 = vmatprep.subr.bf16.mxu0 0
    %4071 = vmatpush1.bf16.msra.mxu0 0
    %4072 = vmatprep.subr.bf16.mxu0 0
    %4073 = vmatpush1.bf16.msra.mxu0 0
    %4074 = vmatprep.subr.bf16.mxu0 0
    %4075 = vmatpush1.bf16.msra.mxu0 0
    %4076 = vmatprep.subr.bf16.mxu0 0
    %4077 = vmatpush1.bf16.msra.mxu0 0
    %4078 = vmatprep.subr.bf16.mxu0 0
    %4079 = vmatpush1.bf16.msra.mxu0 0
    %4080 = vmatprep.subr.bf16.mxu0 0
    %4081 = vmatpush1.bf16.msra.mxu0 0
    %4082 = vmatprep.subr.bf16.mxu0 0
    %4083 = vmatpush1.bf16.msra.mxu0 0
    %4084 = vmatprep.subr.bf16.mxu0 0
    %4085 = vmatpush1.bf16.msra.mxu0 %v4068
    %4086 = vmatprep.subr.bf16.mxu0 0
    %4087 = vmatpush2.bf16.msra.mxu0 0
    %4088 = vmatprep.subr.bf16.mxu0 0
    %4089 = vmatpush2.bf16.msra.mxu0 0
    %4090 = vmatprep.subr.bf16.mxu0 0
    %4091 = vmatpush2.bf16.msra.mxu0 0
    %4092 = vmatprep.subr.bf16.mxu0 0
    %4093 = vmatpush2.bf16.msra.mxu0 0
    %4094 = vmatprep.subr.bf16.mxu0 0
    %4095 = vmatpush2.bf16.msra.mxu0 0
    %4096 = vmatprep.subr.bf16.mxu0 0
    %4097 = vmatpush2.bf16.msra.mxu0 0
    %4098 = vmatprep.subr.bf16.mxu0 0
    %4099 = vmatpush2.bf16.msra.mxu0 0
    %4100 = vmatprep.subr.bf16.mxu0 0
    %4101 = vmatpush2.bf16.msra.mxu0 0
    %4102 = vmatprep.mubr.bf16.mxu0 0
    %4103 = vmatmul.mubr.bf16.gmra.mxu0 %v4065
    %v4104 = vpop.f32.mrf.mxu0
    %v4105 = vadd.f32 0.0, %v4104
    %v4106 = vpop.f32.mrf.mxu0
    %v4107 = vpop.f32.mrf.mxu0
    %v4108 = vpop.f32.mrf.mxu0
    %4109 = vdwg.mxu0
    %v4111 = vsel %vm502, %v4063, 0
    %v4114 = vsel %vm530, %v3947, 0
    %4116 = vmatprep.subr.bf16.mxu0 0
    %4117 = vmatpush1.bf16.msra.mxu0 0
    %4118 = vmatprep.subr.bf16.mxu0 0
    %4119 = vmatpush1.bf16.msra.mxu0 0
    %4120 = vmatprep.subr.bf16.mxu0 0
    %4121 = vmatpush1.bf16.msra.mxu0 0
    %4122 = vmatprep.subr.bf16.mxu0 0
    %4123 = vmatpush1.bf16.msra.mxu0 0
    %4124 = vmatprep.subr.bf16.mxu0 0
    %4125 = vmatpush1.bf16.msra.mxu0 0
    %4126 = vmatprep.subr.bf16.mxu0 0
    %4127 = vmatpush1.bf16.msra.mxu0 0
    %4128 = vmatprep.subr.bf16.mxu0 0
    %4129 = vmatpush1.bf16.msra.mxu0 0
    %4130 = vmatprep.subr.bf16.mxu0 0
    %4131 = vmatpush1.bf16.msra.mxu0 %v4114
    %4132 = vmatprep.subr.bf16.mxu0 0
    %4133 = vmatpush2.bf16.msra.mxu0 0
    %4134 = vmatprep.subr.bf16.mxu0 0
    %4135 = vmatpush2.bf16.msra.mxu0 0
    %4136 = vmatprep.subr.bf16.mxu0 0
    %4137 = vmatpush2.bf16.msra.mxu0 0
    %4138 = vmatprep.subr.bf16.mxu0 0
    %4139 = vmatpush2.bf16.msra.mxu0 0
    %4140 = vmatprep.subr.bf16.mxu0 0
    %4141 = vmatpush2.bf16.msra.mxu0 0
    %4142 = vmatprep.subr.bf16.mxu0 0
    %4143 = vmatpush2.bf16.msra.mxu0 0
    %4144 = vmatprep.subr.bf16.mxu0 0
    %4145 = vmatpush2.bf16.msra.mxu0 0
    %4146 = vmatprep.subr.bf16.mxu0 0
    %4147 = vmatpush2.bf16.msra.mxu0 0
    %4148 = vmatprep.mubr.bf16.mxu0 0
    %4149 = vmatmul.mubr.bf16.gmra.mxu0 %v4111
    %v4150 = vpop.f32.mrf.mxu0
    %v4151 = vadd.f32 0.0, %v4150
    %v4152 = vpop.f32.mrf.mxu0
    %v4153 = vpop.f32.mrf.mxu0
    %v4154 = vpop.f32.mrf.mxu0
    %4155 = vdwg.mxu0
    %v4156 = vpack.c.bf16 %v4151, %v4105
    %s4157 = scalar_lea.vmem %s3, 80
    %v4158 = vld [vmem:[%s4157] sm:$0xf]
    %v4159 = vld [vmem:[%s4157 + $0x4] sm:$0xf]
    %v4160 = vld [vmem:[%s4157 + $0x8] sm:$0xf]
    %v4161 = vld [vmem:[%s4157 + $0xc] sm:$0xf]
    %v4166 = vunpack.c.l.b16 %v4158
    %v4167 = vunpack.c.l.b16 %v4159
    %v4168 = vunpack.c.l.b16 %v4160
    %v4169 = vunpack.c.l.b16 %v4161
    %v4170 = vpack.c.b16 %v4167, %v4166
    %v4171 = vpack.c.b16 %v4169, %v4168
    %v4175 = vsel %vm409, %v4156, 0
    %4177 = vmatprep.subr.bf16.mxu0 0
    %4178 = vmatpush1.bf16.msra.mxu0 0
    %4179 = vmatprep.subr.bf16.mxu0 0
    %4180 = vmatpush1.bf16.msra.mxu0 0
    %4181 = vmatprep.subr.bf16.mxu0 0
    %4182 = vmatpush1.bf16.msra.mxu0 0
    %4183 = vmatprep.subr.bf16.mxu0 0
    %4184 = vmatpush1.bf16.msra.mxu0 0
    %4185 = vmatprep.subr.bf16.mxu0 0
    %4186 = vmatpush1.bf16.msra.mxu0 0
    %4187 = vmatprep.subr.bf16.mxu0 0
    %4188 = vmatpush1.bf16.msra.mxu0 0
    %4189 = vmatprep.subr.bf16.mxu0 0
    %4190 = vmatpush1.bf16.msra.mxu0 %v4171
    %4191 = vmatprep.subr.bf16.mxu0 0
    %4192 = vmatpush1.bf16.msra.mxu0 %v4170
    %4193 = vmatprep.subr.bf16.mxu0 0
    %4194 = vmatpush2.bf16.msra.mxu0 0
    %4195 = vmatprep.subr.bf16.mxu0 0
    %4196 = vmatpush2.bf16.msra.mxu0 0
    %4197 = vmatprep.subr.bf16.mxu0 0
    %4198 = vmatpush2.bf16.msra.mxu0 0
    %4199 = vmatprep.subr.bf16.mxu0 0
    %4200 = vmatpush2.bf16.msra.mxu0 0
    %4201 = vmatprep.subr.bf16.mxu0 0
    %4202 = vmatpush2.bf16.msra.mxu0 0
    %4203 = vmatprep.subr.bf16.mxu0 0
    %4204 = vmatpush2.bf16.msra.mxu0 0
    %4205 = vmatprep.subr.bf16.mxu0 0
    %4206 = vmatpush2.bf16.msra.mxu0 0
    %4207 = vmatprep.subr.bf16.mxu0 0
    %4208 = vmatpush2.bf16.msra.mxu0 0
    %4209 = vmatprep.mubr.bf16.mxu0 0
    %4210 = vmatmul.mubr.bf16.gmra.mxu0 %v4175
    %v4211 = vpop.f32.mrf.mxu0
    %v4212 = vadd.f32 0.0, %v4211
    %v4213 = vpop.f32.mrf.mxu0
    %v4214 = vpop.f32.mrf.mxu0
    %v4215 = vadd.f32 0.0, %v4214
    %v4216 = vpop.f32.mrf.mxu0
    %4217 = vdwg.mxu0
    %v4222 = vunpack.c.l.b16 %v3582
    %v4223 = vunpack.c.l.b16 %v3583
    %v4224 = vunpack.c.l.b16 %v3584
    %v4225 = vunpack.c.l.b16 %v3585
    %v4226 = vpack.c.b16 %v4223, %v4222
    %v4227 = vpack.c.b16 %v4225, %v4224
    %v4231 = vsel %vm409, %v3580, 0
    %4233 = vmatprep.subr.bf16.mxu0 0
    %4234 = vmatpush1.bf16.msra.mxu0 0
    %4235 = vmatprep.subr.bf16.mxu0 0
    %4236 = vmatpush1.bf16.msra.mxu0 0
    %4237 = vmatprep.subr.bf16.mxu0 0
    %4238 = vmatpush1.bf16.msra.mxu0 0
    %4239 = vmatprep.subr.bf16.mxu0 0
    %4240 = vmatpush1.bf16.msra.mxu0 0
    %4241 = vmatprep.subr.bf16.mxu0 0
    %4242 = vmatpush1.bf16.msra.mxu0 0
    %4243 = vmatprep.subr.bf16.mxu0 0
    %4244 = vmatpush1.bf16.msra.mxu0 0
    %4245 = vmatprep.subr.bf16.mxu0 0
    %4246 = vmatpush1.bf16.msra.mxu0 %v4227
    %4247 = vmatprep.subr.bf16.mxu0 0
    %4248 = vmatpush1.bf16.msra.mxu0 %v4226
    %4249 = vmatprep.subr.bf16.mxu0 0
    %4250 = vmatpush2.bf16.msra.mxu0 0
    %4251 = vmatprep.subr.bf16.mxu0 0
    %4252 = vmatpush2.bf16.msra.mxu0 0
    %4253 = vmatprep.subr.bf16.mxu0 0
    %4254 = vmatpush2.bf16.msra.mxu0 0
    %4255 = vmatprep.subr.bf16.mxu0 0
    %4256 = vmatpush2.bf16.msra.mxu0 0
    %4257 = vmatprep.subr.bf16.mxu0 0
    %4258 = vmatpush2.bf16.msra.mxu0 0
    %4259 = vmatprep.subr.bf16.mxu0 0
    %4260 = vmatpush2.bf16.msra.mxu0 0
    %4261 = vmatprep.subr.bf16.mxu0 0
    %4262 = vmatpush2.bf16.msra.mxu0 0
    %4263 = vmatprep.subr.bf16.mxu0 0
    %4264 = vmatpush2.bf16.msra.mxu0 0
    %4265 = vmatprep.mubr.bf16.mxu0 0
    %4266 = vmatmul.mubr.bf16.gmra.mxu0 %v4231
    %v4267 = vpop.f32.mrf.mxu0
    %v4268 = vadd.f32 %v4212, %v4267
    %v4269 = vpop.f32.mrf.mxu0
    %v4270 = vpop.f32.mrf.mxu0
    %v4271 = vadd.f32 %v4215, %v4270
    %v4272 = vpop.f32.mrf.mxu0
    %4273 = vdwg.mxu0
    %s4274 = scalar_lea.vmem %s1, 896
    %v4275 = vld [vmem:[%s4274] sm:$0xf]
    %v4276 = vld [vmem:[%s4274 + $0x4] sm:$0xf]
    %v4277 = vld [vmem:[%s4274 + $0x8] sm:$0xf]
    %v4278 = vld [vmem:[%s4274 + $0xc] sm:$0xf]
    %v4279 = vld [vmem:[%s4274 + $0x10] sm:$0xf]
    %v4280 = vld [vmem:[%s4274 + $0x14] sm:$0xf]
    %v4281 = vld [vmem:[%s4274 + $0x18] sm:$0xf]
    %v4282 = vld [vmem:[%s4274 + $0x1c] sm:$0xf]
    %v4283 = vld [vmem:[%s4274 + $0x20] sm:$0xf]
    %v4284 = vld [vmem:[%s4274 + $0x24] sm:$0xf]
    %v4285 = vld [vmem:[%s4274 + $0x28] sm:$0xf]
    %v4286 = vld [vmem:[%s4274 + $0x2c] sm:$0xf]
    %v4287 = vld [vmem:[%s4274 + $0x30] sm:$0xf]
    %v4288 = vld [vmem:[%s4274 + $0x34] sm:$0xf]
    %v4289 = vld [vmem:[%s4274 + $0x38] sm:$0xf]
    %v4290 = vld [vmem:[%s4274 + $0x3c] sm:$0xf]
    %s4291 = scalar_lea.vmem %s2, 14
    %v4292 = vld [vmem:[%s4291] sm:$0x1]
    %v4294 = vlaneseq
    %v4295 = vshrl.u32 %v4294, 7
    %v4296 = vsub.s32 0, %v4295
    %v4297 = vrot.slane %v4292, %v4296
    %v4315 = vunpack.c.l.b16 %v4275
    %v4316 = vunpack.c.l.b16 %v4276
    %v4317 = vunpack.c.l.b16 %v4277
    %v4318 = vunpack.c.l.b16 %v4278
    %v4319 = vunpack.c.l.b16 %v4279
    %v4320 = vunpack.c.l.b16 %v4280
    %v4321 = vunpack.c.l.b16 %v4281
    %v4322 = vunpack.c.l.b16 %v4282
    %v4323 = vunpack.c.l.b16 %v4283
    %v4324 = vunpack.c.l.b16 %v4284
    %v4325 = vunpack.c.l.b16 %v4285
    %v4326 = vunpack.c.l.b16 %v4286
    %v4327 = vunpack.c.l.b16 %v4287
    %v4328 = vunpack.c.l.b16 %v4288
    %v4329 = vunpack.c.l.b16 %v4289
    %v4330 = vunpack.c.l.b16 %v4290
    %v4331 = vpack.c.b16 %v4316, %v4315
    %v4332 = vpack.c.b16 %v4318, %v4317
    %v4333 = vpack.c.b16 %v4320, %v4319
    %v4334 = vpack.c.b16 %v4322, %v4321
    %v4335 = vpack.c.b16 %v4324, %v4323
    %v4336 = vpack.c.b16 %v4326, %v4325
    %v4337 = vpack.c.b16 %v4328, %v4327
    %v4338 = vpack.c.b16 %v4330, %v4329
    %4347 = vmatprep.subr.bf16.mxu0 0
    %4348 = vmatpush1.bf16.msra.mxu0 %v4338
    %4349 = vmatprep.subr.bf16.mxu0 0
    %4350 = vmatpush1.bf16.msra.mxu0 %v4337
    %4351 = vmatprep.subr.bf16.mxu0 0
    %4352 = vmatpush1.bf16.msra.mxu0 %v4336
    %4353 = vmatprep.subr.bf16.mxu0 0
    %4354 = vmatpush1.bf16.msra.mxu0 %v4335
    %4355 = vmatprep.subr.bf16.mxu0 0
    %4356 = vmatpush1.bf16.msra.mxu0 %v4334
    %4357 = vmatprep.subr.bf16.mxu0 0
    %4358 = vmatpush1.bf16.msra.mxu0 %v4333
    %4359 = vmatprep.subr.bf16.mxu0 0
    %4360 = vmatpush1.bf16.msra.mxu0 %v4332
    %4361 = vmatprep.subr.bf16.mxu0 0
    %4362 = vmatpush1.bf16.msra.mxu0 %v4331
    %4363 = vmatprep.subr.bf16.mxu0 0
    %4364 = vmatpush2.bf16.msra.mxu0 0
    %4365 = vmatprep.subr.bf16.mxu0 0
    %4366 = vmatpush2.bf16.msra.mxu0 0
    %4367 = vmatprep.subr.bf16.mxu0 0
    %4368 = vmatpush2.bf16.msra.mxu0 0
    %4369 = vmatprep.subr.bf16.mxu0 0
    %4370 = vmatpush2.bf16.msra.mxu0 0
    %4371 = vmatprep.subr.bf16.mxu0 0
    %4372 = vmatpush2.bf16.msra.mxu0 0
    %4373 = vmatprep.subr.bf16.mxu0 0
    %4374 = vmatpush2.bf16.msra.mxu0 0
    %4375 = vmatprep.subr.bf16.mxu0 0
    %4376 = vmatpush2.bf16.msra.mxu0 0
    %4377 = vmatprep.subr.bf16.mxu0 0
    %4378 = vmatpush2.bf16.msra.mxu0 0
    %4379 = vmatprep.mubr.bf16.mxu0 0
    %4380 = vmatmul.mubr.bf16.gmra.mxu0 %v3009
    %v4381 = vpop.f32.mrf.mxu0
    %v4382 = vadd.f32 %v4297, %v4381
    %v4383 = vpop.f32.mrf.mxu0
    %v4384 = vpop.f32.mrf.mxu0
    %v4385 = vadd.f32 %v4297, %v4384
    %v4386 = vpop.f32.mrf.mxu0
    %4387 = vdwg.mxu0
    %s4388 = scalar_lea.vmem %s1, 1152
    %v4389 = vld [vmem:[%s4388] sm:$0xf]
    %v4390 = vld [vmem:[%s4388 + $0x4] sm:$0xf]
    %v4391 = vld [vmem:[%s4388 + $0x8] sm:$0xf]
    %v4392 = vld [vmem:[%s4388 + $0xc] sm:$0xf]
    %v4393 = vld [vmem:[%s4388 + $0x10] sm:$0xf]
    %v4394 = vld [vmem:[%s4388 + $0x14] sm:$0xf]
    %v4395 = vld [vmem:[%s4388 + $0x18] sm:$0xf]
    %v4396 = vld [vmem:[%s4388 + $0x1c] sm:$0xf]
    %v4397 = vld [vmem:[%s4388 + $0x20] sm:$0xf]
    %v4398 = vld [vmem:[%s4388 + $0x24] sm:$0xf]
    %v4399 = vld [vmem:[%s4388 + $0x28] sm:$0xf]
    %v4400 = vld [vmem:[%s4388 + $0x2c] sm:$0xf]
    %v4401 = vld [vmem:[%s4388 + $0x30] sm:$0xf]
    %v4402 = vld [vmem:[%s4388 + $0x34] sm:$0xf]
    %v4403 = vld [vmem:[%s4388 + $0x38] sm:$0xf]
    %v4404 = vld [vmem:[%s4388 + $0x3c] sm:$0xf]
    %s4405 = scalar_lea.vmem %s2, 18
    %v4406 = vld [vmem:[%s4405] sm:$0x1]
    %v4408 = vlaneseq
    %v4409 = vshrl.u32 %v4408, 7
    %v4410 = vsub.s32 0, %v4409
    %v4411 = vrot.slane %v4406, %v4410
    %v4429 = vunpack.c.l.b16 %v4389
    %v4430 = vunpack.c.l.b16 %v4390
    %v4431 = vunpack.c.l.b16 %v4391
    %v4432 = vunpack.c.l.b16 %v4392
    %v4433 = vunpack.c.l.b16 %v4393
    %v4434 = vunpack.c.l.b16 %v4394
    %v4435 = vunpack.c.l.b16 %v4395
    %v4436 = vunpack.c.l.b16 %v4396
    %v4437 = vunpack.c.l.b16 %v4397
    %v4438 = vunpack.c.l.b16 %v4398
    %v4439 = vunpack.c.l.b16 %v4399
    %v4440 = vunpack.c.l.b16 %v4400
    %v4441 = vunpack.c.l.b16 %v4401
    %v4442 = vunpack.c.l.b16 %v4402
    %v4443 = vunpack.c.l.b16 %v4403
    %v4444 = vunpack.c.l.b16 %v4404
    %v4445 = vpack.c.b16 %v4430, %v4429
    %v4446 = vpack.c.b16 %v4432, %v4431
    %v4447 = vpack.c.b16 %v4434, %v4433
    %v4448 = vpack.c.b16 %v4436, %v4435
    %v4449 = vpack.c.b16 %v4438, %v4437
    %v4450 = vpack.c.b16 %v4440, %v4439
    %v4451 = vpack.c.b16 %v4442, %v4441
    %v4452 = vpack.c.b16 %v4444, %v4443
    %4461 = vmatprep.subr.bf16.mxu0 0
    %4462 = vmatpush1.bf16.msra.mxu0 %v4452
    %4463 = vmatprep.subr.bf16.mxu0 0
    %4464 = vmatpush1.bf16.msra.mxu0 %v4451
    %4465 = vmatprep.subr.bf16.mxu0 0
    %4466 = vmatpush1.bf16.msra.mxu0 %v4450
    %4467 = vmatprep.subr.bf16.mxu0 0
    %4468 = vmatpush1.bf16.msra.mxu0 %v4449
    %4469 = vmatprep.subr.bf16.mxu0 0
    %4470 = vmatpush1.bf16.msra.mxu0 %v4448
    %4471 = vmatprep.subr.bf16.mxu0 0
    %4472 = vmatpush1.bf16.msra.mxu0 %v4447
    %4473 = vmatprep.subr.bf16.mxu0 0
    %4474 = vmatpush1.bf16.msra.mxu0 %v4446
    %4475 = vmatprep.subr.bf16.mxu0 0
    %4476 = vmatpush1.bf16.msra.mxu0 %v4445
    %4477 = vmatprep.subr.bf16.mxu0 0
    %4478 = vmatpush2.bf16.msra.mxu0 0
    %4479 = vmatprep.subr.bf16.mxu0 0
    %4480 = vmatpush2.bf16.msra.mxu0 0
    %4481 = vmatprep.subr.bf16.mxu0 0
    %4482 = vmatpush2.bf16.msra.mxu0 0
    %4483 = vmatprep.subr.bf16.mxu0 0
    %4484 = vmatpush2.bf16.msra.mxu0 0
    %4485 = vmatprep.subr.bf16.mxu0 0
    %4486 = vmatpush2.bf16.msra.mxu0 0
    %4487 = vmatprep.subr.bf16.mxu0 0
    %4488 = vmatpush2.bf16.msra.mxu0 0
    %4489 = vmatprep.subr.bf16.mxu0 0
    %4490 = vmatpush2.bf16.msra.mxu0 0
    %4491 = vmatprep.subr.bf16.mxu0 0
    %4492 = vmatpush2.bf16.msra.mxu0 0
    %4493 = vmatprep.mubr.bf16.mxu0 0
    %4494 = vmatmul.mubr.bf16.gmra.mxu0 %v3009
    %v4495 = vpop.f32.mrf.mxu0
    %v4496 = vadd.f32 %v4411, %v4495
    %v4497 = vpop.f32.mrf.mxu0
    %v4498 = vpop.f32.mrf.mxu0
    %v4499 = vadd.f32 %v4411, %v4498
    %v4500 = vpop.f32.mrf.mxu0
    %4501 = vdwg.mxu0
    %s4502 = scalar_lea.vmem %s1, 1408
    %v4503 = vld [vmem:[%s4502] sm:$0xf]
    %v4504 = vld [vmem:[%s4502 + $0x4] sm:$0xf]
    %v4505 = vld [vmem:[%s4502 + $0x8] sm:$0xf]
    %v4506 = vld [vmem:[%s4502 + $0xc] sm:$0xf]
    %v4507 = vld [vmem:[%s4502 + $0x10] sm:$0xf]
    %v4508 = vld [vmem:[%s4502 + $0x14] sm:$0xf]
    %v4509 = vld [vmem:[%s4502 + $0x18] sm:$0xf]
    %v4510 = vld [vmem:[%s4502 + $0x1c] sm:$0xf]
    %v4511 = vld [vmem:[%s4502 + $0x20] sm:$0xf]
    %v4512 = vld [vmem:[%s4502 + $0x24] sm:$0xf]
    %v4513 = vld [vmem:[%s4502 + $0x28] sm:$0xf]
    %v4514 = vld [vmem:[%s4502 + $0x2c] sm:$0xf]
    %v4515 = vld [vmem:[%s4502 + $0x30] sm:$0xf]
    %v4516 = vld [vmem:[%s4502 + $0x34] sm:$0xf]
    %v4517 = vld [vmem:[%s4502 + $0x38] sm:$0xf]
    %v4518 = vld [vmem:[%s4502 + $0x3c] sm:$0xf]
    %s4519 = scalar_lea.vmem %s2, 22
    %v4520 = vld [vmem:[%s4519] sm:$0x1]
    %v4522 = vlaneseq
    %v4523 = vshrl.u32 %v4522, 7
    %v4524 = vsub.s32 0, %v4523
    %v4525 = vrot.slane %v4520, %v4524
    %v4543 = vunpack.c.l.b16 %v4503
    %v4544 = vunpack.c.l.b16 %v4504
    %v4545 = vunpack.c.l.b16 %v4505
    %v4546 = vunpack.c.l.b16 %v4506
    %v4547 = vunpack.c.l.b16 %v4507
    %v4548 = vunpack.c.l.b16 %v4508
    %v4549 = vunpack.c.l.b16 %v4509
    %v4550 = vunpack.c.l.b16 %v4510
    %v4551 = vunpack.c.l.b16 %v4511
    %v4552 = vunpack.c.l.b16 %v4512
    %v4553 = vunpack.c.l.b16 %v4513
    %v4554 = vunpack.c.l.b16 %v4514
    %v4555 = vunpack.c.l.b16 %v4515
    %v4556 = vunpack.c.l.b16 %v4516
    %v4557 = vunpack.c.l.b16 %v4517
    %v4558 = vunpack.c.l.b16 %v4518
    %v4559 = vpack.c.b16 %v4544, %v4543
    %v4560 = vpack.c.b16 %v4546, %v4545
    %v4561 = vpack.c.b16 %v4548, %v4547
    %v4562 = vpack.c.b16 %v4550, %v4549
    %v4563 = vpack.c.b16 %v4552, %v4551
    %v4564 = vpack.c.b16 %v4554, %v4553
    %v4565 = vpack.c.b16 %v4556, %v4555
    %v4566 = vpack.c.b16 %v4558, %v4557
    %4575 = vmatprep.subr.bf16.mxu0 0
    %4576 = vmatpush1.bf16.msra.mxu0 %v4566
    %4577 = vmatprep.subr.bf16.mxu0 0
    %4578 = vmatpush1.bf16.msra.mxu0 %v4565
    %4579 = vmatprep.subr.bf16.mxu0 0
    %4580 = vmatpush1.bf16.msra.mxu0 %v4564
    %4581 = vmatprep.subr.bf16.mxu0 0
    %4582 = vmatpush1.bf16.msra.mxu0 %v4563
    %4583 = vmatprep.subr.bf16.mxu0 0
    %4584 = vmatpush1.bf16.msra.mxu0 %v4562
    %4585 = vmatprep.subr.bf16.mxu0 0
    %4586 = vmatpush1.bf16.msra.mxu0 %v4561
    %4587 = vmatprep.subr.bf16.mxu0 0
    %4588 = vmatpush1.bf16.msra.mxu0 %v4560
    %4589 = vmatprep.subr.bf16.mxu0 0
    %4590 = vmatpush1.bf16.msra.mxu0 %v4559
    %4591 = vmatprep.subr.bf16.mxu0 0
    %4592 = vmatpush2.bf16.msra.mxu0 0
    %4593 = vmatprep.subr.bf16.mxu0 0
    %4594 = vmatpush2.bf16.msra.mxu0 0
    %4595 = vmatprep.subr.bf16.mxu0 0
    %4596 = vmatpush2.bf16.msra.mxu0 0
    %4597 = vmatprep.subr.bf16.mxu0 0
    %4598 = vmatpush2.bf16.msra.mxu0 0
    %4599 = vmatprep.subr.bf16.mxu0 0
    %4600 = vmatpush2.bf16.msra.mxu0 0
    %4601 = vmatprep.subr.bf16.mxu0 0
    %4602 = vmatpush2.bf16.msra.mxu0 0
    %4603 = vmatprep.subr.bf16.mxu0 0
    %4604 = vmatpush2.bf16.msra.mxu0 0
    %4605 = vmatprep.subr.bf16.mxu0 0
    %4606 = vmatpush2.bf16.msra.mxu0 0
    %4607 = vmatprep.mubr.bf16.mxu0 0
    %4608 = vmatmul.mubr.bf16.gmra.mxu0 %v3009
    %v4609 = vpop.f32.mrf.mxu0
    %v4610 = vadd.f32 %v4525, %v4609
    %v4611 = vpop.f32.mrf.mxu0
    %v4612 = vpop.f32.mrf.mxu0
    %v4613 = vadd.f32 %v4525, %v4612
    %v4614 = vpop.f32.mrf.mxu0
    %4615 = vdwg.mxu0
    %v4616 = vmul.f32 %v4382, 0.17677669
    %v4617 = vmul.f32 %v4385, 0.17677669
    %v4618 = vpack.c.bf16 %v4617, %v4616
    %v4620 = vunpack.c.l.b16 %v4618
    %v4621 = vunpack.c.h.b16 %v4618
    %v4622 = vpack.c.b16 %v4620, %v4620
    %v4623 = vpack.c.b16 %v4621, %v4621
    %v4624 = vpack.c.bf16 %v4499, %v4496
    %v4626 = vunpack.c.l.b16 %v4624
    %v4627 = vunpack.c.h.b16 %v4624
    %v4628 = vpack.c.b16 %v4626, %v4626
    %v4629 = vpack.c.b16 %v4627, %v4627
    %v4630 = vpack.c.bf16 %v4613, %v4610
    %v4632 = vunpack.c.l.b16 %v4630
    %v4633 = vunpack.c.h.b16 %v4630
    %v4634 = vpack.c.b16 %v4632, %v4632
    %v4635 = vpack.c.b16 %v4633, %v4633
    %v4637 = vsel %vm409, %v4622, 0
    %v4640 = vsel %vm409, %v4628, 0
    %4642 = vmatprep.subr.bf16.mxu0 0
    %4643 = vmatpush1.bf16.xpose.msra.mxu0 0
    %4644 = vmatprep.subr.bf16.mxu0 0
    %4645 = vmatpush1.bf16.xpose.msra.mxu0 0
    %4646 = vmatprep.subr.bf16.mxu0 0
    %4647 = vmatpush1.bf16.xpose.msra.mxu0 0
    %4648 = vmatprep.subr.bf16.mxu0 0
    %4649 = vmatpush1.bf16.xpose.msra.mxu0 0
    %4650 = vmatprep.subr.bf16.mxu0 0
    %4651 = vmatpush1.bf16.xpose.msra.mxu0 0
    %4652 = vmatprep.subr.bf16.mxu0 0
    %4653 = vmatpush1.bf16.xpose.msra.mxu0 0
    %4654 = vmatprep.subr.bf16.mxu0 0
    %4655 = vmatpush1.bf16.xpose.msra.mxu0 0
    %4656 = vmatprep.subr.bf16.mxu0 0
    %4657 = vmatpush1.bf16.xpose.msra.mxu0 %v4640
    %4658 = vmatprep.subr.bf16.mxu0 0
    %4659 = vmatpush2.bf16.xpose.msra.mxu0 0
    %4660 = vmatprep.subr.bf16.mxu0 0
    %4661 = vmatpush2.bf16.xpose.msra.mxu0 0
    %4662 = vmatprep.subr.bf16.mxu0 0
    %4663 = vmatpush2.bf16.xpose.msra.mxu0 0
    %4664 = vmatprep.subr.bf16.mxu0 0
    %4665 = vmatpush2.bf16.xpose.msra.mxu0 0
    %4666 = vmatprep.subr.bf16.mxu0 0
    %4667 = vmatpush2.bf16.xpose.msra.mxu0 0
    %4668 = vmatprep.subr.bf16.mxu0 0
    %4669 = vmatpush2.bf16.xpose.msra.mxu0 0
    %4670 = vmatprep.subr.bf16.mxu0 0
    %4671 = vmatpush2.bf16.xpose.msra.mxu0 0
    %4672 = vmatprep.subr.bf16.mxu0 0
    %4673 = vmatpush2.bf16.xpose.msra.mxu0 0
    %4674 = vmatprep.mubr.bf16.mxu0 0
    %4675 = vmatmul.mubr.bf16.gmra.mxu0 %v4637
    %v4676 = vpop.f32.mrf.mxu0
    %v4677 = vadd.f32 0.0, %v4676
    %v4678 = vpop.f32.mrf.mxu0
    %v4679 = vpop.f32.mrf.mxu0
    %v4680 = vpop.f32.mrf.mxu0
    %4681 = vdwg.mxu0
    %v4683 = vsel %vm409, %v4623, 0
    %v4686 = vsel %vm409, %v4629, 0
    %4688 = vmatprep.subr.bf16.mxu0 0
    %4689 = vmatpush1.bf16.xpose.msra.mxu0 0
    %4690 = vmatprep.subr.bf16.mxu0 0
    %4691 = vmatpush1.bf16.xpose.msra.mxu0 0
    %4692 = vmatprep.subr.bf16.mxu0 0
    %4693 = vmatpush1.bf16.xpose.msra.mxu0 0
    %4694 = vmatprep.subr.bf16.mxu0 0
    %4695 = vmatpush1.bf16.xpose.msra.mxu0 0
    %4696 = vmatprep.subr.bf16.mxu0 0
    %4697 = vmatpush1.bf16.xpose.msra.mxu0 0
    %4698 = vmatprep.subr.bf16.mxu0 0
    %4699 = vmatpush1.bf16.xpose.msra.mxu0 0
    %4700 = vmatprep.subr.bf16.mxu0 0
    %4701 = vmatpush1.bf16.xpose.msra.mxu0 0
    %4702 = vmatprep.subr.bf16.mxu0 0
    %4703 = vmatpush1.bf16.xpose.msra.mxu0 %v4686
    %4704 = vmatprep.subr.bf16.mxu0 0
    %4705 = vmatpush2.bf16.xpose.msra.mxu0 0
    %4706 = vmatprep.subr.bf16.mxu0 0
    %4707 = vmatpush2.bf16.xpose.msra.mxu0 0
    %4708 = vmatprep.subr.bf16.mxu0 0
    %4709 = vmatpush2.bf16.xpose.msra.mxu0 0
    %4710 = vmatprep.subr.bf16.mxu0 0
    %4711 = vmatpush2.bf16.xpose.msra.mxu0 0
    %4712 = vmatprep.subr.bf16.mxu0 0
    %4713 = vmatpush2.bf16.xpose.msra.mxu0 0
    %4714 = vmatprep.subr.bf16.mxu0 0
    %4715 = vmatpush2.bf16.xpose.msra.mxu0 0
    %4716 = vmatprep.subr.bf16.mxu0 0
    %4717 = vmatpush2.bf16.xpose.msra.mxu0 0
    %4718 = vmatprep.subr.bf16.mxu0 0
    %4719 = vmatpush2.bf16.xpose.msra.mxu0 0
    %4720 = vmatprep.mubr.bf16.mxu0 0
    %4721 = vmatmul.mubr.bf16.gmra.mxu0 %v4683
    %v4722 = vpop.f32.mrf.mxu0
    %v4723 = vadd.f32 0.0, %v4722
    %v4724 = vpop.f32.mrf.mxu0
    %v4725 = vpop.f32.mrf.mxu0
    %v4726 = vpop.f32.mrf.mxu0
    %4727 = vdwg.mxu0
    %v4728 = vsel %vm502, %v4677, -inf
    %4729 = vmax.xlane.f32.xlu0 %v4728
    %v4730 = vpop.xlane.xlu0 %4729
    %v4731 = vsel %vm502, %v4723, -inf
    %4732 = vmax.xlane.f32.xlu0 %v4731
    %v4733 = vpop.xlane.xlu0 %4732
    %v4734 = vsub.f32 %v4677, %v4730
    %v4735 = vsub.f32 %v4723, %v4733
    %v4736 = vmul.f32 %v4734, 1.442695
    %v4737 = vpow.pop %v4736
    %v4738 = vmul.f32 %v4735, 1.442695
    %v4739 = vpow.pop %v4738
    %v4740 = vsel %vm502, %v4737, 0.0
    %4741 = vadd.xlane.f32.xlu0 %v4740
    %v4742 = vpop.xlane.xlu0 %4741
    %v4743 = vsel %vm502, %v4739, 0.0
    %4744 = vadd.xlane.f32.xlu0 %v4743
    %v4745 = vpop.xlane.xlu0 %4744
    %v4746 = vrcp.pop %v4742
    %v4747 = vrcp.pop %v4745
    %v4748 = vmul.f32 %v4737, %v4746
    %v4749 = vmul.f32 %v4739, %v4747
    %v4750 = vpack.c.bf16 %v4748, %v4748
    %v4751 = vpack.c.bf16 %v4749, %v4749
    %v4753 = vsel %vm502, %v4750, 0
    %v4756 = vsel %vm530, %v4634, 0
    %4758 = vmatprep.subr.bf16.mxu0 0
    %4759 = vmatpush1.bf16.msra.mxu0 0
    %4760 = vmatprep.subr.bf16.mxu0 0
    %4761 = vmatpush1.bf16.msra.mxu0 0
    %4762 = vmatprep.subr.bf16.mxu0 0
    %4763 = vmatpush1.bf16.msra.mxu0 0
    %4764 = vmatprep.subr.bf16.mxu0 0
    %4765 = vmatpush1.bf16.msra.mxu0 0
    %4766 = vmatprep.subr.bf16.mxu0 0
    %4767 = vmatpush1.bf16.msra.mxu0 0
    %4768 = vmatprep.subr.bf16.mxu0 0
    %4769 = vmatpush1.bf16.msra.mxu0 0
    %4770 = vmatprep.subr.bf16.mxu0 0
    %4771 = vmatpush1.bf16.msra.mxu0 0
    %4772 = vmatprep.subr.bf16.mxu0 0
    %4773 = vmatpush1.bf16.msra.mxu0 %v4756
    %4774 = vmatprep.subr.bf16.mxu0 0
    %4775 = vmatpush2.bf16.msra.mxu0 0
    %4776 = vmatprep.subr.bf16.mxu0 0
    %4777 = vmatpush2.bf16.msra.mxu0 0
    %4778 = vmatprep.subr.bf16.mxu0 0
    %4779 = vmatpush2.bf16.msra.mxu0 0
    %4780 = vmatprep.subr.bf16.mxu0 0
    %4781 = vmatpush2.bf16.msra.mxu0 0
    %4782 = vmatprep.subr.bf16.mxu0 0
    %4783 = vmatpush2.bf16.msra.mxu0 0
    %4784 = vmatprep.subr.bf16.mxu0 0
    %4785 = vmatpush2.bf16.msra.mxu0 0
    %4786 = vmatprep.subr.bf16.mxu0 0
    %4787 = vmatpush2.bf16.msra.mxu0 0
    %4788 = vmatprep.subr.bf16.mxu0 0
    %4789 = vmatpush2.bf16.msra.mxu0 0
    %4790 = vmatprep.mubr.bf16.mxu0 0
    %4791 = vmatmul.mubr.bf16.gmra.mxu0 %v4753
    %v4792 = vpop.f32.mrf.mxu0
    %v4793 = vadd.f32 0.0, %v4792
    %v4794 = vpop.f32.mrf.mxu0
    %v4795 = vpop.f32.mrf.mxu0
    %v4796 = vpop.f32.mrf.mxu0
    %4797 = vdwg.mxu0
    %v4799 = vsel %vm502, %v4751, 0
    %v4802 = vsel %vm530, %v4635, 0
    %4804 = vmatprep.subr.bf16.mxu0 0
    %4805 = vmatpush1.bf16.msra.mxu0 0
    %4806 = vmatprep.subr.bf16.mxu0 0
    %4807 = vmatpush1.bf16.msra.mxu0 0
    %4808 = vmatprep.subr.bf16.mxu0 0
    %4809 = vmatpush1.bf16.msra.mxu0 0
    %4810 = vmatprep.subr.bf16.mxu0 0
    %4811 = vmatpush1.bf16.msra.mxu0 0
    %4812 = vmatprep.subr.bf16.mxu0 0
    %4813 = vmatpush1.bf16.msra.mxu0 0
    %4814 = vmatprep.subr.bf16.mxu0 0
    %4815 = vmatpush1.bf16.msra.mxu0 0
    %4816 = vmatprep.subr.bf16.mxu0 0
    %4817 = vmatpush1.bf16.msra.mxu0 0
    %4818 = vmatprep.subr.bf16.mxu0 0
    %4819 = vmatpush1.bf16.msra.mxu0 %v4802
    %4820 = vmatprep.subr.bf16.mxu0 0
    %4821 = vmatpush2.bf16.msra.mxu0 0
    %4822 = vmatprep.subr.bf16.mxu0 0
    %4823 = vmatpush2.bf16.msra.mxu0 0
    %4824 = vmatprep.subr.bf16.mxu0 0
    %4825 = vmatpush2.bf16.msra.mxu0 0
    %4826 = vmatprep.subr.bf16.mxu0 0
    %4827 = vmatpush2.bf16.msra.mxu0 0
    %4828 = vmatprep.subr.bf16.mxu0 0
    %4829 = vmatpush2.bf16.msra.mxu0 0
    %4830 = vmatprep.subr.bf16.mxu0 0
    %4831 = vmatpush2.bf16.msra.mxu0 0
    %4832 = vmatprep.subr.bf16.mxu0 0
    %4833 = vmatpush2.bf16.msra.mxu0 0
    %4834 = vmatprep.subr.bf16.mxu0 0
    %4835 = vmatpush2.bf16.msra.mxu0 0
    %4836 = vmatprep.mubr.bf16.mxu0 0
    %4837 = vmatmul.mubr.bf16.gmra.mxu0 %v4799
    %v4838 = vpop.f32.mrf.mxu0
    %v4839 = vadd.f32 0.0, %v4838
    %v4840 = vpop.f32.mrf.mxu0
    %v4841 = vpop.f32.mrf.mxu0
    %v4842 = vpop.f32.mrf.mxu0
    %4843 = vdwg.mxu0
    %v4844 = vpack.c.bf16 %v4839, %v4793
    %s4845 = scalar_lea.vmem %s3, 96
    %v4846 = vld [vmem:[%s4845] sm:$0xf]
    %v4847 = vld [vmem:[%s4845 + $0x4] sm:$0xf]
    %v4848 = vld [vmem:[%s4845 + $0x8] sm:$0xf]
    %v4849 = vld [vmem:[%s4845 + $0xc] sm:$0xf]
    %v4854 = vunpack.c.l.b16 %v4846
    %v4855 = vunpack.c.l.b16 %v4847
    %v4856 = vunpack.c.l.b16 %v4848
    %v4857 = vunpack.c.l.b16 %v4849
    %v4858 = vpack.c.b16 %v4855, %v4854
    %v4859 = vpack.c.b16 %v4857, %v4856
    %v4863 = vsel %vm409, %v4844, 0
    %4865 = vmatprep.subr.bf16.mxu0 0
    %4866 = vmatpush1.bf16.msra.mxu0 0
    %4867 = vmatprep.subr.bf16.mxu0 0
    %4868 = vmatpush1.bf16.msra.mxu0 0
    %4869 = vmatprep.subr.bf16.mxu0 0
    %4870 = vmatpush1.bf16.msra.mxu0 0
    %4871 = vmatprep.subr.bf16.mxu0 0
    %4872 = vmatpush1.bf16.msra.mxu0 0
    %4873 = vmatprep.subr.bf16.mxu0 0
    %4874 = vmatpush1.bf16.msra.mxu0 0
    %4875 = vmatprep.subr.bf16.mxu0 0
    %4876 = vmatpush1.bf16.msra.mxu0 0
    %4877 = vmatprep.subr.bf16.mxu0 0
    %4878 = vmatpush1.bf16.msra.mxu0 %v4859
    %4879 = vmatprep.subr.bf16.mxu0 0
    %4880 = vmatpush1.bf16.msra.mxu0 %v4858
    %4881 = vmatprep.subr.bf16.mxu0 0
    %4882 = vmatpush2.bf16.msra.mxu0 0
    %4883 = vmatprep.subr.bf16.mxu0 0
    %4884 = vmatpush2.bf16.msra.mxu0 0
    %4885 = vmatprep.subr.bf16.mxu0 0
    %4886 = vmatpush2.bf16.msra.mxu0 0
    %4887 = vmatprep.subr.bf16.mxu0 0
    %4888 = vmatpush2.bf16.msra.mxu0 0
    %4889 = vmatprep.subr.bf16.mxu0 0
    %4890 = vmatpush2.bf16.msra.mxu0 0
    %4891 = vmatprep.subr.bf16.mxu0 0
    %4892 = vmatpush2.bf16.msra.mxu0 0
    %4893 = vmatprep.subr.bf16.mxu0 0
    %4894 = vmatpush2.bf16.msra.mxu0 0
    %4895 = vmatprep.subr.bf16.mxu0 0
    %4896 = vmatpush2.bf16.msra.mxu0 0
    %4897 = vmatprep.mubr.bf16.mxu0 0
    %4898 = vmatmul.mubr.bf16.gmra.mxu0 %v4863
    %v4899 = vpop.f32.mrf.mxu0
    %v4900 = vadd.f32 0.0, %v4899
    %v4901 = vpop.f32.mrf.mxu0
    %v4902 = vpop.f32.mrf.mxu0
    %v4903 = vadd.f32 0.0, %v4902
    %v4904 = vpop.f32.mrf.mxu0
    %4905 = vdwg.mxu0
    %v4906 = vadd.f32 %v4268, %v4900
    %v4907 = vadd.f32 %v4271, %v4903
    %s4908 = scalar_lea.vmem %s1, 960
    %v4909 = vld [vmem:[%s4908] sm:$0xf]
    %v4910 = vld [vmem:[%s4908 + $0x4] sm:$0xf]
    %v4911 = vld [vmem:[%s4908 + $0x8] sm:$0xf]
    %v4912 = vld [vmem:[%s4908 + $0xc] sm:$0xf]
    %v4913 = vld [vmem:[%s4908 + $0x10] sm:$0xf]
    %v4914 = vld [vmem:[%s4908 + $0x14] sm:$0xf]
    %v4915 = vld [vmem:[%s4908 + $0x18] sm:$0xf]
    %v4916 = vld [vmem:[%s4908 + $0x1c] sm:$0xf]
    %v4917 = vld [vmem:[%s4908 + $0x20] sm:$0xf]
    %v4918 = vld [vmem:[%s4908 + $0x24] sm:$0xf]
    %v4919 = vld [vmem:[%s4908 + $0x28] sm:$0xf]
    %v4920 = vld [vmem:[%s4908 + $0x2c] sm:$0xf]
    %v4921 = vld [vmem:[%s4908 + $0x30] sm:$0xf]
    %v4922 = vld [vmem:[%s4908 + $0x34] sm:$0xf]
    %v4923 = vld [vmem:[%s4908 + $0x38] sm:$0xf]
    %v4924 = vld [vmem:[%s4908 + $0x3c] sm:$0xf]
    %s4925 = scalar_lea.vmem %s2, 15
    %v4926 = vld [vmem:[%s4925] sm:$0x1]
    %v4928 = vlaneseq
    %v4929 = vshrl.u32 %v4928, 7
    %v4930 = vsub.s32 0, %v4929
    %v4931 = vrot.slane %v4926, %v4930
    %v4949 = vunpack.c.l.b16 %v4909
    %v4950 = vunpack.c.l.b16 %v4910
    %v4951 = vunpack.c.l.b16 %v4911
    %v4952 = vunpack.c.l.b16 %v4912
    %v4953 = vunpack.c.l.b16 %v4913
    %v4954 = vunpack.c.l.b16 %v4914
    %v4955 = vunpack.c.l.b16 %v4915
    %v4956 = vunpack.c.l.b16 %v4916
    %v4957 = vunpack.c.l.b16 %v4917
    %v4958 = vunpack.c.l.b16 %v4918
    %v4959 = vunpack.c.l.b16 %v4919
    %v4960 = vunpack.c.l.b16 %v4920
    %v4961 = vunpack.c.l.b16 %v4921
    %v4962 = vunpack.c.l.b16 %v4922
    %v4963 = vunpack.c.l.b16 %v4923
    %v4964 = vunpack.c.l.b16 %v4924
    %v4965 = vpack.c.b16 %v4950, %v4949
    %v4966 = vpack.c.b16 %v4952, %v4951
    %v4967 = vpack.c.b16 %v4954, %v4953
    %v4968 = vpack.c.b16 %v4956, %v4955
    %v4969 = vpack.c.b16 %v4958, %v4957
    %v4970 = vpack.c.b16 %v4960, %v4959
    %v4971 = vpack.c.b16 %v4962, %v4961
    %v4972 = vpack.c.b16 %v4964, %v4963
    %4981 = vmatprep.subr.bf16.mxu0 0
    %4982 = vmatpush1.bf16.msra.mxu0 %v4972
    %4983 = vmatprep.subr.bf16.mxu0 0
    %4984 = vmatpush1.bf16.msra.mxu0 %v4971
    %4985 = vmatprep.subr.bf16.mxu0 0
    %4986 = vmatpush1.bf16.msra.mxu0 %v4970
    %4987 = vmatprep.subr.bf16.mxu0 0
    %4988 = vmatpush1.bf16.msra.mxu0 %v4969
    %4989 = vmatprep.subr.bf16.mxu0 0
    %4990 = vmatpush1.bf16.msra.mxu0 %v4968
    %4991 = vmatprep.subr.bf16.mxu0 0
    %4992 = vmatpush1.bf16.msra.mxu0 %v4967
    %4993 = vmatprep.subr.bf16.mxu0 0
    %4994 = vmatpush1.bf16.msra.mxu0 %v4966
    %4995 = vmatprep.subr.bf16.mxu0 0
    %4996 = vmatpush1.bf16.msra.mxu0 %v4965
    %4997 = vmatprep.subr.bf16.mxu0 0
    %4998 = vmatpush2.bf16.msra.mxu0 0
    %4999 = vmatprep.subr.bf16.mxu0 0
    %5000 = vmatpush2.bf16.msra.mxu0 0
    %5001 = vmatprep.subr.bf16.mxu0 0
    %5002 = vmatpush2.bf16.msra.mxu0 0
    %5003 = vmatprep.subr.bf16.mxu0 0
    %5004 = vmatpush2.bf16.msra.mxu0 0
    %5005 = vmatprep.subr.bf16.mxu0 0
    %5006 = vmatpush2.bf16.msra.mxu0 0
    %5007 = vmatprep.subr.bf16.mxu0 0
    %5008 = vmatpush2.bf16.msra.mxu0 0
    %5009 = vmatprep.subr.bf16.mxu0 0
    %5010 = vmatpush2.bf16.msra.mxu0 0
    %5011 = vmatprep.subr.bf16.mxu0 0
    %5012 = vmatpush2.bf16.msra.mxu0 0
    %5013 = vmatprep.mubr.bf16.mxu0 0
    %5014 = vmatmul.mubr.bf16.gmra.mxu0 %v3009
    %v5015 = vpop.f32.mrf.mxu0
    %v5016 = vadd.f32 %v4931, %v5015
    %v5017 = vpop.f32.mrf.mxu0
    %v5018 = vpop.f32.mrf.mxu0
    %v5019 = vadd.f32 %v4931, %v5018
    %v5020 = vpop.f32.mrf.mxu0
    %5021 = vdwg.mxu0
    %s5022 = scalar_lea.vmem %s1, 1216
    %v5023 = vld [vmem:[%s5022] sm:$0xf]
    %v5024 = vld [vmem:[%s5022 + $0x4] sm:$0xf]
    %v5025 = vld [vmem:[%s5022 + $0x8] sm:$0xf]
    %v5026 = vld [vmem:[%s5022 + $0xc] sm:$0xf]
    %v5027 = vld [vmem:[%s5022 + $0x10] sm:$0xf]
    %v5028 = vld [vmem:[%s5022 + $0x14] sm:$0xf]
    %v5029 = vld [vmem:[%s5022 + $0x18] sm:$0xf]
    %v5030 = vld [vmem:[%s5022 + $0x1c] sm:$0xf]
    %v5031 = vld [vmem:[%s5022 + $0x20] sm:$0xf]
    %v5032 = vld [vmem:[%s5022 + $0x24] sm:$0xf]
    %v5033 = vld [vmem:[%s5022 + $0x28] sm:$0xf]
    %v5034 = vld [vmem:[%s5022 + $0x2c] sm:$0xf]
    %v5035 = vld [vmem:[%s5022 + $0x30] sm:$0xf]
    %v5036 = vld [vmem:[%s5022 + $0x34] sm:$0xf]
    %v5037 = vld [vmem:[%s5022 + $0x38] sm:$0xf]
    %v5038 = vld [vmem:[%s5022 + $0x3c] sm:$0xf]
    %s5039 = scalar_lea.vmem %s2, 19
    %v5040 = vld [vmem:[%s5039] sm:$0x1]
    %v5042 = vlaneseq
    %v5043 = vshrl.u32 %v5042, 7
    %v5044 = vsub.s32 0, %v5043
    %v5045 = vrot.slane %v5040, %v5044
    %v5063 = vunpack.c.l.b16 %v5023
    %v5064 = vunpack.c.l.b16 %v5024
    %v5065 = vunpack.c.l.b16 %v5025
    %v5066 = vunpack.c.l.b16 %v5026
    %v5067 = vunpack.c.l.b16 %v5027
    %v5068 = vunpack.c.l.b16 %v5028
    %v5069 = vunpack.c.l.b16 %v5029
    %v5070 = vunpack.c.l.b16 %v5030
    %v5071 = vunpack.c.l.b16 %v5031
    %v5072 = vunpack.c.l.b16 %v5032
    %v5073 = vunpack.c.l.b16 %v5033
    %v5074 = vunpack.c.l.b16 %v5034
    %v5075 = vunpack.c.l.b16 %v5035
    %v5076 = vunpack.c.l.b16 %v5036
    %v5077 = vunpack.c.l.b16 %v5037
    %v5078 = vunpack.c.l.b16 %v5038
    %v5079 = vpack.c.b16 %v5064, %v5063
    %v5080 = vpack.c.b16 %v5066, %v5065
    %v5081 = vpack.c.b16 %v5068, %v5067
    %v5082 = vpack.c.b16 %v5070, %v5069
    %v5083 = vpack.c.b16 %v5072, %v5071
    %v5084 = vpack.c.b16 %v5074, %v5073
    %v5085 = vpack.c.b16 %v5076, %v5075
    %v5086 = vpack.c.b16 %v5078, %v5077
    %5095 = vmatprep.subr.bf16.mxu0 0
    %5096 = vmatpush1.bf16.msra.mxu0 %v5086
    %5097 = vmatprep.subr.bf16.mxu0 0
    %5098 = vmatpush1.bf16.msra.mxu0 %v5085
    %5099 = vmatprep.subr.bf16.mxu0 0
    %5100 = vmatpush1.bf16.msra.mxu0 %v5084
    %5101 = vmatprep.subr.bf16.mxu0 0
    %5102 = vmatpush1.bf16.msra.mxu0 %v5083
    %5103 = vmatprep.subr.bf16.mxu0 0
    %5104 = vmatpush1.bf16.msra.mxu0 %v5082
    %5105 = vmatprep.subr.bf16.mxu0 0
    %5106 = vmatpush1.bf16.msra.mxu0 %v5081
    %5107 = vmatprep.subr.bf16.mxu0 0
    %5108 = vmatpush1.bf16.msra.mxu0 %v5080
    %5109 = vmatprep.subr.bf16.mxu0 0
    %5110 = vmatpush1.bf16.msra.mxu0 %v5079
    %5111 = vmatprep.subr.bf16.mxu0 0
    %5112 = vmatpush2.bf16.msra.mxu0 0
    %5113 = vmatprep.subr.bf16.mxu0 0
    %5114 = vmatpush2.bf16.msra.mxu0 0
    %5115 = vmatprep.subr.bf16.mxu0 0
    %5116 = vmatpush2.bf16.msra.mxu0 0
    %5117 = vmatprep.subr.bf16.mxu0 0
    %5118 = vmatpush2.bf16.msra.mxu0 0
    %5119 = vmatprep.subr.bf16.mxu0 0
    %5120 = vmatpush2.bf16.msra.mxu0 0
    %5121 = vmatprep.subr.bf16.mxu0 0
    %5122 = vmatpush2.bf16.msra.mxu0 0
    %5123 = vmatprep.subr.bf16.mxu0 0
    %5124 = vmatpush2.bf16.msra.mxu0 0
    %5125 = vmatprep.subr.bf16.mxu0 0
    %5126 = vmatpush2.bf16.msra.mxu0 0
    %5127 = vmatprep.mubr.bf16.mxu0 0
    %5128 = vmatmul.mubr.bf16.gmra.mxu0 %v3009
    %v5129 = vpop.f32.mrf.mxu0
    %v5130 = vadd.f32 %v5045, %v5129
    %v5131 = vpop.f32.mrf.mxu0
    %v5132 = vpop.f32.mrf.mxu0
    %v5133 = vadd.f32 %v5045, %v5132
    %v5134 = vpop.f32.mrf.mxu0
    %5135 = vdwg.mxu0
    %s5136 = scalar_lea.vmem %s1, 1472
    %v5137 = vld [vmem:[%s5136] sm:$0xf]
    %v5138 = vld [vmem:[%s5136 + $0x4] sm:$0xf]
    %v5139 = vld [vmem:[%s5136 + $0x8] sm:$0xf]
    %v5140 = vld [vmem:[%s5136 + $0xc] sm:$0xf]
    %v5141 = vld [vmem:[%s5136 + $0x10] sm:$0xf]
    %v5142 = vld [vmem:[%s5136 + $0x14] sm:$0xf]
    %v5143 = vld [vmem:[%s5136 + $0x18] sm:$0xf]
    %v5144 = vld [vmem:[%s5136 + $0x1c] sm:$0xf]
    %v5145 = vld [vmem:[%s5136 + $0x20] sm:$0xf]
    %v5146 = vld [vmem:[%s5136 + $0x24] sm:$0xf]
    %v5147 = vld [vmem:[%s5136 + $0x28] sm:$0xf]
    %v5148 = vld [vmem:[%s5136 + $0x2c] sm:$0xf]
    %v5149 = vld [vmem:[%s5136 + $0x30] sm:$0xf]
    %v5150 = vld [vmem:[%s5136 + $0x34] sm:$0xf]
    %v5151 = vld [vmem:[%s5136 + $0x38] sm:$0xf]
    %v5152 = vld [vmem:[%s5136 + $0x3c] sm:$0xf]
    %s5153 = scalar_lea.vmem %s2, 23
    %v5154 = vld [vmem:[%s5153] sm:$0x1]
    %v5156 = vlaneseq
    %v5157 = vshrl.u32 %v5156, 7
    %v5158 = vsub.s32 0, %v5157
    %v5159 = vrot.slane %v5154, %v5158
    %v5177 = vunpack.c.l.b16 %v5137
    %v5178 = vunpack.c.l.b16 %v5138
    %v5179 = vunpack.c.l.b16 %v5139
    %v5180 = vunpack.c.l.b16 %v5140
    %v5181 = vunpack.c.l.b16 %v5141
    %v5182 = vunpack.c.l.b16 %v5142
    %v5183 = vunpack.c.l.b16 %v5143
    %v5184 = vunpack.c.l.b16 %v5144
    %v5185 = vunpack.c.l.b16 %v5145
    %v5186 = vunpack.c.l.b16 %v5146
    %v5187 = vunpack.c.l.b16 %v5147
    %v5188 = vunpack.c.l.b16 %v5148
    %v5189 = vunpack.c.l.b16 %v5149
    %v5190 = vunpack.c.l.b16 %v5150
    %v5191 = vunpack.c.l.b16 %v5151
    %v5192 = vunpack.c.l.b16 %v5152
    %v5193 = vpack.c.b16 %v5178, %v5177
    %v5194 = vpack.c.b16 %v5180, %v5179
    %v5195 = vpack.c.b16 %v5182, %v5181
    %v5196 = vpack.c.b16 %v5184, %v5183
    %v5197 = vpack.c.b16 %v5186, %v5185
    %v5198 = vpack.c.b16 %v5188, %v5187
    %v5199 = vpack.c.b16 %v5190, %v5189
    %v5200 = vpack.c.b16 %v5192, %v5191
    %5209 = vmatprep.subr.bf16.mxu0 0
    %5210 = vmatpush1.bf16.msra.mxu0 %v5200
    %5211 = vmatprep.subr.bf16.mxu0 0
    %5212 = vmatpush1.bf16.msra.mxu0 %v5199
    %5213 = vmatprep.subr.bf16.mxu0 0
    %5214 = vmatpush1.bf16.msra.mxu0 %v5198
    %5215 = vmatprep.subr.bf16.mxu0 0
    %5216 = vmatpush1.bf16.msra.mxu0 %v5197
    %5217 = vmatprep.subr.bf16.mxu0 0
    %5218 = vmatpush1.bf16.msra.mxu0 %v5196
    %5219 = vmatprep.subr.bf16.mxu0 0
    %5220 = vmatpush1.bf16.msra.mxu0 %v5195
    %5221 = vmatprep.subr.bf16.mxu0 0
    %5222 = vmatpush1.bf16.msra.mxu0 %v5194
    %5223 = vmatprep.subr.bf16.mxu0 0
    %5224 = vmatpush1.bf16.msra.mxu0 %v5193
    %5225 = vmatprep.subr.bf16.mxu0 0
    %5226 = vmatpush2.bf16.msra.mxu0 0
    %5227 = vmatprep.subr.bf16.mxu0 0
    %5228 = vmatpush2.bf16.msra.mxu0 0
    %5229 = vmatprep.subr.bf16.mxu0 0
    %5230 = vmatpush2.bf16.msra.mxu0 0
    %5231 = vmatprep.subr.bf16.mxu0 0
    %5232 = vmatpush2.bf16.msra.mxu0 0
    %5233 = vmatprep.subr.bf16.mxu0 0
    %5234 = vmatpush2.bf16.msra.mxu0 0
    %5235 = vmatprep.subr.bf16.mxu0 0
    %5236 = vmatpush2.bf16.msra.mxu0 0
    %5237 = vmatprep.subr.bf16.mxu0 0
    %5238 = vmatpush2.bf16.msra.mxu0 0
    %5239 = vmatprep.subr.bf16.mxu0 0
    %5240 = vmatpush2.bf16.msra.mxu0 0
    %5241 = vmatprep.mubr.bf16.mxu0 0
    %5242 = vmatmul.mubr.bf16.gmra.mxu0 %v3009
    %v5243 = vpop.f32.mrf.mxu0
    %v5244 = vadd.f32 %v5159, %v5243
    %v5245 = vpop.f32.mrf.mxu0
    %v5246 = vpop.f32.mrf.mxu0
    %v5247 = vadd.f32 %v5159, %v5246
    %v5248 = vpop.f32.mrf.mxu0
    %5249 = vdwg.mxu0
    %v5250 = vmul.f32 %v5016, 0.17677669
    %v5251 = vmul.f32 %v5019, 0.17677669
    %v5252 = vpack.c.bf16 %v5251, %v5250
    %v5254 = vunpack.c.l.b16 %v5252
    %v5255 = vunpack.c.h.b16 %v5252
    %v5256 = vpack.c.b16 %v5254, %v5254
    %v5257 = vpack.c.b16 %v5255, %v5255
    %v5258 = vpack.c.bf16 %v5133, %v5130
    %v5260 = vunpack.c.l.b16 %v5258
    %v5261 = vunpack.c.h.b16 %v5258
    %v5262 = vpack.c.b16 %v5260, %v5260
    %v5263 = vpack.c.b16 %v5261, %v5261
    %v5264 = vpack.c.bf16 %v5247, %v5244
    %v5266 = vunpack.c.l.b16 %v5264
    %v5267 = vunpack.c.h.b16 %v5264
    %v5268 = vpack.c.b16 %v5266, %v5266
    %v5269 = vpack.c.b16 %v5267, %v5267
    %v5271 = vsel %vm409, %v5256, 0
    %v5274 = vsel %vm409, %v5262, 0
    %5276 = vmatprep.subr.bf16.mxu0 0
    %5277 = vmatpush1.bf16.xpose.msra.mxu0 0
    %5278 = vmatprep.subr.bf16.mxu0 0
    %5279 = vmatpush1.bf16.xpose.msra.mxu0 0
    %5280 = vmatprep.subr.bf16.mxu0 0
    %5281 = vmatpush1.bf16.xpose.msra.mxu0 0
    %5282 = vmatprep.subr.bf16.mxu0 0
    %5283 = vmatpush1.bf16.xpose.msra.mxu0 0
    %5284 = vmatprep.subr.bf16.mxu0 0
    %5285 = vmatpush1.bf16.xpose.msra.mxu0 0
    %5286 = vmatprep.subr.bf16.mxu0 0
    %5287 = vmatpush1.bf16.xpose.msra.mxu0 0
    %5288 = vmatprep.subr.bf16.mxu0 0
    %5289 = vmatpush1.bf16.xpose.msra.mxu0 0
    %5290 = vmatprep.subr.bf16.mxu0 0
    %5291 = vmatpush1.bf16.xpose.msra.mxu0 %v5274
    %5292 = vmatprep.subr.bf16.mxu0 0
    %5293 = vmatpush2.bf16.xpose.msra.mxu0 0
    %5294 = vmatprep.subr.bf16.mxu0 0
    %5295 = vmatpush2.bf16.xpose.msra.mxu0 0
    %5296 = vmatprep.subr.bf16.mxu0 0
    %5297 = vmatpush2.bf16.xpose.msra.mxu0 0
    %5298 = vmatprep.subr.bf16.mxu0 0
    %5299 = vmatpush2.bf16.xpose.msra.mxu0 0
    %5300 = vmatprep.subr.bf16.mxu0 0
    %5301 = vmatpush2.bf16.xpose.msra.mxu0 0
    %5302 = vmatprep.subr.bf16.mxu0 0
    %5303 = vmatpush2.bf16.xpose.msra.mxu0 0
    %5304 = vmatprep.subr.bf16.mxu0 0
    %5305 = vmatpush2.bf16.xpose.msra.mxu0 0
    %5306 = vmatprep.subr.bf16.mxu0 0
    %5307 = vmatpush2.bf16.xpose.msra.mxu0 0
    %5308 = vmatprep.mubr.bf16.mxu0 0
    %5309 = vmatmul.mubr.bf16.gmra.mxu0 %v5271
    %v5310 = vpop.f32.mrf.mxu0
    %v5311 = vadd.f32 0.0, %v5310
    %v5312 = vpop.f32.mrf.mxu0
    %v5313 = vpop.f32.mrf.mxu0
    %v5314 = vpop.f32.mrf.mxu0
    %5315 = vdwg.mxu0
    %v5317 = vsel %vm409, %v5257, 0
    %v5320 = vsel %vm409, %v5263, 0
    %5322 = vmatprep.subr.bf16.mxu0 0
    %5323 = vmatpush1.bf16.xpose.msra.mxu0 0
    %5324 = vmatprep.subr.bf16.mxu0 0
    %5325 = vmatpush1.bf16.xpose.msra.mxu0 0
    %5326 = vmatprep.subr.bf16.mxu0 0
    %5327 = vmatpush1.bf16.xpose.msra.mxu0 0
    %5328 = vmatprep.subr.bf16.mxu0 0
    %5329 = vmatpush1.bf16.xpose.msra.mxu0 0
    %5330 = vmatprep.subr.bf16.mxu0 0
    %5331 = vmatpush1.bf16.xpose.msra.mxu0 0
    %5332 = vmatprep.subr.bf16.mxu0 0
    %5333 = vmatpush1.bf16.xpose.msra.mxu0 0
    %5334 = vmatprep.subr.bf16.mxu0 0
    %5335 = vmatpush1.bf16.xpose.msra.mxu0 0
    %5336 = vmatprep.subr.bf16.mxu0 0
    %5337 = vmatpush1.bf16.xpose.msra.mxu0 %v5320
    %5338 = vmatprep.subr.bf16.mxu0 0
    %5339 = vmatpush2.bf16.xpose.msra.mxu0 0
    %5340 = vmatprep.subr.bf16.mxu0 0
    %5341 = vmatpush2.bf16.xpose.msra.mxu0 0
    %5342 = vmatprep.subr.bf16.mxu0 0
    %5343 = vmatpush2.bf16.xpose.msra.mxu0 0
    %5344 = vmatprep.subr.bf16.mxu0 0
    %5345 = vmatpush2.bf16.xpose.msra.mxu0 0
    %5346 = vmatprep.subr.bf16.mxu0 0
    %5347 = vmatpush2.bf16.xpose.msra.mxu0 0
    %5348 = vmatprep.subr.bf16.mxu0 0
    %5349 = vmatpush2.bf16.xpose.msra.mxu0 0
    %5350 = vmatprep.subr.bf16.mxu0 0
    %5351 = vmatpush2.bf16.xpose.msra.mxu0 0
    %5352 = vmatprep.subr.bf16.mxu0 0
    %5353 = vmatpush2.bf16.xpose.msra.mxu0 0
    %5354 = vmatprep.mubr.bf16.mxu0 0
    %5355 = vmatmul.mubr.bf16.gmra.mxu0 %v5317
    %v5356 = vpop.f32.mrf.mxu0
    %v5357 = vadd.f32 0.0, %v5356
    %v5358 = vpop.f32.mrf.mxu0
    %v5359 = vpop.f32.mrf.mxu0
    %v5360 = vpop.f32.mrf.mxu0
    %5361 = vdwg.mxu0
    %v5362 = vsel %vm502, %v5311, -inf
    %5363 = vmax.xlane.f32.xlu0 %v5362
    %v5364 = vpop.xlane.xlu0 %5363
    %v5365 = vsel %vm502, %v5357, -inf
    %5366 = vmax.xlane.f32.xlu0 %v5365
    %v5367 = vpop.xlane.xlu0 %5366
    %v5368 = vsub.f32 %v5311, %v5364
    %v5369 = vsub.f32 %v5357, %v5367
    %v5370 = vmul.f32 %v5368, 1.442695
    %v5371 = vpow.pop %v5370
    %v5372 = vmul.f32 %v5369, 1.442695
    %v5373 = vpow.pop %v5372
    %v5374 = vsel %vm502, %v5371, 0.0
    %5375 = vadd.xlane.f32.xlu0 %v5374
    %v5376 = vpop.xlane.xlu0 %5375
    %v5377 = vsel %vm502, %v5373, 0.0
    %5378 = vadd.xlane.f32.xlu0 %v5377
    %v5379 = vpop.xlane.xlu0 %5378
    %v5380 = vrcp.pop %v5376
    %v5381 = vrcp.pop %v5379
    %v5382 = vmul.f32 %v5371, %v5380
    %v5383 = vmul.f32 %v5373, %v5381
    %v5384 = vpack.c.bf16 %v5382, %v5382
    %v5385 = vpack.c.bf16 %v5383, %v5383
    %v5387 = vsel %vm502, %v5384, 0
    %v5390 = vsel %vm530, %v5268, 0
    %5392 = vmatprep.subr.bf16.mxu0 0
    %5393 = vmatpush1.bf16.msra.mxu0 0
    %5394 = vmatprep.subr.bf16.mxu0 0
    %5395 = vmatpush1.bf16.msra.mxu0 0
    %5396 = vmatprep.subr.bf16.mxu0 0
    %5397 = vmatpush1.bf16.msra.mxu0 0
    %5398 = vmatprep.subr.bf16.mxu0 0
    %5399 = vmatpush1.bf16.msra.mxu0 0
    %5400 = vmatprep.subr.bf16.mxu0 0
    %5401 = vmatpush1.bf16.msra.mxu0 0
    %5402 = vmatprep.subr.bf16.mxu0 0
    %5403 = vmatpush1.bf16.msra.mxu0 0
    %5404 = vmatprep.subr.bf16.mxu0 0
    %5405 = vmatpush1.bf16.msra.mxu0 0
    %5406 = vmatprep.subr.bf16.mxu0 0
    %5407 = vmatpush1.bf16.msra.mxu0 %v5390
    %5408 = vmatprep.subr.bf16.mxu0 0
    %5409 = vmatpush2.bf16.msra.mxu0 0
    %5410 = vmatprep.subr.bf16.mxu0 0
    %5411 = vmatpush2.bf16.msra.mxu0 0
    %5412 = vmatprep.subr.bf16.mxu0 0
    %5413 = vmatpush2.bf16.msra.mxu0 0
    %5414 = vmatprep.subr.bf16.mxu0 0
    %5415 = vmatpush2.bf16.msra.mxu0 0
    %5416 = vmatprep.subr.bf16.mxu0 0
    %5417 = vmatpush2.bf16.msra.mxu0 0
    %5418 = vmatprep.subr.bf16.mxu0 0
    %5419 = vmatpush2.bf16.msra.mxu0 0
    %5420 = vmatprep.subr.bf16.mxu0 0
    %5421 = vmatpush2.bf16.msra.mxu0 0
    %5422 = vmatprep.subr.bf16.mxu0 0
    %5423 = vmatpush2.bf16.msra.mxu0 0
    %5424 = vmatprep.mubr.bf16.mxu0 0
    %5425 = vmatmul.mubr.bf16.gmra.mxu0 %v5387
    %v5426 = vpop.f32.mrf.mxu0
    %v5427 = vadd.f32 0.0, %v5426
    %v5428 = vpop.f32.mrf.mxu0
    %v5429 = vpop.f32.mrf.mxu0
    %v5430 = vpop.f32.mrf.mxu0
    %5431 = vdwg.mxu0
    %v5433 = vsel %vm502, %v5385, 0
    %v5436 = vsel %vm530, %v5269, 0
    %5438 = vmatprep.subr.bf16.mxu0 0
    %5439 = vmatpush1.bf16.msra.mxu0 0
    %5440 = vmatprep.subr.bf16.mxu0 0
    %5441 = vmatpush1.bf16.msra.mxu0 0
    %5442 = vmatprep.subr.bf16.mxu0 0
    %5443 = vmatpush1.bf16.msra.mxu0 0
    %5444 = vmatprep.subr.bf16.mxu0 0
    %5445 = vmatpush1.bf16.msra.mxu0 0
    %5446 = vmatprep.subr.bf16.mxu0 0
    %5447 = vmatpush1.bf16.msra.mxu0 0
    %5448 = vmatprep.subr.bf16.mxu0 0
    %5449 = vmatpush1.bf16.msra.mxu0 0
    %5450 = vmatprep.subr.bf16.mxu0 0
    %5451 = vmatpush1.bf16.msra.mxu0 0
    %5452 = vmatprep.subr.bf16.mxu0 0
    %5453 = vmatpush1.bf16.msra.mxu0 %v5436
    %5454 = vmatprep.subr.bf16.mxu0 0
    %5455 = vmatpush2.bf16.msra.mxu0 0
    %5456 = vmatprep.subr.bf16.mxu0 0
    %5457 = vmatpush2.bf16.msra.mxu0 0
    %5458 = vmatprep.subr.bf16.mxu0 0
    %5459 = vmatpush2.bf16.msra.mxu0 0
    %5460 = vmatprep.subr.bf16.mxu0 0
    %5461 = vmatpush2.bf16.msra.mxu0 0
    %5462 = vmatprep.subr.bf16.mxu0 0
    %5463 = vmatpush2.bf16.msra.mxu0 0
    %5464 = vmatprep.subr.bf16.mxu0 0
    %5465 = vmatpush2.bf16.msra.mxu0 0
    %5466 = vmatprep.subr.bf16.mxu0 0
    %5467 = vmatpush2.bf16.msra.mxu0 0
    %5468 = vmatprep.subr.bf16.mxu0 0
    %5469 = vmatpush2.bf16.msra.mxu0 0
    %5470 = vmatprep.mubr.bf16.mxu0 0
    %5471 = vmatmul.mubr.bf16.gmra.mxu0 %v5433
    %v5472 = vpop.f32.mrf.mxu0
    %v5473 = vadd.f32 0.0, %v5472
    %v5474 = vpop.f32.mrf.mxu0
    %v5475 = vpop.f32.mrf.mxu0
    %v5476 = vpop.f32.mrf.mxu0
    %5477 = vdwg.mxu0
    %v5478 = vpack.c.bf16 %v5473, %v5427
    %s5479 = scalar_lea.vmem %s3, 112
    %v5480 = vld [vmem:[%s5479] sm:$0xf]
    %v5481 = vld [vmem:[%s5479 + $0x4] sm:$0xf]
    %v5482 = vld [vmem:[%s5479 + $0x8] sm:$0xf]
    %v5483 = vld [vmem:[%s5479 + $0xc] sm:$0xf]
    %v5488 = vunpack.c.l.b16 %v5480
    %v5489 = vunpack.c.l.b16 %v5481
    %v5490 = vunpack.c.l.b16 %v5482
    %v5491 = vunpack.c.l.b16 %v5483
    %v5492 = vpack.c.b16 %v5489, %v5488
    %v5493 = vpack.c.b16 %v5491, %v5490
    %v5497 = vsel %vm409, %v5478, 0
    %5499 = vmatprep.subr.bf16.mxu0 0
    %5500 = vmatpush1.bf16.msra.mxu0 0
    %5501 = vmatprep.subr.bf16.mxu0 0
    %5502 = vmatpush1.bf16.msra.mxu0 0
    %5503 = vmatprep.subr.bf16.mxu0 0
    %5504 = vmatpush1.bf16.msra.mxu0 0
    %5505 = vmatprep.subr.bf16.mxu0 0
    %5506 = vmatpush1.bf16.msra.mxu0 0
    %5507 = vmatprep.subr.bf16.mxu0 0
    %5508 = vmatpush1.bf16.msra.mxu0 0
    %5509 = vmatprep.subr.bf16.mxu0 0
    %5510 = vmatpush1.bf16.msra.mxu0 0
    %5511 = vmatprep.subr.bf16.mxu0 0
    %5512 = vmatpush1.bf16.msra.mxu0 %v5493
    %5513 = vmatprep.subr.bf16.mxu0 0
    %5514 = vmatpush1.bf16.msra.mxu0 %v5492
    %5515 = vmatprep.subr.bf16.mxu0 0
    %5516 = vmatpush2.bf16.msra.mxu0 0
    %5517 = vmatprep.subr.bf16.mxu0 0
    %5518 = vmatpush2.bf16.msra.mxu0 0
    %5519 = vmatprep.subr.bf16.mxu0 0
    %5520 = vmatpush2.bf16.msra.mxu0 0
    %5521 = vmatprep.subr.bf16.mxu0 0
    %5522 = vmatpush2.bf16.msra.mxu0 0
    %5523 = vmatprep.subr.bf16.mxu0 0
    %5524 = vmatpush2.bf16.msra.mxu0 0
    %5525 = vmatprep.subr.bf16.mxu0 0
    %5526 = vmatpush2.bf16.msra.mxu0 0
    %5527 = vmatprep.subr.bf16.mxu0 0
    %5528 = vmatpush2.bf16.msra.mxu0 0
    %5529 = vmatprep.subr.bf16.mxu0 0
    %5530 = vmatpush2.bf16.msra.mxu0 0
    %5531 = vmatprep.mubr.bf16.mxu0 0
    %5532 = vmatmul.mubr.bf16.gmra.mxu0 %v5497
    %v5533 = vpop.f32.mrf.mxu0
    %v5534 = vadd.f32 0.0, %v5533
    %v5535 = vpop.f32.mrf.mxu0
    %v5536 = vpop.f32.mrf.mxu0
    %v5537 = vadd.f32 0.0, %v5536
    %v5538 = vpop.f32.mrf.mxu0
    %5539 = vdwg.mxu0
    %v5540 = vadd.f32 %v4906, %v5534
    %v5541 = vadd.f32 %v4907, %v5537
    %s5542 = scalar_lea.vmem %s4, 1
    %v5543 = vld [vmem:[%s5542] sm:$0x1]
    %v5545 = vlaneseq
    %v5546 = vshrl.u32 %v5545, 7
    %v5547 = vsub.s32 0, %v5546
    %v5548 = vrot.slane %v5543, %v5547
    %v5550 = vadd.f32 %v5540, %v5548
    %v5551 = vadd.f32 %v5541, %v5548
    %v5552 = vadd.f32 %v3007, %v5550
    %v5553 = vadd.f32 %v3008, %v5551
    %s5554 = scalar_lea.vmem %s5, 1
    %v5555 = vld [vmem:[%s5554] sm:$0x1]
    %s5556 = scalar_lea.vmem %s6, 1
    %v5557 = vld [vmem:[%s5556] sm:$0x1]
    %5558 = vadd.xlane.f32.xlu0 %v5552
    %v5559 = vpop.xlane.xlu0 %5558
    %5560 = vadd.xlane.f32.xlu0 %v5553
    %v5561 = vpop.xlane.xlu0 %5560
    %v5562 = vmul.f32 %v5559, %v2598
    %v5563 = vmul.f32 %v5561, %v2598
    %v5564 = vsub.f32 %v5552, %v5562
    %v5565 = vsub.f32 %v5553, %v5563
    %v5566 = vmul.f32 %v5564, %v5564
    %v5567 = vmul.f32 %v5565, %v5565
    %5568 = vadd.xlane.f32.xlu0 %v5566
    %v5569 = vpop.xlane.xlu0 %5568
    %5570 = vadd.xlane.f32.xlu0 %v5567
    %v5571 = vpop.xlane.xlu0 %5570
    %v5572 = vmul.f32 %v5569, %v2598
    %v5573 = vmul.f32 %v5571, %v2598
    %v5574 = vadd.f32 %v5572, 1e-05
    %v5575 = vadd.f32 %v5573, 1e-05
    %v5576 = vrsqrt.pop %v5574
    %v5577 = vrsqrt.pop %v5575
    %v5578 = vmul.f32 %v5564, %v5576
    %v5579 = vmul.f32 %v5565, %v5577
    %v5581 = vlaneseq
    %v5582 = vshrl.u32 %v5581, 7
    %v5583 = vsub.s32 0, %v5582
    %v5584 = vrot.slane %v5555, %v5583
    %v5586 = vmul.f32 %v5578, %v5584
    %v5587 = vmul.f32 %v5579, %v5584
    %v5589 = vlaneseq
    %v5590 = vshrl.u32 %v5589, 7
    %v5591 = vsub.s32 0, %v5590
    %v5592 = vrot.slane %v5557, %v5591
    %v5594 = vadd.f32 %v5586, %v5592
    %v5595 = vadd.f32 %v5587, %v5592
    %v5596 = vpack.c.bf16 %v5595, %v5594
    %s5597 = scalar_lea.vmem %s7, 128
    %v5598 = vld [vmem:[%s5597] sm:$0xff]
    %v5599 = vld [vmem:[%s5597 + $0x8] sm:$0xff]
    %v5600 = vld [vmem:[%s5597 + $0x10] sm:$0xff]
    %v5601 = vld [vmem:[%s5597 + $0x18] sm:$0xff]
    %v5602 = vld [vmem:[%s5597 + $0x20] sm:$0xff]
    %v5603 = vld [vmem:[%s5597 + $0x28] sm:$0xff]
    %v5604 = vld [vmem:[%s5597 + $0x30] sm:$0xff]
    %v5605 = vld [vmem:[%s5597 + $0x38] sm:$0xff]
    %v5606 = vld [vmem:[%s5597 + $0x40] sm:$0xff]
    %v5607 = vld [vmem:[%s5597 + $0x48] sm:$0xff]
    %v5608 = vld [vmem:[%s5597 + $0x50] sm:$0xff]
    %v5609 = vld [vmem:[%s5597 + $0x58] sm:$0xff]
    %v5610 = vld [vmem:[%s5597 + $0x60] sm:$0xff]
    %v5611 = vld [vmem:[%s5597 + $0x68] sm:$0xff]
    %v5612 = vld [vmem:[%s5597 + $0x70] sm:$0xff]
    %v5613 = vld [vmem:[%s5597 + $0x78] sm:$0xff]
    %s5614 = scalar_lea.vmem %s8, 2
    %v5615 = vld [vmem:[%s5614] sm:$0x3]
    %v5617 = vlaneseq
    %v5618 = vshrl.u32 %v5617, 7
    %v5619 = vsub.s32 0, %v5618
    %v5620 = vrot.slane %v5615, %v5619
    %v5621 = vlaneseq
    %v5622 = vshrl.u32 %v5621, 7
    %v5623 = vsub.s32 1, %v5622
    %v5624 = vrot.slane %v5615, %v5623
    %v5643 = vunpack.c.l.b16 %v5598
    %v5644 = vunpack.c.h.b16 %v5598
    %v5645 = vunpack.c.l.b16 %v5599
    %v5646 = vunpack.c.h.b16 %v5599
    %v5647 = vunpack.c.l.b16 %v5600
    %v5648 = vunpack.c.h.b16 %v5600
    %v5649 = vunpack.c.l.b16 %v5601
    %v5650 = vunpack.c.h.b16 %v5601
    %v5651 = vunpack.c.l.b16 %v5602
    %v5652 = vunpack.c.h.b16 %v5602
    %v5653 = vunpack.c.l.b16 %v5603
    %v5654 = vunpack.c.h.b16 %v5603
    %v5655 = vunpack.c.l.b16 %v5604
    %v5656 = vunpack.c.h.b16 %v5604
    %v5657 = vunpack.c.l.b16 %v5605
    %v5658 = vunpack.c.h.b16 %v5605
    %v5659 = vunpack.c.l.b16 %v5606
    %v5660 = vunpack.c.h.b16 %v5606
    %v5661 = vunpack.c.l.b16 %v5607
    %v5662 = vunpack.c.h.b16 %v5607
    %v5663 = vunpack.c.l.b16 %v5608
    %v5664 = vunpack.c.h.b16 %v5608
    %v5665 = vunpack.c.l.b16 %v5609
    %v5666 = vunpack.c.h.b16 %v5609
    %v5667 = vunpack.c.l.b16 %v5610
    %v5668 = vunpack.c.h.b16 %v5610
    %v5669 = vunpack.c.l.b16 %v5611
    %v5670 = vunpack.c.h.b16 %v5611
    %v5671 = vunpack.c.l.b16 %v5612
    %v5672 = vunpack.c.h.b16 %v5612
    %v5673 = vunpack.c.l.b16 %v5613
    %v5674 = vunpack.c.h.b16 %v5613
    %v5675 = vpack.c.b16 %v5645, %v5643
    %v5676 = vpack.c.b16 %v5646, %v5644
    %v5677 = vpack.c.b16 %v5649, %v5647
    %v5678 = vpack.c.b16 %v5650, %v5648
    %v5679 = vpack.c.b16 %v5653, %v5651
    %v5680 = vpack.c.b16 %v5654, %v5652
    %v5681 = vpack.c.b16 %v5657, %v5655
    %v5682 = vpack.c.b16 %v5658, %v5656
    %v5683 = vpack.c.b16 %v5661, %v5659
    %v5684 = vpack.c.b16 %v5662, %v5660
    %v5685 = vpack.c.b16 %v5665, %v5663
    %v5686 = vpack.c.b16 %v5666, %v5664
    %v5687 = vpack.c.b16 %v5669, %v5667
    %v5688 = vpack.c.b16 %v5670, %v5668
    %v5689 = vpack.c.b16 %v5673, %v5671
    %v5690 = vpack.c.b16 %v5674, %v5672
    %5707 = vmatprep.subr.bf16.mxu0 %v5690
    %5708 = vmatpush1.bf16.msra.mxu0 %v5689
    %5709 = vmatprep.subr.bf16.mxu0 %v5688
    %5710 = vmatpush1.bf16.msra.mxu0 %v5687
    %5711 = vmatprep.subr.bf16.mxu0 %v5686
    %5712 = vmatpush1.bf16.msra.mxu0 %v5685
    %5713 = vmatprep.subr.bf16.mxu0 %v5684
    %5714 = vmatpush1.bf16.msra.mxu0 %v5683
    %5715 = vmatprep.subr.bf16.mxu0 %v5682
    %5716 = vmatpush1.bf16.msra.mxu0 %v5681
    %5717 = vmatprep.subr.bf16.mxu0 %v5680
    %5718 = vmatpush1.bf16.msra.mxu0 %v5679
    %5719 = vmatprep.subr.bf16.mxu0 %v5678
    %5720 = vmatpush1.bf16.msra.mxu0 %v5677
    %5721 = vmatprep.subr.bf16.mxu0 %v5676
    %5722 = vmatpush1.bf16.msra.mxu0 %v5675
    %5723 = vmatprep.subr.bf16.mxu0 0
    %5724 = vmatpush2.bf16.msra.mxu0 0
    %5725 = vmatprep.subr.bf16.mxu0 0
    %5726 = vmatpush2.bf16.msra.mxu0 0
    %5727 = vmatprep.subr.bf16.mxu0 0
    %5728 = vmatpush2.bf16.msra.mxu0 0
    %5729 = vmatprep.subr.bf16.mxu0 0
    %5730 = vmatpush2.bf16.msra.mxu0 0
    %5731 = vmatprep.subr.bf16.mxu0 0
    %5732 = vmatpush2.bf16.msra.mxu0 0
    %5733 = vmatprep.subr.bf16.mxu0 0
    %5734 = vmatpush2.bf16.msra.mxu0 0
    %5735 = vmatprep.subr.bf16.mxu0 0
    %5736 = vmatpush2.bf16.msra.mxu0 0
    %5737 = vmatprep.subr.bf16.mxu0 0
    %5738 = vmatpush2.bf16.msra.mxu0 0
    %5739 = vmatprep.mubr.bf16.mxu0 0
    %5740 = vmatmul.mubr.bf16.gmra.mxu0 %v5596
    %v5741 = vpop.f32.mrf.mxu0
    %v5742 = vadd.f32 %v5620, %v5741
    %v5743 = vpop.f32.mrf.mxu0
    %v5744 = vadd.f32 %v5624, %v5743
    %v5745 = vpop.f32.mrf.mxu0
    %v5746 = vadd.f32 %v5620, %v5745
    %v5747 = vpop.f32.mrf.mxu0
    %v5748 = vadd.f32 %v5624, %v5747
    %5749 = vdwg.mxu0
    %v5750 = vmax.f32 %v5742, 0.0
    %v5751 = vmax.f32 %v5744, 0.0
    %v5752 = vmax.f32 %v5746, 0.0
    %v5753 = vmax.f32 %v5748, 0.0
    %v5754 = vpack.c.bf16 %v5752, %v5750
    %v5755 = vpack.c.bf16 %v5753, %v5751
    %s5756 = scalar_lea.vmem %s9, 128
    %v5757 = vld [vmem:[%s5756] sm:$0xf]
    %v5758 = vld [vmem:[%s5756 + $0x4] sm:$0xf]
    %v5759 = vld [vmem:[%s5756 + $0x8] sm:$0xf]
    %v5760 = vld [vmem:[%s5756 + $0xc] sm:$0xf]
    %v5761 = vld [vmem:[%s5756 + $0x10] sm:$0xf]
    %v5762 = vld [vmem:[%s5756 + $0x14] sm:$0xf]
    %v5763 = vld [vmem:[%s5756 + $0x18] sm:$0xf]
    %v5764 = vld [vmem:[%s5756 + $0x1c] sm:$0xf]
    %v5765 = vld [vmem:[%s5756 + $0x20] sm:$0xf]
    %v5766 = vld [vmem:[%s5756 + $0x24] sm:$0xf]
    %v5767 = vld [vmem:[%s5756 + $0x28] sm:$0xf]
    %v5768 = vld [vmem:[%s5756 + $0x2c] sm:$0xf]
    %v5769 = vld [vmem:[%s5756 + $0x30] sm:$0xf]
    %v5770 = vld [vmem:[%s5756 + $0x34] sm:$0xf]
    %v5771 = vld [vmem:[%s5756 + $0x38] sm:$0xf]
    %v5772 = vld [vmem:[%s5756 + $0x3c] sm:$0xf]
    %v5773 = vld [vmem:[%s5756 + $0x40] sm:$0xf]
    %v5774 = vld [vmem:[%s5756 + $0x44] sm:$0xf]
    %v5775 = vld [vmem:[%s5756 + $0x48] sm:$0xf]
    %v5776 = vld [vmem:[%s5756 + $0x4c] sm:$0xf]
    %v5777 = vld [vmem:[%s5756 + $0x50] sm:$0xf]
    %v5778 = vld [vmem:[%s5756 + $0x54] sm:$0xf]
    %v5779 = vld [vmem:[%s5756 + $0x58] sm:$0xf]
    %v5780 = vld [vmem:[%s5756 + $0x5c] sm:$0xf]
    %v5781 = vld [vmem:[%s5756 + $0x60] sm:$0xf]
    %v5782 = vld [vmem:[%s5756 + $0x64] sm:$0xf]
    %v5783 = vld [vmem:[%s5756 + $0x68] sm:$0xf]
    %v5784 = vld [vmem:[%s5756 + $0x6c] sm:$0xf]
    %v5785 = vld [vmem:[%s5756 + $0x70] sm:$0xf]
    %v5786 = vld [vmem:[%s5756 + $0x74] sm:$0xf]
    %v5787 = vld [vmem:[%s5756 + $0x78] sm:$0xf]
    %v5788 = vld [vmem:[%s5756 + $0x7c] sm:$0xf]
    %s5789 = scalar_lea.vmem %s10, 1
    %v5790 = vld [vmem:[%s5789] sm:$0x1]
    %v5792 = vlaneseq
    %v5793 = vshrl.u32 %v5792, 7
    %v5794 = vsub.s32 0, %v5793
    %v5795 = vrot.slane %v5790, %v5794
    %v5829 = vunpack.c.l.b16 %v5757
    %v5830 = vunpack.c.l.b16 %v5758
    %v5831 = vunpack.c.l.b16 %v5759
    %v5832 = vunpack.c.l.b16 %v5760
    %v5833 = vunpack.c.l.b16 %v5761
    %v5834 = vunpack.c.l.b16 %v5762
    %v5835 = vunpack.c.l.b16 %v5763
    %v5836 = vunpack.c.l.b16 %v5764
    %v5837 = vunpack.c.l.b16 %v5765
    %v5838 = vunpack.c.l.b16 %v5766
    %v5839 = vunpack.c.l.b16 %v5767
    %v5840 = vunpack.c.l.b16 %v5768
    %v5841 = vunpack.c.l.b16 %v5769
    %v5842 = vunpack.c.l.b16 %v5770
    %v5843 = vunpack.c.l.b16 %v5771
    %v5844 = vunpack.c.l.b16 %v5772
    %v5845 = vunpack.c.l.b16 %v5773
    %v5846 = vunpack.c.l.b16 %v5774
    %v5847 = vunpack.c.l.b16 %v5775
    %v5848 = vunpack.c.l.b16 %v5776
    %v5849 = vunpack.c.l.b16 %v5777
    %v5850 = vunpack.c.l.b16 %v5778
    %v5851 = vunpack.c.l.b16 %v5779
    %v5852 = vunpack.c.l.b16 %v5780
    %v5853 = vunpack.c.l.b16 %v5781
    %v5854 = vunpack.c.l.b16 %v5782
    %v5855 = vunpack.c.l.b16 %v5783
    %v5856 = vunpack.c.l.b16 %v5784
    %v5857 = vunpack.c.l.b16 %v5785
    %v5858 = vunpack.c.l.b16 %v5786
    %v5859 = vunpack.c.l.b16 %v5787
    %v5860 = vunpack.c.l.b16 %v5788
    %v5861 = vpack.c.b16 %v5830, %v5829
    %v5862 = vpack.c.b16 %v5832, %v5831
    %v5863 = vpack.c.b16 %v5834, %v5833
    %v5864 = vpack.c.b16 %v5836, %v5835
    %v5865 = vpack.c.b16 %v5838, %v5837
    %v5866 = vpack.c.b16 %v5840, %v5839
    %v5867 = vpack.c.b16 %v5842, %v5841
    %v5868 = vpack.c.b16 %v5844, %v5843
    %v5869 = vpack.c.b16 %v5846, %v5845
    %v5870 = vpack.c.b16 %v5848, %v5847
    %v5871 = vpack.c.b16 %v5850, %v5849
    %v5872 = vpack.c.b16 %v5852, %v5851
    %v5873 = vpack.c.b16 %v5854, %v5853
    %v5874 = vpack.c.b16 %v5856, %v5855
    %v5875 = vpack.c.b16 %v5858, %v5857
    %v5876 = vpack.c.b16 %v5860, %v5859
    %5893 = vmatprep.subr.bf16.mxu0 0
    %5894 = vmatpush1.bf16.msra.mxu0 %v5868
    %5895 = vmatprep.subr.bf16.mxu0 0
    %5896 = vmatpush1.bf16.msra.mxu0 %v5867
    %5897 = vmatprep.subr.bf16.mxu0 0
    %5898 = vmatpush1.bf16.msra.mxu0 %v5866
    %5899 = vmatprep.subr.bf16.mxu0 0
    %5900 = vmatpush1.bf16.msra.mxu0 %v5865
    %5901 = vmatprep.subr.bf16.mxu0 0
    %5902 = vmatpush1.bf16.msra.mxu0 %v5864
    %5903 = vmatprep.subr.bf16.mxu0 0
    %5904 = vmatpush1.bf16.msra.mxu0 %v5863
    %5905 = vmatprep.subr.bf16.mxu0 0
    %5906 = vmatpush1.bf16.msra.mxu0 %v5862
    %5907 = vmatprep.subr.bf16.mxu0 0
    %5908 = vmatpush1.bf16.msra.mxu0 %v5861
    %5909 = vmatprep.subr.bf16.mxu0 0
    %5910 = vmatpush2.bf16.msra.mxu0 %v5876
    %5911 = vmatprep.subr.bf16.mxu0 0
    %5912 = vmatpush2.bf16.msra.mxu0 %v5875
    %5913 = vmatprep.subr.bf16.mxu0 0
    %5914 = vmatpush2.bf16.msra.mxu0 %v5874
    %5915 = vmatprep.subr.bf16.mxu0 0
    %5916 = vmatpush2.bf16.msra.mxu0 %v5873
    %5917 = vmatprep.subr.bf16.mxu0 0
    %5918 = vmatpush2.bf16.msra.mxu0 %v5872
    %5919 = vmatprep.subr.bf16.mxu0 0
    %5920 = vmatpush2.bf16.msra.mxu0 %v5871
    %5921 = vmatprep.subr.bf16.mxu0 0
    %5922 = vmatpush2.bf16.msra.mxu0 %v5870
    %5923 = vmatprep.subr.bf16.mxu0 0
    %5924 = vmatpush2.bf16.msra.mxu0 %v5869
    %5925 = vmatprep.mubr.bf16.mxu0 %v5755
    %5926 = vmatmul.mubr.bf16.gmra.mxu0 %v5754
    %v5927 = vpop.f32.mrf.mxu0
    %v5928 = vadd.f32 %v5795, %v5927
    %v5929 = vpop.f32.mrf.mxu0
    %v5930 = vpop.f32.mrf.mxu0
    %v5931 = vadd.f32 %v5795, %v5930
    %v5932 = vpop.f32.mrf.mxu0
    %5933 = vdwg.mxu0
    %v5934 = vadd.f32 %v5594, %v5928
    %v5935 = vadd.f32 %v5595, %v5931
    %s5936 = scalar_lea.vmem %s11, 1
    %v5937 = vld [vmem:[%s5936] sm:$0x1]
    %s5938 = scalar_lea.vmem %s12, 1
    %v5939 = vld [vmem:[%s5938] sm:$0x1]
    %5940 = vadd.xlane.f32.xlu0 %v5934
    %v5941 = vpop.xlane.xlu0 %5940
    %5942 = vadd.xlane.f32.xlu0 %v5935
    %v5943 = vpop.xlane.xlu0 %5942
    %v5944 = vmul.f32 %v5941, %v2598
    %v5945 = vmul.f32 %v5943, %v2598
    %v5946 = vsub.f32 %v5934, %v5944
    %v5947 = vsub.f32 %v5935, %v5945
    %v5948 = vmul.f32 %v5946, %v5946
    %v5949 = vmul.f32 %v5947, %v5947
    %5950 = vadd.xlane.f32.xlu0 %v5948
    %v5951 = vpop.xlane.xlu0 %5950
    %5952 = vadd.xlane.f32.xlu0 %v5949
    %v5953 = vpop.xlane.xlu0 %5952
    %v5954 = vmul.f32 %v5951, %v2598
    %v5955 = vmul.f32 %v5953, %v2598
    %v5956 = vadd.f32 %v5954, 1e-05
    %v5957 = vadd.f32 %v5955, 1e-05
    %v5958 = vrsqrt.pop %v5956
    %v5959 = vrsqrt.pop %v5957
    %v5960 = vmul.f32 %v5946, %v5958
    %v5961 = vmul.f32 %v5947, %v5959
    %v5963 = vlaneseq
    %v5964 = vshrl.u32 %v5963, 7
    %v5965 = vsub.s32 0, %v5964
    %v5966 = vrot.slane %v5937, %v5965
    %v5968 = vmul.f32 %v5960, %v5966
    %v5969 = vmul.f32 %v5961, %v5966
    %v5971 = vlaneseq
    %v5972 = vshrl.u32 %v5971, 7
    %v5973 = vsub.s32 0, %v5972
    %v5974 = vrot.slane %v5939, %v5973
    %v5976 = vadd.f32 %v5968, %v5974
    %v5977 = vadd.f32 %v5969, %v5974
    %5978 = vst [vmem:[#allocation2] sm:$0xff] %v5976
    %5979 = vst [vmem:[#allocation2 + $0x8] sm:$0xff] %v5977
    // Predicated region
    $region54: #{tpu_custom_call.1} parent=1 // pred_check
      _
    $region55: #{tpu_custom_call.1} parent=1 // pred_check_branch
      %5981 = sbr.rel (0) target = $region57
    $region56: #{tpu_custom_call.1} parent=1 // pred_region
      %s5983 = ssub.s32 256, 256
      %5984 = vsyncadd [#allocation3], %s5983
      %s5985 = sshll.u32 [#allocation2], 4
      %s5986 = int_to_ptr.vmem [resolvable:$true] %s5985
      %5991 = dma.vmem_to_hbm [thread:$0]  %s5986, 256, %s13, [#allocation3], 128, 128, 8
    $region57: #{tpu_custom_call.1} parent=1 // pred_fallthru
      _
    // Predicated region
    $region58: #{tpu_custom_call.1} parent=1 // pred_check
      _
    $region59: #{tpu_custom_call.1} parent=1 // pred_check_branch
      %5993 = sbr.rel (0) target = $region61
    $region60: #{tpu_custom_call.1} parent=1 // pred_region
      %5994 = dma.done [#allocation3], 256
    $region61: #{tpu_custom_call.1} parent=1 // pred_fallthru
      _
    %5995 = vsyncpa [#allocation3], 1

</llo_original>
